<compile_context>
chip_gen: v5e
topology: v5e:2x2
jax: 0.10.0
libtpu: 0.0.40
codegen_flags: <defaults>
</compile_context>

<pallas_src>
import functools

import jax
import jax.numpy as jnp
from jax.experimental import pallas as pl
from jax.experimental.pallas import tpu as pltpu

LANE = 128
VMEM_LIMIT = 48 * 1024 * 1024
BN_EPS = 1e-5


def _rup(x, m=LANE):
    return ((x + m - 1) // m) * m


def _pick_tm(m):
    """Row-tile size: large tiles (low per-step overhead) but >=2 grid steps when possible."""
    if m >= 1024:
        return 512
    if m >= 16:
        return max(8, (((m + 1) // 2 + 7) // 8) * 8)
    return m


# ----------------------------------------------------------------------------
# Pallas kernels
# ----------------------------------------------------------------------------
def _matmul_kernel(a_ref, w_ref, o_ref):
    o_ref[...] = jnp.dot(a_ref[...].astype(jnp.bfloat16), w_ref[...],
                         preferred_element_type=jnp.float32)


def pallas_matmul(a, w):
    m, k = a.shape
    n = w.shape[1]
    tm = _pick_tm(m)
    return pl.pallas_call(
        _matmul_kernel,
        out_shape=jax.ShapeDtypeStruct((m, n), jnp.float32),
        grid=(pl.cdiv(m, tm),),
        in_specs=[pl.BlockSpec((tm, k), lambda i: (i, 0)),
                  pl.BlockSpec((k, n), lambda i: (0, 0))],
        out_specs=pl.BlockSpec((tm, n), lambda i: (i, 0)),
        compiler_params=pltpu.CompilerParams(
            dimension_semantics=("parallel",), vmem_limit_bytes=VMEM_LIMIT),
    )(a, w)


def _stats_kernel(x_ref, sum_ref, sq_ref, *, rows_total, tm):
    i = pl.program_id(0)

    @pl.when(i == 0)
    def _init():
        sum_ref[...] = jnp.zeros_like(sum_ref)
        sq_ref[...] = jnp.zeros_like(sq_ref)

    x = x_ref[...]
    row = jax.lax.broadcasted_iota(jnp.int32, x.shape, 0) + i * tm
    x = jnp.where(row < rows_total, x, 0.0)       # mask ragged last tile
    sum_ref[...] += jnp.sum(x, axis=0, keepdims=True)
    sq_ref[...] += jnp.sum(x * x, axis=0, keepdims=True)


def channel_stats(x2d):
    r, c = x2d.shape
    tm = _pick_tm(r)
    kern = functools.partial(_stats_kernel, rows_total=r, tm=tm)
    return pl.pallas_call(
        kern,
        out_shape=(jax.ShapeDtypeStruct((1, c), jnp.float32),
                   jax.ShapeDtypeStruct((1, c), jnp.float32)),
        grid=(pl.cdiv(r, tm),),
        in_specs=[pl.BlockSpec((tm, c), lambda i: (i, 0))],
        out_specs=(pl.BlockSpec((1, c), lambda i: (0, 0)),
                   pl.BlockSpec((1, c), lambda i: (0, 0))),
        compiler_params=pltpu.CompilerParams(
            dimension_semantics=("arbitrary",), vmem_limit_bytes=VMEM_LIMIT),
    )(x2d)


def bn_scale_shift(x2d, gamma, beta):
    """Training-mode BN folded to per-channel (scale, shift); math kept in f32."""
    r = x2d.shape[0]
    s, q = channel_stats(x2d)
    mean = s / r
    var = jnp.maximum(q / r - mean * mean, 0.0)   # biased variance
    inv = jax.lax.rsqrt(var + BN_EPS)
    scale = gamma * inv                           # padded channels: gamma==0 -> scale==0
    shift = beta - mean * scale
    return scale, shift


def _bnrelu_matmul_kernel(x_ref, s_ref, t_ref, w_ref, o_ref):
    y = jnp.maximum(x_ref[...] * s_ref[...] + t_ref[...], 0.0)
    o_ref[...] = jnp.dot(y.astype(jnp.bfloat16), w_ref[...],
                         preferred_element_type=jnp.float32)


def bnrelu_matmul(x2d, scale, shift, w):
    m, k = x2d.shape
    n = w.shape[1]
    tm = _pick_tm(m)
    return pl.pallas_call(
        _bnrelu_matmul_kernel,
        out_shape=jax.ShapeDtypeStruct((m, n), jnp.float32),
        grid=(pl.cdiv(m, tm),),
        in_specs=[pl.BlockSpec((tm, k), lambda i: (i, 0)),
                  pl.BlockSpec((1, k), lambda i: (0, 0)),
                  pl.BlockSpec((1, k), lambda i: (0, 0)),
                  pl.BlockSpec((k, n), lambda i: (0, 0))],
        out_specs=pl.BlockSpec((tm, n), lambda i: (i, 0)),
        compiler_params=pltpu.CompilerParams(
            dimension_semantics=("parallel",), vmem_limit_bytes=VMEM_LIMIT),
    )(x2d, scale, shift, w)


def _conv3x3_kernel(x_ref, m_ref, s_ref, t_ref, w_ref, o_ref, *, wp, lout):
    # x_ref: (1, Le, Cin) flattened spatially-padded image; m_ref: (Le, 1) interior mask.
    x = x_ref[0]
    y = jnp.maximum(x * s_ref[...] + t_ref[...], 0.0) * m_ref[...]
    yb = y.astype(jnp.bfloat16)
    cout = o_ref.shape[-1]
    acc = jnp.zeros((lout, cout), jnp.float32)
    for di in range(3):
        for dj in range(3):
            start = (di + 1) * wp + dj - 1            # flat shift for this tap
            acc = acc + jnp.dot(yb[start:start + lout, :], w_ref[di * 3 + dj],
                                preferred_element_type=jnp.float32)
    o_ref[0] = acc


def conv3x3_bnrelu(z4, scale, shift, w9):
    """Fused scale/shift/relu + 3x3 stride-1 pad-1 conv; no im2col in HBM."""
    n, h, w, c = z4.shape
    cout = w9.shape[-1]
    wp = w + 2
    le = (h + 4) * wp
    lout = h * wp
    ze = jnp.pad(z4, ((0, 0), (2, 2), (1, 1), (0, 0))).reshape(n, le, c)
    a_idx = jnp.arange(le) // wp
    b_idx = jnp.arange(le) % wp
    mask = ((a_idx >= 2) & (a_idx <= h + 1) & (b_idx >= 1) & (b_idx <= w))
    mask = mask.astype(jnp.float32).reshape(le, 1)
    kern = functools.partial(_conv3x3_kernel, wp=wp, lout=lout)
    out = pl.pallas_call(
        kern,
        out_shape=jax.ShapeDtypeStruct((n, lout, cout), jnp.float32),
        grid=(n,),
        in_specs=[pl.BlockSpec((1, le, c), lambda i: (i, 0, 0)),
                  pl.BlockSpec((le, 1), lambda i: (0, 0)),
                  pl.BlockSpec((1, c), lambda i: (0, 0)),
                  pl.BlockSpec((1, c), lambda i: (0, 0)),
                  pl.BlockSpec((9, c, cout), lambda i: (0, 0, 0))],
        out_specs=pl.BlockSpec((1, lout, cout), lambda i: (i, 0, 0)),
        compiler_params=pltpu.CompilerParams(
            dimension_semantics=("parallel",), vmem_limit_bytes=VMEM_LIMIT),
    )(ze, mask, scale, shift, w9)
    return out.reshape(n, h, wp, cout)[:, :, 1:1 + w, :]


def _maxpool_bnrelu_kernel(x0_ref, x1_ref, x2_ref, s_ref, t_ref, o_ref):
    s = s_ref[...]
    t = t_ref[...]
    wo = o_ref.shape[2]
    m = None
    for xr in (x0_ref, x1_ref, x2_ref):
        row = jnp.maximum(xr[0, 0] * s + t, 0.0)          # (Wp, C)
        wsel = row.shape[0] - 2
        cm = jnp.maximum(jnp.maximum(row[0:wsel, :], row[1:wsel + 1, :]),
                         row[2:wsel + 2, :])              # window max at stride 1
        m = cm if m is None else jnp.maximum(m, cm)
    rows = jax.lax.broadcasted_iota(jnp.int32, (wo, m.shape[0]), 0)
    cols = jax.lax.broadcasted_iota(jnp.int32, (wo, m.shape[0]), 1)
    sel = jnp.where(cols == 2 * rows, 1.0, 0.0)           # exact stride-2 selection
    o_ref[0, 0] = jnp.dot(sel, m, preferred_element_type=jnp.float32)


def _shifted_row_spec(di, wp, c):
    return pl.BlockSpec((1, 1, wp, c), lambda n, h: (n, 2 * h + di, 0, 0))


def maxpool3x3s2_bnrelu(xpad, scale, shift):
    n, hp, wp, c = xpad.shape
    ho = (hp - 3) // 2 + 1
    wo = (wp - 3) // 2 + 1
    return pl.pallas_call(
        _maxpool_bnrelu_kernel,
        out_shape=jax.ShapeDtypeStruct((n, ho, wo, c), jnp.float32),
        grid=(n, ho),
        in_specs=[_shifted_row_spec(0, wp, c),
                  _shifted_row_spec(1, wp, c),
                  _shifted_row_spec(2, wp, c),
                  pl.BlockSpec((1, c), lambda i, j: (0, 0)),
                  pl.BlockSpec((1, c), lambda i, j: (0, 0))],
        out_specs=pl.BlockSpec((1, 1, wo, c), lambda i, j: (i, j, 0, 0)),
        compiler_params=pltpu.CompilerParams(
            dimension_semantics=("parallel", "parallel")),
    )(xpad, xpad, xpad, scale, shift)


def _avgpool_kernel(x0_ref, x1_ref, o_ref):
    rowsum = x0_ref[0, 0] + x1_ref[0, 0]                  # (W, C)
    wo = o_ref.shape[2]
    w = rowsum.shape[0]
    rows = jax.lax.broadcasted_iota(jnp.int32, (wo, w), 0)
    cols = jax.lax.broadcasted_iota(jnp.int32, (wo, w), 1)
    p = jnp.where((cols == 2 * rows) | (cols == 2 * rows + 1), 0.25, 0.0)
    o_ref[0, 0] = jnp.dot(p, rowsum, preferred_element_type=jnp.float32)


def avgpool2x2s2(x4):
    n, h, w, c = x4.shape
    ho, wo = h // 2, w // 2

    def row_spec(p):
        return pl.BlockSpec((1, 1, w, c), lambda i, j: (i, 2 * j + p, 0, 0))

    return pl.pallas_call(
        _avgpool_kernel,
        out_shape=jax.ShapeDtypeStruct((n, ho, wo, c), jnp.float32),
        grid=(n, ho),
        in_specs=[row_spec(0), row_spec(1)],
        out_specs=pl.BlockSpec((1, 1, wo, c), lambda i, j: (i, j, 0, 0)),
        compiler_params=pltpu.CompilerParams(
            dimension_semantics=("parallel", "parallel")),
    )(x4, x4)


def _head_kernel(x_ref, s_ref, t_ref, w_ref, b_ref, o_ref):
    s = s_ref[...].reshape(1, 1, -1)
    t = t_ref[...].reshape(1, 1, -1)
    y = jnp.maximum(x_ref[...] * s + t, 0.0)              # norm5 + relu5
    feat = jnp.mean(y, axis=1)                             # global avg pool -> (N, C)
    o_ref[...] = (jnp.dot(feat.astype(jnp.bfloat16), w_ref[...],
                          preferred_element_type=jnp.float32) + b_ref[...])


def head_pool_classifier(x3, scale, shift, fc_w, fc_b):
    n, hw, c = x3.shape
    ncls = fc_w.shape[1]
    return pl.pallas_call(
        _head_kernel,
        out_shape=jax.ShapeDtypeStruct((n, ncls), jnp.float32),
        grid=(1,),
        in_specs=[pl.BlockSpec((n, hw, c), lambda i: (0, 0, 0)),
                  pl.BlockSpec((1, c), lambda i: (0, 0)),
                  pl.BlockSpec((1, c), lambda i: (0, 0)),
                  pl.BlockSpec((c, ncls), lambda i: (0, 0)),
                  pl.BlockSpec((1, ncls), lambda i: (0, 0))],
        out_specs=pl.BlockSpec((n, ncls), lambda i: (0, 0)),
        compiler_params=pltpu.CompilerParams(vmem_limit_bytes=VMEM_LIMIT),
    )(x3, scale, shift, fc_w, fc_b)


# ----------------------------------------------------------------------------
# Plain-JAX glue
# ----------------------------------------------------------------------------
def extract_patches(x, k, stride, pad):
    """im2col for the 7x7 stem only (Cin=3)."""
    n, h, w, c = x.shape
    xp = jnp.pad(x, ((0, 0), (pad, pad), (pad, pad), (0, 0)))
    ho = (h + 2 * pad - k) // stride + 1
    wo = (w + 2 * pad - k) // stride + 1
    slices = []
    for di in range(k):
        for dj in range(k):
            slices.append(xp[:, di:di + stride * ho:stride,
                             dj:dj + stride * wo:stride, :])
    return jnp.stack(slices, axis=3), ho, wo


def fit_channels(x4, cpad):
    c = x4.shape[-1]
    if c == cpad:
        return x4
    if c < cpad:
        return jnp.pad(x4, ((0, 0), (0, 0), (0, 0), (0, cpad - c)))
    return x4[..., :cpad]          # extra channels are zero padding, safe to drop


# ----------------------------------------------------------------------------
# Parameters (packed for the kernels; zero padding keeps padded channels inert)
# ----------------------------------------------------------------------------
def kaiming_oihw(key, cout, cin, kh, kw):
    fan_out = cout * kh * kw
    std = (2.0 / fan_out) ** 0.5
    return std * jax.random.normal(key, (cout, cin, kh, kw), dtype=jnp.float32)


def pack_bn(c_real, c_pad):
    g = jnp.concatenate([jnp.ones((c_real,), jnp.float32),
                         jnp.zeros((c_pad - c_real,), jnp.float32)]).reshape(1, c_pad)
    b = jnp.zeros((1, c_pad), jnp.float32)
    return g, b


def pack_conv1x1(w_oihw, cin_pad, cout_pad):
    cout, cin = w_oihw.shape[0], w_oihw.shape[1]
    w = jnp.transpose(w_oihw[:, :, 0, 0], (1, 0))
    w = jnp.pad(w, ((0, cin_pad - cin), (0, cout_pad - cout)))
    return w.astype(jnp.bfloat16)


def pack_conv3x3(w_oihw, cin_pad):
    cout, cin, kh, kw = w_oihw.shape
    w = jnp.transpose(w_oihw, (2, 3, 1, 0))
    w = jnp.pad(w, ((0, 0), (0, 0), (0, cin_pad - cin), (0, 0)))
    return w.reshape(kh * kw, cin_pad, cout).astype(jnp.bfloat16)


def pack_stem(w_oihw, cout_pad):
    cout, cin, kh, kw = w_oihw.shape
    w = jnp.transpose(w_oihw, (2, 3, 1, 0)).reshape(kh * kw * cin, cout)
    w = jnp.pad(w, ((0, 0), (0, cout_pad - cout)))
    return w.astype(jnp.bfloat16)


def init_densenet_params(key, growth, block_config, num_init, bn_size,
                         num_classes, in_channels):
    params = {}
    key, k0 = jax.random.split(key)
    c0pad = _rup(num_init)
    params["conv0"] = pack_stem(kaiming_oihw(k0, num_init, in_channels, 7, 7), c0pad)
    params["g0"], params["b0"] = pack_bn(num_init, c0pad)

    c1 = bn_size * growth
    c1pad = _rup(c1)
    blocks, transitions = [], []
    nf = num_init
    cpad = c0pad
    for bi, num_layers in enumerate(block_config):
        cpad = _rup(nf + num_layers * growth)
        layers = []
        for j in range(num_layers):
            cin = nf + j * growth
            key, ka, kb = jax.random.split(key, 3)
            g1, b1 = pack_bn(cin, cpad)
            g2, b2 = pack_bn(c1, c1pad)
            layers.append(dict(
                g1=g1, b1=b1,
                w1=pack_conv1x1(kaiming_oihw(ka, c1, cin, 1, 1), cpad, c1pad),
                g2=g2, b2=b2,
                w2=pack_conv3x3(kaiming_oihw(kb, growth, c1, 3, 3), c1pad)))
        blocks.append(layers)
        nf = nf + num_layers * growth
        if bi != len(block_config) - 1:
            key, kt = jax.random.split(key)
            gt, bt = pack_bn(nf, cpad)
            transitions.append(dict(
                g=gt, b=bt,
                w=pack_conv1x1(kaiming_oihw(kt, nf // 2, nf, 1, 1),
                               cpad, _rup(nf // 2))))
            nf //= 2
    params["blocks"] = blocks
    params["transitions"] = transitions
    params["g5"], params["b5"] = pack_bn(nf, cpad)
    key, kw = jax.random.split(key)
    fcw = jax.random.normal(kw, (num_classes, nf), jnp.float32) * (1.0 / nf ** 0.5)
    params["fc_w"] = jnp.pad(jnp.transpose(fcw, (1, 0)),
                             ((0, cpad - nf), (0, 0))).astype(jnp.bfloat16)
    params["fc_b"] = jnp.zeros((1, num_classes), jnp.float32)   # constant_(bias, 0)
    return params


# ----------------------------------------------------------------------------
# Forward pass
# ----------------------------------------------------------------------------
def densenet_forward(cfg, params, x_nchw):
    growth, block_config, num_init, bn_size, num_classes = cfg
    n = x_nchw.shape[0]
    x = jnp.transpose(x_nchw, (0, 2, 3, 1)).astype(jnp.float32)   # NCHW -> NHWC

    # Stem: conv7x7/s2 via im2col + bf16 matmul.
    patches, ho, wo = extract_patches(x, 7, 2, 3)
    a = patches.reshape(n * ho * wo, -1)
    stem = pallas_matmul(a, params["conv0"])                      # (N*Ho*Wo, C0pad)
    c0pad = params["conv0"].shape[1]

    # bn0 + relu fused into the 3x3/s2 maxpool; spatial pad value is chosen per channel
    # so that relu(scale*pad + shift) == 0 and never wins the max.
    s0, t0 = bn_scale_shift(stem, params["g0"], params["b0"])
    stem4 = stem.reshape(n, ho, wo, c0pad)
    safe_s = jnp.where(s0 != 0.0, s0, 1.0)
    padval = jnp.where(s0 != 0.0, -(t0 + 1.0) / safe_s, 0.0)
    xpad = jnp.broadcast_to(padval.reshape(1, 1, 1, c0pad),
                            (n, ho + 2, wo + 2, c0pad))
    xpad = xpad.at[:, 1:1 + ho, 1:1 + wo, :].set(stem4)
    feat = maxpool3x3s2_bnrelu(xpad, s0, t0)                      # (N, ho//2, wo//2, C0pad)

    nf = num_init
    for bi, num_layers in enumerate(block_config):
        layers = params["blocks"][bi]
        cpad = layers[0]["w1"].shape[0]
        feat = fit_channels(feat, cpad)       # channel-padded slab for the whole block
        h, w = feat.shape[1], feat.shape[2]
        for j in range(num_layers):
            lyr = layers[j]
            x2d = feat.reshape(n * h * w, cpad)
            s1, t1 = bn_scale_shift(x2d, lyr["g1"], lyr["b1"])
            h1 = bnrelu_matmul(x2d, s1, t1, lyr["w1"])            # bn1+relu+conv1 (1x1)
            s2, t2 = bn_scale_shift(h1, lyr["g2"], lyr["b2"])
            z4 = h1.reshape(n, h, w, lyr["w1"].shape[1])
            y = conv3x3_bnrelu(z4, s2, t2, lyr["w2"])             # bn2+relu+conv2 (3x3)
            # TODO(synk): training-mode dropout not implemented (drop_rate == 0 here).
            feat = jax.lax.dynamic_update_slice(
                feat, y, (0, 0, 0, nf + j * growth))              # write into the slab
        nf = nf + num_layers * growth
        if bi != len(block_config) - 1:
            tr = params["transitions"][bi]
            x2d = feat.reshape(n * h * w, cpad)
            st, tt = bn_scale_shift(x2d, tr["g"], tr["b"])
            hconv = bnrelu_matmul(x2d, st, tt, tr["w"])           # trans bn+relu+conv1x1
            h4 = hconv.reshape(n, h, w, tr["w"].shape[1])
            feat = avgpool2x2s2(h4)
            nf //= 2

    # norm5 + relu5 + AdaptiveAvgPool2d((1,1)) + Linear, in one fused kernel.
    cpad = feat.shape[-1]
    h, w = feat.shape[1], feat.shape[2]
    x2d = feat.reshape(n * h * w, cpad)
    s5, t5 = bn_scale_shift(x2d, params["g5"], params["b5"])
    logits = head_pool_classifier(feat.reshape(n, h * w, cpad), s5, t5,
                                  params["fc_w"], params["fc_b"])
    return logits


if __name__ == "__main__":
    growth_rate = 8
    block_config = (2, 2)
    num_init_features = 16
    bn_size = 2
    num_classes = 10
    in_channels = 3

    key = jax.random.PRNGKey(0)
    key, kx, kp = jax.random.split(key, 3)
    x = jax.random.normal(kx, (2, in_channels, 32, 32), dtype=jnp.float32)  # NCHW
    params = init_densenet_params(kp, growth_rate, block_config,
                                  num_init_features, bn_size,
                                  num_classes, in_channels)

    cfg = (growth_rate, tuple(block_config), num_init_features, bn_size, num_classes)
    fwd = jax.jit(functools.partial(densenet_forward, cfg))
    out = jax.block_until_ready(fwd(params, x))
    assert out.shape == (2, num_classes)
    assert out.dtype == jnp.float32
    print("KERNEL_OK")
</pallas_src>

<mosaic_0001>
module attributes {stable_mosaic.version = 11 : i64} {
  func.func @_matmul_kernel(%arg0: i32, %arg1: memref<256x147xf32, #tpu.memory_space<vmem>>, %arg2: memref<147x128xbf16, #tpu.memory_space<vmem>>, %arg3: memref<256x128xf32, #tpu.memory_space<vmem>>) attributes {dimension_semantics = [#tpu.dimension_semantics<parallel>], iteration_bounds = array<i64: 2>, scalar_prefetch = 0 : i64, scratch_operands = 0 : i64, tpu.core_type = #tpu.core_type<tc>, window_params = [{transform_indices = @transform_0, window_bounds = array<i64: 256, 147>}, {pipeline_mode = #tpu.pipeline_mode<synchronous>, transform_indices = @transform_1, window_bounds = array<i64: 147, 128>}, {transform_indices = @transform_2, window_bounds = array<i64: 256, 128>}]} {
    %c0 = arith.constant 0 : index
    %c0_0 = arith.constant 0 : index
    %0 = vector.load %arg1[%c0, %c0_0] : memref<256x147xf32, #tpu.memory_space<vmem>>, vector<256x147xf32>
    %1 = arith.truncf %0 : vector<256x147xf32> to vector<256x147xbf16>
    %c0_1 = arith.constant 0 : index
    %c0_2 = arith.constant 0 : index
    %2 = vector.load %arg2[%c0_1, %c0_2] : memref<147x128xbf16, #tpu.memory_space<vmem>>, vector<147x128xbf16>
    %cst = arith.constant dense<0.000000e+00> : vector<256x128xf32>
    %3 = tpu.matmul %1, %2, %cst {dimension_numbers = #tpu.dot_dimension_numbers<[1], [0], [0], [1], [0, 0, 1, 1], [], []>} : vector<256x147xbf16>, vector<147x128xbf16>, vector<256x128xf32> -> vector<256x128xf32>
    %c0_3 = arith.constant 0 : index
    %c0_4 = arith.constant 0 : index
    %4 = vector.load %arg3[%c0_3, %c0_4] : memref<256x128xf32, #tpu.memory_space<vmem>>, vector<256x128xf32>
    tpu.vector_store %arg3[%c0_3, %c0_4], %3 {strides = array<i32>} : memref<256x128xf32, #tpu.memory_space<vmem>>, vector<256x128xf32>,
    return
  }
  func.func @transform_0(%arg0: i32) -> (i32, i32) {
    %c0_i32 = arith.constant 0 : i32
    %c0_i32_0 = arith.constant 0 : i32
    return %arg0, %c0_i32 : i32, i32
  }
  func.func @transform_1(%arg0: i32) -> (i32, i32) {
    %c0_i32 = arith.constant 0 : i32
    %c0_i32_0 = arith.constant 0 : i32
    %c0_i32_1 = arith.constant 0 : i32
    return %c0_i32, %c0_i32_0 : i32, i32
  }
  func.func @transform_2(%arg0: i32) -> (i32, i32) {
    %c0_i32 = arith.constant 0 : i32
    %c0_i32_0 = arith.constant 0 : i32
    return %arg0, %c0_i32 : i32, i32
  }
}

module attributes {stable_mosaic.version = 11 : i64} {
  func.func @_stats_kernel(%arg0: i32, %arg1: memref<256x128xf32, #tpu.memory_space<vmem>>, %arg2: memref<1x128xf32, #tpu.memory_space<vmem>>, %arg3: memref<1x128xf32, #tpu.memory_space<vmem>>) attributes {dimension_semantics = [#tpu.dimension_semantics<arbitrary>], iteration_bounds = array<i64: 2>, scalar_prefetch = 0 : i64, scratch_operands = 0 : i64, tpu.core_type = #tpu.core_type<tc>, window_params = [{transform_indices = @transform_0, window_bounds = array<i64: 256, 128>}, {pipeline_mode = #tpu.pipeline_mode<synchronous>, transform_indices = @transform_1, window_bounds = array<i64: 1, 128>}, {pipeline_mode = #tpu.pipeline_mode<synchronous>, transform_indices = @transform_2, window_bounds = array<i64: 1, 128>}]} {
    %c0_i32 = arith.constant 0 : i32
    %0 = arith.cmpi eq, %arg0, %c0_i32 : i32
    %1 = arith.extui %0 : i1 to i32
    %c0_i32_0 = arith.constant 0 : i32
    %2 = arith.cmpi ne, %1, %c0_i32_0 : i32
    scf.if %2 {
      %cst_12 = arith.constant 0.000000e+00 : f32
      %23 = vector.broadcast %cst_12 : f32 to vector<1x128xf32>
      %c0_13 = arith.constant 0 : index
      %c0_14 = arith.constant 0 : index
      %24 = vector.load %arg2[%c0_13, %c0_14] : memref<1x128xf32, #tpu.memory_space<vmem>>, vector<1x128xf32>
      tpu.vector_store %arg2[%c0_13, %c0_14], %23 {strides = array<i32>} : memref<1x128xf32, #tpu.memory_space<vmem>>, vector<1x128xf32>,
      %cst_15 = arith.constant 0.000000e+00 : f32
      %25 = vector.broadcast %cst_15 : f32 to vector<1x128xf32>
      %c0_16 = arith.constant 0 : index
      %c0_17 = arith.constant 0 : index
      %26 = vector.load %arg3[%c0_16, %c0_17] : memref<1x128xf32, #tpu.memory_space<vmem>>, vector<1x128xf32>
      tpu.vector_store %arg3[%c0_16, %c0_17], %25 {strides = array<i32>} : memref<1x128xf32, #tpu.memory_space<vmem>>, vector<1x128xf32>,
    } else {
    }
    %c0 = arith.constant 0 : index
    %c0_1 = arith.constant 0 : index
    %3 = vector.load %arg1[%c0, %c0_1] : memref<256x128xf32, #tpu.memory_space<vmem>>, vector<256x128xf32>
    %4 = tpu.iota {dimensions = array<i32: 0>} : vector<256x128xi32>
    %c256_i32 = arith.constant 256 : i32
    %5 = arith.muli %arg0, %c256_i32 : i32
    %6 = vector.broadcast %5 : i32 to vector<256x128xi32>
    %7 = arith.addi %4, %6 : vector<256x128xi32>
    %c512_i32 = arith.constant 512 : i32
    %8 = vector.broadcast %c512_i32 : i32 to vector<256x128xi32>
    %9 = arith.cmpi slt, %7, %8 : vector<256x128xi32>
    %cst = arith.constant 0.000000e+00 : f32
    %10 = vector.broadcast %cst : f32 to vector<256x128xf32>
    %11 = arith.select %9, %3, %10 : vector<256x128xi1>, vector<256x128xf32>
    %c0_2 = arith.constant 0 : index
    %c0_3 = arith.constant 0 : index
    %12 = vector.load %arg2[%c0_2, %c0_3] : memref<1x128xf32, #tpu.memory_space<vmem>>, vector<1x128xf32>
    %cst_4 = arith.constant dense<0.000000e+00> : vector<128xf32>
    %13 = vector.multi_reduction <add>, %11, %cst_4 [0] : vector<256x128xf32> to vector<128xf32>
    %14 = vector.shape_cast %13 : vector<128xf32> to vector<1x128xf32>
    %15 = arith.addf %12, %14 : vector<1x128xf32>
    %c0_5 = arith.constant 0 : index
    %c0_6 = arith.constant 0 : index
    %16 = vector.load %arg2[%c0_5, %c0_6] : memref<1x128xf32, #tpu.memory_space<vmem>>, vector<1x128xf32>
    tpu.vector_store %arg2[%c0_5, %c0_6], %15 {strides = array<i32>} : memref<1x128xf32, #tpu.memory_space<vmem>>, vector<1x128xf32>,
    %c0_7 = arith.constant 0 : index
    %c0_8 = arith.constant 0 : index
    %17 = vector.load %arg3[%c0_7, %c0_8] : memref<1x128xf32, #tpu.memory_space<vmem>>, vector<1x128xf32>
    %18 = arith.mulf %11, %11 : vector<256x128xf32>
    %cst_9 = arith.constant dense<0.000000e+00> : vector<128xf32>
    %19 = vector.multi_reduction <add>, %18, %cst_9 [0] : vector<256x128xf32> to vector<128xf32>
    %20 = vector.shape_cast %19 : vector<128xf32> to vector<1x128xf32>
    %21 = arith.addf %17, %20 : vector<1x128xf32>
    %c0_10 = arith.constant 0 : index
    %c0_11 = arith.constant 0 : index
    %22 = vector.load %arg3[%c0_10, %c0_11] : memref<1x128xf32, #tpu.memory_space<vmem>>, vector<1x128xf32>
    tpu.vector_store %arg3[%c0_10, %c0_11], %21 {strides = array<i32>} : memref<1x128xf32, #tpu.memory_space<vmem>>, vector<1x128xf32>,
    return
  }
  func.func @transform_0(%arg0: i32) -> (i32, i32) {
    %c0_i32 = arith.constant 0 : i32
    %c0_i32_0 = arith.constant 0 : i32
    return %arg0, %c0_i32 : i32, i32
  }
  func.func @transform_1(%arg0: i32) -> (i32, i32) {
    %c0_i32 = arith.constant 0 : i32
    %c0_i32_0 = arith.constant 0 : i32
    %c0_i32_1 = arith.constant 0 : i32
    return %c0_i32, %c0_i32_0 : i32, i32
  }
  func.func @transform_2(%arg0: i32) -> (i32, i32) {
    %c0_i32 = arith.constant 0 : i32
    %c0_i32_0 = arith.constant 0 : i32
    %c0_i32_1 = arith.constant 0 : i32
    return %c0_i32, %c0_i32_0 : i32, i32
  }
}

module attributes {stable_mosaic.version = 11 : i64} {
  func.func @_maxpool_bnrelu_kernel(%arg0: i32, %arg1: i32, %arg2: memref<1x1x18x128xf32, #tpu.memory_space<vmem>>, %arg3: memref<1x1x18x128xf32, #tpu.memory_space<vmem>>, %arg4: memref<1x1x18x128xf32, #tpu.memory_space<vmem>>, %arg5: memref<1x128xf32, #tpu.memory_space<vmem>>, %arg6: memref<1x128xf32, #tpu.memory_space<vmem>>, %arg7: memref<1x1x8x128xf32, #tpu.memory_space<vmem>>) attributes {dimension_semantics = [#tpu.dimension_semantics<parallel>, #tpu.dimension_semantics<parallel>], iteration_bounds = array<i64: 2, 8>, scalar_prefetch = 0 : i64, scratch_operands = 0 : i64, tpu.core_type = #tpu.core_type<tc>, window_params = [{transform_indices = @transform_0, window_bounds = array<i64: 1, 1, 18, 128>}, {transform_indices = @transform_1, window_bounds = array<i64: 1, 1, 18, 128>}, {transform_indices = @transform_2, window_bounds = array<i64: 1, 1, 18, 128>}, {pipeline_mode = #tpu.pipeline_mode<synchronous>, transform_indices = @transform_3, window_bounds = array<i64: 1, 128>}, {pipeline_mode = #tpu.pipeline_mode<synchronous>, transform_indices = @transform_4, window_bounds = array<i64: 1, 128>}, {transform_indices = @transform_5, window_bounds = array<i64: 1, 1, 8, 128>}]} {
    %c0 = arith.constant 0 : index
    %c0_0 = arith.constant 0 : index
    %0 = vector.load %arg5[%c0, %c0_0] : memref<1x128xf32, #tpu.memory_space<vmem>>, vector<1x128xf32>
    %c0_1 = arith.constant 0 : index
    %c0_2 = arith.constant 0 : index
    %1 = vector.load %arg6[%c0_1, %c0_2] : memref<1x128xf32, #tpu.memory_space<vmem>>, vector<1x128xf32>
    %c0_3 = arith.constant 0 : index
    %c0_4 = arith.constant 0 : index
    %c0_5 = arith.constant 0 : index
    %c0_6 = arith.constant 0 : index
    %2 = vector.load %arg2[%c0_3, %c0_4, %c0_5, %c0_6] : memref<1x1x18x128xf32, #tpu.memory_space<vmem>>, vector<1x1x18x128xf32>
    %3 = vector.shape_cast %2 : vector<1x1x18x128xf32> to vector<18x128xf32>
    %4 = vector.broadcast %0 : vector<1x128xf32> to vector<18x128xf32>
    %5 = arith.mulf %3, %4 : vector<18x128xf32>
    %6 = vector.broadcast %1 : vector<1x128xf32> to vector<18x128xf32>
    %7 = arith.addf %5, %6 : vector<18x128xf32>
    %cst = arith.constant 0.000000e+00 : f32
    %8 = vector.broadcast %cst : f32 to vector<18x128xf32>
    %9 = arith.maximumf %7, %8 : vector<18x128xf32>
    %10 = vector.extract_strided_slice %9 {offsets = [0, 0], sizes = [16, 128], strides = [1, 1]} : vector<18x128xf32> to vector<16x128xf32>
    %11 = vector.extract_strided_slice %9 {offsets = [1, 0], sizes = [16, 128], strides = [1, 1]} : vector<18x128xf32> to vector<16x128xf32>
    %12 = arith.maximumf %10, %11 : vector<16x128xf32>
    %13 = vector.extract_strided_slice %9 {offsets = [2, 0], sizes = [16, 128], strides = [1, 1]} : vector<18x128xf32> to vector<16x128xf32>
    %14 = arith.maximumf %12, %13 : vector<16x128xf32>
    %c0_7 = arith.constant 0 : index
    %c0_8 = arith.constant 0 : index
    %c0_9 = arith.constant 0 : index
    %c0_10 = arith.constant 0 : index
    %15 = vector.load %arg3[%c0_7, %c0_8, %c0_9, %c0_10] : memref<1x1x18x128xf32, #tpu.memory_space<vmem>>, vector<1x1x18x128xf32>
    %16 = vector.shape_cast %15 : vector<1x1x18x128xf32> to vector<18x128xf32>
    %17 = vector.broadcast %0 : vector<1x128xf32> to vector<18x128xf32>
    %18 = arith.mulf %16, %17 : vector<18x128xf32>
    %19 = vector.broadcast %1 : vector<1x128xf32> to vector<18x128xf32>
    %20 = arith.addf %18, %19 : vector<18x128xf32>
    %cst_11 = arith.constant 0.000000e+00 : f32
    %21 = vector.broadcast %cst_11 : f32 to vector<18x128xf32>
    %22 = arith.maximumf %20, %21 : vector<18x128xf32>
    %23 = vector.extract_strided_slice %22 {offsets = [0, 0], sizes = [16, 128], strides = [1, 1]} : vector<18x128xf32> to vector<16x128xf32>
    %24 = vector.extract_strided_slice %22 {offsets = [1, 0], sizes = [16, 128], strides = [1, 1]} : vector<18x128xf32> to vector<16x128xf32>
    %25 = arith.maximumf %23, %24 : vector<16x128xf32>
    %26 = vector.extract_strided_slice %22 {offsets = [2, 0], sizes = [16, 128], strides = [1, 1]} : vector<18x128xf32> to vector<16x128xf32>
    %27 = arith.maximumf %25, %26 : vector<16x128xf32>
    %28 = arith.maximumf %14, %27 : vector<16x128xf32>
    %c0_12 = arith.constant 0 : index
    %c0_13 = arith.constant 0 : index
    %c0_14 = arith.constant 0 : index
    %c0_15 = arith.constant 0 : index
    %29 = vector.load %arg4[%c0_12, %c0_13, %c0_14, %c0_15] : memref<1x1x18x128xf32, #tpu.memory_space<vmem>>, vector<1x1x18x128xf32>
    %30 = vector.shape_cast %29 : vector<1x1x18x128xf32> to vector<18x128xf32>
    %31 = vector.broadcast %0 : vector<1x128xf32> to vector<18x128xf32>
    %32 = arith.mulf %30, %31 : vector<18x128xf32>
    %33 = vector.broadcast %1 : vector<1x128xf32> to vector<18x128xf32>
    %34 = arith.addf %32, %33 : vector<18x128xf32>
    %cst_16 = arith.constant 0.000000e+00 : f32
    %35 = vector.broadcast %cst_16 : f32 to vector<18x128xf32>
    %36 = arith.maximumf %34, %35 : vector<18x128xf32>
    %37 = vector.extract_strided_slice %36 {offsets = [0, 0], sizes = [16, 128], strides = [1, 1]} : vector<18x128xf32> to vector<16x128xf32>
    %38 = vector.extract_strided_slice %36 {offsets = [1, 0], sizes = [16, 128], strides = [1, 1]} : vector<18x128xf32> to vector<16x128xf32>
    %39 = arith.maximumf %37, %38 : vector<16x128xf32>
    %40 = vector.extract_strided_slice %36 {offsets = [2, 0], sizes = [16, 128], strides = [1, 1]} : vector<18x128xf32> to vector<16x128xf32>
    %41 = arith.maximumf %39, %40 : vector<16x128xf32>
    %42 = arith.maximumf %28, %41 : vector<16x128xf32>
    %43 = tpu.iota {dimensions = array<i32: 0>} : vector<8x16xi32>
    %44 = tpu.iota {dimensions = array<i32: 1>} : vector<8x16xi32>
    %c2_i32 = arith.constant 2 : i32
    %45 = vector.broadcast %c2_i32 : i32 to vector<8x16xi32>
    %46 = arith.muli %45, %43 : vector<8x16xi32>
    %47 = arith.cmpi eq, %44, %46 : vector<8x16xi32>
    %cst_17 = arith.constant 1.000000e+00 : f32
    %cst_18 = arith.constant 0.000000e+00 : f32
    %48 = vector.broadcast %cst_17 : f32 to vector<8x16xf32>
    %49 = vector.broadcast %cst_18 : f32 to vector<8x16xf32>
    %50 = arith.select %47, %48, %49 : vector<8x16xi1>, vector<8x16xf32>
    %cst_19 = arith.constant dense<0.000000e+00> : vector<8x128xf32>
    %51 = tpu.matmul %50, %42, %cst_19 {dimension_numbers = #tpu.dot_dimension_numbers<[1], [0], [0], [1], [0, 0, 1, 1], [], []>} : vector<8x16xf32>, vector<16x128xf32>, vector<8x128xf32> -> vector<8x128xf32>
    %c0_20 = arith.constant 0 : index
    %c0_21 = arith.constant 0 : index
    %c0_22 = arith.constant 0 : index
    %c0_23 = arith.constant 0 : index
    %52 = vector.load %arg7[%c0_20, %c0_21, %c0_22, %c0_23] : memref<1x1x8x128xf32, #tpu.memory_space<vmem>>, vector<1x1x8x128xf32>
    %53 = vector.shape_cast %52 : vector<1x1x8x128xf32> to vector<8x128xf32>
    %54 = vector.shape_cast %51 : vector<8x128xf32> to vector<1x1x8x128xf32>
    tpu.vector_store %arg7[%c0_20, %c0_21, %c0_22, %c0_23], %54 {strides = array<i32>} : memref<1x1x8x128xf32, #tpu.memory_space<vmem>>, vector<1x1x8x128xf32>,
    return
  }
  func.func @transform_0(%arg0: i32, %arg1: i32) -> (i32, i32, i32, i32) {
    %c2_i32 = arith.constant 2 : i32
    %0 = arith.muli %c2_i32, %arg1 : i32
    %c0_i32 = arith.constant 0 : i32
    %1 = arith.addi %0, %c0_i32 : i32
    %c0_i32_0 = arith.constant 0 : i32
    %c0_i32_1 = arith.constant 0 : i32
    %c0_i32_2 = arith.constant 0 : i32
    return %arg0, %1, %c0_i32_0, %c0_i32_1 : i32, i32, i32, i32
  }
  func.func @transform_1(%arg0: i32, %arg1: i32) -> (i32, i32, i32, i32) {
    %c2_i32 = arith.constant 2 : i32
    %0 = arith.muli %c2_i32, %arg1 : i32
    %c1_i32 = arith.constant 1 : i32
    %1 = arith.addi %0, %c1_i32 : i32
    %c0_i32 = arith.constant 0 : i32
    %c0_i32_0 = arith.constant 0 : i32
    %c0_i32_1 = arith.constant 0 : i32
    return %arg0, %1, %c0_i32, %c0_i32_0 : i32, i32, i32, i32
  }
  func.func @transform_2(%arg0: i32, %arg1: i32) -> (i32, i32, i32, i32) {
    %c2_i32 = arith.constant 2 : i32
    %0 = arith.muli %c2_i32, %arg1 : i32
    %c2_i32_0 = arith.constant 2 : i32
    %1 = arith.addi %0, %c2_i32_0 : i32
    %c0_i32 = arith.constant 0 : i32
    %c0_i32_1 = arith.constant 0 : i32
    %c0_i32_2 = arith.constant 0 : i32
    return %arg0, %1, %c0_i32, %c0_i32_1 : i32, i32, i32, i32
  }
  func.func @transform_3(%arg0: i32, %arg1: i32) -> (i32, i32) {
    %c0_i32 = arith.constant 0 : i32
    %c0_i32_0 = arith.constant 0 : i32
    %c0_i32_1 = arith.constant 0 : i32
    return %c0_i32, %c0_i32_0 : i32, i32
  }
  func.func @transform_4(%arg0: i32, %arg1: i32) -> (i32, i32) {
    %c0_i32 = arith.constant 0 : i32
    %c0_i32_0 = arith.constant 0 : i32
    %c0_i32_1 = arith.constant 0 : i32
    return %c0_i32, %c0_i32_0 : i32, i32
  }
  func.func @transform_5(%arg0: i32, %arg1: i32) -> (i32, i32, i32, i32) {
    %c0_i32 = arith.constant 0 : i32
    %c0_i32_0 = arith.constant 0 : i32
    %c0_i32_1 = arith.constant 0 : i32
    return %arg0, %arg1, %c0_i32, %c0_i32_0 : i32, i32, i32, i32
  }
}

module attributes {stable_mosaic.version = 11 : i64} {
  func.func @_stats_kernel(%arg0: i32, %arg1: memref<64x128xf32, #tpu.memory_space<vmem>>, %arg2: memref<1x128xf32, #tpu.memory_space<vmem>>, %arg3: memref<1x128xf32, #tpu.memory_space<vmem>>) attributes {dimension_semantics = [#tpu.dimension_semantics<arbitrary>], iteration_bounds = array<i64: 2>, scalar_prefetch = 0 : i64, scratch_operands = 0 : i64, tpu.core_type = #tpu.core_type<tc>, window_params = [{transform_indices = @transform_0, window_bounds = array<i64: 64, 128>}, {pipeline_mode = #tpu.pipeline_mode<synchronous>, transform_indices = @transform_1, window_bounds = array<i64: 1, 128>}, {pipeline_mode = #tpu.pipeline_mode<synchronous>, transform_indices = @transform_2, window_bounds = array<i64: 1, 128>}]} {
    %c0_i32 = arith.constant 0 : i32
    %0 = arith.cmpi eq, %arg0, %c0_i32 : i32
    %1 = arith.extui %0 : i1 to i32
    %c0_i32_0 = arith.constant 0 : i32
    %2 = arith.cmpi ne, %1, %c0_i32_0 : i32
    scf.if %2 {
      %cst_12 = arith.constant 0.000000e+00 : f32
      %23 = vector.broadcast %cst_12 : f32 to vector<1x128xf32>
      %c0_13 = arith.constant 0 : index
      %c0_14 = arith.constant 0 : index
      %24 = vector.load %arg2[%c0_13, %c0_14] : memref<1x128xf32, #tpu.memory_space<vmem>>, vector<1x128xf32>
      tpu.vector_store %arg2[%c0_13, %c0_14], %23 {strides = array<i32>} : memref<1x128xf32, #tpu.memory_space<vmem>>, vector<1x128xf32>,
      %cst_15 = arith.constant 0.000000e+00 : f32
      %25 = vector.broadcast %cst_15 : f32 to vector<1x128xf32>
      %c0_16 = arith.constant 0 : index
      %c0_17 = arith.constant 0 : index
      %26 = vector.load %arg3[%c0_16, %c0_17] : memref<1x128xf32, #tpu.memory_space<vmem>>, vector<1x128xf32>
      tpu.vector_store %arg3[%c0_16, %c0_17], %25 {strides = array<i32>} : memref<1x128xf32, #tpu.memory_space<vmem>>, vector<1x128xf32>,
    } else {
    }
    %c0 = arith.constant 0 : index
    %c0_1 = arith.constant 0 : index
    %3 = vector.load %arg1[%c0, %c0_1] : memref<64x128xf32, #tpu.memory_space<vmem>>, vector<64x128xf32>
    %4 = tpu.iota {dimensions = array<i32: 0>} : vector<64x128xi32>
    %c64_i32 = arith.constant 64 : i32
    %5 = arith.muli %arg0, %c64_i32 : i32
    %6 = vector.broadcast %5 : i32 to vector<64x128xi32>
    %7 = arith.addi %4, %6 : vector<64x128xi32>
    %c128_i32 = arith.constant 128 : i32
    %8 = vector.broadcast %c128_i32 : i32 to vector<64x128xi32>
    %9 = arith.cmpi slt, %7, %8 : vector<64x128xi32>
    %cst = arith.constant 0.000000e+00 : f32
    %10 = vector.broadcast %cst : f32 to vector<64x128xf32>
    %11 = arith.select %9, %3, %10 : vector<64x128xi1>, vector<64x128xf32>
    %c0_2 = arith.constant 0 : index
    %c0_3 = arith.constant 0 : index
    %12 = vector.load %arg2[%c0_2, %c0_3] : memref<1x128xf32, #tpu.memory_space<vmem>>, vector<1x128xf32>
    %cst_4 = arith.constant dense<0.000000e+00> : vector<128xf32>
    %13 = vector.multi_reduction <add>, %11, %cst_4 [0] : vector<64x128xf32> to vector<128xf32>
    %14 = vector.shape_cast %13 : vector<128xf32> to vector<1x128xf32>
    %15 = arith.addf %12, %14 : vector<1x128xf32>
    %c0_5 = arith.constant 0 : index
    %c0_6 = arith.constant 0 : index
    %16 = vector.load %arg2[%c0_5, %c0_6] : memref<1x128xf32, #tpu.memory_space<vmem>>, vector<1x128xf32>
    tpu.vector_store %arg2[%c0_5, %c0_6], %15 {strides = array<i32>} : memref<1x128xf32, #tpu.memory_space<vmem>>, vector<1x128xf32>,
    %c0_7 = arith.constant 0 : index
    %c0_8 = arith.constant 0 : index
    %17 = vector.load %arg3[%c0_7, %c0_8] : memref<1x128xf32, #tpu.memory_space<vmem>>, vector<1x128xf32>
    %18 = arith.mulf %11, %11 : vector<64x128xf32>
    %cst_9 = arith.constant dense<0.000000e+00> : vector<128xf32>
    %19 = vector.multi_reduction <add>, %18, %cst_9 [0] : vector<64x128xf32> to vector<128xf32>
    %20 = vector.shape_cast %19 : vector<128xf32> to vector<1x128xf32>
    %21 = arith.addf %17, %20 : vector<1x128xf32>
    %c0_10 = arith.constant 0 : index
    %c0_11 = arith.constant 0 : index
    %22 = vector.load %arg3[%c0_10, %c0_11] : memref<1x128xf32, #tpu.memory_space<vmem>>, vector<1x128xf32>
    tpu.vector_store %arg3[%c0_10, %c0_11], %21 {strides = array<i32>} : memref<1x128xf32, #tpu.memory_space<vmem>>, vector<1x128xf32>,
    return
  }
  func.func @transform_0(%arg0: i32) -> (i32, i32) {
    %c0_i32 = arith.constant 0 : i32
    %c0_i32_0 = arith.constant 0 : i32
    return %arg0, %c0_i32 : i32, i32
  }
  func.func @transform_1(%arg0: i32) -> (i32, i32) {
    %c0_i32 = arith.constant 0 : i32
    %c0_i32_0 = arith.constant 0 : i32
    %c0_i32_1 = arith.constant 0 : i32
    return %c0_i32, %c0_i32_0 : i32, i32
  }
  func.func @transform_2(%arg0: i32) -> (i32, i32) {
    %c0_i32 = arith.constant 0 : i32
    %c0_i32_0 = arith.constant 0 : i32
    %c0_i32_1 = arith.constant 0 : i32
    return %c0_i32, %c0_i32_0 : i32, i32
  }
}

module attributes {stable_mosaic.version = 11 : i64} {
  func.func @_bnrelu_matmul_kernel(%arg0: i32, %arg1: memref<64x128xf32, #tpu.memory_space<vmem>>, %arg2: memref<1x128xf32, #tpu.memory_space<vmem>>, %arg3: memref<1x128xf32, #tpu.memory_space<vmem>>, %arg4: memref<128x128xbf16, #tpu.memory_space<vmem>>, %arg5: memref<64x128xf32, #tpu.memory_space<vmem>>) attributes {dimension_semantics = [#tpu.dimension_semantics<parallel>], iteration_bounds = array<i64: 2>, scalar_prefetch = 0 : i64, scratch_operands = 0 : i64, tpu.core_type = #tpu.core_type<tc>, window_params = [{transform_indices = @transform_0, window_bounds = array<i64: 64, 128>}, {pipeline_mode = #tpu.pipeline_mode<synchronous>, transform_indices = @transform_1, window_bounds = array<i64: 1, 128>}, {pipeline_mode = #tpu.pipeline_mode<synchronous>, transform_indices = @transform_2, window_bounds = array<i64: 1, 128>}, {pipeline_mode = #tpu.pipeline_mode<synchronous>, transform_indices = @transform_3, window_bounds = array<i64: 128, 128>}, {transform_indices = @transform_4, window_bounds = array<i64: 64, 128>}]} {
    %c0 = arith.constant 0 : index
    %c0_0 = arith.constant 0 : index
    %0 = vector.load %arg1[%c0, %c0_0] : memref<64x128xf32, #tpu.memory_space<vmem>>, vector<64x128xf32>
    %c0_1 = arith.constant 0 : index
    %c0_2 = arith.constant 0 : index
    %1 = vector.load %arg2[%c0_1, %c0_2] : memref<1x128xf32, #tpu.memory_space<vmem>>, vector<1x128xf32>
    %2 = vector.broadcast %1 : vector<1x128xf32> to vector<64x128xf32>
    %3 = arith.mulf %0, %2 : vector<64x128xf32>
    %c0_3 = arith.constant 0 : index
    %c0_4 = arith.constant 0 : index
    %4 = vector.load %arg3[%c0_3, %c0_4] : memref<1x128xf32, #tpu.memory_space<vmem>>, vector<1x128xf32>
    %5 = vector.broadcast %4 : vector<1x128xf32> to vector<64x128xf32>
    %6 = arith.addf %3, %5 : vector<64x128xf32>
    %cst = arith.constant 0.000000e+00 : f32
    %7 = vector.broadcast %cst : f32 to vector<64x128xf32>
    %8 = arith.maximumf %6, %7 : vector<64x128xf32>
    %9 = arith.truncf %8 : vector<64x128xf32> to vector<64x128xbf16>
    %c0_5 = arith.constant 0 : index
    %c0_6 = arith.constant 0 : index
    %10 = vector.load %arg4[%c0_5, %c0_6] : memref<128x128xbf16, #tpu.memory_space<vmem>>, vector<128x128xbf16>
    %cst_7 = arith.constant dense<0.000000e+00> : vector<64x128xf32>
    %11 = tpu.matmul %9, %10, %cst_7 {dimension_numbers = #tpu.dot_dimension_numbers<[1], [0], [0], [1], [0, 0, 1, 1], [], []>} : vector<64x128xbf16>, vector<128x128xbf16>, vector<64x128xf32> -> vector<64x128xf32>
    %c0_8 = arith.constant 0 : index
    %c0_9 = arith.constant 0 : index
    %12 = vector.load %arg5[%c0_8, %c0_9] : memref<64x128xf32, #tpu.memory_space<vmem>>, vector<64x128xf32>
    tpu.vector_store %arg5[%c0_8, %c0_9], %11 {strides = array<i32>} : memref<64x128xf32, #tpu.memory_space<vmem>>, vector<64x128xf32>,
    return
  }
  func.func @transform_0(%arg0: i32) -> (i32, i32) {
    %c0_i32 = arith.constant 0 : i32
    %c0_i32_0 = arith.constant 0 : i32
    return %arg0, %c0_i32 : i32, i32
  }
  func.func @transform_1(%arg0: i32) -> (i32, i32) {
    %c0_i32 = arith.constant 0 : i32
    %c0_i32_0 = arith.constant 0 : i32
    %c0_i32_1 = arith.constant 0 : i32
    return %c0_i32, %c0_i32_0 : i32, i32
  }
  func.func @transform_2(%arg0: i32) -> (i32, i32) {
    %c0_i32 = arith.constant 0 : i32
    %c0_i32_0 = arith.constant 0 : i32
    %c0_i32_1 = arith.constant 0 : i32
    return %c0_i32, %c0_i32_0 : i32, i32
  }
  func.func @transform_3(%arg0: i32) -> (i32, i32) {
    %c0_i32 = arith.constant 0 : i32
    %c0_i32_0 = arith.constant 0 : i32
    %c0_i32_1 = arith.constant 0 : i32
    return %c0_i32, %c0_i32_0 : i32, i32
  }
  func.func @transform_4(%arg0: i32) -> (i32, i32) {
    %c0_i32 = arith.constant 0 : i32
    %c0_i32_0 = arith.constant 0 : i32
    return %arg0, %c0_i32 : i32, i32
  }
}

module attributes {stable_mosaic.version = 11 : i64} {
  func.func @_conv3x3_kernel(%arg0: i32, %arg1: memref<1x120x128xf32, #tpu.memory_space<vmem>>, %arg2: memref<120x1xf32, #tpu.memory_space<vmem>>, %arg3: memref<1x128xf32, #tpu.memory_space<vmem>>, %arg4: memref<1x128xf32, #tpu.memory_space<vmem>>, %arg5: memref<9x128x8xbf16, #tpu.memory_space<vmem>>, %arg6: memref<1x80x8xf32, #tpu.memory_space<vmem>>) attributes {dimension_semantics = [#tpu.dimension_semantics<parallel>], iteration_bounds = array<i64: 2>, scalar_prefetch = 0 : i64, scratch_operands = 0 : i64, tpu.core_type = #tpu.core_type<tc>, window_params = [{transform_indices = @transform_0, window_bounds = array<i64: 1, 120, 128>}, {pipeline_mode = #tpu.pipeline_mode<synchronous>, transform_indices = @transform_1, window_bounds = array<i64: 120, 1>}, {pipeline_mode = #tpu.pipeline_mode<synchronous>, transform_indices = @transform_2, window_bounds = array<i64: 1, 128>}, {pipeline_mode = #tpu.pipeline_mode<synchronous>, transform_indices = @transform_3, window_bounds = array<i64: 1, 128>}, {pipeline_mode = #tpu.pipeline_mode<synchronous>, transform_indices = @transform_4, window_bounds = array<i64: 9, 128, 8>}, {transform_indices = @transform_5, window_bounds = array<i64: 1, 80, 8>}]} {
    %c0 = arith.constant 0 : index
    %c0_0 = arith.constant 0 : index
    %c0_1 = arith.constant 0 : index
    %0 = vector.load %arg1[%c0, %c0_0, %c0_1] : memref<1x120x128xf32, #tpu.memory_space<vmem>>, vector<1x120x128xf32>
    %1 = vector.shape_cast %0 : vector<1x120x128xf32> to vector<120x128xf32>
    %c0_2 = arith.constant 0 : index
    %c0_3 = arith.constant 0 : index
    %2 = vector.load %arg3[%c0_2, %c0_3] : memref<1x128xf32, #tpu.memory_space<vmem>>, vector<1x128xf32>
    %3 = vector.broadcast %2 : vector<1x128xf32> to vector<120x128xf32>
    %4 = arith.mulf %1, %3 : vector<120x128xf32>
    %c0_4 = arith.constant 0 : index
    %c0_5 = arith.constant 0 : index
    %5 = vector.load %arg4[%c0_4, %c0_5] : memref<1x128xf32, #tpu.memory_space<vmem>>, vector<1x128xf32>
    %6 = vector.broadcast %5 : vector<1x128xf32> to vector<120x128xf32>
    %7 = arith.addf %4, %6 : vector<120x128xf32>
    %cst = arith.constant 0.000000e+00 : f32
    %8 = vector.broadcast %cst : f32 to vector<120x128xf32>
    %9 = arith.maximumf %7, %8 : vector<120x128xf32>
    %c0_6 = arith.constant 0 : index
    %c0_7 = arith.constant 0 : index
    %10 = vector.load %arg2[%c0_6, %c0_7] : memref<120x1xf32, #tpu.memory_space<vmem>>, vector<120x1xf32>
    %11 = vector.broadcast %10 : vector<120x1xf32> to vector<120x128xf32>
    %12 = arith.mulf %9, %11 : vector<120x128xf32>
    %13 = arith.truncf %12 : vector<120x128xf32> to vector<120x128xbf16>
    %cst_8 = arith.constant 0.000000e+00 : f32
    %14 = vector.broadcast %cst_8 : f32 to vector<80x8xf32>
    %15 = vector.extract_strided_slice %13 {offsets = [9, 0], sizes = [80, 128], strides = [1, 1]} : vector<120x128xbf16> to vector<80x128xbf16>
    %c0_9 = arith.constant 0 : index
    %c0_10 = arith.constant 0 : index
    %c0_11 = arith.constant 0 : index
    %16 = vector.load %arg5[%c0_9, %c0_10, %c0_11] : memref<9x128x8xbf16, #tpu.memory_space<vmem>>, vector<1x128x8xbf16>
    %17 = vector.shape_cast %16 : vector<1x128x8xbf16> to vector<128x8xbf16>
    %cst_12 = arith.constant dense<0.000000e+00> : vector<80x8xf32>
    %18 = tpu.matmul %15, %17, %cst_12 {dimension_numbers = #tpu.dot_dimension_numbers<[1], [0], [0], [1], [0, 0, 1, 1], [], []>} : vector<80x128xbf16>, vector<128x8xbf16>, vector<80x8xf32> -> vector<80x8xf32>
    %19 = arith.addf %14, %18 : vector<80x8xf32>
    %20 = vector.extract_strided_slice %13 {offsets = [10, 0], sizes = [80, 128], strides = [1, 1]} : vector<120x128xbf16> to vector<80x128xbf16>
    %c1 = arith.constant 1 : index
    %c0_13 = arith.constant 0 : index
    %c0_14 = arith.constant 0 : index
    %21 = vector.load %arg5[%c1, %c0_13, %c0_14] : memref<9x128x8xbf16, #tpu.memory_space<vmem>>, vector<1x128x8xbf16>
    %22 = vector.shape_cast %21 : vector<1x128x8xbf16> to vector<128x8xbf16>
    %cst_15 = arith.constant dense<0.000000e+00> : vector<80x8xf32>
    %23 = tpu.matmul %20, %22, %cst_15 {dimension_numbers = #tpu.dot_dimension_numbers<[1], [0], [0], [1], [0, 0, 1, 1], [], []>} : vector<80x128xbf16>, vector<128x8xbf16>, vector<80x8xf32> -> vector<80x8xf32>
    %24 = arith.addf %19, %23 : vector<80x8xf32>
    %25 = vector.extract_strided_slice %13 {offsets = [11, 0], sizes = [80, 128], strides = [1, 1]} : vector<120x128xbf16> to vector<80x128xbf16>
    %c2 = arith.constant 2 : index
    %c0_16 = arith.constant 0 : index
    %c0_17 = arith.constant 0 : index
    %26 = vector.load %arg5[%c2, %c0_16, %c0_17] : memref<9x128x8xbf16, #tpu.memory_space<vmem>>, vector<1x128x8xbf16>
    %27 = vector.shape_cast %26 : vector<1x128x8xbf16> to vector<128x8xbf16>
    %cst_18 = arith.constant dense<0.000000e+00> : vector<80x8xf32>
    %28 = tpu.matmul %25, %27, %cst_18 {dimension_numbers = #tpu.dot_dimension_numbers<[1], [0], [0], [1], [0, 0, 1, 1], [], []>} : vector<80x128xbf16>, vector<128x8xbf16>, vector<80x8xf32> -> vector<80x8xf32>
    %29 = arith.addf %24, %28 : vector<80x8xf32>
    %30 = vector.extract_strided_slice %13 {offsets = [19, 0], sizes = [80, 128], strides = [1, 1]} : vector<120x128xbf16> to vector<80x128xbf16>
    %c3 = arith.constant 3 : index
    %c0_19 = arith.constant 0 : index
    %c0_20 = arith.constant 0 : index
    %31 = vector.load %arg5[%c3, %c0_19, %c0_20] : memref<9x128x8xbf16, #tpu.memory_space<vmem>>, vector<1x128x8xbf16>
    %32 = vector.shape_cast %31 : vector<1x128x8xbf16> to vector<128x8xbf16>
    %cst_21 = arith.constant dense<0.000000e+00> : vector<80x8xf32>
    %33 = tpu.matmul %30, %32, %cst_21 {dimension_numbers = #tpu.dot_dimension_numbers<[1], [0], [0], [1], [0, 0, 1, 1], [], []>} : vector<80x128xbf16>, vector<128x8xbf16>, vector<80x8xf32> -> vector<80x8xf32>
    %34 = arith.addf %29, %33 : vector<80x8xf32>
    %35 = vector.extract_strided_slice %13 {offsets = [20, 0], sizes = [80, 128], strides = [1, 1]} : vector<120x128xbf16> to vector<80x128xbf16>
    %c4 = arith.constant 4 : index
    %c0_22 = arith.constant 0 : index
    %c0_23 = arith.constant 0 : index
    %36 = vector.load %arg5[%c4, %c0_22, %c0_23] : memref<9x128x8xbf16, #tpu.memory_space<vmem>>, vector<1x128x8xbf16>
    %37 = vector.shape_cast %36 : vector<1x128x8xbf16> to vector<128x8xbf16>
    %cst_24 = arith.constant dense<0.000000e+00> : vector<80x8xf32>
    %38 = tpu.matmul %35, %37, %cst_24 {dimension_numbers = #tpu.dot_dimension_numbers<[1], [0], [0], [1], [0, 0, 1, 1], [], []>} : vector<80x128xbf16>, vector<128x8xbf16>, vector<80x8xf32> -> vector<80x8xf32>
    %39 = arith.addf %34, %38 : vector<80x8xf32>
    %40 = vector.extract_strided_slice %13 {offsets = [21, 0], sizes = [80, 128], strides = [1, 1]} : vector<120x128xbf16> to vector<80x128xbf16>
    %c5 = arith.constant 5 : index
    %c0_25 = arith.constant 0 : index
    %c0_26 = arith.constant 0 : index
    %41 = vector.load %arg5[%c5, %c0_25, %c0_26] : memref<9x128x8xbf16, #tpu.memory_space<vmem>>, vector<1x128x8xbf16>
    %42 = vector.shape_cast %41 : vector<1x128x8xbf16> to vector<128x8xbf16>
    %cst_27 = arith.constant dense<0.000000e+00> : vector<80x8xf32>
    %43 = tpu.matmul %40, %42, %cst_27 {dimension_numbers = #tpu.dot_dimension_numbers<[1], [0], [0], [1], [0, 0, 1, 1], [], []>} : vector<80x128xbf16>, vector<128x8xbf16>, vector<80x8xf32> -> vector<80x8xf32>
    %44 = arith.addf %39, %43 : vector<80x8xf32>
    %45 = vector.extract_strided_slice %13 {offsets = [29, 0], sizes = [80, 128], strides = [1, 1]} : vector<120x128xbf16> to vector<80x128xbf16>
    %c6 = arith.constant 6 : index
    %c0_28 = arith.constant 0 : index
    %c0_29 = arith.constant 0 : index
    %46 = vector.load %arg5[%c6, %c0_28, %c0_29] : memref<9x128x8xbf16, #tpu.memory_space<vmem>>, vector<1x128x8xbf16>
    %47 = vector.shape_cast %46 : vector<1x128x8xbf16> to vector<128x8xbf16>
    %cst_30 = arith.constant dense<0.000000e+00> : vector<80x8xf32>
    %48 = tpu.matmul %45, %47, %cst_30 {dimension_numbers = #tpu.dot_dimension_numbers<[1], [0], [0], [1], [0, 0, 1, 1], [], []>} : vector<80x128xbf16>, vector<128x8xbf16>, vector<80x8xf32> -> vector<80x8xf32>
    %49 = arith.addf %44, %48 : vector<80x8xf32>
    %50 = vector.extract_strided_slice %13 {offsets = [30, 0], sizes = [80, 128], strides = [1, 1]} : vector<120x128xbf16> to vector<80x128xbf16>
    %c7 = arith.constant 7 : index
    %c0_31 = arith.constant 0 : index
    %c0_32 = arith.constant 0 : index
    %51 = vector.load %arg5[%c7, %c0_31, %c0_32] : memref<9x128x8xbf16, #tpu.memory_space<vmem>>, vector<1x128x8xbf16>
    %52 = vector.shape_cast %51 : vector<1x128x8xbf16> to vector<128x8xbf16>
    %cst_33 = arith.constant dense<0.000000e+00> : vector<80x8xf32>
    %53 = tpu.matmul %50, %52, %cst_33 {dimension_numbers = #tpu.dot_dimension_numbers<[1], [0], [0], [1], [0, 0, 1, 1], [], []>} : vector<80x128xbf16>, vector<128x8xbf16>, vector<80x8xf32> -> vector<80x8xf32>
    %54 = arith.addf %49, %53 : vector<80x8xf32>
    %55 = vector.extract_strided_slice %13 {offsets = [31, 0], sizes = [80, 128], strides = [1, 1]} : vector<120x128xbf16> to vector<80x128xbf16>
    %c8 = arith.constant 8 : index
    %c0_34 = arith.constant 0 : index
    %c0_35 = arith.constant 0 : index
    %56 = vector.load %arg5[%c8, %c0_34, %c0_35] : memref<9x128x8xbf16, #tpu.memory_space<vmem>>, vector<1x128x8xbf16>
    %57 = vector.shape_cast %56 : vector<1x128x8xbf16> to vector<128x8xbf16>
    %cst_36 = arith.constant dense<0.000000e+00> : vector<80x8xf32>
    %58 = tpu.matmul %55, %57, %cst_36 {dimension_numbers = #tpu.dot_dimension_numbers<[1], [0], [0], [1], [0, 0, 1, 1], [], []>} : vector<80x128xbf16>, vector<128x8xbf16>, vector<80x8xf32> -> vector<80x8xf32>
    %59 = arith.addf %54, %58 : vector<80x8xf32>
    %c0_37 = arith.constant 0 : index
    %c0_38 = arith.constant 0 : index
    %c0_39 = arith.constant 0 : index
    %60 = vector.load %arg6[%c0_37, %c0_38, %c0_39] : memref<1x80x8xf32, #tpu.memory_space<vmem>>, vector<1x80x8xf32>
    %61 = vector.shape_cast %60 : vector<1x80x8xf32> to vector<80x8xf32>
    %62 = vector.shape_cast %59 : vector<80x8xf32> to vector<1x80x8xf32>
    tpu.vector_store %arg6[%c0_37, %c0_38, %c0_39], %62 {strides = array<i32>} : memref<1x80x8xf32, #tpu.memory_space<vmem>>, vector<1x80x8xf32>,
    return
  }
  func.func @transform_0(%arg0: i32) -> (i32, i32, i32) {
    %c0_i32 = arith.constant 0 : i32
    %c0_i32_0 = arith.constant 0 : i32
    %c0_i32_1 = arith.constant 0 : i32
    return %arg0, %c0_i32, %c0_i32_0 : i32, i32, i32
  }
  func.func @transform_1(%arg0: i32) -> (i32, i32) {
    %c0_i32 = arith.constant 0 : i32
    %c0_i32_0 = arith.constant 0 : i32
    %c0_i32_1 = arith.constant 0 : i32
    return %c0_i32, %c0_i32_0 : i32, i32
  }
  func.func @transform_2(%arg0: i32) -> (i32, i32) {
    %c0_i32 = arith.constant 0 : i32
    %c0_i32_0 = arith.constant 0 : i32
    %c0_i32_1 = arith.constant 0 : i32
    return %c0_i32, %c0_i32_0 : i32, i32
  }
  func.func @transform_3(%arg0: i32) -> (i32, i32) {
    %c0_i32 = arith.constant 0 : i32
    %c0_i32_0 = arith.constant 0 : i32
    %c0_i32_1 = arith.constant 0 : i32
    return %c0_i32, %c0_i32_0 : i32, i32
  }
  func.func @transform_4(%arg0: i32) -> (i32, i32, i32) {
    %c0_i32 = arith.constant 0 : i32
    %c0_i32_0 = arith.constant 0 : i32
    %c0_i32_1 = arith.constant 0 : i32
    %c0_i32_2 = arith.constant 0 : i32
    return %c0_i32, %c0_i32_0, %c0_i32_1 : i32, i32, i32
  }
  func.func @transform_5(%arg0: i32) -> (i32, i32, i32) {
    %c0_i32 = arith.constant 0 : i32
    %c0_i32_0 = arith.constant 0 : i32
    %c0_i32_1 = arith.constant 0 : i32
    return %arg0, %c0_i32, %c0_i32_0 : i32, i32, i32
  }
}

module attributes {stable_mosaic.version = 11 : i64} {
  func.func @_avgpool_kernel(%arg0: i32, %arg1: i32, %arg2: memref<1x1x8x128xf32, #tpu.memory_space<vmem>>, %arg3: memref<1x1x8x128xf32, #tpu.memory_space<vmem>>, %arg4: memref<1x1x4x128xf32, #tpu.memory_space<vmem>>) attributes {dimension_semantics = [#tpu.dimension_semantics<parallel>, #tpu.dimension_semantics<parallel>], iteration_bounds = array<i64: 2, 4>, scalar_prefetch = 0 : i64, scratch_operands = 0 : i64, tpu.core_type = #tpu.core_type<tc>, window_params = [{transform_indices = @transform_0, window_bounds = array<i64: 1, 1, 8, 128>}, {transform_indices = @transform_1, window_bounds = array<i64: 1, 1, 8, 128>}, {transform_indices = @transform_2, window_bounds = array<i64: 1, 1, 4, 128>}]} {
    %c0 = arith.constant 0 : index
    %c0_0 = arith.constant 0 : index
    %c0_1 = arith.constant 0 : index
    %c0_2 = arith.constant 0 : index
    %0 = vector.load %arg2[%c0, %c0_0, %c0_1, %c0_2] : memref<1x1x8x128xf32, #tpu.memory_space<vmem>>, vector<1x1x8x128xf32>
    %1 = vector.shape_cast %0 : vector<1x1x8x128xf32> to vector<8x128xf32>
    %c0_3 = arith.constant 0 : index
    %c0_4 = arith.constant 0 : index
    %c0_5 = arith.constant 0 : index
    %c0_6 = arith.constant 0 : index
    %2 = vector.load %arg3[%c0_3, %c0_4, %c0_5, %c0_6] : memref<1x1x8x128xf32, #tpu.memory_space<vmem>>, vector<1x1x8x128xf32>
    %3 = vector.shape_cast %2 : vector<1x1x8x128xf32> to vector<8x128xf32>
    %4 = arith.addf %1, %3 : vector<8x128xf32>
    %5 = tpu.iota {dimensions = array<i32: 0>} : vector<4x8xi32>
    %6 = tpu.iota {dimensions = array<i32: 1>} : vector<4x8xi32>
    %c2_i32 = arith.constant 2 : i32
    %7 = vector.broadcast %c2_i32 : i32 to vector<4x8xi32>
    %8 = arith.muli %7, %5 : vector<4x8xi32>
    %9 = arith.cmpi eq, %6, %8 : vector<4x8xi32>
    %c2_i32_7 = arith.constant 2 : i32
    %10 = vector.broadcast %c2_i32_7 : i32 to vector<4x8xi32>
    %11 = arith.muli %10, %5 : vector<4x8xi32>
    %c1_i32 = arith.constant 1 : i32
    %12 = vector.broadcast %c1_i32 : i32 to vector<4x8xi32>
    %13 = arith.addi %11, %12 : vector<4x8xi32>
    %14 = arith.cmpi eq, %6, %13 : vector<4x8xi32>
    %15 = arith.ori %9, %14 : vector<4x8xi1>
    %cst = arith.constant 2.500000e-01 : f32
    %cst_8 = arith.constant 0.000000e+00 : f32
    %16 = vector.broadcast %cst : f32 to vector<4x8xf32>
    %17 = vector.broadcast %cst_8 : f32 to vector<4x8xf32>
    %18 = arith.select %15, %16, %17 : vector<4x8xi1>, vector<4x8xf32>
    %cst_9 = arith.constant dense<0.000000e+00> : vector<4x128xf32>
    %19 = tpu.matmul %18, %4, %cst_9 {dimension_numbers = #tpu.dot_dimension_numbers<[1], [0], [0], [1], [0, 0, 1, 1], [], []>} : vector<4x8xf32>, vector<8x128xf32>, vector<4x128xf32> -> vector<4x128xf32>
    %c0_10 = arith.constant 0 : index
    %c0_11 = arith.constant 0 : index
    %c0_12 = arith.constant 0 : index
    %c0_13 = arith.constant 0 : index
    %20 = vector.load %arg4[%c0_10, %c0_11, %c0_12, %c0_13] : memref<1x1x4x128xf32, #tpu.memory_space<vmem>>, vector<1x1x4x128xf32>
    %21 = vector.shape_cast %20 : vector<1x1x4x128xf32> to vector<4x128xf32>
    %22 = vector.shape_cast %19 : vector<4x128xf32> to vector<1x1x4x128xf32>
    tpu.vector_store %arg4[%c0_10, %c0_11, %c0_12, %c0_13], %22 {strides = array<i32>} : memref<1x1x4x128xf32, #tpu.memory_space<vmem>>, vector<1x1x4x128xf32>,
    return
  }
  func.func @transform_0(%arg0: i32, %arg1: i32) -> (i32, i32, i32, i32) {
    %c2_i32 = arith.constant 2 : i32
    %0 = arith.muli %c2_i32, %arg1 : i32
    %c0_i32 = arith.constant 0 : i32
    %1 = arith.addi %0, %c0_i32 : i32
    %c0_i32_0 = arith.constant 0 : i32
    %c0_i32_1 = arith.constant 0 : i32
    %c0_i32_2 = arith.constant 0 : i32
    return %arg0, %1, %c0_i32_0, %c0_i32_1 : i32, i32, i32, i32
  }
  func.func @transform_1(%arg0: i32, %arg1: i32) -> (i32, i32, i32, i32) {
    %c2_i32 = arith.constant 2 : i32
    %0 = arith.muli %c2_i32, %arg1 : i32
    %c1_i32 = arith.constant 1 : i32
    %1 = arith.addi %0, %c1_i32 : i32
    %c0_i32 = arith.constant 0 : i32
    %c0_i32_0 = arith.constant 0 : i32
    %c0_i32_1 = arith.constant 0 : i32
    return %arg0, %1, %c0_i32, %c0_i32_0 : i32, i32, i32, i32
  }
  func.func @transform_2(%arg0: i32, %arg1: i32) -> (i32, i32, i32, i32) {
    %c0_i32 = arith.constant 0 : i32
    %c0_i32_0 = arith.constant 0 : i32
    %c0_i32_1 = arith.constant 0 : i32
    return %arg0, %arg1, %c0_i32, %c0_i32_0 : i32, i32, i32, i32
  }
}

module attributes {stable_mosaic.version = 11 : i64} {
  func.func @_stats_kernel(%arg0: i32, %arg1: memref<16x128xf32, #tpu.memory_space<vmem>>, %arg2: memref<1x128xf32, #tpu.memory_space<vmem>>, %arg3: memref<1x128xf32, #tpu.memory_space<vmem>>) attributes {dimension_semantics = [#tpu.dimension_semantics<arbitrary>], iteration_bounds = array<i64: 2>, scalar_prefetch = 0 : i64, scratch_operands = 0 : i64, tpu.core_type = #tpu.core_type<tc>, window_params = [{transform_indices = @transform_0, window_bounds = array<i64: 16, 128>}, {pipeline_mode = #tpu.pipeline_mode<synchronous>, transform_indices = @transform_1, window_bounds = array<i64: 1, 128>}, {pipeline_mode = #tpu.pipeline_mode<synchronous>, transform_indices = @transform_2, window_bounds = array<i64: 1, 128>}]} {
    %c0_i32 = arith.constant 0 : i32
    %0 = arith.cmpi eq, %arg0, %c0_i32 : i32
    %1 = arith.extui %0 : i1 to i32
    %c0_i32_0 = arith.constant 0 : i32
    %2 = arith.cmpi ne, %1, %c0_i32_0 : i32
    scf.if %2 {
      %cst_12 = arith.constant 0.000000e+00 : f32
      %23 = vector.broadcast %cst_12 : f32 to vector<1x128xf32>
      %c0_13 = arith.constant 0 : index
      %c0_14 = arith.constant 0 : index
      %24 = vector.load %arg2[%c0_13, %c0_14] : memref<1x128xf32, #tpu.memory_space<vmem>>, vector<1x128xf32>
      tpu.vector_store %arg2[%c0_13, %c0_14], %23 {strides = array<i32>} : memref<1x128xf32, #tpu.memory_space<vmem>>, vector<1x128xf32>,
      %cst_15 = arith.constant 0.000000e+00 : f32
      %25 = vector.broadcast %cst_15 : f32 to vector<1x128xf32>
      %c0_16 = arith.constant 0 : index
      %c0_17 = arith.constant 0 : index
      %26 = vector.load %arg3[%c0_16, %c0_17] : memref<1x128xf32, #tpu.memory_space<vmem>>, vector<1x128xf32>
      tpu.vector_store %arg3[%c0_16, %c0_17], %25 {strides = array<i32>} : memref<1x128xf32, #tpu.memory_space<vmem>>, vector<1x128xf32>,
    } else {
    }
    %c0 = arith.constant 0 : index
    %c0_1 = arith.constant 0 : index
    %3 = vector.load %arg1[%c0, %c0_1] : memref<16x128xf32, #tpu.memory_space<vmem>>, vector<16x128xf32>
    %4 = tpu.iota {dimensions = array<i32: 0>} : vector<16x128xi32>
    %c16_i32 = arith.constant 16 : i32
    %5 = arith.muli %arg0, %c16_i32 : i32
    %6 = vector.broadcast %5 : i32 to vector<16x128xi32>
    %7 = arith.addi %4, %6 : vector<16x128xi32>
    %c32_i32 = arith.constant 32 : i32
    %8 = vector.broadcast %c32_i32 : i32 to vector<16x128xi32>
    %9 = arith.cmpi slt, %7, %8 : vector<16x128xi32>
    %cst = arith.constant 0.000000e+00 : f32
    %10 = vector.broadcast %cst : f32 to vector<16x128xf32>
    %11 = arith.select %9, %3, %10 : vector<16x128xi1>, vector<16x128xf32>
    %c0_2 = arith.constant 0 : index
    %c0_3 = arith.constant 0 : index
    %12 = vector.load %arg2[%c0_2, %c0_3] : memref<1x128xf32, #tpu.memory_space<vmem>>, vector<1x128xf32>
    %cst_4 = arith.constant dense<0.000000e+00> : vector<128xf32>
    %13 = vector.multi_reduction <add>, %11, %cst_4 [0] : vector<16x128xf32> to vector<128xf32>
    %14 = vector.shape_cast %13 : vector<128xf32> to vector<1x128xf32>
    %15 = arith.addf %12, %14 : vector<1x128xf32>
    %c0_5 = arith.constant 0 : index
    %c0_6 = arith.constant 0 : index
    %16 = vector.load %arg2[%c0_5, %c0_6] : memref<1x128xf32, #tpu.memory_space<vmem>>, vector<1x128xf32>
    tpu.vector_store %arg2[%c0_5, %c0_6], %15 {strides = array<i32>} : memref<1x128xf32, #tpu.memory_space<vmem>>, vector<1x128xf32>,
    %c0_7 = arith.constant 0 : index
    %c0_8 = arith.constant 0 : index
    %17 = vector.load %arg3[%c0_7, %c0_8] : memref<1x128xf32, #tpu.memory_space<vmem>>, vector<1x128xf32>
    %18 = arith.mulf %11, %11 : vector<16x128xf32>
    %cst_9 = arith.constant dense<0.000000e+00> : vector<128xf32>
    %19 = vector.multi_reduction <add>, %18, %cst_9 [0] : vector<16x128xf32> to vector<128xf32>
    %20 = vector.shape_cast %19 : vector<128xf32> to vector<1x128xf32>
    %21 = arith.addf %17, %20 : vector<1x128xf32>
    %c0_10 = arith.constant 0 : index
    %c0_11 = arith.constant 0 : index
    %22 = vector.load %arg3[%c0_10, %c0_11] : memref<1x128xf32, #tpu.memory_space<vmem>>, vector<1x128xf32>
    tpu.vector_store %arg3[%c0_10, %c0_11], %21 {strides = array<i32>} : memref<1x128xf32, #tpu.memory_space<vmem>>, vector<1x128xf32>,
    return
  }
  func.func @transform_0(%arg0: i32) -> (i32, i32) {
    %c0_i32 = arith.constant 0 : i32
    %c0_i32_0 = arith.constant 0 : i32
    return %arg0, %c0_i32 : i32, i32
  }
  func.func @transform_1(%arg0: i32) -> (i32, i32) {
    %c0_i32 = arith.constant 0 : i32
    %c0_i32_0 = arith.constant 0 : i32
    %c0_i32_1 = arith.constant 0 : i32
    return %c0_i32, %c0_i32_0 : i32, i32
  }
  func.func @transform_2(%arg0: i32) -> (i32, i32) {
    %c0_i32 = arith.constant 0 : i32
    %c0_i32_0 = arith.constant 0 : i32
    %c0_i32_1 = arith.constant 0 : i32
    return %c0_i32, %c0_i32_0 : i32, i32
  }
}

module attributes {stable_mosaic.version = 11 : i64} {
  func.func @_bnrelu_matmul_kernel(%arg0: i32, %arg1: memref<16x128xf32, #tpu.memory_space<vmem>>, %arg2: memref<1x128xf32, #tpu.memory_space<vmem>>, %arg3: memref<1x128xf32, #tpu.memory_space<vmem>>, %arg4: memref<128x128xbf16, #tpu.memory_space<vmem>>, %arg5: memref<16x128xf32, #tpu.memory_space<vmem>>) attributes {dimension_semantics = [#tpu.dimension_semantics<parallel>], iteration_bounds = array<i64: 2>, scalar_prefetch = 0 : i64, scratch_operands = 0 : i64, tpu.core_type = #tpu.core_type<tc>, window_params = [{transform_indices = @transform_0, window_bounds = array<i64: 16, 128>}, {pipeline_mode = #tpu.pipeline_mode<synchronous>, transform_indices = @transform_1, window_bounds = array<i64: 1, 128>}, {pipeline_mode = #tpu.pipeline_mode<synchronous>, transform_indices = @transform_2, window_bounds = array<i64: 1, 128>}, {pipeline_mode = #tpu.pipeline_mode<synchronous>, transform_indices = @transform_3, window_bounds = array<i64: 128, 128>}, {transform_indices = @transform_4, window_bounds = array<i64: 16, 128>}]} {
    %c0 = arith.constant 0 : index
    %c0_0 = arith.constant 0 : index
    %0 = vector.load %arg1[%c0, %c0_0] : memref<16x128xf32, #tpu.memory_space<vmem>>, vector<16x128xf32>
    %c0_1 = arith.constant 0 : index
    %c0_2 = arith.constant 0 : index
    %1 = vector.load %arg2[%c0_1, %c0_2] : memref<1x128xf32, #tpu.memory_space<vmem>>, vector<1x128xf32>
    %2 = vector.broadcast %1 : vector<1x128xf32> to vector<16x128xf32>
    %3 = arith.mulf %0, %2 : vector<16x128xf32>
    %c0_3 = arith.constant 0 : index
    %c0_4 = arith.constant 0 : index
    %4 = vector.load %arg3[%c0_3, %c0_4] : memref<1x128xf32, #tpu.memory_space<vmem>>, vector<1x128xf32>
    %5 = vector.broadcast %4 : vector<1x128xf32> to vector<16x128xf32>
    %6 = arith.addf %3, %5 : vector<16x128xf32>
    %cst = arith.constant 0.000000e+00 : f32
    %7 = vector.broadcast %cst : f32 to vector<16x128xf32>
    %8 = arith.maximumf %6, %7 : vector<16x128xf32>
    %9 = arith.truncf %8 : vector<16x128xf32> to vector<16x128xbf16>
    %c0_5 = arith.constant 0 : index
    %c0_6 = arith.constant 0 : index
    %10 = vector.load %arg4[%c0_5, %c0_6] : memref<128x128xbf16, #tpu.memory_space<vmem>>, vector<128x128xbf16>
    %cst_7 = arith.constant dense<0.000000e+00> : vector<16x128xf32>
    %11 = tpu.matmul %9, %10, %cst_7 {dimension_numbers = #tpu.dot_dimension_numbers<[1], [0], [0], [1], [0, 0, 1, 1], [], []>} : vector<16x128xbf16>, vector<128x128xbf16>, vector<16x128xf32> -> vector<16x128xf32>
    %c0_8 = arith.constant 0 : index
    %c0_9 = arith.constant 0 : index
    %12 = vector.load %arg5[%c0_8, %c0_9] : memref<16x128xf32, #tpu.memory_space<vmem>>, vector<16x128xf32>
    tpu.vector_store %arg5[%c0_8, %c0_9], %11 {strides = array<i32>} : memref<16x128xf32, #tpu.memory_space<vmem>>, vector<16x128xf32>,
    return
  }
  func.func @transform_0(%arg0: i32) -> (i32, i32) {
    %c0_i32 = arith.constant 0 : i32
    %c0_i32_0 = arith.constant 0 : i32
    return %arg0, %c0_i32 : i32, i32
  }
  func.func @transform_1(%arg0: i32) -> (i32, i32) {
    %c0_i32 = arith.constant 0 : i32
    %c0_i32_0 = arith.constant 0 : i32
    %c0_i32_1 = arith.constant 0 : i32
    return %c0_i32, %c0_i32_0 : i32, i32
  }
  func.func @transform_2(%arg0: i32) -> (i32, i32) {
    %c0_i32 = arith.constant 0 : i32
    %c0_i32_0 = arith.constant 0 : i32
    %c0_i32_1 = arith.constant 0 : i32
    return %c0_i32, %c0_i32_0 : i32, i32
  }
  func.func @transform_3(%arg0: i32) -> (i32, i32) {
    %c0_i32 = arith.constant 0 : i32
    %c0_i32_0 = arith.constant 0 : i32
    %c0_i32_1 = arith.constant 0 : i32
    return %c0_i32, %c0_i32_0 : i32, i32
  }
  func.func @transform_4(%arg0: i32) -> (i32, i32) {
    %c0_i32 = arith.constant 0 : i32
    %c0_i32_0 = arith.constant 0 : i32
    return %arg0, %c0_i32 : i32, i32
  }
}

module attributes {stable_mosaic.version = 11 : i64} {
  func.func @_conv3x3_kernel(%arg0: i32, %arg1: memref<1x48x128xf32, #tpu.memory_space<vmem>>, %arg2: memref<48x1xf32, #tpu.memory_space<vmem>>, %arg3: memref<1x128xf32, #tpu.memory_space<vmem>>, %arg4: memref<1x128xf32, #tpu.memory_space<vmem>>, %arg5: memref<9x128x8xbf16, #tpu.memory_space<vmem>>, %arg6: memref<1x24x8xf32, #tpu.memory_space<vmem>>) attributes {dimension_semantics = [#tpu.dimension_semantics<parallel>], iteration_bounds = array<i64: 2>, scalar_prefetch = 0 : i64, scratch_operands = 0 : i64, tpu.core_type = #tpu.core_type<tc>, window_params = [{transform_indices = @transform_0, window_bounds = array<i64: 1, 48, 128>}, {pipeline_mode = #tpu.pipeline_mode<synchronous>, transform_indices = @transform_1, window_bounds = array<i64: 48, 1>}, {pipeline_mode = #tpu.pipeline_mode<synchronous>, transform_indices = @transform_2, window_bounds = array<i64: 1, 128>}, {pipeline_mode = #tpu.pipeline_mode<synchronous>, transform_indices = @transform_3, window_bounds = array<i64: 1, 128>}, {pipeline_mode = #tpu.pipeline_mode<synchronous>, transform_indices = @transform_4, window_bounds = array<i64: 9, 128, 8>}, {transform_indices = @transform_5, window_bounds = array<i64: 1, 24, 8>}]} {
    %c0 = arith.constant 0 : index
    %c0_0 = arith.constant 0 : index
    %c0_1 = arith.constant 0 : index
    %0 = vector.load %arg1[%c0, %c0_0, %c0_1] : memref<1x48x128xf32, #tpu.memory_space<vmem>>, vector<1x48x128xf32>
    %1 = vector.shape_cast %0 : vector<1x48x128xf32> to vector<48x128xf32>
    %c0_2 = arith.constant 0 : index
    %c0_3 = arith.constant 0 : index
    %2 = vector.load %arg3[%c0_2, %c0_3] : memref<1x128xf32, #tpu.memory_space<vmem>>, vector<1x128xf32>
    %3 = vector.broadcast %2 : vector<1x128xf32> to vector<48x128xf32>
    %4 = arith.mulf %1, %3 : vector<48x128xf32>
    %c0_4 = arith.constant 0 : index
    %c0_5 = arith.constant 0 : index
    %5 = vector.load %arg4[%c0_4, %c0_5] : memref<1x128xf32, #tpu.memory_space<vmem>>, vector<1x128xf32>
    %6 = vector.broadcast %5 : vector<1x128xf32> to vector<48x128xf32>
    %7 = arith.addf %4, %6 : vector<48x128xf32>
    %cst = arith.constant 0.000000e+00 : f32
    %8 = vector.broadcast %cst : f32 to vector<48x128xf32>
    %9 = arith.maximumf %7, %8 : vector<48x128xf32>
    %c0_6 = arith.constant 0 : index
    %c0_7 = arith.constant 0 : index
    %10 = vector.load %arg2[%c0_6, %c0_7] : memref<48x1xf32, #tpu.memory_space<vmem>>, vector<48x1xf32>
    %11 = vector.broadcast %10 : vector<48x1xf32> to vector<48x128xf32>
    %12 = arith.mulf %9, %11 : vector<48x128xf32>
    %13 = arith.truncf %12 : vector<48x128xf32> to vector<48x128xbf16>
    %cst_8 = arith.constant 0.000000e+00 : f32
    %14 = vector.broadcast %cst_8 : f32 to vector<24x8xf32>
    %15 = vector.extract_strided_slice %13 {offsets = [5, 0], sizes = [24, 128], strides = [1, 1]} : vector<48x128xbf16> to vector<24x128xbf16>
    %c0_9 = arith.constant 0 : index
    %c0_10 = arith.constant 0 : index
    %c0_11 = arith.constant 0 : index
    %16 = vector.load %arg5[%c0_9, %c0_10, %c0_11] : memref<9x128x8xbf16, #tpu.memory_space<vmem>>, vector<1x128x8xbf16>
    %17 = vector.shape_cast %16 : vector<1x128x8xbf16> to vector<128x8xbf16>
    %cst_12 = arith.constant dense<0.000000e+00> : vector<24x8xf32>
    %18 = tpu.matmul %15, %17, %cst_12 {dimension_numbers = #tpu.dot_dimension_numbers<[1], [0], [0], [1], [0, 0, 1, 1], [], []>} : vector<24x128xbf16>, vector<128x8xbf16>, vector<24x8xf32> -> vector<24x8xf32>
    %19 = arith.addf %14, %18 : vector<24x8xf32>
    %20 = vector.extract_strided_slice %13 {offsets = [6, 0], sizes = [24, 128], strides = [1, 1]} : vector<48x128xbf16> to vector<24x128xbf16>
    %c1 = arith.constant 1 : index
    %c0_13 = arith.constant 0 : index
    %c0_14 = arith.constant 0 : index
    %21 = vector.load %arg5[%c1, %c0_13, %c0_14] : memref<9x128x8xbf16, #tpu.memory_space<vmem>>, vector<1x128x8xbf16>
    %22 = vector.shape_cast %21 : vector<1x128x8xbf16> to vector<128x8xbf16>
    %cst_15 = arith.constant dense<0.000000e+00> : vector<24x8xf32>
    %23 = tpu.matmul %20, %22, %cst_15 {dimension_numbers = #tpu.dot_dimension_numbers<[1], [0], [0], [1], [0, 0, 1, 1], [], []>} : vector<24x128xbf16>, vector<128x8xbf16>, vector<24x8xf32> -> vector<24x8xf32>
    %24 = arith.addf %19, %23 : vector<24x8xf32>
    %25 = vector.extract_strided_slice %13 {offsets = [7, 0], sizes = [24, 128], strides = [1, 1]} : vector<48x128xbf16> to vector<24x128xbf16>
    %c2 = arith.constant 2 : index
    %c0_16 = arith.constant 0 : index
    %c0_17 = arith.constant 0 : index
    %26 = vector.load %arg5[%c2, %c0_16, %c0_17] : memref<9x128x8xbf16, #tpu.memory_space<vmem>>, vector<1x128x8xbf16>
    %27 = vector.shape_cast %26 : vector<1x128x8xbf16> to vector<128x8xbf16>
    %cst_18 = arith.constant dense<0.000000e+00> : vector<24x8xf32>
    %28 = tpu.matmul %25, %27, %cst_18 {dimension_numbers = #tpu.dot_dimension_numbers<[1], [0], [0], [1], [0, 0, 1, 1], [], []>} : vector<24x128xbf16>, vector<128x8xbf16>, vector<24x8xf32> -> vector<24x8xf32>
    %29 = arith.addf %24, %28 : vector<24x8xf32>
    %30 = vector.extract_strided_slice %13 {offsets = [11, 0], sizes = [24, 128], strides = [1, 1]} : vector<48x128xbf16> to vector<24x128xbf16>
    %c3 = arith.constant 3 : index
    %c0_19 = arith.constant 0 : index
    %c0_20 = arith.constant 0 : index
    %31 = vector.load %arg5[%c3, %c0_19, %c0_20] : memref<9x128x8xbf16, #tpu.memory_space<vmem>>, vector<1x128x8xbf16>
    %32 = vector.shape_cast %31 : vector<1x128x8xbf16> to vector<128x8xbf16>
    %cst_21 = arith.constant dense<0.000000e+00> : vector<24x8xf32>
    %33 = tpu.matmul %30, %32, %cst_21 {dimension_numbers = #tpu.dot_dimension_numbers<[1], [0], [0], [1], [0, 0, 1, 1], [], []>} : vector<24x128xbf16>, vector<128x8xbf16>, vector<24x8xf32> -> vector<24x8xf32>
    %34 = arith.addf %29, %33 : vector<24x8xf32>
    %35 = vector.extract_strided_slice %13 {offsets = [12, 0], sizes = [24, 128], strides = [1, 1]} : vector<48x128xbf16> to vector<24x128xbf16>
    %c4 = arith.constant 4 : index
    %c0_22 = arith.constant 0 : index
    %c0_23 = arith.constant 0 : index
    %36 = vector.load %arg5[%c4, %c0_22, %c0_23] : memref<9x128x8xbf16, #tpu.memory_space<vmem>>, vector<1x128x8xbf16>
    %37 = vector.shape_cast %36 : vector<1x128x8xbf16> to vector<128x8xbf16>
    %cst_24 = arith.constant dense<0.000000e+00> : vector<24x8xf32>
    %38 = tpu.matmul %35, %37, %cst_24 {dimension_numbers = #tpu.dot_dimension_numbers<[1], [0], [0], [1], [0, 0, 1, 1], [], []>} : vector<24x128xbf16>, vector<128x8xbf16>, vector<24x8xf32> -> vector<24x8xf32>
    %39 = arith.addf %34, %38 : vector<24x8xf32>
    %40 = vector.extract_strided_slice %13 {offsets = [13, 0], sizes = [24, 128], strides = [1, 1]} : vector<48x128xbf16> to vector<24x128xbf16>
    %c5 = arith.constant 5 : index
    %c0_25 = arith.constant 0 : index
    %c0_26 = arith.constant 0 : index
    %41 = vector.load %arg5[%c5, %c0_25, %c0_26] : memref<9x128x8xbf16, #tpu.memory_space<vmem>>, vector<1x128x8xbf16>
    %42 = vector.shape_cast %41 : vector<1x128x8xbf16> to vector<128x8xbf16>
    %cst_27 = arith.constant dense<0.000000e+00> : vector<24x8xf32>
    %43 = tpu.matmul %40, %42, %cst_27 {dimension_numbers = #tpu.dot_dimension_numbers<[1], [0], [0], [1], [0, 0, 1, 1], [], []>} : vector<24x128xbf16>, vector<128x8xbf16>, vector<24x8xf32> -> vector<24x8xf32>
    %44 = arith.addf %39, %43 : vector<24x8xf32>
    %45 = vector.extract_strided_slice %13 {offsets = [17, 0], sizes = [24, 128], strides = [1, 1]} : vector<48x128xbf16> to vector<24x128xbf16>
    %c6 = arith.constant 6 : index
    %c0_28 = arith.constant 0 : index
    %c0_29 = arith.constant 0 : index
    %46 = vector.load %arg5[%c6, %c0_28, %c0_29] : memref<9x128x8xbf16, #tpu.memory_space<vmem>>, vector<1x128x8xbf16>
    %47 = vector.shape_cast %46 : vector<1x128x8xbf16> to vector<128x8xbf16>
    %cst_30 = arith.constant dense<0.000000e+00> : vector<24x8xf32>
    %48 = tpu.matmul %45, %47, %cst_30 {dimension_numbers = #tpu.dot_dimension_numbers<[1], [0], [0], [1], [0, 0, 1, 1], [], []>} : vector<24x128xbf16>, vector<128x8xbf16>, vector<24x8xf32> -> vector<24x8xf32>
    %49 = arith.addf %44, %48 : vector<24x8xf32>
    %50 = vector.extract_strided_slice %13 {offsets = [18, 0], sizes = [24, 128], strides = [1, 1]} : vector<48x128xbf16> to vector<24x128xbf16>
    %c7 = arith.constant 7 : index
    %c0_31 = arith.constant 0 : index
    %c0_32 = arith.constant 0 : index
    %51 = vector.load %arg5[%c7, %c0_31, %c0_32] : memref<9x128x8xbf16, #tpu.memory_space<vmem>>, vector<1x128x8xbf16>
    %52 = vector.shape_cast %51 : vector<1x128x8xbf16> to vector<128x8xbf16>
    %cst_33 = arith.constant dense<0.000000e+00> : vector<24x8xf32>
    %53 = tpu.matmul %50, %52, %cst_33 {dimension_numbers = #tpu.dot_dimension_numbers<[1], [0], [0], [1], [0, 0, 1, 1], [], []>} : vector<24x128xbf16>, vector<128x8xbf16>, vector<24x8xf32> -> vector<24x8xf32>
    %54 = arith.addf %49, %53 : vector<24x8xf32>
    %55 = vector.extract_strided_slice %13 {offsets = [19, 0], sizes = [24, 128], strides = [1, 1]} : vector<48x128xbf16> to vector<24x128xbf16>
    %c8 = arith.constant 8 : index
    %c0_34 = arith.constant 0 : index
    %c0_35 = arith.constant 0 : index
    %56 = vector.load %arg5[%c8, %c0_34, %c0_35] : memref<9x128x8xbf16, #tpu.memory_space<vmem>>, vector<1x128x8xbf16>
    %57 = vector.shape_cast %56 : vector<1x128x8xbf16> to vector<128x8xbf16>
    %cst_36 = arith.constant dense<0.000000e+00> : vector<24x8xf32>
    %58 = tpu.matmul %55, %57, %cst_36 {dimension_numbers = #tpu.dot_dimension_numbers<[1], [0], [0], [1], [0, 0, 1, 1], [], []>} : vector<24x128xbf16>, vector<128x8xbf16>, vector<24x8xf32> -> vector<24x8xf32>
    %59 = arith.addf %54, %58 : vector<24x8xf32>
    %c0_37 = arith.constant 0 : index
    %c0_38 = arith.constant 0 : index
    %c0_39 = arith.constant 0 : index
    %60 = vector.load %arg6[%c0_37, %c0_38, %c0_39] : memref<1x24x8xf32, #tpu.memory_space<vmem>>, vector<1x24x8xf32>
    %61 = vector.shape_cast %60 : vector<1x24x8xf32> to vector<24x8xf32>
    %62 = vector.shape_cast %59 : vector<24x8xf32> to vector<1x24x8xf32>
    tpu.vector_store %arg6[%c0_37, %c0_38, %c0_39], %62 {strides = array<i32>} : memref<1x24x8xf32, #tpu.memory_space<vmem>>, vector<1x24x8xf32>,
    return
  }
  func.func @transform_0(%arg0: i32) -> (i32, i32, i32) {
    %c0_i32 = arith.constant 0 : i32
    %c0_i32_0 = arith.constant 0 : i32
    %c0_i32_1 = arith.constant 0 : i32
    return %arg0, %c0_i32, %c0_i32_0 : i32, i32, i32
  }
  func.func @transform_1(%arg0: i32) -> (i32, i32) {
    %c0_i32 = arith.constant 0 : i32
    %c0_i32_0 = arith.constant 0 : i32
    %c0_i32_1 = arith.constant 0 : i32
    return %c0_i32, %c0_i32_0 : i32, i32
  }
  func.func @transform_2(%arg0: i32) -> (i32, i32) {
    %c0_i32 = arith.constant 0 : i32
    %c0_i32_0 = arith.constant 0 : i32
    %c0_i32_1 = arith.constant 0 : i32
    return %c0_i32, %c0_i32_0 : i32, i32
  }
  func.func @transform_3(%arg0: i32) -> (i32, i32) {
    %c0_i32 = arith.constant 0 : i32
    %c0_i32_0 = arith.constant 0 : i32
    %c0_i32_1 = arith.constant 0 : i32
    return %c0_i32, %c0_i32_0 : i32, i32
  }
  func.func @transform_4(%arg0: i32) -> (i32, i32, i32) {
    %c0_i32 = arith.constant 0 : i32
    %c0_i32_0 = arith.constant 0 : i32
    %c0_i32_1 = arith.constant 0 : i32
    %c0_i32_2 = arith.constant 0 : i32
    return %c0_i32, %c0_i32_0, %c0_i32_1 : i32, i32, i32
  }
  func.func @transform_5(%arg0: i32) -> (i32, i32, i32) {
    %c0_i32 = arith.constant 0 : i32
    %c0_i32_0 = arith.constant 0 : i32
    %c0_i32_1 = arith.constant 0 : i32
    return %arg0, %c0_i32, %c0_i32_0 : i32, i32, i32
  }
}

module attributes {stable_mosaic.version = 11 : i64} {
  func.func @_head_kernel(%arg0: i32, %arg1: memref<2x16x128xf32, #tpu.memory_space<vmem>>, %arg2: memref<1x128xf32, #tpu.memory_space<vmem>>, %arg3: memref<1x128xf32, #tpu.memory_space<vmem>>, %arg4: memref<128x10xbf16, #tpu.memory_space<vmem>>, %arg5: memref<1x10xf32, #tpu.memory_space<vmem>>, %arg6: memref<2x10xf32, #tpu.memory_space<vmem>>) attributes {dimension_semantics = [#tpu.dimension_semantics<arbitrary>], iteration_bounds = array<i64: 1>, scalar_prefetch = 0 : i64, scratch_operands = 0 : i64, tpu.core_type = #tpu.core_type<tc>, window_params = [{pipeline_mode = #tpu.pipeline_mode<synchronous>, transform_indices = @transform_0, window_bounds = array<i64: 2, 16, 128>}, {pipeline_mode = #tpu.pipeline_mode<synchronous>, transform_indices = @transform_1, window_bounds = array<i64: 1, 128>}, {pipeline_mode = #tpu.pipeline_mode<synchronous>, transform_indices = @transform_2, window_bounds = array<i64: 1, 128>}, {pipeline_mode = #tpu.pipeline_mode<synchronous>, transform_indices = @transform_3, window_bounds = array<i64: 128, 10>}, {pipeline_mode = #tpu.pipeline_mode<synchronous>, transform_indices = @transform_4, window_bounds = array<i64: 1, 10>}, {pipeline_mode = #tpu.pipeline_mode<synchronous>, transform_indices = @transform_5, window_bounds = array<i64: 2, 10>}]} {
    %c0 = arith.constant 0 : index
    %c0_0 = arith.constant 0 : index
    %0 = vector.load %arg2[%c0, %c0_0] : memref<1x128xf32, #tpu.memory_space<vmem>>, vector<1x128xf32>
    %1 = vector.shape_cast %0 : vector<1x128xf32> to vector<1x1x128xf32>
    %c0_1 = arith.constant 0 : index
    %c0_2 = arith.constant 0 : index
    %2 = vector.load %arg3[%c0_1, %c0_2] : memref<1x128xf32, #tpu.memory_space<vmem>>, vector<1x128xf32>
    %3 = vector.shape_cast %2 : vector<1x128xf32> to vector<1x1x128xf32>
    %c0_3 = arith.constant 0 : index
    %c0_4 = arith.constant 0 : index
    %c0_5 = arith.constant 0 : index
    %4 = vector.load %arg1[%c0_3, %c0_4, %c0_5] : memref<2x16x128xf32, #tpu.memory_space<vmem>>, vector<2x16x128xf32>
    %5 = vector.broadcast %1 : vector<1x1x128xf32> to vector<2x16x128xf32>
    %6 = arith.mulf %4, %5 : vector<2x16x128xf32>
    %7 = vector.broadcast %3 : vector<1x1x128xf32> to vector<2x16x128xf32>
    %8 = arith.addf %6, %7 : vector<2x16x128xf32>
    %cst = arith.constant 0.000000e+00 : f32
    %9 = vector.broadcast %cst : f32 to vector<2x16x128xf32>
    %10 = arith.maximumf %8, %9 : vector<2x16x128xf32>
    %cst_6 = arith.constant dense<0.000000e+00> : vector<2x128xf32>
    %11 = vector.multi_reduction <add>, %10, %cst_6 [1] : vector<2x16x128xf32> to vector<2x128xf32>
    %cst_7 = arith.constant 1.600000e+01 : f32
    %12 = vector.broadcast %cst_7 : f32 to vector<2x128xf32>
    %13 = arith.divf %11, %12 : vector<2x128xf32>
    %14 = arith.truncf %13 : vector<2x128xf32> to vector<2x128xbf16>
    %c0_8 = arith.constant 0 : index
    %c0_9 = arith.constant 0 : index
    %15 = vector.load %arg4[%c0_8, %c0_9] : memref<128x10xbf16, #tpu.memory_space<vmem>>, vector<128x10xbf16>
    %cst_10 = arith.constant dense<0.000000e+00> : vector<2x10xf32>
    %16 = tpu.matmul %14, %15, %cst_10 {dimension_numbers = #tpu.dot_dimension_numbers<[1], [0], [0], [1], [0, 0, 1, 1], [], []>} : vector<2x128xbf16>, vector<128x10xbf16>, vector<2x10xf32> -> vector<2x10xf32>
    %c0_11 = arith.constant 0 : index
    %c0_12 = arith.constant 0 : index
    %17 = vector.load %arg5[%c0_11, %c0_12] : memref<1x10xf32, #tpu.memory_space<vmem>>, vector<1x10xf32>
    %18 = vector.broadcast %17 : vector<1x10xf32> to vector<2x10xf32>
    %19 = arith.addf %16, %18 : vector<2x10xf32>
    %c0_13 = arith.constant 0 : index
    %c0_14 = arith.constant 0 : index
    %20 = vector.load %arg6[%c0_13, %c0_14] : memref<2x10xf32, #tpu.memory_space<vmem>>, vector<2x10xf32>
    tpu.vector_store %arg6[%c0_13, %c0_14], %19 {strides = array<i32>} : memref<2x10xf32, #tpu.memory_space<vmem>>, vector<2x10xf32>,
    return
  }
  func.func @transform_0(%arg0: i32) -> (i32, i32, i32) {
    %c0_i32 = arith.constant 0 : i32
    %c0_i32_0 = arith.constant 0 : i32
    %c0_i32_1 = arith.constant 0 : i32
    %c0_i32_2 = arith.constant 0 : i32
    return %c0_i32, %c0_i32_0, %c0_i32_1 : i32, i32, i32
  }
  func.func @transform_1(%arg0: i32) -> (i32, i32) {
    %c0_i32 = arith.constant 0 : i32
    %c0_i32_0 = arith.constant 0 : i32
    %c0_i32_1 = arith.constant 0 : i32
    return %c0_i32, %c0_i32_0 : i32, i32
  }
  func.func @transform_2(%arg0: i32) -> (i32, i32) {
    %c0_i32 = arith.constant 0 : i32
    %c0_i32_0 = arith.constant 0 : i32
    %c0_i32_1 = arith.constant 0 : i32
    return %c0_i32, %c0_i32_0 : i32, i32
  }
  func.func @transform_3(%arg0: i32) -> (i32, i32) {
    %c0_i32 = arith.constant 0 : i32
    %c0_i32_0 = arith.constant 0 : i32
    %c0_i32_1 = arith.constant 0 : i32
    return %c0_i32, %c0_i32_0 : i32, i32
  }
  func.func @transform_4(%arg0: i32) -> (i32, i32) {
    %c0_i32 = arith.constant 0 : i32
    %c0_i32_0 = arith.constant 0 : i32
    %c0_i32_1 = arith.constant 0 : i32
    return %c0_i32, %c0_i32_0 : i32, i32
  }
  func.func @transform_5(%arg0: i32) -> (i32, i32) {
    %c0_i32 = arith.constant 0 : i32
    %c0_i32_0 = arith.constant 0 : i32
    %c0_i32_1 = arith.constant 0 : i32
    return %c0_i32, %c0_i32_0 : i32, i32
  }
}

</mosaic_0001>

<llo_original>
// kernel: densenet_forward.25
$region0: #{densenet_forward.25}
  #allocation0 [shape = 'u32[]', space=smem, size = 0x4, offset = 0x4, fixed_abs, tag = 'smem constant byte address 0x4 - core index']
  #allocation1 [shape = 'u32[72,128]{1,0:T(1,128)}', space=vmem, size = 0x9000, scoped, tag = 'internal scratch']
  %s0 = inlined_call_operand.vmem [shape: f32[512,128], index: 0, kind: input, shape index: {}]
  %s1 = inlined_call_operand.vmem [shape: f32[1,128], index: 1, kind: output, shape index: {0}]
  %s2 = inlined_call_operand.vmem [shape: f32[1,128], index: 2, kind: output, shape index: {1}]
  %3 = xla_tuple %s1, %s2
  %s4 = sld [smem:[#allocation0]]
  $region49: #{densenet_forward.25} parent=0
    _
  %s6 = ssub.s32 1, %s4
  %s7 = scalar_select 0, %s6, %s4
  loop: start=0, step=1, limit=4
  $region2: #{densenet_forward.25} parent=0 // loop_pre_header
    _
  $region3: #{densenet_forward.25} parent=0 // loop_header
    %s9 = sphi 0, %s13
    %p10 = scmp.ge.s32.totalorder %s9, 4
    %s19 = sphi 0, %s21
    %s22 = sphi 0, %s19
    %s23 = sphi 0, %s22
    %s39 = sphi 0, %s23
    %s43 = sphi 0, %s43
    %s45 = sphi 0, %s43
    %s46 = sphi 0, %s45
    %s60 = sphi 0, %s46
    %s64 = sphi 0, %s64
    %s66 = sphi 0, %s64
    %s67 = sphi 0, %s66
    %s81 = sphi 0, %s67
  $region4: #{densenet_forward.25} parent=0 // loop_header_branch
    %12 = sbr.rel (%p10) target = $region8
  $region5: #{densenet_forward.25} parent=0 // loop_body
    %s14 = ssub.s32 %s9, 1
    %s15 = ssub.s32 %s9, 2
    %s16 = sadd.s32 %s9, 1
    %s17 = ssub.s32 %s9, %s16
    %p18 = scmp.eq.s32.totalorder %s17, 0
    %s20 = sadd.s32 %s19, 1
    %s21 = scalar_select %p18, %s19, %s20
    %p24 = pneg %p18
    %p25 = scmp.eq.s32.totalorder %s9, 1
    %p26 = por %p24, %p25
    %p27 = scmp.ne.s32.totalorder %s19, %s22
    %p28 = scmp.eq.s32.totalorder %s9, 0
    %p29 = por %p27, %p28
    %p30 = scmp.ne.s32.totalorder %s19, %s22
    %p31 = scmp.eq.s32.totalorder %s14, 1
    %p32 = por %p30, %p31
    %p33 = scmp.ne.s32.totalorder %s22, %s23
    %p34 = scmp.eq.s32.totalorder %s14, 0
    %p35 = por %p33, %p34
    %p36 = scmp.ne.s32.totalorder %s22, %s23
    %p37 = scmp.eq.s32.totalorder %s15, 1
    %p38 = por %p36, %p37
    %p40 = scmp.ne.s32.totalorder %s23, %s39
    %p41 = scmp.eq.s32.totalorder %s15, 0
    %p42 = por %p40, %p41
    %s44 = sadd.s32 %s43, 1
    %p47 = scmp.eq.s32.totalorder %s9, 1
    %p48 = scmp.ne.s32.totalorder %s43, %s45
    %p49 = scmp.eq.s32.totalorder %s9, 0
    %p50 = por %p48, %p49
    %p51 = scmp.ne.s32.totalorder %s43, %s45
    %p52 = scmp.eq.s32.totalorder %s14, 1
    %p53 = por %p51, %p52
    %p54 = scmp.ne.s32.totalorder %s45, %s46
    %p55 = scmp.eq.s32.totalorder %s14, 0
    %p56 = por %p54, %p55
    %p57 = scmp.ne.s32.totalorder %s45, %s46
    %p58 = scmp.eq.s32.totalorder %s15, 1
    %p59 = por %p57, %p58
    %p61 = scmp.ne.s32.totalorder %s46, %s60
    %p62 = scmp.eq.s32.totalorder %s15, 0
    %p63 = por %p61, %p62
    %s65 = sadd.s32 %s64, 1
    %p68 = scmp.eq.s32.totalorder %s9, 1
    %p69 = scmp.ne.s32.totalorder %s64, %s66
    %p70 = scmp.eq.s32.totalorder %s9, 0
    %p71 = por %p69, %p70
    %p72 = scmp.ne.s32.totalorder %s64, %s66
    %p73 = scmp.eq.s32.totalorder %s14, 1
    %p74 = por %p72, %p73
    %p75 = scmp.ne.s32.totalorder %s66, %s67
    %p76 = scmp.eq.s32.totalorder %s14, 0
    %p77 = por %p75, %p76
    %p78 = scmp.ne.s32.totalorder %s66, %s67
    %p79 = scmp.eq.s32.totalorder %s15, 1
    %p80 = por %p78, %p79
    %p82 = scmp.ne.s32.totalorder %s67, %s81
    %p83 = scmp.eq.s32.totalorder %s15, 0
    %p84 = por %p82, %p83
    %p85 = scmp.le.s32.totalorder 1, %s9
    %p86 = scmp.lt.s32.totalorder %s9, 3
    %p87 = pnand %p85, %p86
    %p88 = pneg %p87
    // Predicated region
    $region9: #{densenet_forward.25} parent=5 // pred_check
      _
    $region10: #{densenet_forward.25} parent=5 // pred_check_branch
      %90 = sbr.rel (%p87) target = $region12
    $region11: #{densenet_forward.25} parent=5 // pred_region
      %s91 = ssub.s32 %s9, 1
    $region12: #{densenet_forward.25} parent=5 // pred_fallthru
      _
    %p92 = scmp.lt.s32.totalorder %s9, 2
    // Predicated region
    $region13: #{densenet_forward.25} parent=5 // pred_check
      %p93 = pneg %p92
    $region14: #{densenet_forward.25} parent=5 // pred_check_branch
      %95 = sbr.rel (%p93) target = $region16
    $region15: #{densenet_forward.25} parent=5 // pred_region
      // Predicated region
      $region17: #{densenet_forward.25} parent=15 // pred_check
        %p96 = pneg %p29
      $region18: #{densenet_forward.25} parent=15 // pred_check_branch
        %98 = sbr.rel (%p96) target = $region20
      $region19: #{densenet_forward.25} parent=15 // pred_region
        %s99 = smul.u32 32, %s9
        %p100 = scmp.lt.s32.totalorder %s99, 63
        %s101 = scalar_select %p100, %s99, 63
        %s102 = smul.addr %s101, 8
        %s103 = scalar_lea.vmem %s0, %s102
        %s104 = smul.u32 32, %s9
      $region20: #{densenet_forward.25} parent=15 // pred_fallthru
        _
    $region16: #{densenet_forward.25} parent=5 // pred_fallthru
      _
    %p105 = scmp.le.s32.totalorder 1, %s9
    %p106 = scmp.lt.s32.totalorder %s9, 3
    %p107 = pnand %p105, %p106
    %p108 = pneg %p107
    // Predicated region
    $region21: #{densenet_forward.25} parent=5 // pred_check
      _
    $region22: #{densenet_forward.25} parent=5 // pred_check_branch
      %110 = sbr.rel (%p107) target = $region24
    $region23: #{densenet_forward.25} parent=5 // pred_region
      %s111 = ssub.s32 %s9, 1
      %s112 = smul.u32 32, %s14
      %p113 = scmp.lt.s32.totalorder %s112, 63
      %s114 = scalar_select %p113, %s112, 63
      %s115 = smul.addr %s114, 8
      %s116 = scalar_lea.vmem %s0, %s115
      %p117 = pneg %p35
      %p118 = pneg %p32
      %p119 = pneg %p56
      %p120 = pneg %p53
      %p121 = pneg %p77
      %p122 = pneg %p74
      %s123 = smul.u32 32, %s14
      %p124 = scmp.lt.s32.totalorder %s123, 63
      %s125 = scalar_select %p124, %s123, 63
      %s126 = smul.addr %s125, 8
      %s127 = scalar_lea.vmem %s0, %s126
      %s128 = smul.u32 32, %s14
      %p129 = scmp.eq.s32.totalorder %s14, 0
      // Predicated region
      $region25: #{densenet_forward.25} parent=23 // pred_check
        %p130 = pneg %p129
      $region26: #{densenet_forward.25} parent=23 // pred_check_branch
        %132 = sbr.rel (%p130) target = $region28
      $region27: #{densenet_forward.25} parent=23 // pred_region
        %133 = vst [vmem:[%s1] sm:$0x1] 0.0
        %134 = vst [vmem:[%s2] sm:$0x1] 0.0
      $region28: #{densenet_forward.25} parent=23 // pred_fallthru
        _
      %v135 = vld [vmem:[%s127] sm:$0xff]
      %v136 = vld [vmem:[%s127 + $0x8] sm:$0xff]
      %v137 = vld [vmem:[%s127 + $0x10] sm:$0xff]
      %v138 = vld [vmem:[%s127 + $0x18] sm:$0xff]
      %v139 = vld [vmem:[%s127 + $0x20] sm:$0xff]
      %v140 = vld [vmem:[%s127 + $0x28] sm:$0xff]
      %v141 = vld [vmem:[%s127 + $0x30] sm:$0xff]
      %v142 = vld [vmem:[%s127 + $0x38] sm:$0xff]
      %v143 = vld [vmem:[%s127 + $0x40] sm:$0xff]
      %v144 = vld [vmem:[%s127 + $0x48] sm:$0xff]
      %v145 = vld [vmem:[%s127 + $0x50] sm:$0xff]
      %v146 = vld [vmem:[%s127 + $0x58] sm:$0xff]
      %v147 = vld [vmem:[%s127 + $0x60] sm:$0xff]
      %v148 = vld [vmem:[%s127 + $0x68] sm:$0xff]
      %v149 = vld [vmem:[%s127 + $0x70] sm:$0xff]
      %v150 = vld [vmem:[%s127 + $0x78] sm:$0xff]
      %v151 = vld [vmem:[%s127 + $0x80] sm:$0xff]
      %v152 = vld [vmem:[%s127 + $0x88] sm:$0xff]
      %v153 = vld [vmem:[%s127 + $0x90] sm:$0xff]
      %v154 = vld [vmem:[%s127 + $0x98] sm:$0xff]
      %v155 = vld [vmem:[%s127 + $0xa0] sm:$0xff]
      %v156 = vld [vmem:[%s127 + $0xa8] sm:$0xff]
      %v157 = vld [vmem:[%s127 + $0xb0] sm:$0xff]
      %v158 = vld [vmem:[%s127 + $0xb8] sm:$0xff]
      %v159 = vld [vmem:[%s127 + $0xc0] sm:$0xff]
      %v160 = vld [vmem:[%s127 + $0xc8] sm:$0xff]
      %v161 = vld [vmem:[%s127 + $0xd0] sm:$0xff]
      %v162 = vld [vmem:[%s127 + $0xd8] sm:$0xff]
      %v163 = vld [vmem:[%s127 + $0xe0] sm:$0xff]
      %v164 = vld [vmem:[%s127 + $0xe8] sm:$0xff]
      %v165 = vld [vmem:[%s127 + $0xf0] sm:$0xff]
      %v166 = vld [vmem:[%s127 + $0xf8] sm:$0xff]
      %v167 = vlaneseq
      %v168 = vshrl.u32 %v167, 7
      %v169 = vadd.s32 %v168, 8
      %v170 = vadd.s32 %v168, 16
      %v171 = vadd.s32 %v168, 24
      %v172 = vadd.s32 %v168, 32
      %v173 = vadd.s32 %v168, 40
      %v174 = vadd.s32 %v168, 48
      %v175 = vadd.s32 %v168, 56
      %v176 = vadd.s32 %v168, 64
      %v177 = vadd.s32 %v168, 72
      %v178 = vadd.s32 %v168, 80
      %v179 = vadd.s32 %v168, 88
      %v180 = vadd.s32 %v168, 96
      %v181 = vadd.s32 %v168, 104
      %v182 = vadd.s32 %v168, 112
      %v183 = vadd.s32 %v168, 120
      %v184 = vadd.s32 %v168, 128
      %v185 = vadd.s32 %v168, 136
      %v186 = vadd.s32 %v168, 144
      %v187 = vadd.s32 %v168, 152
      %v188 = vadd.s32 %v168, 160
      %v189 = vadd.s32 %v168, 168
      %v190 = vadd.s32 %v168, 176
      %v191 = vadd.s32 %v168, 184
      %v192 = vadd.s32 %v168, 192
      %v193 = vadd.s32 %v168, 200
      %v194 = vadd.s32 %v168, 208
      %v195 = vadd.s32 %v168, 216
      %v196 = vadd.s32 %v168, 224
      %v197 = vadd.s32 %v168, 232
      %v198 = vadd.s32 %v168, 240
      %v199 = vadd.s32 %v168, 248
      %s200 = smul.u32 %s14, 256
      %v201 = vstv %s200
      %v202 = vadd.s32 %v168, %v201
      %v203 = vadd.s32 %v169, %v201
      %v204 = vadd.s32 %v170, %v201
      %v205 = vadd.s32 %v171, %v201
      %v206 = vadd.s32 %v172, %v201
      %v207 = vadd.s32 %v173, %v201
      %v208 = vadd.s32 %v174, %v201
      %v209 = vadd.s32 %v175, %v201
      %v210 = vadd.s32 %v176, %v201
      %v211 = vadd.s32 %v177, %v201
      %v212 = vadd.s32 %v178, %v201
      %v213 = vadd.s32 %v179, %v201
      %v214 = vadd.s32 %v180, %v201
      %v215 = vadd.s32 %v181, %v201
      %v216 = vadd.s32 %v182, %v201
      %v217 = vadd.s32 %v183, %v201
      %v218 = vadd.s32 %v184, %v201
      %v219 = vadd.s32 %v185, %v201
      %v220 = vadd.s32 %v186, %v201
      %v221 = vadd.s32 %v187, %v201
      %v222 = vadd.s32 %v188, %v201
      %v223 = vadd.s32 %v189, %v201
      %v224 = vadd.s32 %v190, %v201
      %v225 = vadd.s32 %v191, %v201
      %v226 = vadd.s32 %v192, %v201
      %v227 = vadd.s32 %v193, %v201
      %v228 = vadd.s32 %v194, %v201
      %v229 = vadd.s32 %v195, %v201
      %v230 = vadd.s32 %v196, %v201
      %v231 = vadd.s32 %v197, %v201
      %v232 = vadd.s32 %v198, %v201
      %v233 = vadd.s32 %v199, %v201
      %vm234 = vcmp.lt.s32.totalorder %v202, 512
      %vm235 = vcmp.lt.s32.totalorder %v203, 512
      %vm236 = vcmp.lt.s32.totalorder %v204, 512
      %vm237 = vcmp.lt.s32.totalorder %v205, 512
      %vm238 = vcmp.lt.s32.totalorder %v206, 512
      %vm239 = vcmp.lt.s32.totalorder %v207, 512
      %vm240 = vcmp.lt.s32.totalorder %v208, 512
      %vm241 = vcmp.lt.s32.totalorder %v209, 512
      %vm242 = vcmp.lt.s32.totalorder %v210, 512
      %vm243 = vcmp.lt.s32.totalorder %v211, 512
      %vm244 = vcmp.lt.s32.totalorder %v212, 512
      %vm245 = vcmp.lt.s32.totalorder %v213, 512
      %vm246 = vcmp.lt.s32.totalorder %v214, 512
      %vm247 = vcmp.lt.s32.totalorder %v215, 512
      %vm248 = vcmp.lt.s32.totalorder %v216, 512
      %vm249 = vcmp.lt.s32.totalorder %v217, 512
      %vm250 = vcmp.lt.s32.totalorder %v218, 512
      %vm251 = vcmp.lt.s32.totalorder %v219, 512
      %vm252 = vcmp.lt.s32.totalorder %v220, 512
      %vm253 = vcmp.lt.s32.totalorder %v221, 512
      %vm254 = vcmp.lt.s32.totalorder %v222, 512
      %vm255 = vcmp.lt.s32.totalorder %v223, 512
      %vm256 = vcmp.lt.s32.totalorder %v224, 512
      %vm257 = vcmp.lt.s32.totalorder %v225, 512
      %vm258 = vcmp.lt.s32.totalorder %v226, 512
      %vm259 = vcmp.lt.s32.totalorder %v227, 512
      %vm260 = vcmp.lt.s32.totalorder %v228, 512
      %vm261 = vcmp.lt.s32.totalorder %v229, 512
      %vm262 = vcmp.lt.s32.totalorder %v230, 512
      %vm263 = vcmp.lt.s32.totalorder %v231, 512
      %vm264 = vcmp.lt.s32.totalorder %v232, 512
      %vm265 = vcmp.lt.s32.totalorder %v233, 512
      %v266 = vsel %vm234, %v135, 0.0
      %v267 = vsel %vm235, %v136, 0.0
      %v268 = vsel %vm236, %v137, 0.0
      %v269 = vsel %vm237, %v138, 0.0
      %v270 = vsel %vm238, %v139, 0.0
      %v271 = vsel %vm239, %v140, 0.0
      %v272 = vsel %vm240, %v141, 0.0
      %v273 = vsel %vm241, %v142, 0.0
      %v274 = vsel %vm242, %v143, 0.0
      %v275 = vsel %vm243, %v144, 0.0
      %v276 = vsel %vm244, %v145, 0.0
      %v277 = vsel %vm245, %v146, 0.0
      %v278 = vsel %vm246, %v147, 0.0
      %v279 = vsel %vm247, %v148, 0.0
      %v280 = vsel %vm248, %v149, 0.0
      %v281 = vsel %vm249, %v150, 0.0
      %v282 = vsel %vm250, %v151, 0.0
      %v283 = vsel %vm251, %v152, 0.0
      %v284 = vsel %vm252, %v153, 0.0
      %v285 = vsel %vm253, %v154, 0.0
      %v286 = vsel %vm254, %v155, 0.0
      %v287 = vsel %vm255, %v156, 0.0
      %v288 = vsel %vm256, %v157, 0.0
      %v289 = vsel %vm257, %v158, 0.0
      %v290 = vsel %vm258, %v159, 0.0
      %v291 = vsel %vm259, %v160, 0.0
      %v292 = vsel %vm260, %v161, 0.0
      %v293 = vsel %vm261, %v162, 0.0
      %v294 = vsel %vm262, %v163, 0.0
      %v295 = vsel %vm263, %v164, 0.0
      %v296 = vsel %vm264, %v165, 0.0
      %v297 = vsel %vm265, %v166, 0.0
      %v298 = vld [vmem:[%s1] sm:$0x1]
      %v299 = vadd.f32 %v266, %v267
      %v300 = vadd.f32 %v299, %v268
      %v301 = vadd.f32 %v300, %v269
      %v302 = vadd.f32 %v301, %v270
      %v303 = vadd.f32 %v302, %v271
      %v304 = vadd.f32 %v303, %v272
      %v305 = vadd.f32 %v304, %v273
      %v306 = vadd.f32 %v305, %v274
      %v307 = vadd.f32 %v306, %v275
      %v308 = vadd.f32 %v307, %v276
      %v309 = vadd.f32 %v308, %v277
      %v310 = vadd.f32 %v309, %v278
      %v311 = vadd.f32 %v310, %v279
      %v312 = vadd.f32 %v311, %v280
      %v313 = vadd.f32 %v312, %v281
      %v314 = vadd.f32 %v313, %v282
      %v315 = vadd.f32 %v314, %v283
      %v316 = vadd.f32 %v315, %v284
      %v317 = vadd.f32 %v316, %v285
      %v318 = vadd.f32 %v317, %v286
      %v319 = vadd.f32 %v318, %v287
      %v320 = vadd.f32 %v319, %v288
      %v321 = vadd.f32 %v320, %v289
      %v322 = vadd.f32 %v321, %v290
      %v323 = vadd.f32 %v322, %v291
      %v324 = vadd.f32 %v323, %v292
      %v325 = vadd.f32 %v324, %v293
      %v326 = vadd.f32 %v325, %v294
      %v327 = vadd.f32 %v326, %v295
      %v328 = vadd.f32 %v327, %v296
      %v329 = vadd.f32 %v328, %v297
      %v330 = vrot.slane %v329, 4
      %v331 = vadd.f32 %v329, %v330
      %v332 = vrot.slane %v331, 2
      %v333 = vadd.f32 %v331, %v332
      %v334 = vrot.slane %v333, 1
      %v335 = vadd.f32 %v333, %v334
      %v336 = vadd.f32 %v298, %v335
      %337 = vst [vmem:[%s1] sm:$0x1] %v336
      %v338 = vld [vmem:[%s2] sm:$0x1]
      %v339 = vmul.f32 %v266, %v266
      %v340 = vmul.f32 %v267, %v267
      %v341 = vmul.f32 %v268, %v268
      %v342 = vmul.f32 %v269, %v269
      %v343 = vmul.f32 %v270, %v270
      %v344 = vmul.f32 %v271, %v271
      %v345 = vmul.f32 %v272, %v272
      %v346 = vmul.f32 %v273, %v273
      %v347 = vmul.f32 %v274, %v274
      %v348 = vmul.f32 %v275, %v275
      %v349 = vmul.f32 %v276, %v276
      %v350 = vmul.f32 %v277, %v277
      %v351 = vmul.f32 %v278, %v278
      %v352 = vmul.f32 %v279, %v279
      %v353 = vmul.f32 %v280, %v280
      %v354 = vmul.f32 %v281, %v281
      %v355 = vmul.f32 %v282, %v282
      %v356 = vmul.f32 %v283, %v283
      %v357 = vmul.f32 %v284, %v284
      %v358 = vmul.f32 %v285, %v285
      %v359 = vmul.f32 %v286, %v286
      %v360 = vmul.f32 %v287, %v287
      %v361 = vmul.f32 %v288, %v288
      %v362 = vmul.f32 %v289, %v289
      %v363 = vmul.f32 %v290, %v290
      %v364 = vmul.f32 %v291, %v291
      %v365 = vmul.f32 %v292, %v292
      %v366 = vmul.f32 %v293, %v293
      %v367 = vmul.f32 %v294, %v294
      %v368 = vmul.f32 %v295, %v295
      %v369 = vmul.f32 %v296, %v296
      %v370 = vmul.f32 %v297, %v297
      %v371 = vadd.f32 %v339, %v340
      %v372 = vadd.f32 %v371, %v341
      %v373 = vadd.f32 %v372, %v342
      %v374 = vadd.f32 %v373, %v343
      %v375 = vadd.f32 %v374, %v344
      %v376 = vadd.f32 %v375, %v345
      %v377 = vadd.f32 %v376, %v346
      %v378 = vadd.f32 %v377, %v347
      %v379 = vadd.f32 %v378, %v348
      %v380 = vadd.f32 %v379, %v349
      %v381 = vadd.f32 %v380, %v350
      %v382 = vadd.f32 %v381, %v351
      %v383 = vadd.f32 %v382, %v352
      %v384 = vadd.f32 %v383, %v353
      %v385 = vadd.f32 %v384, %v354
      %v386 = vadd.f32 %v385, %v355
      %v387 = vadd.f32 %v386, %v356
      %v388 = vadd.f32 %v387, %v357
      %v389 = vadd.f32 %v388, %v358
      %v390 = vadd.f32 %v389, %v359
      %v391 = vadd.f32 %v390, %v360
      %v392 = vadd.f32 %v391, %v361
      %v393 = vadd.f32 %v392, %v362
      %v394 = vadd.f32 %v393, %v363
      %v395 = vadd.f32 %v394, %v364
      %v396 = vadd.f32 %v395, %v365
      %v397 = vadd.f32 %v396, %v366
      %v398 = vadd.f32 %v397, %v367
      %v399 = vadd.f32 %v398, %v368
      %v400 = vadd.f32 %v399, %v369
      %v401 = vadd.f32 %v400, %v370
      %v402 = vrot.slane %v401, 4
      %v403 = vadd.f32 %v401, %v402
      %v404 = vrot.slane %v403, 2
      %v405 = vadd.f32 %v403, %v404
      %v406 = vrot.slane %v405, 1
      %v407 = vadd.f32 %v405, %v406
      %v408 = vadd.f32 %v338, %v407
      %409 = vst [vmem:[%s2] sm:$0x1] %v408
      // Predicated region
      $region29: #{densenet_forward.25} parent=23 // pred_check
        %p410 = pneg %p53
      $region30: #{densenet_forward.25} parent=23 // pred_check_branch
        %412 = sbr.rel (%p410) target = $region32
      $region31: #{densenet_forward.25} parent=23 // pred_region
        _
      $region32: #{densenet_forward.25} parent=23 // pred_fallthru
        _
      // Predicated region
      $region33: #{densenet_forward.25} parent=23 // pred_check
        %p413 = pneg %p74
      $region34: #{densenet_forward.25} parent=23 // pred_check_branch
        %415 = sbr.rel (%p413) target = $region36
      $region35: #{densenet_forward.25} parent=23 // pred_region
        _
      $region36: #{densenet_forward.25} parent=23 // pred_fallthru
        _
      // Predicated region
      $region37: #{densenet_forward.25} parent=23 // pred_check
        %p416 = pneg %p53
      $region38: #{densenet_forward.25} parent=23 // pred_check_branch
        %418 = sbr.rel (%p416) target = $region40
      $region39: #{densenet_forward.25} parent=23 // pred_region
        _
      $region40: #{densenet_forward.25} parent=23 // pred_fallthru
        _
      // Predicated region
      $region41: #{densenet_forward.25} parent=23 // pred_check
        %p419 = pneg %p74
      $region42: #{densenet_forward.25} parent=23 // pred_check_branch
        %421 = sbr.rel (%p419) target = $region44
      $region43: #{densenet_forward.25} parent=23 // pred_region
        _
      $region44: #{densenet_forward.25} parent=23 // pred_fallthru
        _
    $region24: #{densenet_forward.25} parent=5 // pred_fallthru
      _
    %p422 = scmp.le.s32.totalorder 2, %s9
    // Predicated region
    $region45: #{densenet_forward.25} parent=5 // pred_check
      %p423 = pneg %p422
    $region46: #{densenet_forward.25} parent=5 // pred_check_branch
      %425 = sbr.rel (%p423) target = $region48
    $region47: #{densenet_forward.25} parent=5 // pred_region
      %s426 = ssub.s32 %s9, 2
    $region48: #{densenet_forward.25} parent=5 // pred_fallthru
      _
  $region6: #{densenet_forward.25} parent=0 // loop_footer
    %s13 = sadd.s32 1, %s9
  $region7: #{densenet_forward.25} parent=0 // loop_footer_branch
    %8 = sbr.rel target = $region3
  $region8: #{densenet_forward.25} parent=0 // loop_exit
    _

// kernel: densenet_forward.24
$region0: #{densenet_forward.24}
  #allocation0 [shape = 'u32[]', space=smem, size = 0x4, offset = 0x4, fixed_abs, tag = 'smem constant byte address 0x4 - core index']
  #allocation1 [shape = 'u32[72,128]{1,0:T(1,128)}', space=vmem, size = 0x9000, scoped, tag = 'internal scratch']
  %s0 = inlined_call_operand.vmem [shape: f32[512,147], index: 0, kind: input, shape index: {}]
  %s1 = inlined_call_operand.vmem [shape: bf16[147,128], index: 1, kind: input, shape index: {}]
  %s2 = inlined_call_operand.vmem [shape: f32[512,128], index: 2, kind: output, shape index: {}]
  %s3 = sld [smem:[#allocation0]]
  $region41: #{densenet_forward.24} parent=0
    _
  %s5 = ssub.s32 1, %s3
  %s6 = scalar_select 0, %s5, %s3
  loop: start=0, step=1, limit=4
  $region2: #{densenet_forward.24} parent=0 // loop_pre_header
    _
  $region3: #{densenet_forward.24} parent=0 // loop_header
    %s8 = sphi 0, %s12
    %p9 = scmp.ge.s32.totalorder %s8, 4
    %s18 = sphi 0, %s20
    %s21 = sphi 0, %s18
    %s22 = sphi 0, %s21
    %s38 = sphi 0, %s22
    %s42 = sphi 0, %s42
    %s44 = sphi 0, %s42
    %s45 = sphi 0, %s44
    %s59 = sphi 0, %s45
    %s65 = sphi 0, %s67
    %s68 = sphi 0, %s65
    %s69 = sphi 0, %s68
    %s85 = sphi 0, %s69
  $region4: #{densenet_forward.24} parent=0 // loop_header_branch
    %11 = sbr.rel (%p9) target = $region8
  $region5: #{densenet_forward.24} parent=0 // loop_body
    %s13 = ssub.s32 %s8, 1
    %s14 = ssub.s32 %s8, 2
    %s15 = sadd.s32 %s8, 1
    %s16 = ssub.s32 %s8, %s15
    %p17 = scmp.eq.s32.totalorder %s16, 0
    %s19 = sadd.s32 %s18, 1
    %s20 = scalar_select %p17, %s18, %s19
    %p23 = pneg %p17
    %p24 = scmp.eq.s32.totalorder %s8, 1
    %p25 = por %p23, %p24
    %p26 = scmp.ne.s32.totalorder %s18, %s21
    %p27 = scmp.eq.s32.totalorder %s8, 0
    %p28 = por %p26, %p27
    %p29 = scmp.ne.s32.totalorder %s18, %s21
    %p30 = scmp.eq.s32.totalorder %s13, 1
    %p31 = por %p29, %p30
    %p32 = scmp.ne.s32.totalorder %s21, %s22
    %p33 = scmp.eq.s32.totalorder %s13, 0
    %p34 = por %p32, %p33
    %p35 = scmp.ne.s32.totalorder %s21, %s22
    %p36 = scmp.eq.s32.totalorder %s14, 1
    %p37 = por %p35, %p36
    %p39 = scmp.ne.s32.totalorder %s22, %s38
    %p40 = scmp.eq.s32.totalorder %s14, 0
    %p41 = por %p39, %p40
    %s43 = sadd.s32 %s42, 1
    %p46 = scmp.eq.s32.totalorder %s8, 1
    %p47 = scmp.ne.s32.totalorder %s42, %s44
    %p48 = scmp.eq.s32.totalorder %s8, 0
    %p49 = por %p47, %p48
    %p50 = scmp.ne.s32.totalorder %s42, %s44
    %p51 = scmp.eq.s32.totalorder %s13, 1
    %p52 = por %p50, %p51
    %p53 = scmp.ne.s32.totalorder %s44, %s45
    %p54 = scmp.eq.s32.totalorder %s13, 0
    %p55 = por %p53, %p54
    %p56 = scmp.ne.s32.totalorder %s44, %s45
    %p57 = scmp.eq.s32.totalorder %s14, 1
    %p58 = por %p56, %p57
    %p60 = scmp.ne.s32.totalorder %s45, %s59
    %p61 = scmp.eq.s32.totalorder %s14, 0
    %p62 = por %p60, %p61
    %s63 = ssub.s32 %s8, %s15
    %p64 = scmp.eq.s32.totalorder %s63, 0
    %s66 = sadd.s32 %s65, 1
    %s67 = scalar_select %p64, %s65, %s66
    %p70 = pneg %p64
    %p71 = scmp.eq.s32.totalorder %s8, 1
    %p72 = por %p70, %p71
    %p73 = scmp.ne.s32.totalorder %s65, %s68
    %p74 = scmp.eq.s32.totalorder %s8, 0
    %p75 = por %p73, %p74
    %p76 = scmp.ne.s32.totalorder %s65, %s68
    %p77 = scmp.eq.s32.totalorder %s13, 1
    %p78 = por %p76, %p77
    %p79 = scmp.ne.s32.totalorder %s68, %s69
    %p80 = scmp.eq.s32.totalorder %s13, 0
    %p81 = por %p79, %p80
    %p82 = scmp.ne.s32.totalorder %s68, %s69
    %p83 = scmp.eq.s32.totalorder %s14, 1
    %p84 = por %p82, %p83
    %p86 = scmp.ne.s32.totalorder %s69, %s85
    %p87 = scmp.eq.s32.totalorder %s14, 0
    %p88 = por %p86, %p87
    %p89 = scmp.le.s32.totalorder 1, %s8
    %p90 = scmp.lt.s32.totalorder %s8, 3
    %p91 = pnand %p89, %p90
    %p92 = pneg %p91
    // Predicated region
    $region9: #{densenet_forward.24} parent=5 // pred_check
      _
    $region10: #{densenet_forward.24} parent=5 // pred_check_branch
      %94 = sbr.rel (%p91) target = $region12
    $region11: #{densenet_forward.24} parent=5 // pred_region
      %s95 = ssub.s32 %s8, 1
      // Predicated region
      $region13: #{densenet_forward.24} parent=11 // pred_check
        %p96 = pneg %p55
      $region14: #{densenet_forward.24} parent=11 // pred_check_branch
        %98 = sbr.rel (%p96) target = $region16
      $region15: #{densenet_forward.24} parent=11 // pred_region
        _
      $region16: #{densenet_forward.24} parent=11 // pred_fallthru
        _
    $region12: #{densenet_forward.24} parent=5 // pred_fallthru
      _
    %p99 = scmp.lt.s32.totalorder %s8, 2
    // Predicated region
    $region17: #{densenet_forward.24} parent=5 // pred_check
      %p100 = pneg %p99
    $region18: #{densenet_forward.24} parent=5 // pred_check_branch
      %102 = sbr.rel (%p100) target = $region20
    $region19: #{densenet_forward.24} parent=5 // pred_region
      // Predicated region
      $region21: #{densenet_forward.24} parent=19 // pred_check
        %p103 = pneg %p28
      $region22: #{densenet_forward.24} parent=19 // pred_check_branch
        %105 = sbr.rel (%p103) target = $region24
      $region23: #{densenet_forward.24} parent=19 // pred_region
        %s106 = smul.u32 32, %s8
        %p107 = scmp.lt.s32.totalorder %s106, 63
        %s108 = scalar_select %p107, %s106, 63
        %s109 = smul.addr %s108, 2
        %s110 = smul.addr %s109, 8
        %s111 = scalar_lea.vmem %s0, %s110
        %s112 = smul.u32 32, %s8
      $region24: #{densenet_forward.24} parent=19 // pred_fallthru
        _
    $region20: #{densenet_forward.24} parent=5 // pred_fallthru
      _
    %p113 = scmp.le.s32.totalorder 1, %s8
    %p114 = scmp.lt.s32.totalorder %s8, 3
    %p115 = pnand %p113, %p114
    %p116 = pneg %p115
    // Predicated region
    $region25: #{densenet_forward.24} parent=5 // pred_check
      _
    $region26: #{densenet_forward.24} parent=5 // pred_check_branch
      %118 = sbr.rel (%p115) target = $region28
    $region27: #{densenet_forward.24} parent=5 // pred_region
      %s119 = ssub.s32 %s8, 1
      %s120 = smul.u32 32, %s13
      %p121 = scmp.lt.s32.totalorder %s120, 63
      %s122 = scalar_select %p121, %s120, 63
      %s123 = smul.addr %s122, 2
      %s124 = smul.addr %s123, 8
      %s125 = scalar_lea.vmem %s0, %s124
      %p126 = pneg %p34
      %p127 = pneg %p31
      %p128 = pneg %p55
      %p129 = pneg %p52
      %p130 = pneg %p81
      %p131 = pneg %p78
      %s132 = smul.u32 32, %s13
      %p133 = scmp.lt.s32.totalorder %s132, 63
      %s134 = scalar_select %p133, %s132, 63
      %s135 = smul.addr %s134, 8
      %s136 = scalar_lea.vmem %s2, %s135
      %s137 = smul.u32 32, %s13
      %p138 = scmp.lt.s32.totalorder %s137, 63
      %s139 = scalar_select %p138, %s137, 63
      %s140 = smul.addr %s139, 2
      %s141 = smul.addr %s140, 8
      %s142 = scalar_lea.vmem %s0, %s141
      %s143 = smul.u32 32, %s13
      %s144 = smul.u32 32, %s13
      %p145 = scmp.lt.s32.totalorder %s144, 63
      %s146 = scalar_select %p145, %s144, 63
      %s147 = smul.addr %s146, 8
      %s148 = scalar_lea.vmem %s2, %s147
      %s149 = smul.u32 32, %s13
      %v151 = vld [vmem:[%s142] sm:$0xff]
      %v152 = vld [vmem:[%s142 + $0x8] sm:$0xff]
      %v153 = vld [vmem:[%s142 + $0x10] sm:$0xff]
      %v154 = vld [vmem:[%s142 + $0x18] sm:$0xff]
      %v155 = vld [vmem:[%s142 + $0x20] sm:$0xff]
      %v156 = vld [vmem:[%s142 + $0x28] sm:$0xff]
      %v157 = vld [vmem:[%s142 + $0x30] sm:$0xff]
      %v158 = vld [vmem:[%s142 + $0x38] sm:$0xff]
      %v159 = vld [vmem:[%s142 + $0x40] sm:$0xff]
      %v160 = vld [vmem:[%s142 + $0x48] sm:$0xff]
      %v161 = vld [vmem:[%s142 + $0x50] sm:$0xff]
      %v162 = vld [vmem:[%s142 + $0x58] sm:$0xff]
      %v163 = vld [vmem:[%s142 + $0x60] sm:$0xff]
      %v164 = vld [vmem:[%s142 + $0x68] sm:$0xff]
      %v165 = vld [vmem:[%s142 + $0x70] sm:$0xff]
      %v166 = vld [vmem:[%s142 + $0x78] sm:$0xff]
      %v167 = vld [vmem:[%s142 + $0x80] sm:$0xff]
      %v168 = vld [vmem:[%s142 + $0x88] sm:$0xff]
      %v169 = vld [vmem:[%s142 + $0x90] sm:$0xff]
      %v170 = vld [vmem:[%s142 + $0x98] sm:$0xff]
      %v171 = vld [vmem:[%s142 + $0xa0] sm:$0xff]
      %v172 = vld [vmem:[%s142 + $0xa8] sm:$0xff]
      %v173 = vld [vmem:[%s142 + $0xb0] sm:$0xff]
      %v174 = vld [vmem:[%s142 + $0xb8] sm:$0xff]
      %v175 = vld [vmem:[%s142 + $0xc0] sm:$0xff]
      %v176 = vld [vmem:[%s142 + $0xc8] sm:$0xff]
      %v177 = vld [vmem:[%s142 + $0xd0] sm:$0xff]
      %v178 = vld [vmem:[%s142 + $0xd8] sm:$0xff]
      %v179 = vld [vmem:[%s142 + $0xe0] sm:$0xff]
      %v180 = vld [vmem:[%s142 + $0xe8] sm:$0xff]
      %v181 = vld [vmem:[%s142 + $0xf0] sm:$0xff]
      %v182 = vld [vmem:[%s142 + $0xf8] sm:$0xff]
      %v183 = vld [vmem:[%s142 + $0x100] sm:$0xff]
      %v184 = vld [vmem:[%s142 + $0x108] sm:$0xff]
      %v185 = vld [vmem:[%s142 + $0x110] sm:$0xff]
      %v186 = vld [vmem:[%s142 + $0x118] sm:$0xff]
      %v187 = vld [vmem:[%s142 + $0x120] sm:$0xff]
      %v188 = vld [vmem:[%s142 + $0x128] sm:$0xff]
      %v189 = vld [vmem:[%s142 + $0x130] sm:$0xff]
      %v190 = vld [vmem:[%s142 + $0x138] sm:$0xff]
      %v191 = vld [vmem:[%s142 + $0x140] sm:$0xff]
      %v192 = vld [vmem:[%s142 + $0x148] sm:$0xff]
      %v193 = vld [vmem:[%s142 + $0x150] sm:$0xff]
      %v194 = vld [vmem:[%s142 + $0x158] sm:$0xff]
      %v195 = vld [vmem:[%s142 + $0x160] sm:$0xff]
      %v196 = vld [vmem:[%s142 + $0x168] sm:$0xff]
      %v197 = vld [vmem:[%s142 + $0x170] sm:$0xff]
      %v198 = vld [vmem:[%s142 + $0x178] sm:$0xff]
      %v199 = vld [vmem:[%s142 + $0x180] sm:$0xff]
      %v200 = vld [vmem:[%s142 + $0x188] sm:$0xff]
      %v201 = vld [vmem:[%s142 + $0x190] sm:$0xff]
      %v202 = vld [vmem:[%s142 + $0x198] sm:$0xff]
      %v203 = vld [vmem:[%s142 + $0x1a0] sm:$0xff]
      %v204 = vld [vmem:[%s142 + $0x1a8] sm:$0xff]
      %v205 = vld [vmem:[%s142 + $0x1b0] sm:$0xff]
      %v206 = vld [vmem:[%s142 + $0x1b8] sm:$0xff]
      %v207 = vld [vmem:[%s142 + $0x1c0] sm:$0xff]
      %v208 = vld [vmem:[%s142 + $0x1c8] sm:$0xff]
      %v209 = vld [vmem:[%s142 + $0x1d0] sm:$0xff]
      %v210 = vld [vmem:[%s142 + $0x1d8] sm:$0xff]
      %v211 = vld [vmem:[%s142 + $0x1e0] sm:$0xff]
      %v212 = vld [vmem:[%s142 + $0x1e8] sm:$0xff]
      %v213 = vld [vmem:[%s142 + $0x1f0] sm:$0xff]
      %v214 = vld [vmem:[%s142 + $0x1f8] sm:$0xff]
      %v215 = vpack.c.bf16 %v153, %v151
      %v216 = vpack.c.bf16 %v154, %v152
      %v217 = vpack.c.bf16 %v157, %v155
      %v218 = vpack.c.bf16 %v158, %v156
      %v219 = vpack.c.bf16 %v161, %v159
      %v220 = vpack.c.bf16 %v162, %v160
      %v221 = vpack.c.bf16 %v165, %v163
      %v222 = vpack.c.bf16 %v166, %v164
      %v223 = vpack.c.bf16 %v169, %v167
      %v224 = vpack.c.bf16 %v170, %v168
      %v225 = vpack.c.bf16 %v173, %v171
      %v226 = vpack.c.bf16 %v174, %v172
      %v227 = vpack.c.bf16 %v177, %v175
      %v228 = vpack.c.bf16 %v178, %v176
      %v229 = vpack.c.bf16 %v181, %v179
      %v230 = vpack.c.bf16 %v182, %v180
      %v231 = vpack.c.bf16 %v185, %v183
      %v232 = vpack.c.bf16 %v186, %v184
      %v233 = vpack.c.bf16 %v189, %v187
      %v234 = vpack.c.bf16 %v190, %v188
      %v235 = vpack.c.bf16 %v193, %v191
      %v236 = vpack.c.bf16 %v194, %v192
      %v237 = vpack.c.bf16 %v197, %v195
      %v238 = vpack.c.bf16 %v198, %v196
      %v239 = vpack.c.bf16 %v201, %v199
      %v240 = vpack.c.bf16 %v202, %v200
      %v241 = vpack.c.bf16 %v205, %v203
      %v242 = vpack.c.bf16 %v206, %v204
      %v243 = vpack.c.bf16 %v209, %v207
      %v244 = vpack.c.bf16 %v210, %v208
      %v245 = vpack.c.bf16 %v213, %v211
      %v246 = vpack.c.bf16 %v214, %v212
      %v247 = vld [vmem:[%s1] sm:$0xf]
      %v248 = vld [vmem:[%s1 + $0x4] sm:$0xf]
      %v249 = vld [vmem:[%s1 + $0x8] sm:$0xf]
      %v250 = vld [vmem:[%s1 + $0xc] sm:$0xf]
      %v251 = vld [vmem:[%s1 + $0x10] sm:$0xf]
      %v252 = vld [vmem:[%s1 + $0x14] sm:$0xf]
      %v253 = vld [vmem:[%s1 + $0x18] sm:$0xf]
      %v254 = vld [vmem:[%s1 + $0x1c] sm:$0xf]
      %v255 = vld [vmem:[%s1 + $0x20] sm:$0xf]
      %v256 = vld [vmem:[%s1 + $0x24] sm:$0xf]
      %v257 = vld [vmem:[%s1 + $0x28] sm:$0xf]
      %v258 = vld [vmem:[%s1 + $0x2c] sm:$0xf]
      %v259 = vld [vmem:[%s1 + $0x30] sm:$0xf]
      %v260 = vld [vmem:[%s1 + $0x34] sm:$0xf]
      %v261 = vld [vmem:[%s1 + $0x38] sm:$0xf]
      %v262 = vld [vmem:[%s1 + $0x3c] sm:$0xf]
      %v263 = vld [vmem:[%s1 + $0x40] sm:$0xf]
      %v264 = vld [vmem:[%s1 + $0x44] sm:$0xf]
      %v265 = vld [vmem:[%s1 + $0x48] sm:$0x3]
      %v285 = vunpack.c.l.b16 %v247
      %v286 = vunpack.c.l.b16 %v248
      %v287 = vunpack.c.l.b16 %v249
      %v288 = vunpack.c.l.b16 %v250
      %v289 = vunpack.c.l.b16 %v251
      %v290 = vunpack.c.l.b16 %v252
      %v291 = vunpack.c.l.b16 %v253
      %v292 = vunpack.c.l.b16 %v254
      %v293 = vunpack.c.l.b16 %v255
      %v294 = vunpack.c.l.b16 %v256
      %v295 = vunpack.c.l.b16 %v257
      %v296 = vunpack.c.l.b16 %v258
      %v297 = vunpack.c.l.b16 %v259
      %v298 = vunpack.c.l.b16 %v260
      %v299 = vunpack.c.l.b16 %v261
      %v300 = vunpack.c.l.b16 %v262
      %v301 = vunpack.c.l.b16 %v263
      %v302 = vunpack.c.l.b16 %v264
      %v303 = vunpack.c.l.b16 %v265
      %v304 = vpack.c.b16 %v286, %v285
      %v305 = vpack.c.b16 %v288, %v287
      %v306 = vpack.c.b16 %v290, %v289
      %v307 = vpack.c.b16 %v292, %v291
      %v308 = vpack.c.b16 %v294, %v293
      %v309 = vpack.c.b16 %v296, %v295
      %v310 = vpack.c.b16 %v298, %v297
      %v311 = vpack.c.b16 %v300, %v299
      %v312 = vpack.c.b16 %v302, %v301
      %v313 = vpack.c.b16 %v303, %v303
      %vm323 = vcmask 154624
      %v325 = vsel %vm323, %v216, 0
      %v328 = vsel %vm323, %v218, 0
      %v331 = vsel %vm323, %v220, 0
      %v334 = vsel %vm323, %v222, 0
      %v337 = vsel %vm323, %v224, 0
      %v340 = vsel %vm323, %v226, 0
      %v343 = vsel %vm323, %v228, 0
      %v346 = vsel %vm323, %v230, 0
      %v349 = vsel %vm323, %v232, 0
      %v352 = vsel %vm323, %v234, 0
      %v355 = vsel %vm323, %v236, 0
      %v358 = vsel %vm323, %v238, 0
      %v361 = vsel %vm323, %v240, 0
      %v364 = vsel %vm323, %v242, 0
      %v367 = vsel %vm323, %v244, 0
      %v370 = vsel %vm323, %v246, 0
      %vm372 = vcmask 1040384
      %vm373 = vcmask 1041408
      %v374 = vsel %vm372, 4294967295, 65535
      %v375 = vsel %vm373, %v374, 0
      %v377 = vand.u32 %v313, %v375
      %379 = vmatpush.bf16.msra.mxu0 %v311
      %380 = vmatpush.bf16.msra.mxu0 %v310
      %381 = vmatpush.bf16.msra.mxu0 %v309
      %382 = vmatpush.bf16.msra.mxu0 %v308
      %383 = vmatpush.bf16.msra.mxu0 %v307
      %384 = vmatpush.bf16.msra.mxu0 %v306
      %385 = vmatpush.bf16.msra.mxu0 %v305
      %386 = vmatpush.bf16.msra.mxu0 %v304
      %387 = vmatmul.bf16.gmra.mxu0 %v215
      %v388 = vpop.f32.mrf.mxu0
      %v389 = vadd.f32 0.0, %v388
      %v390 = vpop.f32.mrf.mxu0
      %v391 = vadd.f32 0.0, %v390
      %392 = vmatmul.bf16.gmra.mxu0 %v217
      %v393 = vpop.f32.mrf.mxu0
      %v394 = vadd.f32 0.0, %v393
      %v395 = vpop.f32.mrf.mxu0
      %v396 = vadd.f32 0.0, %v395
      %397 = vmatmul.bf16.gmra.mxu0 %v219
      %v398 = vpop.f32.mrf.mxu0
      %v399 = vadd.f32 0.0, %v398
      %v400 = vpop.f32.mrf.mxu0
      %v401 = vadd.f32 0.0, %v400
      %402 = vmatmul.bf16.gmra.mxu0 %v221
      %v403 = vpop.f32.mrf.mxu0
      %v404 = vadd.f32 0.0, %v403
      %v405 = vpop.f32.mrf.mxu0
      %v406 = vadd.f32 0.0, %v405
      %407 = vmatmul.bf16.gmra.mxu0 %v223
      %v408 = vpop.f32.mrf.mxu0
      %v409 = vadd.f32 0.0, %v408
      %v410 = vpop.f32.mrf.mxu0
      %v411 = vadd.f32 0.0, %v410
      %412 = vmatmul.bf16.gmra.mxu0 %v225
      %v413 = vpop.f32.mrf.mxu0
      %v414 = vadd.f32 0.0, %v413
      %v415 = vpop.f32.mrf.mxu0
      %v416 = vadd.f32 0.0, %v415
      %417 = vmatmul.bf16.gmra.mxu0 %v227
      %v418 = vpop.f32.mrf.mxu0
      %v419 = vadd.f32 0.0, %v418
      %v420 = vpop.f32.mrf.mxu0
      %v421 = vadd.f32 0.0, %v420
      %422 = vmatmul.bf16.gmra.mxu0 %v229
      %v423 = vpop.f32.mrf.mxu0
      %v424 = vadd.f32 0.0, %v423
      %v425 = vpop.f32.mrf.mxu0
      %v426 = vadd.f32 0.0, %v425
      %427 = vmatmul.bf16.gmra.mxu0 %v231
      %v428 = vpop.f32.mrf.mxu0
      %v429 = vadd.f32 0.0, %v428
      %v430 = vpop.f32.mrf.mxu0
      %v431 = vadd.f32 0.0, %v430
      %432 = vmatmul.bf16.gmra.mxu0 %v233
      %v433 = vpop.f32.mrf.mxu0
      %v434 = vadd.f32 0.0, %v433
      %v435 = vpop.f32.mrf.mxu0
      %v436 = vadd.f32 0.0, %v435
      %437 = vmatmul.bf16.gmra.mxu0 %v235
      %v438 = vpop.f32.mrf.mxu0
      %v439 = vadd.f32 0.0, %v438
      %v440 = vpop.f32.mrf.mxu0
      %v441 = vadd.f32 0.0, %v440
      %442 = vmatmul.bf16.gmra.mxu0 %v237
      %v443 = vpop.f32.mrf.mxu0
      %v444 = vadd.f32 0.0, %v443
      %v445 = vpop.f32.mrf.mxu0
      %v446 = vadd.f32 0.0, %v445
      %447 = vmatmul.bf16.gmra.mxu0 %v239
      %v448 = vpop.f32.mrf.mxu0
      %v449 = vadd.f32 0.0, %v448
      %v450 = vpop.f32.mrf.mxu0
      %v451 = vadd.f32 0.0, %v450
      %452 = vmatmul.bf16.gmra.mxu0 %v241
      %v453 = vpop.f32.mrf.mxu0
      %v454 = vadd.f32 0.0, %v453
      %v455 = vpop.f32.mrf.mxu0
      %v456 = vadd.f32 0.0, %v455
      %457 = vmatmul.bf16.gmra.mxu0 %v243
      %v458 = vpop.f32.mrf.mxu0
      %v459 = vadd.f32 0.0, %v458
      %v460 = vpop.f32.mrf.mxu0
      %v461 = vadd.f32 0.0, %v460
      %462 = vmatmul.bf16.gmra.mxu0 %v245
      %v463 = vpop.f32.mrf.mxu0
      %v464 = vadd.f32 0.0, %v463
      %v465 = vpop.f32.mrf.mxu0
      %v466 = vadd.f32 0.0, %v465
      %467 = vdwg.mxu0
      %468 = vmatpush.bf16.msra.mxu0 0
      %469 = vmatpush.bf16.msra.mxu0 0
      %470 = vmatpush.bf16.msra.mxu0 0
      %471 = vmatpush.bf16.msra.mxu0 0
      %472 = vmatpush.bf16.msra.mxu0 0
      %473 = vmatpush.bf16.msra.mxu0 0
      %474 = vmatpush.bf16.msra.mxu0 %v377
      %475 = vmatpush.bf16.msra.mxu0 %v312
      %476 = vmatmul.bf16.gmra.mxu0 %v325
      %v477 = vpop.f32.mrf.mxu0
      %v478 = vadd.f32 %v389, %v477
      %v479 = vpop.f32.mrf.mxu0
      %v480 = vadd.f32 %v391, %v479
      %481 = vmatmul.bf16.gmra.mxu0 %v328
      %v482 = vpop.f32.mrf.mxu0
      %v483 = vadd.f32 %v394, %v482
      %v484 = vpop.f32.mrf.mxu0
      %v485 = vadd.f32 %v396, %v484
      %486 = vmatmul.bf16.gmra.mxu0 %v331
      %v487 = vpop.f32.mrf.mxu0
      %v488 = vadd.f32 %v399, %v487
      %v489 = vpop.f32.mrf.mxu0
      %v490 = vadd.f32 %v401, %v489
      %491 = vmatmul.bf16.gmra.mxu0 %v334
      %v492 = vpop.f32.mrf.mxu0
      %v493 = vadd.f32 %v404, %v492
      %v494 = vpop.f32.mrf.mxu0
      %v495 = vadd.f32 %v406, %v494
      %496 = vmatmul.bf16.gmra.mxu0 %v337
      %v497 = vpop.f32.mrf.mxu0
      %v498 = vadd.f32 %v409, %v497
      %v499 = vpop.f32.mrf.mxu0
      %v500 = vadd.f32 %v411, %v499
      %501 = vmatmul.bf16.gmra.mxu0 %v340
      %v502 = vpop.f32.mrf.mxu0
      %v503 = vadd.f32 %v414, %v502
      %v504 = vpop.f32.mrf.mxu0
      %v505 = vadd.f32 %v416, %v504
      %506 = vmatmul.bf16.gmra.mxu0 %v343
      %v507 = vpop.f32.mrf.mxu0
      %v508 = vadd.f32 %v419, %v507
      %v509 = vpop.f32.mrf.mxu0
      %v510 = vadd.f32 %v421, %v509
      %511 = vmatmul.bf16.gmra.mxu0 %v346
      %v512 = vpop.f32.mrf.mxu0
      %v513 = vadd.f32 %v424, %v512
      %v514 = vpop.f32.mrf.mxu0
      %v515 = vadd.f32 %v426, %v514
      %516 = vmatmul.bf16.gmra.mxu0 %v349
      %v517 = vpop.f32.mrf.mxu0
      %v518 = vadd.f32 %v429, %v517
      %v519 = vpop.f32.mrf.mxu0
      %v520 = vadd.f32 %v431, %v519
      %521 = vmatmul.bf16.gmra.mxu0 %v352
      %v522 = vpop.f32.mrf.mxu0
      %v523 = vadd.f32 %v434, %v522
      %v524 = vpop.f32.mrf.mxu0
      %v525 = vadd.f32 %v436, %v524
      %526 = vmatmul.bf16.gmra.mxu0 %v355
      %v527 = vpop.f32.mrf.mxu0
      %v528 = vadd.f32 %v439, %v527
      %v529 = vpop.f32.mrf.mxu0
      %v530 = vadd.f32 %v441, %v529
      %531 = vmatmul.bf16.gmra.mxu0 %v358
      %v532 = vpop.f32.mrf.mxu0
      %v533 = vadd.f32 %v444, %v532
      %v534 = vpop.f32.mrf.mxu0
      %v535 = vadd.f32 %v446, %v534
      %536 = vmatmul.bf16.gmra.mxu0 %v361
      %v537 = vpop.f32.mrf.mxu0
      %v538 = vadd.f32 %v449, %v537
      %v539 = vpop.f32.mrf.mxu0
      %v540 = vadd.f32 %v451, %v539
      %541 = vmatmul.bf16.gmra.mxu0 %v364
      %v542 = vpop.f32.mrf.mxu0
      %v543 = vadd.f32 %v454, %v542
      %v544 = vpop.f32.mrf.mxu0
      %v545 = vadd.f32 %v456, %v544
      %546 = vmatmul.bf16.gmra.mxu0 %v367
      %v547 = vpop.f32.mrf.mxu0
      %v548 = vadd.f32 %v459, %v547
      %v549 = vpop.f32.mrf.mxu0
      %v550 = vadd.f32 %v461, %v549
      %551 = vmatmul.bf16.gmra.mxu0 %v370
      %v552 = vpop.f32.mrf.mxu0
      %v553 = vadd.f32 %v464, %v552
      %v554 = vpop.f32.mrf.mxu0
      %v555 = vadd.f32 %v466, %v554
      %556 = vdwg.mxu0
      %557 = vst [vmem:[%s148] sm:$0xff] %v478
      %558 = vst [vmem:[%s148 + $0x8] sm:$0xff] %v480
      %559 = vst [vmem:[%s148 + $0x10] sm:$0xff] %v483
      %560 = vst [vmem:[%s148 + $0x18] sm:$0xff] %v485
      %561 = vst [vmem:[%s148 + $0x20] sm:$0xff] %v488
      %562 = vst [vmem:[%s148 + $0x28] sm:$0xff] %v490
      %563 = vst [vmem:[%s148 + $0x30] sm:$0xff] %v493
      %564 = vst [vmem:[%s148 + $0x38] sm:$0xff] %v495
      %565 = vst [vmem:[%s148 + $0x40] sm:$0xff] %v498
      %566 = vst [vmem:[%s148 + $0x48] sm:$0xff] %v500
      %567 = vst [vmem:[%s148 + $0x50] sm:$0xff] %v503
      %568 = vst [vmem:[%s148 + $0x58] sm:$0xff] %v505
      %569 = vst [vmem:[%s148 + $0x60] sm:$0xff] %v508
      %570 = vst [vmem:[%s148 + $0x68] sm:$0xff] %v510
      %571 = vst [vmem:[%s148 + $0x70] sm:$0xff] %v513
      %572 = vst [vmem:[%s148 + $0x78] sm:$0xff] %v515
      %573 = vst [vmem:[%s148 + $0x80] sm:$0xff] %v518
      %574 = vst [vmem:[%s148 + $0x88] sm:$0xff] %v520
      %575 = vst [vmem:[%s148 + $0x90] sm:$0xff] %v523
      %576 = vst [vmem:[%s148 + $0x98] sm:$0xff] %v525
      %577 = vst [vmem:[%s148 + $0xa0] sm:$0xff] %v528
      %578 = vst [vmem:[%s148 + $0xa8] sm:$0xff] %v530
      %579 = vst [vmem:[%s148 + $0xb0] sm:$0xff] %v533
      %580 = vst [vmem:[%s148 + $0xb8] sm:$0xff] %v535
      %581 = vst [vmem:[%s148 + $0xc0] sm:$0xff] %v538
      %582 = vst [vmem:[%s148 + $0xc8] sm:$0xff] %v540
      %583 = vst [vmem:[%s148 + $0xd0] sm:$0xff] %v543
      %584 = vst [vmem:[%s148 + $0xd8] sm:$0xff] %v545
      %585 = vst [vmem:[%s148 + $0xe0] sm:$0xff] %v548
      %586 = vst [vmem:[%s148 + $0xe8] sm:$0xff] %v550
      %587 = vst [vmem:[%s148 + $0xf0] sm:$0xff] %v553
      %588 = vst [vmem:[%s148 + $0xf8] sm:$0xff] %v555
      %s589 = smul.u32 32, %s13
      %p590 = scmp.lt.s32.totalorder %s589, 63
      %s591 = scalar_select %p590, %s589, 63
      %s592 = smul.addr %s591, 8
      %s593 = scalar_lea.vmem %s2, %s592
      // Predicated region
      $region29: #{densenet_forward.24} parent=27 // pred_check
        %p594 = pneg %p78
      $region30: #{densenet_forward.24} parent=27 // pred_check_branch
        %596 = sbr.rel (%p594) target = $region32
      $region31: #{densenet_forward.24} parent=27 // pred_region
        %s597 = smul.u32 32, %s13
      $region32: #{densenet_forward.24} parent=27 // pred_fallthru
        _
    $region28: #{densenet_forward.24} parent=5 // pred_fallthru
      _
    %p598 = scmp.le.s32.totalorder 2, %s8
    // Predicated region
    $region33: #{densenet_forward.24} parent=5 // pred_check
      %p599 = pneg %p598
    $region34: #{densenet_forward.24} parent=5 // pred_check_branch
      %601 = sbr.rel (%p599) target = $region36
    $region35: #{densenet_forward.24} parent=5 // pred_region
      %s602 = ssub.s32 %s8, 2
      // Predicated region
      $region37: #{densenet_forward.24} parent=35 // pred_check
        %p603 = pneg %p84
      $region38: #{densenet_forward.24} parent=35 // pred_check_branch
        %605 = sbr.rel (%p603) target = $region40
      $region39: #{densenet_forward.24} parent=35 // pred_region
        %s606 = smul.u32 32, %s14
        %p607 = scmp.lt.s32.totalorder %s606, 63
        %s608 = scalar_select %p607, %s606, 63
        %s609 = smul.addr %s608, 8
        %s610 = scalar_lea.vmem %s2, %s609
      $region40: #{densenet_forward.24} parent=35 // pred_fallthru
        _
    $region36: #{densenet_forward.24} parent=5 // pred_fallthru
      _
  $region6: #{densenet_forward.24} parent=0 // loop_footer
    %s12 = sadd.s32 1, %s8
  $region7: #{densenet_forward.24} parent=0 // loop_footer_branch
    %7 = sbr.rel target = $region3
  $region8: #{densenet_forward.24} parent=0 // loop_exit
    _

// kernel: densenet_forward.26
$region0: #{densenet_forward.26}
  #allocation0 [shape = 'u32[]', space=smem, size = 0x4, offset = 0x4, fixed_abs, tag = 'smem constant byte address 0x4 - core index']
  #allocation1 [shape = 'u32[72,128]{1,0:T(1,128)}', space=vmem, size = 0x9000, scoped, tag = 'internal scratch']
  %s0 = inlined_call_operand.vmem [shape: f32[2,18,18,128], index: 0, kind: input, shape index: {}, may-alias: {0,1,2}]
  %s1 = inlined_call_operand.vmem [shape: f32[2,18,18,128], index: 1, kind: input, shape index: {}, may-alias: {0,1,2}]
  %s2 = inlined_call_operand.vmem [shape: f32[2,18,18,128], index: 2, kind: input, shape index: {}, may-alias: {0,1,2}]
  %s3 = inlined_call_operand.vmem [shape: f32[1,128], index: 3, kind: input, shape index: {}]
  %s4 = inlined_call_operand.vmem [shape: f32[1,128], index: 4, kind: input, shape index: {}]
  %s5 = inlined_call_operand.vmem [shape: f32[2,8,8,128], index: 5, kind: output, shape index: {}]
  %s6 = sld [smem:[#allocation0]]
  $region53: #{densenet_forward.26} parent=0
    _
  %s8 = ssub.s32 1, %s6
  %s9 = scalar_select 0, %s8, %s6
  loop: start=0, step=1, limit=18
  $region2: #{densenet_forward.26} parent=0 // loop_pre_header
    _
  $region3: #{densenet_forward.26} parent=0 // loop_header
    %s11 = sphi 0, %s15
    %p12 = scmp.ge.s32.totalorder %s11, 18
    %s18 = sphi 0, %s30
    %s19 = sphi 0, %s26
    %s20 = sphi 0, %s18
    %s21 = sphi 0, %s19
    %s22 = sphi 0, %s20
    %s23 = sphi 0, %s21
    %s37 = sphi 0, %s39
    %s40 = sphi 0, %s37
    %s41 = sphi 0, %s40
    %s57 = sphi 0, %s41
    %s69 = sphi 0, %s71
    %s72 = sphi 0, %s69
    %s73 = sphi 0, %s72
    %s89 = sphi 0, %s73
    %s101 = sphi 0, %s103
    %s104 = sphi 0, %s101
    %s105 = sphi 0, %s104
    %s121 = sphi 0, %s105
    %s125 = sphi 0, %s125
    %s127 = sphi 0, %s125
    %s128 = sphi 0, %s127
    %s142 = sphi 0, %s128
    %s146 = sphi 0, %s146
    %s148 = sphi 0, %s146
    %s149 = sphi 0, %s148
    %s163 = sphi 0, %s149
    %s171 = sphi 0, %s173
    %s174 = sphi 0, %s171
    %s175 = sphi 0, %s174
    %s191 = sphi 0, %s175
  $region4: #{densenet_forward.26} parent=0 // loop_header_branch
    %14 = sbr.rel (%p12) target = $region8
  $region5: #{densenet_forward.26} parent=0 // loop_body
    %s16 = ssub.s32 %s11, 1
    %s17 = ssub.s32 %s11, 2
    %s24 = sadd.s32 1, %s19
    %p25 = scmp.ge.s32.totalorder %s24, 8
    %s26 = scalar_select %p25, 0, %s24
    %s27 = sadd.s32 1, %s18
    %s28 = scalar_select %p25, %s27, %s18
    %p29 = scmp.ge.s32.totalorder %s28, 2
    %s30 = scalar_select %p29, 0, %s28
    %s31 = smul.u32 %s19, 2
    %s32 = smul.u32 %s26, 2
    %s33 = ssub.s32 %s18, %s30
    %s34 = ssub.s32 %s31, %s32
    %s35 = sor.u32 %s33, %s34
    %p36 = scmp.eq.s32.totalorder %s35, 0
    %s38 = sadd.s32 %s37, 1
    %s39 = scalar_select %p36, %s37, %s38
    %p42 = pneg %p36
    %p43 = scmp.eq.s32.totalorder %s11, 15
    %p44 = por %p42, %p43
    %p45 = scmp.ne.s32.totalorder %s37, %s40
    %p46 = scmp.eq.s32.totalorder %s11, 0
    %p47 = por %p45, %p46
    %p48 = scmp.ne.s32.totalorder %s37, %s40
    %p49 = scmp.eq.s32.totalorder %s16, 15
    %p50 = por %p48, %p49
    %p51 = scmp.ne.s32.totalorder %s40, %s41
    %p52 = scmp.eq.s32.totalorder %s16, 0
    %p53 = por %p51, %p52
    %p54 = scmp.ne.s32.totalorder %s40, %s41
    %p55 = scmp.eq.s32.totalorder %s17, 15
    %p56 = por %p54, %p55
    %p58 = scmp.ne.s32.totalorder %s41, %s57
    %p59 = scmp.eq.s32.totalorder %s17, 0
    %p60 = por %p58, %p59
    %s61 = smul.u32 %s19, 2
    %s62 = sadd.s32 %s61, 1
    %s63 = smul.u32 %s26, 2
    %s64 = sadd.s32 %s63, 1
    %s65 = ssub.s32 %s18, %s30
    %s66 = ssub.s32 %s62, %s64
    %s67 = sor.u32 %s65, %s66
    %p68 = scmp.eq.s32.totalorder %s67, 0
    %s70 = sadd.s32 %s69, 1
    %s71 = scalar_select %p68, %s69, %s70
    %p74 = pneg %p68
    %p75 = scmp.eq.s32.totalorder %s11, 15
    %p76 = por %p74, %p75
    %p77 = scmp.ne.s32.totalorder %s69, %s72
    %p78 = scmp.eq.s32.totalorder %s11, 0
    %p79 = por %p77, %p78
    %p80 = scmp.ne.s32.totalorder %s69, %s72
    %p81 = scmp.eq.s32.totalorder %s16, 15
    %p82 = por %p80, %p81
    %p83 = scmp.ne.s32.totalorder %s72, %s73
    %p84 = scmp.eq.s32.totalorder %s16, 0
    %p85 = por %p83, %p84
    %p86 = scmp.ne.s32.totalorder %s72, %s73
    %p87 = scmp.eq.s32.totalorder %s17, 15
    %p88 = por %p86, %p87
    %p90 = scmp.ne.s32.totalorder %s73, %s89
    %p91 = scmp.eq.s32.totalorder %s17, 0
    %p92 = por %p90, %p91
    %s93 = smul.u32 %s19, 2
    %s94 = sadd.s32 %s93, 2
    %s95 = smul.u32 %s26, 2
    %s96 = sadd.s32 %s95, 2
    %s97 = ssub.s32 %s18, %s30
    %s98 = ssub.s32 %s94, %s96
    %s99 = sor.u32 %s97, %s98
    %p100 = scmp.eq.s32.totalorder %s99, 0
    %s102 = sadd.s32 %s101, 1
    %s103 = scalar_select %p100, %s101, %s102
    %p106 = pneg %p100
    %p107 = scmp.eq.s32.totalorder %s11, 15
    %p108 = por %p106, %p107
    %p109 = scmp.ne.s32.totalorder %s101, %s104
    %p110 = scmp.eq.s32.totalorder %s11, 0
    %p111 = por %p109, %p110
    %p112 = scmp.ne.s32.totalorder %s101, %s104
    %p113 = scmp.eq.s32.totalorder %s16, 15
    %p114 = por %p112, %p113
    %p115 = scmp.ne.s32.totalorder %s104, %s105
    %p116 = scmp.eq.s32.totalorder %s16, 0
    %p117 = por %p115, %p116
    %p118 = scmp.ne.s32.totalorder %s104, %s105
    %p119 = scmp.eq.s32.totalorder %s17, 15
    %p120 = por %p118, %p119
    %p122 = scmp.ne.s32.totalorder %s105, %s121
    %p123 = scmp.eq.s32.totalorder %s17, 0
    %p124 = por %p122, %p123
    %s126 = sadd.s32 %s125, 1
    %p129 = scmp.eq.s32.totalorder %s11, 15
    %p130 = scmp.ne.s32.totalorder %s125, %s127
    %p131 = scmp.eq.s32.totalorder %s11, 0
    %p132 = por %p130, %p131
    %p133 = scmp.ne.s32.totalorder %s125, %s127
    %p134 = scmp.eq.s32.totalorder %s16, 15
    %p135 = por %p133, %p134
    %p136 = scmp.ne.s32.totalorder %s127, %s128
    %p137 = scmp.eq.s32.totalorder %s16, 0
    %p138 = por %p136, %p137
    %p139 = scmp.ne.s32.totalorder %s127, %s128
    %p140 = scmp.eq.s32.totalorder %s17, 15
    %p141 = por %p139, %p140
    %p143 = scmp.ne.s32.totalorder %s128, %s142
    %p144 = scmp.eq.s32.totalorder %s17, 0
    %p145 = por %p143, %p144
    %s147 = sadd.s32 %s146, 1
    %p150 = scmp.eq.s32.totalorder %s11, 15
    %p151 = scmp.ne.s32.totalorder %s146, %s148
    %p152 = scmp.eq.s32.totalorder %s11, 0
    %p153 = por %p151, %p152
    %p154 = scmp.ne.s32.totalorder %s146, %s148
    %p155 = scmp.eq.s32.totalorder %s16, 15
    %p156 = por %p154, %p155
    %p157 = scmp.ne.s32.totalorder %s148, %s149
    %p158 = scmp.eq.s32.totalorder %s16, 0
    %p159 = por %p157, %p158
    %p160 = scmp.ne.s32.totalorder %s148, %s149
    %p161 = scmp.eq.s32.totalorder %s17, 15
    %p162 = por %p160, %p161
    %p164 = scmp.ne.s32.totalorder %s149, %s163
    %p165 = scmp.eq.s32.totalorder %s17, 0
    %p166 = por %p164, %p165
    %s167 = ssub.s32 %s18, %s30
    %s168 = ssub.s32 %s19, %s26
    %s169 = sor.u32 %s167, %s168
    %p170 = scmp.eq.s32.totalorder %s169, 0
    %s172 = sadd.s32 %s171, 1
    %s173 = scalar_select %p170, %s171, %s172
    %p176 = pneg %p170
    %p177 = scmp.eq.s32.totalorder %s11, 15
    %p178 = por %p176, %p177
    %p179 = scmp.ne.s32.totalorder %s171, %s174
    %p180 = scmp.eq.s32.totalorder %s11, 0
    %p181 = por %p179, %p180
    %p182 = scmp.ne.s32.totalorder %s171, %s174
    %p183 = scmp.eq.s32.totalorder %s16, 15
    %p184 = por %p182, %p183
    %p185 = scmp.ne.s32.totalorder %s174, %s175
    %p186 = scmp.eq.s32.totalorder %s16, 0
    %p187 = por %p185, %p186
    %p188 = scmp.ne.s32.totalorder %s174, %s175
    %p189 = scmp.eq.s32.totalorder %s17, 15
    %p190 = por %p188, %p189
    %p192 = scmp.ne.s32.totalorder %s175, %s191
    %p193 = scmp.eq.s32.totalorder %s17, 0
    %p194 = por %p192, %p193
    %p195 = scmp.le.s32.totalorder 1, %s11
    %p196 = scmp.lt.s32.totalorder %s11, 17
    %p197 = pnand %p195, %p196
    %p198 = pneg %p197
    // Predicated region
    $region9: #{densenet_forward.26} parent=5 // pred_check
      _
    $region10: #{densenet_forward.26} parent=5 // pred_check_branch
      %200 = sbr.rel (%p197) target = $region12
    $region11: #{densenet_forward.26} parent=5 // pred_region
      %s201 = ssub.s32 %s11, 1
      // Predicated region
      $region13: #{densenet_forward.26} parent=11 // pred_check
        %p202 = pneg %p138
      $region14: #{densenet_forward.26} parent=11 // pred_check_branch
        %204 = sbr.rel (%p202) target = $region16
      $region15: #{densenet_forward.26} parent=11 // pred_region
        _
      $region16: #{densenet_forward.26} parent=11 // pred_fallthru
        _
      // Predicated region
      $region17: #{densenet_forward.26} parent=11 // pred_check
        %p205 = pneg %p159
      $region18: #{densenet_forward.26} parent=11 // pred_check_branch
        %207 = sbr.rel (%p205) target = $region20
      $region19: #{densenet_forward.26} parent=11 // pred_region
        _
      $region20: #{densenet_forward.26} parent=11 // pred_fallthru
        _
    $region12: #{densenet_forward.26} parent=5 // pred_fallthru
      _
    %p208 = scmp.lt.s32.totalorder %s11, 16
    // Predicated region
    $region21: #{densenet_forward.26} parent=5 // pred_check
      %p209 = pneg %p208
    $region22: #{densenet_forward.26} parent=5 // pred_check_branch
      %211 = sbr.rel (%p209) target = $region24
    $region23: #{densenet_forward.26} parent=5 // pred_region
      // Predicated region
      $region25: #{densenet_forward.26} parent=23 // pred_check
        %p212 = pneg %p47
      $region26: #{densenet_forward.26} parent=23 // pred_check_branch
        %214 = sbr.rel (%p212) target = $region28
      $region27: #{densenet_forward.26} parent=23 // pred_region
        %s215 = smul.u32 %s19, 2
        %p216 = scmp.lt.s32.totalorder %s18, 1
        %s217 = scalar_select %p216, %s18, 1
        %p218 = scmp.lt.s32.totalorder %s215, 17
        %s219 = scalar_select %p218, %s215, 17
        %s220 = smul.addr %s219, 3
        %s221 = smul.addr %s217, 54
        %s222 = sadd.s32 %s220, %s221
        %s223 = smul.addr %s222, 8
        %s224 = scalar_lea.vmem %s0, %s223
        %s225 = smul.u32 %s19, 2
      $region28: #{densenet_forward.26} parent=23 // pred_fallthru
        _
      // Predicated region
      $region29: #{densenet_forward.26} parent=23 // pred_check
        %p226 = pneg %p79
      $region30: #{densenet_forward.26} parent=23 // pred_check_branch
        %228 = sbr.rel (%p226) target = $region32
      $region31: #{densenet_forward.26} parent=23 // pred_region
        %s229 = smul.u32 %s19, 2
        %s230 = sadd.s32 %s229, 1
        %p231 = scmp.lt.s32.totalorder %s18, 1
        %s232 = scalar_select %p231, %s18, 1
        %p233 = scmp.lt.s32.totalorder %s230, 17
        %s234 = scalar_select %p233, %s230, 17
        %s235 = smul.addr %s234, 3
        %s236 = smul.addr %s232, 54
        %s237 = sadd.s32 %s235, %s236
        %s238 = smul.addr %s237, 8
        %s239 = scalar_lea.vmem %s1, %s238
        %s240 = smul.u32 %s19, 2
        %s241 = sadd.s32 %s240, 1
      $region32: #{densenet_forward.26} parent=23 // pred_fallthru
        _
      // Predicated region
      $region33: #{densenet_forward.26} parent=23 // pred_check
        %p242 = pneg %p111
      $region34: #{densenet_forward.26} parent=23 // pred_check_branch
        %244 = sbr.rel (%p242) target = $region36
      $region35: #{densenet_forward.26} parent=23 // pred_region
        %s245 = smul.u32 %s19, 2
        %s246 = sadd.s32 %s245, 2
        %p247 = scmp.lt.s32.totalorder %s18, 1
        %s248 = scalar_select %p247, %s18, 1
        %p249 = scmp.lt.s32.totalorder %s246, 17
        %s250 = scalar_select %p249, %s246, 17
        %s251 = smul.addr %s250, 3
        %s252 = smul.addr %s248, 54
        %s253 = sadd.s32 %s251, %s252
        %s254 = smul.addr %s253, 8
        %s255 = scalar_lea.vmem %s2, %s254
        %s256 = smul.u32 %s19, 2
        %s257 = sadd.s32 %s256, 2
      $region36: #{densenet_forward.26} parent=23 // pred_fallthru
        _
    $region24: #{densenet_forward.26} parent=5 // pred_fallthru
      _
    %p258 = scmp.le.s32.totalorder 1, %s11
    %p259 = scmp.lt.s32.totalorder %s11, 17
    %p260 = pnand %p258, %p259
    %p261 = pneg %p260
    // Predicated region
    $region37: #{densenet_forward.26} parent=5 // pred_check
      _
    $region38: #{densenet_forward.26} parent=5 // pred_check_branch
      %263 = sbr.rel (%p260) target = $region40
    $region39: #{densenet_forward.26} parent=5 // pred_region
      %s264 = ssub.s32 %s11, 1
      %s265 = smul.u32 %s21, 2
      %p266 = scmp.lt.s32.totalorder %s20, 1
      %s267 = scalar_select %p266, %s20, 1
      %p268 = scmp.lt.s32.totalorder %s265, 17
      %s269 = scalar_select %p268, %s265, 17
      %s270 = smul.addr %s269, 3
      %s271 = smul.addr %s267, 54
      %s272 = sadd.s32 %s270, %s271
      %s273 = smul.addr %s272, 8
      %s274 = scalar_lea.vmem %s0, %s273
      %p275 = pneg %p53
      %p276 = pneg %p50
      %s277 = smul.u32 %s21, 2
      %s278 = sadd.s32 %s277, 1
      %p279 = scmp.lt.s32.totalorder %s20, 1
      %s280 = scalar_select %p279, %s20, 1
      %p281 = scmp.lt.s32.totalorder %s278, 17
      %s282 = scalar_select %p281, %s278, 17
      %s283 = smul.addr %s282, 3
      %s284 = smul.addr %s280, 54
      %s285 = sadd.s32 %s283, %s284
      %s286 = smul.addr %s285, 8
      %s287 = scalar_lea.vmem %s1, %s286
      %p288 = pneg %p85
      %p289 = pneg %p82
      %s290 = smul.u32 %s21, 2
      %s291 = sadd.s32 %s290, 2
      %p292 = scmp.lt.s32.totalorder %s20, 1
      %s293 = scalar_select %p292, %s20, 1
      %p294 = scmp.lt.s32.totalorder %s291, 17
      %s295 = scalar_select %p294, %s291, 17
      %s296 = smul.addr %s295, 3
      %s297 = smul.addr %s293, 54
      %s298 = sadd.s32 %s296, %s297
      %s299 = smul.addr %s298, 8
      %s300 = scalar_lea.vmem %s2, %s299
      %p301 = pneg %p117
      %p302 = pneg %p114
      %p303 = pneg %p138
      %p304 = pneg %p135
      %p305 = pneg %p159
      %p306 = pneg %p156
      %p307 = pneg %p187
      %p308 = pneg %p184
      %p309 = scmp.lt.s32.totalorder %s20, 1
      %s310 = scalar_select %p309, %s20, 1
      %p311 = scmp.lt.s32.totalorder %s21, 7
      %s312 = scalar_select %p311, %s21, 7
      %s313 = smul.addr %s310, 8
      %s314 = sadd.s32 %s312, %s313
      %s315 = smul.addr %s314, 8
      %s316 = scalar_lea.vmem %s5, %s315
      %s317 = smul.u32 %s21, 2
      %p318 = scmp.lt.s32.totalorder %s20, 1
      %s319 = scalar_select %p318, %s20, 1
      %p320 = scmp.lt.s32.totalorder %s317, 17
      %s321 = scalar_select %p320, %s317, 17
      %s322 = smul.addr %s321, 3
      %s323 = smul.addr %s319, 54
      %s324 = sadd.s32 %s322, %s323
      %s325 = smul.addr %s324, 8
      %s326 = scalar_lea.vmem %s0, %s325
      %s327 = smul.u32 %s21, 2
      %s328 = smul.u32 %s21, 2
      %s329 = sadd.s32 %s328, 1
      %p330 = scmp.lt.s32.totalorder %s20, 1
      %s331 = scalar_select %p330, %s20, 1
      %p332 = scmp.lt.s32.totalorder %s329, 17
      %s333 = scalar_select %p332, %s329, 17
      %s334 = smul.addr %s333, 3
      %s335 = smul.addr %s331, 54
      %s336 = sadd.s32 %s334, %s335
      %s337 = smul.addr %s336, 8
      %s338 = scalar_lea.vmem %s1, %s337
      %s339 = smul.u32 %s21, 2
      %s340 = sadd.s32 %s339, 1
      %s341 = smul.u32 %s21, 2
      %s342 = sadd.s32 %s341, 2
      %p343 = scmp.lt.s32.totalorder %s20, 1
      %s344 = scalar_select %p343, %s20, 1
      %p345 = scmp.lt.s32.totalorder %s342, 17
      %s346 = scalar_select %p345, %s342, 17
      %s347 = smul.addr %s346, 3
      %s348 = smul.addr %s344, 54
      %s349 = sadd.s32 %s347, %s348
      %s350 = smul.addr %s349, 8
      %s351 = scalar_lea.vmem %s2, %s350
      %s352 = smul.u32 %s21, 2
      %s353 = sadd.s32 %s352, 2
      %p354 = scmp.lt.s32.totalorder %s20, 1
      %s355 = scalar_select %p354, %s20, 1
      %p356 = scmp.lt.s32.totalorder %s21, 7
      %s357 = scalar_select %p356, %s21, 7
      %s358 = smul.addr %s355, 8
      %s359 = sadd.s32 %s357, %s358
      %s360 = smul.addr %s359, 8
      %s361 = scalar_lea.vmem %s5, %s360
      %v362 = vld [vmem:[%s3] sm:$0x1]
      %v363 = vld [vmem:[%s4] sm:$0x1]
      %v364 = vld [vmem:[%s326] sm:$0xff]
      %v365 = vld [vmem:[%s326 + $0x8] sm:$0xff]
      %v366 = vld [vmem:[%s326 + $0x10] sm:$0x3]
      %v368 = vperm.slane %v362, 0
      %v370 = vmul.f32 %v364, %v368
      %v371 = vmul.f32 %v365, %v368
      %v372 = vmul.f32 %v366, %v368
      %v374 = vperm.slane %v363, 0
      %v376 = vadd.f32 %v370, %v374
      %v377 = vadd.f32 %v371, %v374
      %v378 = vadd.f32 %v372, %v374
      %v379 = vmax.f32 %v376, 0.0
      %v380 = vmax.f32 %v377, 0.0
      %v381 = vmax.f32 %v378, 0.0
      %vm385 = vcmask 1046528
      %v386 = vrot.slane %v379, 1
      %v387 = vrot.slane %v380, 1
      %v388 = vsel %vm385, %v386, %v387
      %v389 = vrot.slane %v381, 1
      %v390 = vsel %vm385, %v387, %v389
      %v393 = vmax.f32 %v379, %v388
      %v394 = vmax.f32 %v380, %v390
      %vm395 = vcmask 1045504
      %v396 = vrot.slane %v379, 2
      %v397 = vrot.slane %v380, 2
      %v398 = vsel %vm395, %v396, %v397
      %v399 = vrot.slane %v381, 2
      %v400 = vsel %vm395, %v397, %v399
      %v403 = vmax.f32 %v393, %v398
      %v404 = vmax.f32 %v394, %v400
      %v405 = vld [vmem:[%s338] sm:$0xff]
      %v406 = vld [vmem:[%s338 + $0x8] sm:$0xff]
      %v407 = vld [vmem:[%s338 + $0x10] sm:$0x3]
      %v408 = vmul.f32 %v405, %v368
      %v409 = vmul.f32 %v406, %v368
      %v410 = vmul.f32 %v407, %v368
      %v411 = vadd.f32 %v408, %v374
      %v412 = vadd.f32 %v409, %v374
      %v413 = vadd.f32 %v410, %v374
      %v414 = vmax.f32 %v411, 0.0
      %v415 = vmax.f32 %v412, 0.0
      %v416 = vmax.f32 %v413, 0.0
      %v420 = vrot.slane %v414, 1
      %v421 = vrot.slane %v415, 1
      %v422 = vsel %vm385, %v420, %v421
      %v423 = vrot.slane %v416, 1
      %v424 = vsel %vm385, %v421, %v423
      %v427 = vmax.f32 %v414, %v422
      %v428 = vmax.f32 %v415, %v424
      %v429 = vrot.slane %v414, 2
      %v430 = vrot.slane %v415, 2
      %v431 = vsel %vm395, %v429, %v430
      %v432 = vrot.slane %v416, 2
      %v433 = vsel %vm395, %v430, %v432
      %v436 = vmax.f32 %v427, %v431
      %v437 = vmax.f32 %v428, %v433
      %v438 = vmax.f32 %v403, %v436
      %v439 = vmax.f32 %v404, %v437
      %v440 = vld [vmem:[%s351] sm:$0xff]
      %v441 = vld [vmem:[%s351 + $0x8] sm:$0xff]
      %v442 = vld [vmem:[%s351 + $0x10] sm:$0x3]
      %v443 = vmul.f32 %v440, %v368
      %v444 = vmul.f32 %v441, %v368
      %v445 = vmul.f32 %v442, %v368
      %v446 = vadd.f32 %v443, %v374
      %v447 = vadd.f32 %v444, %v374
      %v448 = vadd.f32 %v445, %v374
      %v449 = vmax.f32 %v446, 0.0
      %v450 = vmax.f32 %v447, 0.0
      %v451 = vmax.f32 %v448, 0.0
      %v455 = vrot.slane %v449, 1
      %v456 = vrot.slane %v450, 1
      %v457 = vsel %vm385, %v455, %v456
      %v458 = vrot.slane %v451, 1
      %v459 = vsel %vm385, %v456, %v458
      %v462 = vmax.f32 %v449, %v457
      %v463 = vmax.f32 %v450, %v459
      %v464 = vrot.slane %v449, 2
      %v465 = vrot.slane %v450, 2
      %v466 = vsel %vm395, %v464, %v465
      %v467 = vrot.slane %v451, 2
      %v468 = vsel %vm395, %v465, %v467
      %v471 = vmax.f32 %v462, %v466
      %v472 = vmax.f32 %v463, %v468
      %v473 = vmax.f32 %v438, %v471
      %v474 = vmax.f32 %v439, %v472
      %v475 = vlaneseq
      %v476 = vshrl.u32 %v475, 7
      %v477 = vlaneseq
      %v478 = vand.u32 %v477, 127
      %v479 = vmul.u32 %v476, 2
      %vm480 = vcmp.eq.s32.totalorder %v478, %v479
      %v481 = vsel %vm480, 1.0, 0.0
      %vm482 = vcmask 130048
      %v484 = vsel %vm482, %v481, 0
      %486 = vmatpush.msra.mxu0 0.0
      %487 = vmatpush.msra.mxu0 0.0
      %488 = vmatpush.msra.mxu0 0.0
      %489 = vmatpush.msra.mxu0 0.0
      %490 = vmatpush.msra.mxu0 0.0
      %491 = vmatpush.msra.mxu0 0.0
      %492 = vmatpush.msra.mxu0 0.0
      %493 = vmatpush.msra.mxu0 0.0
      %494 = vmatpush.msra.mxu0 0.0
      %495 = vmatpush.msra.mxu0 0.0
      %496 = vmatpush.msra.mxu0 0.0
      %497 = vmatpush.msra.mxu0 0.0
      %498 = vmatpush.msra.mxu0 0.0
      %499 = vmatpush.msra.mxu0 0.0
      %500 = vmatpush.msra.mxu0 %v474
      %501 = vmatpush.msra.mxu0 %v473
      %502 = vmatmul.f32.gmra.mxu0 %v484
      %v503 = vpop.f32.mrf.mxu0
      %v504 = vadd.f32 0.0, %v503
      %505 = vdwg.mxu0
      %506 = vst [vmem:[%s361] sm:$0xff] %v504
      %p507 = scmp.lt.s32.totalorder %s20, 1
      %s508 = scalar_select %p507, %s20, 1
      %p509 = scmp.lt.s32.totalorder %s21, 7
      %s510 = scalar_select %p509, %s21, 7
      %s511 = smul.addr %s508, 8
      %s512 = sadd.s32 %s510, %s511
      %s513 = smul.addr %s512, 8
      %s514 = scalar_lea.vmem %s5, %s513
      // Predicated region
      $region41: #{densenet_forward.26} parent=39 // pred_check
        %p515 = pneg %p184
      $region42: #{densenet_forward.26} parent=39 // pred_check_branch
        %517 = sbr.rel (%p515) target = $region44
      $region43: #{densenet_forward.26} parent=39 // pred_region
        _
      $region44: #{densenet_forward.26} parent=39 // pred_fallthru
        _
    $region40: #{densenet_forward.26} parent=5 // pred_fallthru
      _
    %p518 = scmp.le.s32.totalorder 2, %s11
    // Predicated region
    $region45: #{densenet_forward.26} parent=5 // pred_check
      %p519 = pneg %p518
    $region46: #{densenet_forward.26} parent=5 // pred_check_branch
      %521 = sbr.rel (%p519) target = $region48
    $region47: #{densenet_forward.26} parent=5 // pred_region
      %s522 = ssub.s32 %s11, 2
      // Predicated region
      $region49: #{densenet_forward.26} parent=47 // pred_check
        %p523 = pneg %p190
      $region50: #{densenet_forward.26} parent=47 // pred_check_branch
        %525 = sbr.rel (%p523) target = $region52
      $region51: #{densenet_forward.26} parent=47 // pred_region
        %p526 = scmp.lt.s32.totalorder %s22, 1
        %s527 = scalar_select %p526, %s22, 1
        %p528 = scmp.lt.s32.totalorder %s23, 7
        %s529 = scalar_select %p528, %s23, 7
        %s530 = smul.addr %s527, 8
        %s531 = sadd.s32 %s529, %s530
        %s532 = smul.addr %s531, 8
        %s533 = scalar_lea.vmem %s5, %s532
      $region52: #{densenet_forward.26} parent=47 // pred_fallthru
        _
    $region48: #{densenet_forward.26} parent=5 // pred_fallthru
      _
  $region6: #{densenet_forward.26} parent=0 // loop_footer
    %s15 = sadd.s32 1, %s11
  $region7: #{densenet_forward.26} parent=0 // loop_footer_branch
    %10 = sbr.rel target = $region3
  $region8: #{densenet_forward.26} parent=0 // loop_exit
    _

// kernel: densenet_forward.27
$region0: #{densenet_forward.27}
  #allocation0 [shape = 'u32[]', space=smem, size = 0x4, offset = 0x4, fixed_abs, tag = 'smem constant byte address 0x4 - core index']
  #allocation1 [shape = 'u32[72,128]{1,0:T(1,128)}', space=vmem, size = 0x9000, scoped, tag = 'internal scratch']
  %s0 = inlined_call_operand.vmem [shape: f32[128,128], index: 0, kind: input, shape index: {}]
  %s1 = inlined_call_operand.vmem [shape: f32[1,128], index: 1, kind: output, shape index: {0}]
  %s2 = inlined_call_operand.vmem [shape: f32[1,128], index: 2, kind: output, shape index: {1}]
  %3 = xla_tuple %s1, %s2
  %s4 = sld [smem:[#allocation0]]
  $region49: #{densenet_forward.27} parent=0
    _
  %s6 = ssub.s32 1, %s4
  %s7 = scalar_select 0, %s6, %s4
  loop: start=0, step=1, limit=4
  $region2: #{densenet_forward.27} parent=0 // loop_pre_header
    _
  $region3: #{densenet_forward.27} parent=0 // loop_header
    %s9 = sphi 0, %s13
    %p10 = scmp.ge.s32.totalorder %s9, 4
    %s19 = sphi 0, %s21
    %s22 = sphi 0, %s19
    %s23 = sphi 0, %s22
    %s39 = sphi 0, %s23
    %s43 = sphi 0, %s43
    %s45 = sphi 0, %s43
    %s46 = sphi 0, %s45
    %s60 = sphi 0, %s46
    %s64 = sphi 0, %s64
    %s66 = sphi 0, %s64
    %s67 = sphi 0, %s66
    %s81 = sphi 0, %s67
  $region4: #{densenet_forward.27} parent=0 // loop_header_branch
    %12 = sbr.rel (%p10) target = $region8
  $region5: #{densenet_forward.27} parent=0 // loop_body
    %s14 = ssub.s32 %s9, 1
    %s15 = ssub.s32 %s9, 2
    %s16 = sadd.s32 %s9, 1
    %s17 = ssub.s32 %s9, %s16
    %p18 = scmp.eq.s32.totalorder %s17, 0
    %s20 = sadd.s32 %s19, 1
    %s21 = scalar_select %p18, %s19, %s20
    %p24 = pneg %p18
    %p25 = scmp.eq.s32.totalorder %s9, 1
    %p26 = por %p24, %p25
    %p27 = scmp.ne.s32.totalorder %s19, %s22
    %p28 = scmp.eq.s32.totalorder %s9, 0
    %p29 = por %p27, %p28
    %p30 = scmp.ne.s32.totalorder %s19, %s22
    %p31 = scmp.eq.s32.totalorder %s14, 1
    %p32 = por %p30, %p31
    %p33 = scmp.ne.s32.totalorder %s22, %s23
    %p34 = scmp.eq.s32.totalorder %s14, 0
    %p35 = por %p33, %p34
    %p36 = scmp.ne.s32.totalorder %s22, %s23
    %p37 = scmp.eq.s32.totalorder %s15, 1
    %p38 = por %p36, %p37
    %p40 = scmp.ne.s32.totalorder %s23, %s39
    %p41 = scmp.eq.s32.totalorder %s15, 0
    %p42 = por %p40, %p41
    %s44 = sadd.s32 %s43, 1
    %p47 = scmp.eq.s32.totalorder %s9, 1
    %p48 = scmp.ne.s32.totalorder %s43, %s45
    %p49 = scmp.eq.s32.totalorder %s9, 0
    %p50 = por %p48, %p49
    %p51 = scmp.ne.s32.totalorder %s43, %s45
    %p52 = scmp.eq.s32.totalorder %s14, 1
    %p53 = por %p51, %p52
    %p54 = scmp.ne.s32.totalorder %s45, %s46
    %p55 = scmp.eq.s32.totalorder %s14, 0
    %p56 = por %p54, %p55
    %p57 = scmp.ne.s32.totalorder %s45, %s46
    %p58 = scmp.eq.s32.totalorder %s15, 1
    %p59 = por %p57, %p58
    %p61 = scmp.ne.s32.totalorder %s46, %s60
    %p62 = scmp.eq.s32.totalorder %s15, 0
    %p63 = por %p61, %p62
    %s65 = sadd.s32 %s64, 1
    %p68 = scmp.eq.s32.totalorder %s9, 1
    %p69 = scmp.ne.s32.totalorder %s64, %s66
    %p70 = scmp.eq.s32.totalorder %s9, 0
    %p71 = por %p69, %p70
    %p72 = scmp.ne.s32.totalorder %s64, %s66
    %p73 = scmp.eq.s32.totalorder %s14, 1
    %p74 = por %p72, %p73
    %p75 = scmp.ne.s32.totalorder %s66, %s67
    %p76 = scmp.eq.s32.totalorder %s14, 0
    %p77 = por %p75, %p76
    %p78 = scmp.ne.s32.totalorder %s66, %s67
    %p79 = scmp.eq.s32.totalorder %s15, 1
    %p80 = por %p78, %p79
    %p82 = scmp.ne.s32.totalorder %s67, %s81
    %p83 = scmp.eq.s32.totalorder %s15, 0
    %p84 = por %p82, %p83
    %p85 = scmp.le.s32.totalorder 1, %s9
    %p86 = scmp.lt.s32.totalorder %s9, 3
    %p87 = pnand %p85, %p86
    %p88 = pneg %p87
    // Predicated region
    $region9: #{densenet_forward.27} parent=5 // pred_check
      _
    $region10: #{densenet_forward.27} parent=5 // pred_check_branch
      %90 = sbr.rel (%p87) target = $region12
    $region11: #{densenet_forward.27} parent=5 // pred_region
      %s91 = ssub.s32 %s9, 1
    $region12: #{densenet_forward.27} parent=5 // pred_fallthru
      _
    %p92 = scmp.lt.s32.totalorder %s9, 2
    // Predicated region
    $region13: #{densenet_forward.27} parent=5 // pred_check
      %p93 = pneg %p92
    $region14: #{densenet_forward.27} parent=5 // pred_check_branch
      %95 = sbr.rel (%p93) target = $region16
    $region15: #{densenet_forward.27} parent=5 // pred_region
      // Predicated region
      $region17: #{densenet_forward.27} parent=15 // pred_check
        %p96 = pneg %p29
      $region18: #{densenet_forward.27} parent=15 // pred_check_branch
        %98 = sbr.rel (%p96) target = $region20
      $region19: #{densenet_forward.27} parent=15 // pred_region
        %s99 = smul.u32 8, %s9
        %p100 = scmp.lt.s32.totalorder %s99, 15
        %s101 = scalar_select %p100, %s99, 15
        %s102 = smul.addr %s101, 8
        %s103 = scalar_lea.vmem %s0, %s102
        %s104 = smul.u32 8, %s9
      $region20: #{densenet_forward.27} parent=15 // pred_fallthru
        _
    $region16: #{densenet_forward.27} parent=5 // pred_fallthru
      _
    %p105 = scmp.le.s32.totalorder 1, %s9
    %p106 = scmp.lt.s32.totalorder %s9, 3
    %p107 = pnand %p105, %p106
    %p108 = pneg %p107
    // Predicated region
    $region21: #{densenet_forward.27} parent=5 // pred_check
      _
    $region22: #{densenet_forward.27} parent=5 // pred_check_branch
      %110 = sbr.rel (%p107) target = $region24
    $region23: #{densenet_forward.27} parent=5 // pred_region
      %s111 = ssub.s32 %s9, 1
      %s112 = smul.u32 8, %s14
      %p113 = scmp.lt.s32.totalorder %s112, 15
      %s114 = scalar_select %p113, %s112, 15
      %s115 = smul.addr %s114, 8
      %s116 = scalar_lea.vmem %s0, %s115
      %p117 = pneg %p35
      %p118 = pneg %p32
      %p119 = pneg %p56
      %p120 = pneg %p53
      %p121 = pneg %p77
      %p122 = pneg %p74
      %s123 = smul.u32 8, %s14
      %p124 = scmp.lt.s32.totalorder %s123, 15
      %s125 = scalar_select %p124, %s123, 15
      %s126 = smul.addr %s125, 8
      %s127 = scalar_lea.vmem %s0, %s126
      %s128 = smul.u32 8, %s14
      %p129 = scmp.eq.s32.totalorder %s14, 0
      // Predicated region
      $region25: #{densenet_forward.27} parent=23 // pred_check
        %p130 = pneg %p129
      $region26: #{densenet_forward.27} parent=23 // pred_check_branch
        %132 = sbr.rel (%p130) target = $region28
      $region27: #{densenet_forward.27} parent=23 // pred_region
        %133 = vst [vmem:[%s1] sm:$0x1] 0.0
        %134 = vst [vmem:[%s2] sm:$0x1] 0.0
      $region28: #{densenet_forward.27} parent=23 // pred_fallthru
        _
      %v135 = vld [vmem:[%s127] sm:$0xff]
      %v136 = vld [vmem:[%s127 + $0x8] sm:$0xff]
      %v137 = vld [vmem:[%s127 + $0x10] sm:$0xff]
      %v138 = vld [vmem:[%s127 + $0x18] sm:$0xff]
      %v139 = vld [vmem:[%s127 + $0x20] sm:$0xff]
      %v140 = vld [vmem:[%s127 + $0x28] sm:$0xff]
      %v141 = vld [vmem:[%s127 + $0x30] sm:$0xff]
      %v142 = vld [vmem:[%s127 + $0x38] sm:$0xff]
      %v143 = vlaneseq
      %v144 = vshrl.u32 %v143, 7
      %v145 = vadd.s32 %v144, 8
      %v146 = vadd.s32 %v144, 16
      %v147 = vadd.s32 %v144, 24
      %v148 = vadd.s32 %v144, 32
      %v149 = vadd.s32 %v144, 40
      %v150 = vadd.s32 %v144, 48
      %v151 = vadd.s32 %v144, 56
      %s152 = smul.u32 %s14, 64
      %v153 = vstv %s152
      %v154 = vadd.s32 %v144, %v153
      %v155 = vadd.s32 %v145, %v153
      %v156 = vadd.s32 %v146, %v153
      %v157 = vadd.s32 %v147, %v153
      %v158 = vadd.s32 %v148, %v153
      %v159 = vadd.s32 %v149, %v153
      %v160 = vadd.s32 %v150, %v153
      %v161 = vadd.s32 %v151, %v153
      %vm162 = vcmp.lt.s32.totalorder %v154, 128
      %vm163 = vcmp.lt.s32.totalorder %v155, 128
      %vm164 = vcmp.lt.s32.totalorder %v156, 128
      %vm165 = vcmp.lt.s32.totalorder %v157, 128
      %vm166 = vcmp.lt.s32.totalorder %v158, 128
      %vm167 = vcmp.lt.s32.totalorder %v159, 128
      %vm168 = vcmp.lt.s32.totalorder %v160, 128
      %vm169 = vcmp.lt.s32.totalorder %v161, 128
      %v170 = vsel %vm162, %v135, 0.0
      %v171 = vsel %vm163, %v136, 0.0
      %v172 = vsel %vm164, %v137, 0.0
      %v173 = vsel %vm165, %v138, 0.0
      %v174 = vsel %vm166, %v139, 0.0
      %v175 = vsel %vm167, %v140, 0.0
      %v176 = vsel %vm168, %v141, 0.0
      %v177 = vsel %vm169, %v142, 0.0
      %v178 = vld [vmem:[%s1] sm:$0x1]
      %v179 = vadd.f32 %v170, %v171
      %v180 = vadd.f32 %v179, %v172
      %v181 = vadd.f32 %v180, %v173
      %v182 = vadd.f32 %v181, %v174
      %v183 = vadd.f32 %v182, %v175
      %v184 = vadd.f32 %v183, %v176
      %v185 = vadd.f32 %v184, %v177
      %v186 = vrot.slane %v185, 4
      %v187 = vadd.f32 %v185, %v186
      %v188 = vrot.slane %v187, 2
      %v189 = vadd.f32 %v187, %v188
      %v190 = vrot.slane %v189, 1
      %v191 = vadd.f32 %v189, %v190
      %v192 = vadd.f32 %v178, %v191
      %193 = vst [vmem:[%s1] sm:$0x1] %v192
      %v194 = vld [vmem:[%s2] sm:$0x1]
      %v195 = vmul.f32 %v170, %v170
      %v196 = vmul.f32 %v171, %v171
      %v197 = vmul.f32 %v172, %v172
      %v198 = vmul.f32 %v173, %v173
      %v199 = vmul.f32 %v174, %v174
      %v200 = vmul.f32 %v175, %v175
      %v201 = vmul.f32 %v176, %v176
      %v202 = vmul.f32 %v177, %v177
      %v203 = vadd.f32 %v195, %v196
      %v204 = vadd.f32 %v203, %v197
      %v205 = vadd.f32 %v204, %v198
      %v206 = vadd.f32 %v205, %v199
      %v207 = vadd.f32 %v206, %v200
      %v208 = vadd.f32 %v207, %v201
      %v209 = vadd.f32 %v208, %v202
      %v210 = vrot.slane %v209, 4
      %v211 = vadd.f32 %v209, %v210
      %v212 = vrot.slane %v211, 2
      %v213 = vadd.f32 %v211, %v212
      %v214 = vrot.slane %v213, 1
      %v215 = vadd.f32 %v213, %v214
      %v216 = vadd.f32 %v194, %v215
      %217 = vst [vmem:[%s2] sm:$0x1] %v216
      // Predicated region
      $region29: #{densenet_forward.27} parent=23 // pred_check
        %p218 = pneg %p53
      $region30: #{densenet_forward.27} parent=23 // pred_check_branch
        %220 = sbr.rel (%p218) target = $region32
      $region31: #{densenet_forward.27} parent=23 // pred_region
        _
      $region32: #{densenet_forward.27} parent=23 // pred_fallthru
        _
      // Predicated region
      $region33: #{densenet_forward.27} parent=23 // pred_check
        %p221 = pneg %p74
      $region34: #{densenet_forward.27} parent=23 // pred_check_branch
        %223 = sbr.rel (%p221) target = $region36
      $region35: #{densenet_forward.27} parent=23 // pred_region
        _
      $region36: #{densenet_forward.27} parent=23 // pred_fallthru
        _
      // Predicated region
      $region37: #{densenet_forward.27} parent=23 // pred_check
        %p224 = pneg %p53
      $region38: #{densenet_forward.27} parent=23 // pred_check_branch
        %226 = sbr.rel (%p224) target = $region40
      $region39: #{densenet_forward.27} parent=23 // pred_region
        _
      $region40: #{densenet_forward.27} parent=23 // pred_fallthru
        _
      // Predicated region
      $region41: #{densenet_forward.27} parent=23 // pred_check
        %p227 = pneg %p74
      $region42: #{densenet_forward.27} parent=23 // pred_check_branch
        %229 = sbr.rel (%p227) target = $region44
      $region43: #{densenet_forward.27} parent=23 // pred_region
        _
      $region44: #{densenet_forward.27} parent=23 // pred_fallthru
        _
    $region24: #{densenet_forward.27} parent=5 // pred_fallthru
      _
    %p230 = scmp.le.s32.totalorder 2, %s9
    // Predicated region
    $region45: #{densenet_forward.27} parent=5 // pred_check
      %p231 = pneg %p230
    $region46: #{densenet_forward.27} parent=5 // pred_check_branch
      %233 = sbr.rel (%p231) target = $region48
    $region47: #{densenet_forward.27} parent=5 // pred_region
      %s234 = ssub.s32 %s9, 2
    $region48: #{densenet_forward.27} parent=5 // pred_fallthru
      _
  $region6: #{densenet_forward.27} parent=0 // loop_footer
    %s13 = sadd.s32 1, %s9
  $region7: #{densenet_forward.27} parent=0 // loop_footer_branch
    %8 = sbr.rel target = $region3
  $region8: #{densenet_forward.27} parent=0 // loop_exit
    _

// kernel: densenet_forward.28
$region0: #{densenet_forward.28}
  #allocation0 [shape = 'u32[]', space=smem, size = 0x4, offset = 0x4, fixed_abs, tag = 'smem constant byte address 0x4 - core index']
  #allocation1 [shape = 'u32[72,128]{1,0:T(1,128)}', space=vmem, size = 0x9000, scoped, tag = 'internal scratch']
  %s0 = inlined_call_operand.vmem [shape: f32[128,128], index: 0, kind: input, shape index: {}]
  %s1 = inlined_call_operand.vmem [shape: f32[1,128], index: 1, kind: input, shape index: {}]
  %s2 = inlined_call_operand.vmem [shape: f32[1,128], index: 2, kind: input, shape index: {}]
  %s3 = inlined_call_operand.vmem [shape: bf16[128,128], index: 3, kind: input, shape index: {}]
  %s4 = inlined_call_operand.vmem [shape: f32[128,128], index: 4, kind: output, shape index: {}]
  %s5 = sld [smem:[#allocation0]]
  $region49: #{densenet_forward.28} parent=0
    _
  %s7 = ssub.s32 1, %s5
  %s8 = scalar_select 0, %s7, %s5
  loop: start=0, step=1, limit=4
  $region2: #{densenet_forward.28} parent=0 // loop_pre_header
    _
  $region3: #{densenet_forward.28} parent=0 // loop_header
    %s10 = sphi 0, %s14
    %p11 = scmp.ge.s32.totalorder %s10, 4
    %s20 = sphi 0, %s22
    %s23 = sphi 0, %s20
    %s24 = sphi 0, %s23
    %s40 = sphi 0, %s24
    %s44 = sphi 0, %s44
    %s46 = sphi 0, %s44
    %s47 = sphi 0, %s46
    %s61 = sphi 0, %s47
    %s65 = sphi 0, %s65
    %s67 = sphi 0, %s65
    %s68 = sphi 0, %s67
    %s82 = sphi 0, %s68
    %s86 = sphi 0, %s86
    %s88 = sphi 0, %s86
    %s89 = sphi 0, %s88
    %s103 = sphi 0, %s89
    %s109 = sphi 0, %s111
    %s112 = sphi 0, %s109
    %s113 = sphi 0, %s112
    %s129 = sphi 0, %s113
  $region4: #{densenet_forward.28} parent=0 // loop_header_branch
    %13 = sbr.rel (%p11) target = $region8
  $region5: #{densenet_forward.28} parent=0 // loop_body
    %s15 = ssub.s32 %s10, 1
    %s16 = ssub.s32 %s10, 2
    %s17 = sadd.s32 %s10, 1
    %s18 = ssub.s32 %s10, %s17
    %p19 = scmp.eq.s32.totalorder %s18, 0
    %s21 = sadd.s32 %s20, 1
    %s22 = scalar_select %p19, %s20, %s21
    %p25 = pneg %p19
    %p26 = scmp.eq.s32.totalorder %s10, 1
    %p27 = por %p25, %p26
    %p28 = scmp.ne.s32.totalorder %s20, %s23
    %p29 = scmp.eq.s32.totalorder %s10, 0
    %p30 = por %p28, %p29
    %p31 = scmp.ne.s32.totalorder %s20, %s23
    %p32 = scmp.eq.s32.totalorder %s15, 1
    %p33 = por %p31, %p32
    %p34 = scmp.ne.s32.totalorder %s23, %s24
    %p35 = scmp.eq.s32.totalorder %s15, 0
    %p36 = por %p34, %p35
    %p37 = scmp.ne.s32.totalorder %s23, %s24
    %p38 = scmp.eq.s32.totalorder %s16, 1
    %p39 = por %p37, %p38
    %p41 = scmp.ne.s32.totalorder %s24, %s40
    %p42 = scmp.eq.s32.totalorder %s16, 0
    %p43 = por %p41, %p42
    %s45 = sadd.s32 %s44, 1
    %p48 = scmp.eq.s32.totalorder %s10, 1
    %p49 = scmp.ne.s32.totalorder %s44, %s46
    %p50 = scmp.eq.s32.totalorder %s10, 0
    %p51 = por %p49, %p50
    %p52 = scmp.ne.s32.totalorder %s44, %s46
    %p53 = scmp.eq.s32.totalorder %s15, 1
    %p54 = por %p52, %p53
    %p55 = scmp.ne.s32.totalorder %s46, %s47
    %p56 = scmp.eq.s32.totalorder %s15, 0
    %p57 = por %p55, %p56
    %p58 = scmp.ne.s32.totalorder %s46, %s47
    %p59 = scmp.eq.s32.totalorder %s16, 1
    %p60 = por %p58, %p59
    %p62 = scmp.ne.s32.totalorder %s47, %s61
    %p63 = scmp.eq.s32.totalorder %s16, 0
    %p64 = por %p62, %p63
    %s66 = sadd.s32 %s65, 1
    %p69 = scmp.eq.s32.totalorder %s10, 1
    %p70 = scmp.ne.s32.totalorder %s65, %s67
    %p71 = scmp.eq.s32.totalorder %s10, 0
    %p72 = por %p70, %p71
    %p73 = scmp.ne.s32.totalorder %s65, %s67
    %p74 = scmp.eq.s32.totalorder %s15, 1
    %p75 = por %p73, %p74
    %p76 = scmp.ne.s32.totalorder %s67, %s68
    %p77 = scmp.eq.s32.totalorder %s15, 0
    %p78 = por %p76, %p77
    %p79 = scmp.ne.s32.totalorder %s67, %s68
    %p80 = scmp.eq.s32.totalorder %s16, 1
    %p81 = por %p79, %p80
    %p83 = scmp.ne.s32.totalorder %s68, %s82
    %p84 = scmp.eq.s32.totalorder %s16, 0
    %p85 = por %p83, %p84
    %s87 = sadd.s32 %s86, 1
    %p90 = scmp.eq.s32.totalorder %s10, 1
    %p91 = scmp.ne.s32.totalorder %s86, %s88
    %p92 = scmp.eq.s32.totalorder %s10, 0
    %p93 = por %p91, %p92
    %p94 = scmp.ne.s32.totalorder %s86, %s88
    %p95 = scmp.eq.s32.totalorder %s15, 1
    %p96 = por %p94, %p95
    %p97 = scmp.ne.s32.totalorder %s88, %s89
    %p98 = scmp.eq.s32.totalorder %s15, 0
    %p99 = por %p97, %p98
    %p100 = scmp.ne.s32.totalorder %s88, %s89
    %p101 = scmp.eq.s32.totalorder %s16, 1
    %p102 = por %p100, %p101
    %p104 = scmp.ne.s32.totalorder %s89, %s103
    %p105 = scmp.eq.s32.totalorder %s16, 0
    %p106 = por %p104, %p105
    %s107 = ssub.s32 %s10, %s17
    %p108 = scmp.eq.s32.totalorder %s107, 0
    %s110 = sadd.s32 %s109, 1
    %s111 = scalar_select %p108, %s109, %s110
    %p114 = pneg %p108
    %p115 = scmp.eq.s32.totalorder %s10, 1
    %p116 = por %p114, %p115
    %p117 = scmp.ne.s32.totalorder %s109, %s112
    %p118 = scmp.eq.s32.totalorder %s10, 0
    %p119 = por %p117, %p118
    %p120 = scmp.ne.s32.totalorder %s109, %s112
    %p121 = scmp.eq.s32.totalorder %s15, 1
    %p122 = por %p120, %p121
    %p123 = scmp.ne.s32.totalorder %s112, %s113
    %p124 = scmp.eq.s32.totalorder %s15, 0
    %p125 = por %p123, %p124
    %p126 = scmp.ne.s32.totalorder %s112, %s113
    %p127 = scmp.eq.s32.totalorder %s16, 1
    %p128 = por %p126, %p127
    %p130 = scmp.ne.s32.totalorder %s113, %s129
    %p131 = scmp.eq.s32.totalorder %s16, 0
    %p132 = por %p130, %p131
    %p133 = scmp.le.s32.totalorder 1, %s10
    %p134 = scmp.lt.s32.totalorder %s10, 3
    %p135 = pnand %p133, %p134
    %p136 = pneg %p135
    // Predicated region
    $region9: #{densenet_forward.28} parent=5 // pred_check
      _
    $region10: #{densenet_forward.28} parent=5 // pred_check_branch
      %138 = sbr.rel (%p135) target = $region12
    $region11: #{densenet_forward.28} parent=5 // pred_region
      %s139 = ssub.s32 %s10, 1
      // Predicated region
      $region13: #{densenet_forward.28} parent=11 // pred_check
        %p140 = pneg %p57
      $region14: #{densenet_forward.28} parent=11 // pred_check_branch
        %142 = sbr.rel (%p140) target = $region16
      $region15: #{densenet_forward.28} parent=11 // pred_region
        _
      $region16: #{densenet_forward.28} parent=11 // pred_fallthru
        _
      // Predicated region
      $region17: #{densenet_forward.28} parent=11 // pred_check
        %p143 = pneg %p78
      $region18: #{densenet_forward.28} parent=11 // pred_check_branch
        %145 = sbr.rel (%p143) target = $region20
      $region19: #{densenet_forward.28} parent=11 // pred_region
        _
      $region20: #{densenet_forward.28} parent=11 // pred_fallthru
        _
      // Predicated region
      $region21: #{densenet_forward.28} parent=11 // pred_check
        %p146 = pneg %p99
      $region22: #{densenet_forward.28} parent=11 // pred_check_branch
        %148 = sbr.rel (%p146) target = $region24
      $region23: #{densenet_forward.28} parent=11 // pred_region
        _
      $region24: #{densenet_forward.28} parent=11 // pred_fallthru
        _
    $region12: #{densenet_forward.28} parent=5 // pred_fallthru
      _
    %p149 = scmp.lt.s32.totalorder %s10, 2
    // Predicated region
    $region25: #{densenet_forward.28} parent=5 // pred_check
      %p150 = pneg %p149
    $region26: #{densenet_forward.28} parent=5 // pred_check_branch
      %152 = sbr.rel (%p150) target = $region28
    $region27: #{densenet_forward.28} parent=5 // pred_region
      // Predicated region
      $region29: #{densenet_forward.28} parent=27 // pred_check
        %p153 = pneg %p30
      $region30: #{densenet_forward.28} parent=27 // pred_check_branch
        %155 = sbr.rel (%p153) target = $region32
      $region31: #{densenet_forward.28} parent=27 // pred_region
        %s156 = smul.u32 8, %s10
        %p157 = scmp.lt.s32.totalorder %s156, 15
        %s158 = scalar_select %p157, %s156, 15
        %s159 = smul.addr %s158, 8
        %s160 = scalar_lea.vmem %s0, %s159
        %s161 = smul.u32 8, %s10
      $region32: #{densenet_forward.28} parent=27 // pred_fallthru
        _
    $region28: #{densenet_forward.28} parent=5 // pred_fallthru
      _
    %p162 = scmp.le.s32.totalorder 1, %s10
    %p163 = scmp.lt.s32.totalorder %s10, 3
    %p164 = pnand %p162, %p163
    %p165 = pneg %p164
    // Predicated region
    $region33: #{densenet_forward.28} parent=5 // pred_check
      _
    $region34: #{densenet_forward.28} parent=5 // pred_check_branch
      %167 = sbr.rel (%p164) target = $region36
    $region35: #{densenet_forward.28} parent=5 // pred_region
      %s168 = ssub.s32 %s10, 1
      %s169 = smul.u32 8, %s15
      %p170 = scmp.lt.s32.totalorder %s169, 15
      %s171 = scalar_select %p170, %s169, 15
      %s172 = smul.addr %s171, 8
      %s173 = scalar_lea.vmem %s0, %s172
      %p174 = pneg %p36
      %p175 = pneg %p33
      %p176 = pneg %p57
      %p177 = pneg %p54
      %p178 = pneg %p78
      %p179 = pneg %p75
      %p180 = pneg %p99
      %p181 = pneg %p96
      %p182 = pneg %p125
      %p183 = pneg %p122
      %s184 = smul.u32 8, %s15
      %p185 = scmp.lt.s32.totalorder %s184, 15
      %s186 = scalar_select %p185, %s184, 15
      %s187 = smul.addr %s186, 8
      %s188 = scalar_lea.vmem %s4, %s187
      %s189 = smul.u32 8, %s15
      %p190 = scmp.lt.s32.totalorder %s189, 15
      %s191 = scalar_select %p190, %s189, 15
      %s192 = smul.addr %s191, 8
      %s193 = scalar_lea.vmem %s0, %s192
      %s194 = smul.u32 8, %s15
      %s195 = smul.u32 8, %s15
      %p196 = scmp.lt.s32.totalorder %s195, 15
      %s197 = scalar_select %p196, %s195, 15
      %s198 = smul.addr %s197, 8
      %s199 = scalar_lea.vmem %s4, %s198
      %s200 = smul.u32 8, %s15
      %v201 = vld [vmem:[%s193] sm:$0xff]
      %v202 = vld [vmem:[%s193 + $0x8] sm:$0xff]
      %v203 = vld [vmem:[%s193 + $0x10] sm:$0xff]
      %v204 = vld [vmem:[%s193 + $0x18] sm:$0xff]
      %v205 = vld [vmem:[%s193 + $0x20] sm:$0xff]
      %v206 = vld [vmem:[%s193 + $0x28] sm:$0xff]
      %v207 = vld [vmem:[%s193 + $0x30] sm:$0xff]
      %v208 = vld [vmem:[%s193 + $0x38] sm:$0xff]
      %v209 = vld [vmem:[%s1] sm:$0x1]
      %v211 = vperm.slane %v209, 0
      %v213 = vmul.f32 %v201, %v211
      %v214 = vmul.f32 %v202, %v211
      %v215 = vmul.f32 %v203, %v211
      %v216 = vmul.f32 %v204, %v211
      %v217 = vmul.f32 %v205, %v211
      %v218 = vmul.f32 %v206, %v211
      %v219 = vmul.f32 %v207, %v211
      %v220 = vmul.f32 %v208, %v211
      %v221 = vld [vmem:[%s2] sm:$0x1]
      %v223 = vperm.slane %v221, 0
      %v225 = vadd.f32 %v213, %v223
      %v226 = vadd.f32 %v214, %v223
      %v227 = vadd.f32 %v215, %v223
      %v228 = vadd.f32 %v216, %v223
      %v229 = vadd.f32 %v217, %v223
      %v230 = vadd.f32 %v218, %v223
      %v231 = vadd.f32 %v219, %v223
      %v232 = vadd.f32 %v220, %v223
      %v233 = vmax.f32 %v225, 0.0
      %v234 = vmax.f32 %v226, 0.0
      %v235 = vmax.f32 %v227, 0.0
      %v236 = vmax.f32 %v228, 0.0
      %v237 = vmax.f32 %v229, 0.0
      %v238 = vmax.f32 %v230, 0.0
      %v239 = vmax.f32 %v231, 0.0
      %v240 = vmax.f32 %v232, 0.0
      %v241 = vpack.c.bf16 %v234, %v233
      %v242 = vpack.c.bf16 %v236, %v235
      %v243 = vpack.c.bf16 %v238, %v237
      %v244 = vpack.c.bf16 %v240, %v239
      %v245 = vld [vmem:[%s3] sm:$0xf]
      %v246 = vld [vmem:[%s3 + $0x4] sm:$0xf]
      %v247 = vld [vmem:[%s3 + $0x8] sm:$0xf]
      %v248 = vld [vmem:[%s3 + $0xc] sm:$0xf]
      %v249 = vld [vmem:[%s3 + $0x10] sm:$0xf]
      %v250 = vld [vmem:[%s3 + $0x14] sm:$0xf]
      %v251 = vld [vmem:[%s3 + $0x18] sm:$0xf]
      %v252 = vld [vmem:[%s3 + $0x1c] sm:$0xf]
      %v253 = vld [vmem:[%s3 + $0x20] sm:$0xf]
      %v254 = vld [vmem:[%s3 + $0x24] sm:$0xf]
      %v255 = vld [vmem:[%s3 + $0x28] sm:$0xf]
      %v256 = vld [vmem:[%s3 + $0x2c] sm:$0xf]
      %v257 = vld [vmem:[%s3 + $0x30] sm:$0xf]
      %v258 = vld [vmem:[%s3 + $0x34] sm:$0xf]
      %v259 = vld [vmem:[%s3 + $0x38] sm:$0xf]
      %v260 = vld [vmem:[%s3 + $0x3c] sm:$0xf]
      %v277 = vunpack.c.l.b16 %v245
      %v278 = vunpack.c.l.b16 %v246
      %v279 = vunpack.c.l.b16 %v247
      %v280 = vunpack.c.l.b16 %v248
      %v281 = vunpack.c.l.b16 %v249
      %v282 = vunpack.c.l.b16 %v250
      %v283 = vunpack.c.l.b16 %v251
      %v284 = vunpack.c.l.b16 %v252
      %v285 = vunpack.c.l.b16 %v253
      %v286 = vunpack.c.l.b16 %v254
      %v287 = vunpack.c.l.b16 %v255
      %v288 = vunpack.c.l.b16 %v256
      %v289 = vunpack.c.l.b16 %v257
      %v290 = vunpack.c.l.b16 %v258
      %v291 = vunpack.c.l.b16 %v259
      %v292 = vunpack.c.l.b16 %v260
      %v293 = vpack.c.b16 %v278, %v277
      %v294 = vpack.c.b16 %v280, %v279
      %v295 = vpack.c.b16 %v282, %v281
      %v296 = vpack.c.b16 %v284, %v283
      %v297 = vpack.c.b16 %v286, %v285
      %v298 = vpack.c.b16 %v288, %v287
      %v299 = vpack.c.b16 %v290, %v289
      %v300 = vpack.c.b16 %v292, %v291
      %309 = vmatpush.bf16.msra.mxu0 %v300
      %310 = vmatpush.bf16.msra.mxu0 %v299
      %311 = vmatpush.bf16.msra.mxu0 %v298
      %312 = vmatpush.bf16.msra.mxu0 %v297
      %313 = vmatpush.bf16.msra.mxu0 %v296
      %314 = vmatpush.bf16.msra.mxu0 %v295
      %315 = vmatpush.bf16.msra.mxu0 %v294
      %316 = vmatpush.bf16.msra.mxu0 %v293
      %317 = vmatmul.bf16.gmra.mxu0 %v241
      %v318 = vpop.f32.mrf.mxu0
      %v319 = vadd.f32 0.0, %v318
      %v320 = vpop.f32.mrf.mxu0
      %v321 = vadd.f32 0.0, %v320
      %322 = vmatmul.bf16.gmra.mxu0 %v242
      %v323 = vpop.f32.mrf.mxu0
      %v324 = vadd.f32 0.0, %v323
      %v325 = vpop.f32.mrf.mxu0
      %v326 = vadd.f32 0.0, %v325
      %327 = vmatmul.bf16.gmra.mxu0 %v243
      %v328 = vpop.f32.mrf.mxu0
      %v329 = vadd.f32 0.0, %v328
      %v330 = vpop.f32.mrf.mxu0
      %v331 = vadd.f32 0.0, %v330
      %332 = vmatmul.bf16.gmra.mxu0 %v244
      %v333 = vpop.f32.mrf.mxu0
      %v334 = vadd.f32 0.0, %v333
      %v335 = vpop.f32.mrf.mxu0
      %v336 = vadd.f32 0.0, %v335
      %337 = vdwg.mxu0
      %338 = vst [vmem:[%s199] sm:$0xff] %v319
      %339 = vst [vmem:[%s199 + $0x8] sm:$0xff] %v321
      %340 = vst [vmem:[%s199 + $0x10] sm:$0xff] %v324
      %341 = vst [vmem:[%s199 + $0x18] sm:$0xff] %v326
      %342 = vst [vmem:[%s199 + $0x20] sm:$0xff] %v329
      %343 = vst [vmem:[%s199 + $0x28] sm:$0xff] %v331
      %344 = vst [vmem:[%s199 + $0x30] sm:$0xff] %v334
      %345 = vst [vmem:[%s199 + $0x38] sm:$0xff] %v336
      %s346 = smul.u32 8, %s15
      %p347 = scmp.lt.s32.totalorder %s346, 15
      %s348 = scalar_select %p347, %s346, 15
      %s349 = smul.addr %s348, 8
      %s350 = scalar_lea.vmem %s4, %s349
      // Predicated region
      $region37: #{densenet_forward.28} parent=35 // pred_check
        %p351 = pneg %p122
      $region38: #{densenet_forward.28} parent=35 // pred_check_branch
        %353 = sbr.rel (%p351) target = $region40
      $region39: #{densenet_forward.28} parent=35 // pred_region
        %s354 = smul.u32 8, %s15
      $region40: #{densenet_forward.28} parent=35 // pred_fallthru
        _
    $region36: #{densenet_forward.28} parent=5 // pred_fallthru
      _
    %p355 = scmp.le.s32.totalorder 2, %s10
    // Predicated region
    $region41: #{densenet_forward.28} parent=5 // pred_check
      %p356 = pneg %p355
    $region42: #{densenet_forward.28} parent=5 // pred_check_branch
      %358 = sbr.rel (%p356) target = $region44
    $region43: #{densenet_forward.28} parent=5 // pred_region
      %s359 = ssub.s32 %s10, 2
      // Predicated region
      $region45: #{densenet_forward.28} parent=43 // pred_check
        %p360 = pneg %p128
      $region46: #{densenet_forward.28} parent=43 // pred_check_branch
        %362 = sbr.rel (%p360) target = $region48
      $region47: #{densenet_forward.28} parent=43 // pred_region
        %s363 = smul.u32 8, %s16
        %p364 = scmp.lt.s32.totalorder %s363, 15
        %s365 = scalar_select %p364, %s363, 15
        %s366 = smul.addr %s365, 8
        %s367 = scalar_lea.vmem %s4, %s366
      $region48: #{densenet_forward.28} parent=43 // pred_fallthru
        _
    $region44: #{densenet_forward.28} parent=5 // pred_fallthru
      _
  $region6: #{densenet_forward.28} parent=0 // loop_footer
    %s14 = sadd.s32 1, %s10
  $region7: #{densenet_forward.28} parent=0 // loop_footer_branch
    %9 = sbr.rel target = $region3
  $region8: #{densenet_forward.28} parent=0 // loop_exit
    _

// kernel: densenet_forward.30
$region0: #{densenet_forward.30}
  #allocation0 [shape = 'u32[]', space=smem, size = 0x4, offset = 0x4, fixed_abs, tag = 'smem constant byte address 0x4 - core index']
  #allocation1 [shape = 'u32[72,128]{1,0:T(1,128)}', space=vmem, size = 0x9000, scoped, tag = 'internal scratch']
  %s0 = inlined_call_operand.vmem [shape: f32[2,120,128], index: 0, kind: input, shape index: {}]
  %s1 = inlined_call_operand.vmem [shape: f32[120,1], index: 1, kind: input, shape index: {}]
  %s2 = inlined_call_operand.vmem [shape: f32[1,128], index: 2, kind: input, shape index: {}]
  %s3 = inlined_call_operand.vmem [shape: f32[1,128], index: 3, kind: input, shape index: {}]
  %s4 = inlined_call_operand.vmem [shape: bf16[9,128,8], index: 4, kind: input, shape index: {}]
  %s5 = inlined_call_operand.vmem [shape: f32[2,80,8], index: 5, kind: output, shape index: {}]
  %s6 = sld [smem:[#allocation0]]
  $region53: #{densenet_forward.30} parent=0
    _
  %s8 = ssub.s32 1, %s6
  %s9 = scalar_select 0, %s8, %s6
  loop: start=0, step=1, limit=4
  $region2: #{densenet_forward.30} parent=0 // loop_pre_header
    _
  $region3: #{densenet_forward.30} parent=0 // loop_header
    %s11 = sphi 0, %s15
    %p12 = scmp.ge.s32.totalorder %s11, 4
    %s21 = sphi 0, %s23
    %s24 = sphi 0, %s21
    %s25 = sphi 0, %s24
    %s41 = sphi 0, %s25
    %s45 = sphi 0, %s45
    %s47 = sphi 0, %s45
    %s48 = sphi 0, %s47
    %s62 = sphi 0, %s48
    %s66 = sphi 0, %s66
    %s68 = sphi 0, %s66
    %s69 = sphi 0, %s68
    %s83 = sphi 0, %s69
    %s87 = sphi 0, %s87
    %s89 = sphi 0, %s87
    %s90 = sphi 0, %s89
    %s104 = sphi 0, %s90
    %s108 = sphi 0, %s108
    %s110 = sphi 0, %s108
    %s111 = sphi 0, %s110
    %s125 = sphi 0, %s111
    %s131 = sphi 0, %s133
    %s134 = sphi 0, %s131
    %s135 = sphi 0, %s134
    %s151 = sphi 0, %s135
  $region4: #{densenet_forward.30} parent=0 // loop_header_branch
    %14 = sbr.rel (%p12) target = $region8
  $region5: #{densenet_forward.30} parent=0 // loop_body
    %s16 = ssub.s32 %s11, 1
    %s17 = ssub.s32 %s11, 2
    %s18 = sadd.s32 %s11, 1
    %s19 = ssub.s32 %s11, %s18
    %p20 = scmp.eq.s32.totalorder %s19, 0
    %s22 = sadd.s32 %s21, 1
    %s23 = scalar_select %p20, %s21, %s22
    %p26 = pneg %p20
    %p27 = scmp.eq.s32.totalorder %s11, 1
    %p28 = por %p26, %p27
    %p29 = scmp.ne.s32.totalorder %s21, %s24
    %p30 = scmp.eq.s32.totalorder %s11, 0
    %p31 = por %p29, %p30
    %p32 = scmp.ne.s32.totalorder %s21, %s24
    %p33 = scmp.eq.s32.totalorder %s16, 1
    %p34 = por %p32, %p33
    %p35 = scmp.ne.s32.totalorder %s24, %s25
    %p36 = scmp.eq.s32.totalorder %s16, 0
    %p37 = por %p35, %p36
    %p38 = scmp.ne.s32.totalorder %s24, %s25
    %p39 = scmp.eq.s32.totalorder %s17, 1
    %p40 = por %p38, %p39
    %p42 = scmp.ne.s32.totalorder %s25, %s41
    %p43 = scmp.eq.s32.totalorder %s17, 0
    %p44 = por %p42, %p43
    %s46 = sadd.s32 %s45, 1
    %p49 = scmp.eq.s32.totalorder %s11, 1
    %p50 = scmp.ne.s32.totalorder %s45, %s47
    %p51 = scmp.eq.s32.totalorder %s11, 0
    %p52 = por %p50, %p51
    %p53 = scmp.ne.s32.totalorder %s45, %s47
    %p54 = scmp.eq.s32.totalorder %s16, 1
    %p55 = por %p53, %p54
    %p56 = scmp.ne.s32.totalorder %s47, %s48
    %p57 = scmp.eq.s32.totalorder %s16, 0
    %p58 = por %p56, %p57
    %p59 = scmp.ne.s32.totalorder %s47, %s48
    %p60 = scmp.eq.s32.totalorder %s17, 1
    %p61 = por %p59, %p60
    %p63 = scmp.ne.s32.totalorder %s48, %s62
    %p64 = scmp.eq.s32.totalorder %s17, 0
    %p65 = por %p63, %p64
    %s67 = sadd.s32 %s66, 1
    %p70 = scmp.eq.s32.totalorder %s11, 1
    %p71 = scmp.ne.s32.totalorder %s66, %s68
    %p72 = scmp.eq.s32.totalorder %s11, 0
    %p73 = por %p71, %p72
    %p74 = scmp.ne.s32.totalorder %s66, %s68
    %p75 = scmp.eq.s32.totalorder %s16, 1
    %p76 = por %p74, %p75
    %p77 = scmp.ne.s32.totalorder %s68, %s69
    %p78 = scmp.eq.s32.totalorder %s16, 0
    %p79 = por %p77, %p78
    %p80 = scmp.ne.s32.totalorder %s68, %s69
    %p81 = scmp.eq.s32.totalorder %s17, 1
    %p82 = por %p80, %p81
    %p84 = scmp.ne.s32.totalorder %s69, %s83
    %p85 = scmp.eq.s32.totalorder %s17, 0
    %p86 = por %p84, %p85
    %s88 = sadd.s32 %s87, 1
    %p91 = scmp.eq.s32.totalorder %s11, 1
    %p92 = scmp.ne.s32.totalorder %s87, %s89
    %p93 = scmp.eq.s32.totalorder %s11, 0
    %p94 = por %p92, %p93
    %p95 = scmp.ne.s32.totalorder %s87, %s89
    %p96 = scmp.eq.s32.totalorder %s16, 1
    %p97 = por %p95, %p96
    %p98 = scmp.ne.s32.totalorder %s89, %s90
    %p99 = scmp.eq.s32.totalorder %s16, 0
    %p100 = por %p98, %p99
    %p101 = scmp.ne.s32.totalorder %s89, %s90
    %p102 = scmp.eq.s32.totalorder %s17, 1
    %p103 = por %p101, %p102
    %p105 = scmp.ne.s32.totalorder %s90, %s104
    %p106 = scmp.eq.s32.totalorder %s17, 0
    %p107 = por %p105, %p106
    %s109 = sadd.s32 %s108, 1
    %p112 = scmp.eq.s32.totalorder %s11, 1
    %p113 = scmp.ne.s32.totalorder %s108, %s110
    %p114 = scmp.eq.s32.totalorder %s11, 0
    %p115 = por %p113, %p114
    %p116 = scmp.ne.s32.totalorder %s108, %s110
    %p117 = scmp.eq.s32.totalorder %s16, 1
    %p118 = por %p116, %p117
    %p119 = scmp.ne.s32.totalorder %s110, %s111
    %p120 = scmp.eq.s32.totalorder %s16, 0
    %p121 = por %p119, %p120
    %p122 = scmp.ne.s32.totalorder %s110, %s111
    %p123 = scmp.eq.s32.totalorder %s17, 1
    %p124 = por %p122, %p123
    %p126 = scmp.ne.s32.totalorder %s111, %s125
    %p127 = scmp.eq.s32.totalorder %s17, 0
    %p128 = por %p126, %p127
    %s129 = ssub.s32 %s11, %s18
    %p130 = scmp.eq.s32.totalorder %s129, 0
    %s132 = sadd.s32 %s131, 1
    %s133 = scalar_select %p130, %s131, %s132
    %p136 = pneg %p130
    %p137 = scmp.eq.s32.totalorder %s11, 1
    %p138 = por %p136, %p137
    %p139 = scmp.ne.s32.totalorder %s131, %s134
    %p140 = scmp.eq.s32.totalorder %s11, 0
    %p141 = por %p139, %p140
    %p142 = scmp.ne.s32.totalorder %s131, %s134
    %p143 = scmp.eq.s32.totalorder %s16, 1
    %p144 = por %p142, %p143
    %p145 = scmp.ne.s32.totalorder %s134, %s135
    %p146 = scmp.eq.s32.totalorder %s16, 0
    %p147 = por %p145, %p146
    %p148 = scmp.ne.s32.totalorder %s134, %s135
    %p149 = scmp.eq.s32.totalorder %s17, 1
    %p150 = por %p148, %p149
    %p152 = scmp.ne.s32.totalorder %s135, %s151
    %p153 = scmp.eq.s32.totalorder %s17, 0
    %p154 = por %p152, %p153
    %p155 = scmp.le.s32.totalorder 1, %s11
    %p156 = scmp.lt.s32.totalorder %s11, 3
    %p157 = pnand %p155, %p156
    %p158 = pneg %p157
    // Predicated region
    $region9: #{densenet_forward.30} parent=5 // pred_check
      _
    $region10: #{densenet_forward.30} parent=5 // pred_check_branch
      %160 = sbr.rel (%p157) target = $region12
    $region11: #{densenet_forward.30} parent=5 // pred_region
      %s161 = ssub.s32 %s11, 1
      // Predicated region
      $region13: #{densenet_forward.30} parent=11 // pred_check
        %p162 = pneg %p58
      $region14: #{densenet_forward.30} parent=11 // pred_check_branch
        %164 = sbr.rel (%p162) target = $region16
      $region15: #{densenet_forward.30} parent=11 // pred_region
        _
      $region16: #{densenet_forward.30} parent=11 // pred_fallthru
        _
      // Predicated region
      $region17: #{densenet_forward.30} parent=11 // pred_check
        %p165 = pneg %p79
      $region18: #{densenet_forward.30} parent=11 // pred_check_branch
        %167 = sbr.rel (%p165) target = $region20
      $region19: #{densenet_forward.30} parent=11 // pred_region
        _
      $region20: #{densenet_forward.30} parent=11 // pred_fallthru
        _
      // Predicated region
      $region21: #{densenet_forward.30} parent=11 // pred_check
        %p168 = pneg %p100
      $region22: #{densenet_forward.30} parent=11 // pred_check_branch
        %170 = sbr.rel (%p168) target = $region24
      $region23: #{densenet_forward.30} parent=11 // pred_region
        _
      $region24: #{densenet_forward.30} parent=11 // pred_fallthru
        _
      // Predicated region
      $region25: #{densenet_forward.30} parent=11 // pred_check
        %p171 = pneg %p121
      $region26: #{densenet_forward.30} parent=11 // pred_check_branch
        %173 = sbr.rel (%p171) target = $region28
      $region27: #{densenet_forward.30} parent=11 // pred_region
        _
      $region28: #{densenet_forward.30} parent=11 // pred_fallthru
        _
    $region12: #{densenet_forward.30} parent=5 // pred_fallthru
      _
    %p174 = scmp.lt.s32.totalorder %s11, 2
    // Predicated region
    $region29: #{densenet_forward.30} parent=5 // pred_check
      %p175 = pneg %p174
    $region30: #{densenet_forward.30} parent=5 // pred_check_branch
      %177 = sbr.rel (%p175) target = $region32
    $region31: #{densenet_forward.30} parent=5 // pred_region
      // Predicated region
      $region33: #{densenet_forward.30} parent=31 // pred_check
        %p178 = pneg %p31
      $region34: #{densenet_forward.30} parent=31 // pred_check_branch
        %180 = sbr.rel (%p178) target = $region36
      $region35: #{densenet_forward.30} parent=31 // pred_region
        %p181 = scmp.lt.s32.totalorder %s11, 1
        %s182 = scalar_select %p181, %s11, 1
        %s183 = smul.addr %s182, 15
        %s184 = smul.addr %s183, 8
        %s185 = scalar_lea.vmem %s0, %s184
      $region36: #{densenet_forward.30} parent=31 // pred_fallthru
        _
    $region32: #{densenet_forward.30} parent=5 // pred_fallthru
      _
    %p186 = scmp.le.s32.totalorder 1, %s11
    %p187 = scmp.lt.s32.totalorder %s11, 3
    %p188 = pnand %p186, %p187
    %p189 = pneg %p188
    // Predicated region
    $region37: #{densenet_forward.30} parent=5 // pred_check
      _
    $region38: #{densenet_forward.30} parent=5 // pred_check_branch
      %191 = sbr.rel (%p188) target = $region40
    $region39: #{densenet_forward.30} parent=5 // pred_region
      %s192 = ssub.s32 %s11, 1
      %p193 = scmp.lt.s32.totalorder %s16, 1
      %s194 = scalar_select %p193, %s16, 1
      %s195 = smul.addr %s194, 15
      %s196 = smul.addr %s195, 8
      %s197 = scalar_lea.vmem %s0, %s196
      %p198 = pneg %p37
      %p199 = pneg %p34
      %p200 = pneg %p58
      %p201 = pneg %p55
      %p202 = pneg %p79
      %p203 = pneg %p76
      %p204 = pneg %p100
      %p205 = pneg %p97
      %p206 = pneg %p121
      %p207 = pneg %p118
      %p208 = pneg %p147
      %p209 = pneg %p144
      %p210 = scmp.lt.s32.totalorder %s16, 1
      %s211 = scalar_select %p210, %s16, 1
      %s212 = smul.addr %s211, 10
      %s213 = smul.addr %s212, 8
      %s214 = scalar_lea.vmem %s5, %s213
      %p215 = scmp.lt.s32.totalorder %s16, 1
      %s216 = scalar_select %p215, %s16, 1
      %s217 = smul.addr %s216, 15
      %s218 = smul.addr %s217, 8
      %s219 = scalar_lea.vmem %s0, %s218
      %p220 = scmp.lt.s32.totalorder %s16, 1
      %s221 = scalar_select %p220, %s16, 1
      %s222 = smul.addr %s221, 10
      %s223 = smul.addr %s222, 8
      %s224 = scalar_lea.vmem %s5, %s223
      %v225 = vld [vmem:[%s219 + $0x8] sm:$0xff]
      %v226 = vld [vmem:[%s219 + $0x10] sm:$0xff]
      %v227 = vld [vmem:[%s219 + $0x18] sm:$0xff]
      %v228 = vld [vmem:[%s219 + $0x20] sm:$0xff]
      %v229 = vld [vmem:[%s219 + $0x28] sm:$0xff]
      %v230 = vld [vmem:[%s219 + $0x30] sm:$0xff]
      %v231 = vld [vmem:[%s219 + $0x38] sm:$0xff]
      %v232 = vld [vmem:[%s219 + $0x40] sm:$0xff]
      %v233 = vld [vmem:[%s219 + $0x48] sm:$0xff]
      %v234 = vld [vmem:[%s219 + $0x50] sm:$0xff]
      %v235 = vld [vmem:[%s219 + $0x58] sm:$0xff]
      %v236 = vld [vmem:[%s219 + $0x60] sm:$0xff]
      %v237 = vld [vmem:[%s219 + $0x68] sm:$0xff]
      %v238 = vld [vmem:[%s2] sm:$0x1]
      %v240 = vperm.slane %v238, 0
      %v242 = vmul.f32 %v225, %v240
      %v243 = vmul.f32 %v226, %v240
      %v244 = vmul.f32 %v227, %v240
      %v245 = vmul.f32 %v228, %v240
      %v246 = vmul.f32 %v229, %v240
      %v247 = vmul.f32 %v230, %v240
      %v248 = vmul.f32 %v231, %v240
      %v249 = vmul.f32 %v232, %v240
      %v250 = vmul.f32 %v233, %v240
      %v251 = vmul.f32 %v234, %v240
      %v252 = vmul.f32 %v235, %v240
      %v253 = vmul.f32 %v236, %v240
      %v254 = vmul.f32 %v237, %v240
      %v255 = vld [vmem:[%s3] sm:$0x1]
      %v257 = vperm.slane %v255, 0
      %v259 = vadd.f32 %v242, %v257
      %v260 = vadd.f32 %v243, %v257
      %v261 = vadd.f32 %v244, %v257
      %v262 = vadd.f32 %v245, %v257
      %v263 = vadd.f32 %v246, %v257
      %v264 = vadd.f32 %v247, %v257
      %v265 = vadd.f32 %v248, %v257
      %v266 = vadd.f32 %v249, %v257
      %v267 = vadd.f32 %v250, %v257
      %v268 = vadd.f32 %v251, %v257
      %v269 = vadd.f32 %v252, %v257
      %v270 = vadd.f32 %v253, %v257
      %v271 = vadd.f32 %v254, %v257
      %v272 = vmax.f32 %v259, 0.0
      %v273 = vmax.f32 %v260, 0.0
      %v274 = vmax.f32 %v261, 0.0
      %v275 = vmax.f32 %v262, 0.0
      %v276 = vmax.f32 %v263, 0.0
      %v277 = vmax.f32 %v264, 0.0
      %v278 = vmax.f32 %v265, 0.0
      %v279 = vmax.f32 %v266, 0.0
      %v280 = vmax.f32 %v267, 0.0
      %v281 = vmax.f32 %v268, 0.0
      %v282 = vmax.f32 %v269, 0.0
      %v283 = vmax.f32 %v270, 0.0
      %v284 = vmax.f32 %v271, 0.0
      %v285 = vld [vmem:[%s1 + $0x8] sm:$0xff]
      %v286 = vld [vmem:[%s1 + $0x10] sm:$0xff]
      %v287 = vld [vmem:[%s1 + $0x18] sm:$0xff]
      %v288 = vld [vmem:[%s1 + $0x20] sm:$0xff]
      %v289 = vld [vmem:[%s1 + $0x28] sm:$0xff]
      %v290 = vld [vmem:[%s1 + $0x30] sm:$0xff]
      %v291 = vld [vmem:[%s1 + $0x38] sm:$0xff]
      %v292 = vld [vmem:[%s1 + $0x40] sm:$0xff]
      %v293 = vld [vmem:[%s1 + $0x48] sm:$0xff]
      %v294 = vld [vmem:[%s1 + $0x50] sm:$0xff]
      %v295 = vld [vmem:[%s1 + $0x58] sm:$0xff]
      %v296 = vld [vmem:[%s1 + $0x60] sm:$0xff]
      %v297 = vld [vmem:[%s1 + $0x68] sm:$0xff]
      %299 = vset.pattern.permute.xlu0 0
      %300 = vperm.xlu0 %299, %v285
      %v301 = vpop.permute.xlu0 %300
      %304 = vset.pattern.permute.xlu0 0
      %305 = vperm.xlu0 %304, %v286
      %v306 = vpop.permute.xlu0 %305
      %309 = vset.pattern.permute.xlu0 0
      %310 = vperm.xlu0 %309, %v287
      %v311 = vpop.permute.xlu0 %310
      %314 = vset.pattern.permute.xlu0 0
      %315 = vperm.xlu0 %314, %v288
      %v316 = vpop.permute.xlu0 %315
      %319 = vset.pattern.permute.xlu0 0
      %320 = vperm.xlu0 %319, %v289
      %v321 = vpop.permute.xlu0 %320
      %324 = vset.pattern.permute.xlu0 0
      %325 = vperm.xlu0 %324, %v290
      %v326 = vpop.permute.xlu0 %325
      %329 = vset.pattern.permute.xlu0 0
      %330 = vperm.xlu0 %329, %v291
      %v331 = vpop.permute.xlu0 %330
      %334 = vset.pattern.permute.xlu0 0
      %335 = vperm.xlu0 %334, %v292
      %v336 = vpop.permute.xlu0 %335
      %339 = vset.pattern.permute.xlu0 0
      %340 = vperm.xlu0 %339, %v293
      %v341 = vpop.permute.xlu0 %340
      %344 = vset.pattern.permute.xlu0 0
      %345 = vperm.xlu0 %344, %v294
      %v346 = vpop.permute.xlu0 %345
      %349 = vset.pattern.permute.xlu0 0
      %350 = vperm.xlu0 %349, %v295
      %v351 = vpop.permute.xlu0 %350
      %354 = vset.pattern.permute.xlu0 0
      %355 = vperm.xlu0 %354, %v296
      %v356 = vpop.permute.xlu0 %355
      %359 = vset.pattern.permute.xlu0 0
      %360 = vperm.xlu0 %359, %v297
      %v361 = vpop.permute.xlu0 %360
      %v363 = vmul.f32 %v272, %v301
      %v364 = vmul.f32 %v273, %v306
      %v365 = vmul.f32 %v274, %v311
      %v366 = vmul.f32 %v275, %v316
      %v367 = vmul.f32 %v276, %v321
      %v368 = vmul.f32 %v277, %v326
      %v369 = vmul.f32 %v278, %v331
      %v370 = vmul.f32 %v279, %v336
      %v371 = vmul.f32 %v280, %v341
      %v372 = vmul.f32 %v281, %v346
      %v373 = vmul.f32 %v282, %v351
      %v374 = vmul.f32 %v283, %v356
      %v375 = vmul.f32 %v284, %v361
      %v376 = vpack.c.bf16 %v363, %v363
      %v377 = vpack.c.bf16 %v364, %v364
      %v378 = vpack.c.bf16 %v365, %v365
      %v379 = vpack.c.bf16 %v366, %v366
      %v380 = vpack.c.bf16 %v367, %v367
      %v381 = vpack.c.bf16 %v368, %v368
      %v382 = vpack.c.bf16 %v369, %v369
      %v383 = vpack.c.bf16 %v370, %v370
      %v384 = vpack.c.bf16 %v371, %v371
      %v385 = vpack.c.bf16 %v372, %v372
      %v386 = vpack.c.bf16 %v373, %v373
      %v387 = vpack.c.bf16 %v374, %v374
      %v388 = vpack.c.bf16 %v375, %v375
      %v389 = vld [vmem:[%s4] sm:$0xf]
      %v390 = vld [vmem:[%s4 + $0x4] sm:$0xf]
      %v391 = vld [vmem:[%s4 + $0x8] sm:$0xf]
      %v392 = vld [vmem:[%s4 + $0xc] sm:$0xf]
      %v393 = vld [vmem:[%s4 + $0x10] sm:$0xf]
      %v394 = vld [vmem:[%s4 + $0x14] sm:$0xf]
      %v395 = vld [vmem:[%s4 + $0x18] sm:$0xf]
      %v396 = vld [vmem:[%s4 + $0x1c] sm:$0xf]
      %v397 = vld [vmem:[%s4 + $0x20] sm:$0xf]
      %v398 = vld [vmem:[%s4 + $0x24] sm:$0xf]
      %v399 = vld [vmem:[%s4 + $0x28] sm:$0xf]
      %v400 = vld [vmem:[%s4 + $0x2c] sm:$0xf]
      %v401 = vld [vmem:[%s4 + $0x30] sm:$0xf]
      %v402 = vld [vmem:[%s4 + $0x34] sm:$0xf]
      %v403 = vld [vmem:[%s4 + $0x38] sm:$0xf]
      %v404 = vld [vmem:[%s4 + $0x3c] sm:$0xf]
      %s405 = scalar_lea.vmem %s4, 64
      %v406 = vld [vmem:[%s405] sm:$0xf]
      %v407 = vld [vmem:[%s405 + $0x4] sm:$0xf]
      %v408 = vld [vmem:[%s405 + $0x8] sm:$0xf]
      %v409 = vld [vmem:[%s405 + $0xc] sm:$0xf]
      %v410 = vld [vmem:[%s405 + $0x10] sm:$0xf]
      %v411 = vld [vmem:[%s405 + $0x14] sm:$0xf]
      %v412 = vld [vmem:[%s405 + $0x18] sm:$0xf]
      %v413 = vld [vmem:[%s405 + $0x1c] sm:$0xf]
      %v414 = vld [vmem:[%s405 + $0x20] sm:$0xf]
      %v415 = vld [vmem:[%s405 + $0x24] sm:$0xf]
      %v416 = vld [vmem:[%s405 + $0x28] sm:$0xf]
      %v417 = vld [vmem:[%s405 + $0x2c] sm:$0xf]
      %v418 = vld [vmem:[%s405 + $0x30] sm:$0xf]
      %v419 = vld [vmem:[%s405 + $0x34] sm:$0xf]
      %v420 = vld [vmem:[%s405 + $0x38] sm:$0xf]
      %v421 = vld [vmem:[%s405 + $0x3c] sm:$0xf]
      %v433 = vunpack.c.l.b16 %v376
      %v434 = vunpack.c.l.b16 %v377
      %v435 = vunpack.c.l.b16 %v378
      %v436 = vunpack.c.l.b16 %v379
      %v437 = vunpack.c.l.b16 %v380
      %v438 = vunpack.c.l.b16 %v381
      %v439 = vunpack.c.l.b16 %v382
      %v440 = vunpack.c.l.b16 %v383
      %v441 = vunpack.c.l.b16 %v384
      %v442 = vunpack.c.l.b16 %v385
      %v443 = vunpack.c.l.b16 %v386
      %v444 = vpack.c.b16 %v434, %v433
      %v445 = vpack.c.b16 %v436, %v435
      %v446 = vpack.c.b16 %v438, %v437
      %v447 = vpack.c.b16 %v440, %v439
      %v448 = vpack.c.b16 %v442, %v441
      %v449 = vpack.c.b16 %v443, %v443
      %vm450 = vcmask 1046528
      %v451 = vrot.slane %v444, 1
      %v452 = vrot.slane %v445, 1
      %v453 = vsel %vm450, %v451, %v452
      %v454 = vrot.slane %v446, 1
      %v455 = vsel %vm450, %v452, %v454
      %v456 = vrot.slane %v447, 1
      %v457 = vsel %vm450, %v454, %v456
      %v458 = vrot.slane %v448, 1
      %v459 = vsel %vm450, %v456, %v458
      %v460 = vrot.slane %v449, 1
      %v461 = vsel %vm450, %v458, %v460
      %v483 = vunpack.c.l.b16 %v406
      %v484 = vunpack.c.l.b16 %v407
      %v485 = vunpack.c.l.b16 %v408
      %v486 = vunpack.c.l.b16 %v409
      %v487 = vunpack.c.l.b16 %v410
      %v488 = vunpack.c.l.b16 %v411
      %v489 = vunpack.c.l.b16 %v412
      %v490 = vunpack.c.l.b16 %v413
      %v491 = vunpack.c.l.b16 %v414
      %v492 = vunpack.c.l.b16 %v415
      %v493 = vunpack.c.l.b16 %v416
      %v494 = vunpack.c.l.b16 %v417
      %v495 = vunpack.c.l.b16 %v418
      %v496 = vunpack.c.l.b16 %v419
      %v497 = vunpack.c.l.b16 %v420
      %v498 = vunpack.c.l.b16 %v421
      %v499 = vpack.c.b16 %v484, %v483
      %v500 = vpack.c.b16 %v486, %v485
      %v501 = vpack.c.b16 %v488, %v487
      %v502 = vpack.c.b16 %v490, %v489
      %v503 = vpack.c.b16 %v492, %v491
      %v504 = vpack.c.b16 %v494, %v493
      %v505 = vpack.c.b16 %v496, %v495
      %v506 = vpack.c.b16 %v498, %v497
      %515 = vmatpush.bf16.msra.mxu0 %v506
      %516 = vmatpush.bf16.msra.mxu0 %v505
      %517 = vmatpush.bf16.msra.mxu0 %v504
      %518 = vmatpush.bf16.msra.mxu0 %v503
      %519 = vmatpush.bf16.msra.mxu0 %v502
      %520 = vmatpush.bf16.msra.mxu0 %v501
      %521 = vmatpush.bf16.msra.mxu0 %v500
      %522 = vmatpush.bf16.msra.mxu0 %v499
      %523 = vmatmul.bf16.gmra.mxu0 %v453
      %v524 = vpop.f32.mrf.mxu0
      %v525 = vadd.f32 0.0, %v524
      %v526 = vpop.f32.mrf.mxu0
      %v527 = vadd.f32 0.0, %v526
      %528 = vmatmul.bf16.gmra.mxu0 %v455
      %v529 = vpop.f32.mrf.mxu0
      %v530 = vadd.f32 0.0, %v529
      %v531 = vpop.f32.mrf.mxu0
      %v532 = vadd.f32 0.0, %v531
      %533 = vmatmul.bf16.gmra.mxu0 %v457
      %v534 = vpop.f32.mrf.mxu0
      %v535 = vadd.f32 0.0, %v534
      %v536 = vpop.f32.mrf.mxu0
      %v537 = vadd.f32 0.0, %v536
      %538 = vmatmul.bf16.gmra.mxu0 %v459
      %v539 = vpop.f32.mrf.mxu0
      %v540 = vadd.f32 0.0, %v539
      %v541 = vpop.f32.mrf.mxu0
      %v542 = vadd.f32 0.0, %v541
      %543 = vmatmul.bf16.gmra.mxu0 %v461
      %v544 = vpop.f32.mrf.mxu0
      %v545 = vadd.f32 0.0, %v544
      %v546 = vpop.f32.mrf.mxu0
      %v547 = vadd.f32 0.0, %v546
      %548 = vdwg.mxu0
      %vm549 = vsmask.f32 7424
      %v551 = vshrl.u32 %v444, 16
      %v553 = vshll.u32 %v444, 16
      %v555 = vrot.slane %v553, 1
      %v556 = vor.u32 %v551, %v555
      %v558 = vshll.u32 %v445, 16
      %v560 = vrot.slane %v558, 1
      %v561 = vsel %vm549, %v556, %v560
      %v562 = vshrl.u32 %v445, 16
      %v564 = vor.u32 %v562, %v560
      %v566 = vshll.u32 %v446, 16
      %v568 = vrot.slane %v566, 1
      %v569 = vsel %vm549, %v564, %v568
      %v570 = vshrl.u32 %v446, 16
      %v572 = vor.u32 %v570, %v568
      %v574 = vshll.u32 %v447, 16
      %v576 = vrot.slane %v574, 1
      %v577 = vsel %vm549, %v572, %v576
      %v578 = vshrl.u32 %v447, 16
      %v580 = vor.u32 %v578, %v576
      %v582 = vshll.u32 %v448, 16
      %v584 = vrot.slane %v582, 1
      %v585 = vsel %vm549, %v580, %v584
      %v586 = vshrl.u32 %v448, 16
      %v588 = vor.u32 %v586, %v584
      %v590 = vshll.u32 %v449, 16
      %v592 = vrot.slane %v590, 1
      %v593 = vsel %vm549, %v588, %v592
      %v615 = vunpack.c.l.b16 %v389
      %v616 = vunpack.c.l.b16 %v390
      %v617 = vunpack.c.l.b16 %v391
      %v618 = vunpack.c.l.b16 %v392
      %v619 = vunpack.c.l.b16 %v393
      %v620 = vunpack.c.l.b16 %v394
      %v621 = vunpack.c.l.b16 %v395
      %v622 = vunpack.c.l.b16 %v396
      %v623 = vunpack.c.l.b16 %v397
      %v624 = vunpack.c.l.b16 %v398
      %v625 = vunpack.c.l.b16 %v399
      %v626 = vunpack.c.l.b16 %v400
      %v627 = vunpack.c.l.b16 %v401
      %v628 = vunpack.c.l.b16 %v402
      %v629 = vunpack.c.l.b16 %v403
      %v630 = vunpack.c.l.b16 %v404
      %v631 = vpack.c.b16 %v616, %v615
      %v632 = vpack.c.b16 %v618, %v617
      %v633 = vpack.c.b16 %v620, %v619
      %v634 = vpack.c.b16 %v622, %v621
      %v635 = vpack.c.b16 %v624, %v623
      %v636 = vpack.c.b16 %v626, %v625
      %v637 = vpack.c.b16 %v628, %v627
      %v638 = vpack.c.b16 %v630, %v629
      %647 = vmatpush.bf16.msra.mxu0 %v638
      %648 = vmatpush.bf16.msra.mxu0 %v637
      %649 = vmatpush.bf16.msra.mxu0 %v636
      %650 = vmatpush.bf16.msra.mxu0 %v635
      %651 = vmatpush.bf16.msra.mxu0 %v634
      %652 = vmatpush.bf16.msra.mxu0 %v633
      %653 = vmatpush.bf16.msra.mxu0 %v632
      %654 = vmatpush.bf16.msra.mxu0 %v631
      %655 = vmatmul.bf16.gmra.mxu0 %v561
      %v656 = vpop.f32.mrf.mxu0
      %v657 = vadd.f32 %v525, %v656
      %v658 = vpop.f32.mrf.mxu0
      %v659 = vadd.f32 %v527, %v658
      %660 = vmatmul.bf16.gmra.mxu0 %v569
      %v661 = vpop.f32.mrf.mxu0
      %v662 = vadd.f32 %v530, %v661
      %v663 = vpop.f32.mrf.mxu0
      %v664 = vadd.f32 %v532, %v663
      %665 = vmatmul.bf16.gmra.mxu0 %v577
      %v666 = vpop.f32.mrf.mxu0
      %v667 = vadd.f32 %v535, %v666
      %v668 = vpop.f32.mrf.mxu0
      %v669 = vadd.f32 %v537, %v668
      %670 = vmatmul.bf16.gmra.mxu0 %v585
      %v671 = vpop.f32.mrf.mxu0
      %v672 = vadd.f32 %v540, %v671
      %v673 = vpop.f32.mrf.mxu0
      %v674 = vadd.f32 %v542, %v673
      %675 = vmatmul.bf16.gmra.mxu0 %v593
      %v676 = vpop.f32.mrf.mxu0
      %v677 = vadd.f32 %v545, %v676
      %v678 = vpop.f32.mrf.mxu0
      %v679 = vadd.f32 %v547, %v678
      %680 = vdwg.mxu0
      %s681 = scalar_lea.vmem %s4, 128
      %v682 = vld [vmem:[%s681] sm:$0xf]
      %v683 = vld [vmem:[%s681 + $0x4] sm:$0xf]
      %v684 = vld [vmem:[%s681 + $0x8] sm:$0xf]
      %v685 = vld [vmem:[%s681 + $0xc] sm:$0xf]
      %v686 = vld [vmem:[%s681 + $0x10] sm:$0xf]
      %v687 = vld [vmem:[%s681 + $0x14] sm:$0xf]
      %v688 = vld [vmem:[%s681 + $0x18] sm:$0xf]
      %v689 = vld [vmem:[%s681 + $0x1c] sm:$0xf]
      %v690 = vld [vmem:[%s681 + $0x20] sm:$0xf]
      %v691 = vld [vmem:[%s681 + $0x24] sm:$0xf]
      %v692 = vld [vmem:[%s681 + $0x28] sm:$0xf]
      %v693 = vld [vmem:[%s681 + $0x2c] sm:$0xf]
      %v694 = vld [vmem:[%s681 + $0x30] sm:$0xf]
      %v695 = vld [vmem:[%s681 + $0x34] sm:$0xf]
      %v696 = vld [vmem:[%s681 + $0x38] sm:$0xf]
      %v697 = vld [vmem:[%s681 + $0x3c] sm:$0xf]
      %vm698 = vsmask.f32 6400
      %v699 = vrot.slane %v551, 1
      %v700 = vrot.slane %v553, 2
      %v701 = vor.u32 %v699, %v700
      %v702 = vrot.slane %v562, 1
      %v703 = vrot.slane %v558, 2
      %v704 = vor.u32 %v702, %v703
      %v705 = vsel %vm698, %v701, %v704
      %v706 = vrot.slane %v570, 1
      %v707 = vrot.slane %v566, 2
      %v708 = vor.u32 %v706, %v707
      %v709 = vsel %vm698, %v704, %v708
      %v710 = vrot.slane %v578, 1
      %v711 = vrot.slane %v574, 2
      %v712 = vor.u32 %v710, %v711
      %v713 = vsel %vm698, %v708, %v712
      %v714 = vrot.slane %v586, 1
      %v715 = vrot.slane %v582, 2
      %v716 = vor.u32 %v714, %v715
      %v717 = vsel %vm698, %v712, %v716
      %v718 = vshrl.u32 %v449, 16
      %v720 = vrot.slane %v718, 1
      %v721 = vrot.slane %v590, 2
      %v722 = vor.u32 %v720, %v721
      %v723 = vsel %vm698, %v716, %v722
      %v745 = vunpack.c.l.b16 %v682
      %v746 = vunpack.c.l.b16 %v683
      %v747 = vunpack.c.l.b16 %v684
      %v748 = vunpack.c.l.b16 %v685
      %v749 = vunpack.c.l.b16 %v686
      %v750 = vunpack.c.l.b16 %v687
      %v751 = vunpack.c.l.b16 %v688
      %v752 = vunpack.c.l.b16 %v689
      %v753 = vunpack.c.l.b16 %v690
      %v754 = vunpack.c.l.b16 %v691
      %v755 = vunpack.c.l.b16 %v692
      %v756 = vunpack.c.l.b16 %v693
      %v757 = vunpack.c.l.b16 %v694
      %v758 = vunpack.c.l.b16 %v695
      %v759 = vunpack.c.l.b16 %v696
      %v760 = vunpack.c.l.b16 %v697
      %v761 = vpack.c.b16 %v746, %v745
      %v762 = vpack.c.b16 %v748, %v747
      %v763 = vpack.c.b16 %v750, %v749
      %v764 = vpack.c.b16 %v752, %v751
      %v765 = vpack.c.b16 %v754, %v753
      %v766 = vpack.c.b16 %v756, %v755
      %v767 = vpack.c.b16 %v758, %v757
      %v768 = vpack.c.b16 %v760, %v759
      %777 = vmatpush.bf16.msra.mxu0 %v768
      %778 = vmatpush.bf16.msra.mxu0 %v767
      %779 = vmatpush.bf16.msra.mxu0 %v766
      %780 = vmatpush.bf16.msra.mxu0 %v765
      %781 = vmatpush.bf16.msra.mxu0 %v764
      %782 = vmatpush.bf16.msra.mxu0 %v763
      %783 = vmatpush.bf16.msra.mxu0 %v762
      %784 = vmatpush.bf16.msra.mxu0 %v761
      %785 = vmatmul.bf16.gmra.mxu0 %v705
      %v786 = vpop.f32.mrf.mxu0
      %v787 = vadd.f32 0.0, %v786
      %v788 = vpop.f32.mrf.mxu0
      %v789 = vadd.f32 0.0, %v788
      %790 = vmatmul.bf16.gmra.mxu0 %v709
      %v791 = vpop.f32.mrf.mxu0
      %v792 = vadd.f32 0.0, %v791
      %v793 = vpop.f32.mrf.mxu0
      %v794 = vadd.f32 0.0, %v793
      %795 = vmatmul.bf16.gmra.mxu0 %v713
      %v796 = vpop.f32.mrf.mxu0
      %v797 = vadd.f32 0.0, %v796
      %v798 = vpop.f32.mrf.mxu0
      %v799 = vadd.f32 0.0, %v798
      %800 = vmatmul.bf16.gmra.mxu0 %v717
      %v801 = vpop.f32.mrf.mxu0
      %v802 = vadd.f32 0.0, %v801
      %v803 = vpop.f32.mrf.mxu0
      %v804 = vadd.f32 0.0, %v803
      %805 = vmatmul.bf16.gmra.mxu0 %v723
      %v806 = vpop.f32.mrf.mxu0
      %v807 = vadd.f32 0.0, %v806
      %v808 = vpop.f32.mrf.mxu0
      %v809 = vadd.f32 0.0, %v808
      %810 = vdwg.mxu0
      %v811 = vadd.f32 %v657, %v787
      %v812 = vadd.f32 %v659, %v789
      %v813 = vadd.f32 %v662, %v792
      %v814 = vadd.f32 %v664, %v794
      %v815 = vadd.f32 %v667, %v797
      %v816 = vadd.f32 %v669, %v799
      %v817 = vadd.f32 %v672, %v802
      %v818 = vadd.f32 %v674, %v804
      %v819 = vadd.f32 %v677, %v807
      %v820 = vadd.f32 %v679, %v809
      %s821 = scalar_lea.vmem %s4, 192
      %v822 = vld [vmem:[%s821] sm:$0xf]
      %v823 = vld [vmem:[%s821 + $0x4] sm:$0xf]
      %v824 = vld [vmem:[%s821 + $0x8] sm:$0xf]
      %v825 = vld [vmem:[%s821 + $0xc] sm:$0xf]
      %v826 = vld [vmem:[%s821 + $0x10] sm:$0xf]
      %v827 = vld [vmem:[%s821 + $0x14] sm:$0xf]
      %v828 = vld [vmem:[%s821 + $0x18] sm:$0xf]
      %v829 = vld [vmem:[%s821 + $0x1c] sm:$0xf]
      %v830 = vld [vmem:[%s821 + $0x20] sm:$0xf]
      %v831 = vld [vmem:[%s821 + $0x24] sm:$0xf]
      %v832 = vld [vmem:[%s821 + $0x28] sm:$0xf]
      %v833 = vld [vmem:[%s821 + $0x2c] sm:$0xf]
      %v834 = vld [vmem:[%s821 + $0x30] sm:$0xf]
      %v835 = vld [vmem:[%s821 + $0x34] sm:$0xf]
      %v836 = vld [vmem:[%s821 + $0x38] sm:$0xf]
      %v837 = vld [vmem:[%s821 + $0x3c] sm:$0xf]
      %v839 = vunpack.c.l.b16 %v387
      %v840 = vpack.c.b16 %v435, %v434
      %v841 = vpack.c.b16 %v437, %v436
      %v842 = vpack.c.b16 %v439, %v438
      %v843 = vpack.c.b16 %v441, %v440
      %v844 = vpack.c.b16 %v443, %v442
      %v845 = vpack.c.b16 %v839, %v839
      %v847 = vshrl.u32 %v840, 16
      %v849 = vrot.slane %v847, 1
      %v850 = vshll.u32 %v840, 16
      %v852 = vrot.slane %v850, 2
      %v853 = vor.u32 %v849, %v852
      %v855 = vshrl.u32 %v841, 16
      %v857 = vrot.slane %v855, 1
      %v858 = vshll.u32 %v841, 16
      %v860 = vrot.slane %v858, 2
      %v861 = vor.u32 %v857, %v860
      %v862 = vsel %vm698, %v853, %v861
      %v864 = vshrl.u32 %v842, 16
      %v866 = vrot.slane %v864, 1
      %v867 = vshll.u32 %v842, 16
      %v869 = vrot.slane %v867, 2
      %v870 = vor.u32 %v866, %v869
      %v871 = vsel %vm698, %v861, %v870
      %v873 = vshrl.u32 %v843, 16
      %v875 = vrot.slane %v873, 1
      %v876 = vshll.u32 %v843, 16
      %v878 = vrot.slane %v876, 2
      %v879 = vor.u32 %v875, %v878
      %v880 = vsel %vm698, %v870, %v879
      %v882 = vshrl.u32 %v844, 16
      %v884 = vrot.slane %v882, 1
      %v885 = vshll.u32 %v844, 16
      %v887 = vrot.slane %v885, 2
      %v888 = vor.u32 %v884, %v887
      %v889 = vsel %vm698, %v879, %v888
      %v891 = vshrl.u32 %v845, 16
      %v893 = vrot.slane %v891, 1
      %v894 = vshll.u32 %v845, 16
      %v896 = vrot.slane %v894, 2
      %v897 = vor.u32 %v893, %v896
      %v898 = vsel %vm698, %v888, %v897
      %v920 = vunpack.c.l.b16 %v822
      %v921 = vunpack.c.l.b16 %v823
      %v922 = vunpack.c.l.b16 %v824
      %v923 = vunpack.c.l.b16 %v825
      %v924 = vunpack.c.l.b16 %v826
      %v925 = vunpack.c.l.b16 %v827
      %v926 = vunpack.c.l.b16 %v828
      %v927 = vunpack.c.l.b16 %v829
      %v928 = vunpack.c.l.b16 %v830
      %v929 = vunpack.c.l.b16 %v831
      %v930 = vunpack.c.l.b16 %v832
      %v931 = vunpack.c.l.b16 %v833
      %v932 = vunpack.c.l.b16 %v834
      %v933 = vunpack.c.l.b16 %v835
      %v934 = vunpack.c.l.b16 %v836
      %v935 = vunpack.c.l.b16 %v837
      %v936 = vpack.c.b16 %v921, %v920
      %v937 = vpack.c.b16 %v923, %v922
      %v938 = vpack.c.b16 %v925, %v924
      %v939 = vpack.c.b16 %v927, %v926
      %v940 = vpack.c.b16 %v929, %v928
      %v941 = vpack.c.b16 %v931, %v930
      %v942 = vpack.c.b16 %v933, %v932
      %v943 = vpack.c.b16 %v935, %v934
      %952 = vmatpush.bf16.msra.mxu0 %v943
      %953 = vmatpush.bf16.msra.mxu0 %v942
      %954 = vmatpush.bf16.msra.mxu0 %v941
      %955 = vmatpush.bf16.msra.mxu0 %v940
      %956 = vmatpush.bf16.msra.mxu0 %v939
      %957 = vmatpush.bf16.msra.mxu0 %v938
      %958 = vmatpush.bf16.msra.mxu0 %v937
      %959 = vmatpush.bf16.msra.mxu0 %v936
      %960 = vmatmul.bf16.gmra.mxu0 %v862
      %v961 = vpop.f32.mrf.mxu0
      %v962 = vadd.f32 0.0, %v961
      %v963 = vpop.f32.mrf.mxu0
      %v964 = vadd.f32 0.0, %v963
      %965 = vmatmul.bf16.gmra.mxu0 %v871
      %v966 = vpop.f32.mrf.mxu0
      %v967 = vadd.f32 0.0, %v966
      %v968 = vpop.f32.mrf.mxu0
      %v969 = vadd.f32 0.0, %v968
      %970 = vmatmul.bf16.gmra.mxu0 %v880
      %v971 = vpop.f32.mrf.mxu0
      %v972 = vadd.f32 0.0, %v971
      %v973 = vpop.f32.mrf.mxu0
      %v974 = vadd.f32 0.0, %v973
      %975 = vmatmul.bf16.gmra.mxu0 %v889
      %v976 = vpop.f32.mrf.mxu0
      %v977 = vadd.f32 0.0, %v976
      %v978 = vpop.f32.mrf.mxu0
      %v979 = vadd.f32 0.0, %v978
      %980 = vmatmul.bf16.gmra.mxu0 %v898
      %v981 = vpop.f32.mrf.mxu0
      %v982 = vadd.f32 0.0, %v981
      %v983 = vpop.f32.mrf.mxu0
      %v984 = vadd.f32 0.0, %v983
      %985 = vdwg.mxu0
      %v986 = vadd.f32 %v811, %v962
      %v987 = vadd.f32 %v812, %v964
      %v988 = vadd.f32 %v813, %v967
      %v989 = vadd.f32 %v814, %v969
      %v990 = vadd.f32 %v815, %v972
      %v991 = vadd.f32 %v816, %v974
      %v992 = vadd.f32 %v817, %v977
      %v993 = vadd.f32 %v818, %v979
      %v994 = vadd.f32 %v819, %v982
      %v995 = vadd.f32 %v820, %v984
      %s996 = scalar_lea.vmem %s4, 256
      %v997 = vld [vmem:[%s996] sm:$0xf]
      %v998 = vld [vmem:[%s996 + $0x4] sm:$0xf]
      %v999 = vld [vmem:[%s996 + $0x8] sm:$0xf]
      %v1000 = vld [vmem:[%s996 + $0xc] sm:$0xf]
      %v1001 = vld [vmem:[%s996 + $0x10] sm:$0xf]
      %v1002 = vld [vmem:[%s996 + $0x14] sm:$0xf]
      %v1003 = vld [vmem:[%s996 + $0x18] sm:$0xf]
      %v1004 = vld [vmem:[%s996 + $0x1c] sm:$0xf]
      %v1005 = vld [vmem:[%s996 + $0x20] sm:$0xf]
      %v1006 = vld [vmem:[%s996 + $0x24] sm:$0xf]
      %v1007 = vld [vmem:[%s996 + $0x28] sm:$0xf]
      %v1008 = vld [vmem:[%s996 + $0x2c] sm:$0xf]
      %v1009 = vld [vmem:[%s996 + $0x30] sm:$0xf]
      %v1010 = vld [vmem:[%s996 + $0x34] sm:$0xf]
      %v1011 = vld [vmem:[%s996 + $0x38] sm:$0xf]
      %v1012 = vld [vmem:[%s996 + $0x3c] sm:$0xf]
      %vm1013 = vcmask 1045504
      %v1014 = vrot.slane %v840, 2
      %v1015 = vrot.slane %v841, 2
      %v1016 = vsel %vm1013, %v1014, %v1015
      %v1017 = vrot.slane %v842, 2
      %v1018 = vsel %vm1013, %v1015, %v1017
      %v1019 = vrot.slane %v843, 2
      %v1020 = vsel %vm1013, %v1017, %v1019
      %v1021 = vrot.slane %v844, 2
      %v1022 = vsel %vm1013, %v1019, %v1021
      %v1023 = vrot.slane %v845, 2
      %v1024 = vsel %vm1013, %v1021, %v1023
      %v1046 = vunpack.c.l.b16 %v997
      %v1047 = vunpack.c.l.b16 %v998
      %v1048 = vunpack.c.l.b16 %v999
      %v1049 = vunpack.c.l.b16 %v1000
      %v1050 = vunpack.c.l.b16 %v1001
      %v1051 = vunpack.c.l.b16 %v1002
      %v1052 = vunpack.c.l.b16 %v1003
      %v1053 = vunpack.c.l.b16 %v1004
      %v1054 = vunpack.c.l.b16 %v1005
      %v1055 = vunpack.c.l.b16 %v1006
      %v1056 = vunpack.c.l.b16 %v1007
      %v1057 = vunpack.c.l.b16 %v1008
      %v1058 = vunpack.c.l.b16 %v1009
      %v1059 = vunpack.c.l.b16 %v1010
      %v1060 = vunpack.c.l.b16 %v1011
      %v1061 = vunpack.c.l.b16 %v1012
      %v1062 = vpack.c.b16 %v1047, %v1046
      %v1063 = vpack.c.b16 %v1049, %v1048
      %v1064 = vpack.c.b16 %v1051, %v1050
      %v1065 = vpack.c.b16 %v1053, %v1052
      %v1066 = vpack.c.b16 %v1055, %v1054
      %v1067 = vpack.c.b16 %v1057, %v1056
      %v1068 = vpack.c.b16 %v1059, %v1058
      %v1069 = vpack.c.b16 %v1061, %v1060
      %1078 = vmatpush.bf16.msra.mxu0 %v1069
      %1079 = vmatpush.bf16.msra.mxu0 %v1068
      %1080 = vmatpush.bf16.msra.mxu0 %v1067
      %1081 = vmatpush.bf16.msra.mxu0 %v1066
      %1082 = vmatpush.bf16.msra.mxu0 %v1065
      %1083 = vmatpush.bf16.msra.mxu0 %v1064
      %1084 = vmatpush.bf16.msra.mxu0 %v1063
      %1085 = vmatpush.bf16.msra.mxu0 %v1062
      %1086 = vmatmul.bf16.gmra.mxu0 %v1016
      %v1087 = vpop.f32.mrf.mxu0
      %v1088 = vadd.f32 0.0, %v1087
      %v1089 = vpop.f32.mrf.mxu0
      %v1090 = vadd.f32 0.0, %v1089
      %1091 = vmatmul.bf16.gmra.mxu0 %v1018
      %v1092 = vpop.f32.mrf.mxu0
      %v1093 = vadd.f32 0.0, %v1092
      %v1094 = vpop.f32.mrf.mxu0
      %v1095 = vadd.f32 0.0, %v1094
      %1096 = vmatmul.bf16.gmra.mxu0 %v1020
      %v1097 = vpop.f32.mrf.mxu0
      %v1098 = vadd.f32 0.0, %v1097
      %v1099 = vpop.f32.mrf.mxu0
      %v1100 = vadd.f32 0.0, %v1099
      %1101 = vmatmul.bf16.gmra.mxu0 %v1022
      %v1102 = vpop.f32.mrf.mxu0
      %v1103 = vadd.f32 0.0, %v1102
      %v1104 = vpop.f32.mrf.mxu0
      %v1105 = vadd.f32 0.0, %v1104
      %1106 = vmatmul.bf16.gmra.mxu0 %v1024
      %v1107 = vpop.f32.mrf.mxu0
      %v1108 = vadd.f32 0.0, %v1107
      %v1109 = vpop.f32.mrf.mxu0
      %v1110 = vadd.f32 0.0, %v1109
      %1111 = vdwg.mxu0
      %v1112 = vadd.f32 %v986, %v1088
      %v1113 = vadd.f32 %v987, %v1090
      %v1114 = vadd.f32 %v988, %v1093
      %v1115 = vadd.f32 %v989, %v1095
      %v1116 = vadd.f32 %v990, %v1098
      %v1117 = vadd.f32 %v991, %v1100
      %v1118 = vadd.f32 %v992, %v1103
      %v1119 = vadd.f32 %v993, %v1105
      %v1120 = vadd.f32 %v994, %v1108
      %v1121 = vadd.f32 %v995, %v1110
      %s1122 = scalar_lea.vmem %s4, 320
      %v1123 = vld [vmem:[%s1122] sm:$0xf]
      %v1124 = vld [vmem:[%s1122 + $0x4] sm:$0xf]
      %v1125 = vld [vmem:[%s1122 + $0x8] sm:$0xf]
      %v1126 = vld [vmem:[%s1122 + $0xc] sm:$0xf]
      %v1127 = vld [vmem:[%s1122 + $0x10] sm:$0xf]
      %v1128 = vld [vmem:[%s1122 + $0x14] sm:$0xf]
      %v1129 = vld [vmem:[%s1122 + $0x18] sm:$0xf]
      %v1130 = vld [vmem:[%s1122 + $0x1c] sm:$0xf]
      %v1131 = vld [vmem:[%s1122 + $0x20] sm:$0xf]
      %v1132 = vld [vmem:[%s1122 + $0x24] sm:$0xf]
      %v1133 = vld [vmem:[%s1122 + $0x28] sm:$0xf]
      %v1134 = vld [vmem:[%s1122 + $0x2c] sm:$0xf]
      %v1135 = vld [vmem:[%s1122 + $0x30] sm:$0xf]
      %v1136 = vld [vmem:[%s1122 + $0x34] sm:$0xf]
      %v1137 = vld [vmem:[%s1122 + $0x38] sm:$0xf]
      %v1138 = vld [vmem:[%s1122 + $0x3c] sm:$0xf]
      %vm1139 = vsmask.f32 5376
      %v1140 = vrot.slane %v847, 2
      %v1141 = vrot.slane %v850, 3
      %v1142 = vor.u32 %v1140, %v1141
      %v1143 = vrot.slane %v855, 2
      %v1144 = vrot.slane %v858, 3
      %v1145 = vor.u32 %v1143, %v1144
      %v1146 = vsel %vm1139, %v1142, %v1145
      %v1147 = vrot.slane %v864, 2
      %v1148 = vrot.slane %v867, 3
      %v1149 = vor.u32 %v1147, %v1148
      %v1150 = vsel %vm1139, %v1145, %v1149
      %v1151 = vrot.slane %v873, 2
      %v1152 = vrot.slane %v876, 3
      %v1153 = vor.u32 %v1151, %v1152
      %v1154 = vsel %vm1139, %v1149, %v1153
      %v1155 = vrot.slane %v882, 2
      %v1156 = vrot.slane %v885, 3
      %v1157 = vor.u32 %v1155, %v1156
      %v1158 = vsel %vm1139, %v1153, %v1157
      %v1159 = vrot.slane %v891, 2
      %v1160 = vrot.slane %v894, 3
      %v1161 = vor.u32 %v1159, %v1160
      %v1162 = vsel %vm1139, %v1157, %v1161
      %v1184 = vunpack.c.l.b16 %v1123
      %v1185 = vunpack.c.l.b16 %v1124
      %v1186 = vunpack.c.l.b16 %v1125
      %v1187 = vunpack.c.l.b16 %v1126
      %v1188 = vunpack.c.l.b16 %v1127
      %v1189 = vunpack.c.l.b16 %v1128
      %v1190 = vunpack.c.l.b16 %v1129
      %v1191 = vunpack.c.l.b16 %v1130
      %v1192 = vunpack.c.l.b16 %v1131
      %v1193 = vunpack.c.l.b16 %v1132
      %v1194 = vunpack.c.l.b16 %v1133
      %v1195 = vunpack.c.l.b16 %v1134
      %v1196 = vunpack.c.l.b16 %v1135
      %v1197 = vunpack.c.l.b16 %v1136
      %v1198 = vunpack.c.l.b16 %v1137
      %v1199 = vunpack.c.l.b16 %v1138
      %v1200 = vpack.c.b16 %v1185, %v1184
      %v1201 = vpack.c.b16 %v1187, %v1186
      %v1202 = vpack.c.b16 %v1189, %v1188
      %v1203 = vpack.c.b16 %v1191, %v1190
      %v1204 = vpack.c.b16 %v1193, %v1192
      %v1205 = vpack.c.b16 %v1195, %v1194
      %v1206 = vpack.c.b16 %v1197, %v1196
      %v1207 = vpack.c.b16 %v1199, %v1198
      %1216 = vmatpush.bf16.msra.mxu0 %v1207
      %1217 = vmatpush.bf16.msra.mxu0 %v1206
      %1218 = vmatpush.bf16.msra.mxu0 %v1205
      %1219 = vmatpush.bf16.msra.mxu0 %v1204
      %1220 = vmatpush.bf16.msra.mxu0 %v1203
      %1221 = vmatpush.bf16.msra.mxu0 %v1202
      %1222 = vmatpush.bf16.msra.mxu0 %v1201
      %1223 = vmatpush.bf16.msra.mxu0 %v1200
      %1224 = vmatmul.bf16.gmra.mxu0 %v1146
      %v1225 = vpop.f32.mrf.mxu0
      %v1226 = vadd.f32 0.0, %v1225
      %v1227 = vpop.f32.mrf.mxu0
      %v1228 = vadd.f32 0.0, %v1227
      %1229 = vmatmul.bf16.gmra.mxu0 %v1150
      %v1230 = vpop.f32.mrf.mxu0
      %v1231 = vadd.f32 0.0, %v1230
      %v1232 = vpop.f32.mrf.mxu0
      %v1233 = vadd.f32 0.0, %v1232
      %1234 = vmatmul.bf16.gmra.mxu0 %v1154
      %v1235 = vpop.f32.mrf.mxu0
      %v1236 = vadd.f32 0.0, %v1235
      %v1237 = vpop.f32.mrf.mxu0
      %v1238 = vadd.f32 0.0, %v1237
      %1239 = vmatmul.bf16.gmra.mxu0 %v1158
      %v1240 = vpop.f32.mrf.mxu0
      %v1241 = vadd.f32 0.0, %v1240
      %v1242 = vpop.f32.mrf.mxu0
      %v1243 = vadd.f32 0.0, %v1242
      %1244 = vmatmul.bf16.gmra.mxu0 %v1162
      %v1245 = vpop.f32.mrf.mxu0
      %v1246 = vadd.f32 0.0, %v1245
      %v1247 = vpop.f32.mrf.mxu0
      %v1248 = vadd.f32 0.0, %v1247
      %1249 = vdwg.mxu0
      %v1250 = vadd.f32 %v1112, %v1226
      %v1251 = vadd.f32 %v1113, %v1228
      %v1252 = vadd.f32 %v1114, %v1231
      %v1253 = vadd.f32 %v1115, %v1233
      %v1254 = vadd.f32 %v1116, %v1236
      %v1255 = vadd.f32 %v1117, %v1238
      %v1256 = vadd.f32 %v1118, %v1241
      %v1257 = vadd.f32 %v1119, %v1243
      %v1258 = vadd.f32 %v1120, %v1246
      %v1259 = vadd.f32 %v1121, %v1248
      %s1260 = scalar_lea.vmem %s4, 384
      %v1261 = vld [vmem:[%s1260] sm:$0xf]
      %v1262 = vld [vmem:[%s1260 + $0x4] sm:$0xf]
      %v1263 = vld [vmem:[%s1260 + $0x8] sm:$0xf]
      %v1264 = vld [vmem:[%s1260 + $0xc] sm:$0xf]
      %v1265 = vld [vmem:[%s1260 + $0x10] sm:$0xf]
      %v1266 = vld [vmem:[%s1260 + $0x14] sm:$0xf]
      %v1267 = vld [vmem:[%s1260 + $0x18] sm:$0xf]
      %v1268 = vld [vmem:[%s1260 + $0x1c] sm:$0xf]
      %v1269 = vld [vmem:[%s1260 + $0x20] sm:$0xf]
      %v1270 = vld [vmem:[%s1260 + $0x24] sm:$0xf]
      %v1271 = vld [vmem:[%s1260 + $0x28] sm:$0xf]
      %v1272 = vld [vmem:[%s1260 + $0x2c] sm:$0xf]
      %v1273 = vld [vmem:[%s1260 + $0x30] sm:$0xf]
      %v1274 = vld [vmem:[%s1260 + $0x34] sm:$0xf]
      %v1275 = vld [vmem:[%s1260 + $0x38] sm:$0xf]
      %v1276 = vld [vmem:[%s1260 + $0x3c] sm:$0xf]
      %v1278 = vunpack.c.l.b16 %v388
      %v1279 = vpack.c.b16 %v839, %v443
      %v1280 = vpack.c.b16 %v1278, %v1278
      %v1281 = vrot.slane %v562, 2
      %v1282 = vrot.slane %v558, 3
      %v1283 = vor.u32 %v1281, %v1282
      %v1284 = vrot.slane %v570, 2
      %v1285 = vrot.slane %v566, 3
      %v1286 = vor.u32 %v1284, %v1285
      %v1287 = vsel %vm1139, %v1283, %v1286
      %v1288 = vrot.slane %v578, 2
      %v1289 = vrot.slane %v574, 3
      %v1290 = vor.u32 %v1288, %v1289
      %v1291 = vsel %vm1139, %v1286, %v1290
      %v1292 = vrot.slane %v586, 2
      %v1293 = vrot.slane %v582, 3
      %v1294 = vor.u32 %v1292, %v1293
      %v1295 = vsel %vm1139, %v1290, %v1294
      %v1297 = vshrl.u32 %v1279, 16
      %v1299 = vrot.slane %v1297, 2
      %v1300 = vshll.u32 %v1279, 16
      %v1302 = vrot.slane %v1300, 3
      %v1303 = vor.u32 %v1299, %v1302
      %v1304 = vsel %vm1139, %v1294, %v1303
      %v1306 = vshrl.u32 %v1280, 16
      %v1308 = vrot.slane %v1306, 2
      %v1309 = vshll.u32 %v1280, 16
      %v1311 = vrot.slane %v1309, 3
      %v1312 = vor.u32 %v1308, %v1311
      %v1313 = vsel %vm1139, %v1303, %v1312
      %v1335 = vunpack.c.l.b16 %v1261
      %v1336 = vunpack.c.l.b16 %v1262
      %v1337 = vunpack.c.l.b16 %v1263
      %v1338 = vunpack.c.l.b16 %v1264
      %v1339 = vunpack.c.l.b16 %v1265
      %v1340 = vunpack.c.l.b16 %v1266
      %v1341 = vunpack.c.l.b16 %v1267
      %v1342 = vunpack.c.l.b16 %v1268
      %v1343 = vunpack.c.l.b16 %v1269
      %v1344 = vunpack.c.l.b16 %v1270
      %v1345 = vunpack.c.l.b16 %v1271
      %v1346 = vunpack.c.l.b16 %v1272
      %v1347 = vunpack.c.l.b16 %v1273
      %v1348 = vunpack.c.l.b16 %v1274
      %v1349 = vunpack.c.l.b16 %v1275
      %v1350 = vunpack.c.l.b16 %v1276
      %v1351 = vpack.c.b16 %v1336, %v1335
      %v1352 = vpack.c.b16 %v1338, %v1337
      %v1353 = vpack.c.b16 %v1340, %v1339
      %v1354 = vpack.c.b16 %v1342, %v1341
      %v1355 = vpack.c.b16 %v1344, %v1343
      %v1356 = vpack.c.b16 %v1346, %v1345
      %v1357 = vpack.c.b16 %v1348, %v1347
      %v1358 = vpack.c.b16 %v1350, %v1349
      %1367 = vmatpush.bf16.msra.mxu0 %v1358
      %1368 = vmatpush.bf16.msra.mxu0 %v1357
      %1369 = vmatpush.bf16.msra.mxu0 %v1356
      %1370 = vmatpush.bf16.msra.mxu0 %v1355
      %1371 = vmatpush.bf16.msra.mxu0 %v1354
      %1372 = vmatpush.bf16.msra.mxu0 %v1353
      %1373 = vmatpush.bf16.msra.mxu0 %v1352
      %1374 = vmatpush.bf16.msra.mxu0 %v1351
      %1375 = vmatmul.bf16.gmra.mxu0 %v1287
      %v1376 = vpop.f32.mrf.mxu0
      %v1377 = vadd.f32 0.0, %v1376
      %v1378 = vpop.f32.mrf.mxu0
      %v1379 = vadd.f32 0.0, %v1378
      %1380 = vmatmul.bf16.gmra.mxu0 %v1291
      %v1381 = vpop.f32.mrf.mxu0
      %v1382 = vadd.f32 0.0, %v1381
      %v1383 = vpop.f32.mrf.mxu0
      %v1384 = vadd.f32 0.0, %v1383
      %1385 = vmatmul.bf16.gmra.mxu0 %v1295
      %v1386 = vpop.f32.mrf.mxu0
      %v1387 = vadd.f32 0.0, %v1386
      %v1388 = vpop.f32.mrf.mxu0
      %v1389 = vadd.f32 0.0, %v1388
      %1390 = vmatmul.bf16.gmra.mxu0 %v1304
      %v1391 = vpop.f32.mrf.mxu0
      %v1392 = vadd.f32 0.0, %v1391
      %v1393 = vpop.f32.mrf.mxu0
      %v1394 = vadd.f32 0.0, %v1393
      %1395 = vmatmul.bf16.gmra.mxu0 %v1313
      %v1396 = vpop.f32.mrf.mxu0
      %v1397 = vadd.f32 0.0, %v1396
      %v1398 = vpop.f32.mrf.mxu0
      %v1399 = vadd.f32 0.0, %v1398
      %1400 = vdwg.mxu0
      %v1401 = vadd.f32 %v1250, %v1377
      %v1402 = vadd.f32 %v1251, %v1379
      %v1403 = vadd.f32 %v1252, %v1382
      %v1404 = vadd.f32 %v1253, %v1384
      %v1405 = vadd.f32 %v1254, %v1387
      %v1406 = vadd.f32 %v1255, %v1389
      %v1407 = vadd.f32 %v1256, %v1392
      %v1408 = vadd.f32 %v1257, %v1394
      %v1409 = vadd.f32 %v1258, %v1397
      %v1410 = vadd.f32 %v1259, %v1399
      %s1411 = scalar_lea.vmem %s4, 448
      %v1412 = vld [vmem:[%s1411] sm:$0xf]
      %v1413 = vld [vmem:[%s1411 + $0x4] sm:$0xf]
      %v1414 = vld [vmem:[%s1411 + $0x8] sm:$0xf]
      %v1415 = vld [vmem:[%s1411 + $0xc] sm:$0xf]
      %v1416 = vld [vmem:[%s1411 + $0x10] sm:$0xf]
      %v1417 = vld [vmem:[%s1411 + $0x14] sm:$0xf]
      %v1418 = vld [vmem:[%s1411 + $0x18] sm:$0xf]
      %v1419 = vld [vmem:[%s1411 + $0x1c] sm:$0xf]
      %v1420 = vld [vmem:[%s1411 + $0x20] sm:$0xf]
      %v1421 = vld [vmem:[%s1411 + $0x24] sm:$0xf]
      %v1422 = vld [vmem:[%s1411 + $0x28] sm:$0xf]
      %v1423 = vld [vmem:[%s1411 + $0x2c] sm:$0xf]
      %v1424 = vld [vmem:[%s1411 + $0x30] sm:$0xf]
      %v1425 = vld [vmem:[%s1411 + $0x34] sm:$0xf]
      %v1426 = vld [vmem:[%s1411 + $0x38] sm:$0xf]
      %v1427 = vld [vmem:[%s1411 + $0x3c] sm:$0xf]
      %vm1428 = vcmask 1044480
      %v1429 = vrot.slane %v445, 3
      %v1430 = vrot.slane %v446, 3
      %v1431 = vsel %vm1428, %v1429, %v1430
      %v1432 = vrot.slane %v447, 3
      %v1433 = vsel %vm1428, %v1430, %v1432
      %v1434 = vrot.slane %v448, 3
      %v1435 = vsel %vm1428, %v1432, %v1434
      %v1436 = vrot.slane %v1279, 3
      %v1437 = vsel %vm1428, %v1434, %v1436
      %v1438 = vrot.slane %v1280, 3
      %v1439 = vsel %vm1428, %v1436, %v1438
      %v1461 = vunpack.c.l.b16 %v1412
      %v1462 = vunpack.c.l.b16 %v1413
      %v1463 = vunpack.c.l.b16 %v1414
      %v1464 = vunpack.c.l.b16 %v1415
      %v1465 = vunpack.c.l.b16 %v1416
      %v1466 = vunpack.c.l.b16 %v1417
      %v1467 = vunpack.c.l.b16 %v1418
      %v1468 = vunpack.c.l.b16 %v1419
      %v1469 = vunpack.c.l.b16 %v1420
      %v1470 = vunpack.c.l.b16 %v1421
      %v1471 = vunpack.c.l.b16 %v1422
      %v1472 = vunpack.c.l.b16 %v1423
      %v1473 = vunpack.c.l.b16 %v1424
      %v1474 = vunpack.c.l.b16 %v1425
      %v1475 = vunpack.c.l.b16 %v1426
      %v1476 = vunpack.c.l.b16 %v1427
      %v1477 = vpack.c.b16 %v1462, %v1461
      %v1478 = vpack.c.b16 %v1464, %v1463
      %v1479 = vpack.c.b16 %v1466, %v1465
      %v1480 = vpack.c.b16 %v1468, %v1467
      %v1481 = vpack.c.b16 %v1470, %v1469
      %v1482 = vpack.c.b16 %v1472, %v1471
      %v1483 = vpack.c.b16 %v1474, %v1473
      %v1484 = vpack.c.b16 %v1476, %v1475
      %1493 = vmatpush.bf16.msra.mxu0 %v1484
      %1494 = vmatpush.bf16.msra.mxu0 %v1483
      %1495 = vmatpush.bf16.msra.mxu0 %v1482
      %1496 = vmatpush.bf16.msra.mxu0 %v1481
      %1497 = vmatpush.bf16.msra.mxu0 %v1480
      %1498 = vmatpush.bf16.msra.mxu0 %v1479
      %1499 = vmatpush.bf16.msra.mxu0 %v1478
      %1500 = vmatpush.bf16.msra.mxu0 %v1477
      %1501 = vmatmul.bf16.gmra.mxu0 %v1431
      %v1502 = vpop.f32.mrf.mxu0
      %v1503 = vadd.f32 0.0, %v1502
      %v1504 = vpop.f32.mrf.mxu0
      %v1505 = vadd.f32 0.0, %v1504
      %1506 = vmatmul.bf16.gmra.mxu0 %v1433
      %v1507 = vpop.f32.mrf.mxu0
      %v1508 = vadd.f32 0.0, %v1507
      %v1509 = vpop.f32.mrf.mxu0
      %v1510 = vadd.f32 0.0, %v1509
      %1511 = vmatmul.bf16.gmra.mxu0 %v1435
      %v1512 = vpop.f32.mrf.mxu0
      %v1513 = vadd.f32 0.0, %v1512
      %v1514 = vpop.f32.mrf.mxu0
      %v1515 = vadd.f32 0.0, %v1514
      %1516 = vmatmul.bf16.gmra.mxu0 %v1437
      %v1517 = vpop.f32.mrf.mxu0
      %v1518 = vadd.f32 0.0, %v1517
      %v1519 = vpop.f32.mrf.mxu0
      %v1520 = vadd.f32 0.0, %v1519
      %1521 = vmatmul.bf16.gmra.mxu0 %v1439
      %v1522 = vpop.f32.mrf.mxu0
      %v1523 = vadd.f32 0.0, %v1522
      %v1524 = vpop.f32.mrf.mxu0
      %v1525 = vadd.f32 0.0, %v1524
      %1526 = vdwg.mxu0
      %v1527 = vadd.f32 %v1401, %v1503
      %v1528 = vadd.f32 %v1402, %v1505
      %v1529 = vadd.f32 %v1403, %v1508
      %v1530 = vadd.f32 %v1404, %v1510
      %v1531 = vadd.f32 %v1405, %v1513
      %v1532 = vadd.f32 %v1406, %v1515
      %v1533 = vadd.f32 %v1407, %v1518
      %v1534 = vadd.f32 %v1408, %v1520
      %v1535 = vadd.f32 %v1409, %v1523
      %v1536 = vadd.f32 %v1410, %v1525
      %s1537 = scalar_lea.vmem %s4, 512
      %v1538 = vld [vmem:[%s1537] sm:$0xf]
      %v1539 = vld [vmem:[%s1537 + $0x4] sm:$0xf]
      %v1540 = vld [vmem:[%s1537 + $0x8] sm:$0xf]
      %v1541 = vld [vmem:[%s1537 + $0xc] sm:$0xf]
      %v1542 = vld [vmem:[%s1537 + $0x10] sm:$0xf]
      %v1543 = vld [vmem:[%s1537 + $0x14] sm:$0xf]
      %v1544 = vld [vmem:[%s1537 + $0x18] sm:$0xf]
      %v1545 = vld [vmem:[%s1537 + $0x1c] sm:$0xf]
      %v1546 = vld [vmem:[%s1537 + $0x20] sm:$0xf]
      %v1547 = vld [vmem:[%s1537 + $0x24] sm:$0xf]
      %v1548 = vld [vmem:[%s1537 + $0x28] sm:$0xf]
      %v1549 = vld [vmem:[%s1537 + $0x2c] sm:$0xf]
      %v1550 = vld [vmem:[%s1537 + $0x30] sm:$0xf]
      %v1551 = vld [vmem:[%s1537 + $0x34] sm:$0xf]
      %v1552 = vld [vmem:[%s1537 + $0x38] sm:$0xf]
      %v1553 = vld [vmem:[%s1537 + $0x3c] sm:$0xf]
      %vm1554 = vsmask.f32 4352
      %v1555 = vrot.slane %v562, 3
      %v1556 = vrot.slane %v558, 4
      %v1557 = vor.u32 %v1555, %v1556
      %v1558 = vrot.slane %v570, 3
      %v1559 = vrot.slane %v566, 4
      %v1560 = vor.u32 %v1558, %v1559
      %v1561 = vsel %vm1554, %v1557, %v1560
      %v1562 = vrot.slane %v578, 3
      %v1563 = vrot.slane %v574, 4
      %v1564 = vor.u32 %v1562, %v1563
      %v1565 = vsel %vm1554, %v1560, %v1564
      %v1566 = vrot.slane %v586, 3
      %v1567 = vrot.slane %v582, 4
      %v1568 = vor.u32 %v1566, %v1567
      %v1569 = vsel %vm1554, %v1564, %v1568
      %v1570 = vrot.slane %v1297, 3
      %v1571 = vrot.slane %v1300, 4
      %v1572 = vor.u32 %v1570, %v1571
      %v1573 = vsel %vm1554, %v1568, %v1572
      %v1574 = vrot.slane %v1306, 3
      %v1575 = vrot.slane %v1309, 4
      %v1576 = vor.u32 %v1574, %v1575
      %v1577 = vsel %vm1554, %v1572, %v1576
      %v1599 = vunpack.c.l.b16 %v1538
      %v1600 = vunpack.c.l.b16 %v1539
      %v1601 = vunpack.c.l.b16 %v1540
      %v1602 = vunpack.c.l.b16 %v1541
      %v1603 = vunpack.c.l.b16 %v1542
      %v1604 = vunpack.c.l.b16 %v1543
      %v1605 = vunpack.c.l.b16 %v1544
      %v1606 = vunpack.c.l.b16 %v1545
      %v1607 = vunpack.c.l.b16 %v1546
      %v1608 = vunpack.c.l.b16 %v1547
      %v1609 = vunpack.c.l.b16 %v1548
      %v1610 = vunpack.c.l.b16 %v1549
      %v1611 = vunpack.c.l.b16 %v1550
      %v1612 = vunpack.c.l.b16 %v1551
      %v1613 = vunpack.c.l.b16 %v1552
      %v1614 = vunpack.c.l.b16 %v1553
      %v1615 = vpack.c.b16 %v1600, %v1599
      %v1616 = vpack.c.b16 %v1602, %v1601
      %v1617 = vpack.c.b16 %v1604, %v1603
      %v1618 = vpack.c.b16 %v1606, %v1605
      %v1619 = vpack.c.b16 %v1608, %v1607
      %v1620 = vpack.c.b16 %v1610, %v1609
      %v1621 = vpack.c.b16 %v1612, %v1611
      %v1622 = vpack.c.b16 %v1614, %v1613
      %1631 = vmatpush.bf16.msra.mxu0 %v1622
      %1632 = vmatpush.bf16.msra.mxu0 %v1621
      %1633 = vmatpush.bf16.msra.mxu0 %v1620
      %1634 = vmatpush.bf16.msra.mxu0 %v1619
      %1635 = vmatpush.bf16.msra.mxu0 %v1618
      %1636 = vmatpush.bf16.msra.mxu0 %v1617
      %1637 = vmatpush.bf16.msra.mxu0 %v1616
      %1638 = vmatpush.bf16.msra.mxu0 %v1615
      %1639 = vmatmul.bf16.gmra.mxu0 %v1561
      %v1640 = vpop.f32.mrf.mxu0
      %v1641 = vadd.f32 0.0, %v1640
      %v1642 = vpop.f32.mrf.mxu0
      %v1643 = vadd.f32 0.0, %v1642
      %1644 = vmatmul.bf16.gmra.mxu0 %v1565
      %v1645 = vpop.f32.mrf.mxu0
      %v1646 = vadd.f32 0.0, %v1645
      %v1647 = vpop.f32.mrf.mxu0
      %v1648 = vadd.f32 0.0, %v1647
      %1649 = vmatmul.bf16.gmra.mxu0 %v1569
      %v1650 = vpop.f32.mrf.mxu0
      %v1651 = vadd.f32 0.0, %v1650
      %v1652 = vpop.f32.mrf.mxu0
      %v1653 = vadd.f32 0.0, %v1652
      %1654 = vmatmul.bf16.gmra.mxu0 %v1573
      %v1655 = vpop.f32.mrf.mxu0
      %v1656 = vadd.f32 0.0, %v1655
      %v1657 = vpop.f32.mrf.mxu0
      %v1658 = vadd.f32 0.0, %v1657
      %1659 = vmatmul.bf16.gmra.mxu0 %v1577
      %v1660 = vpop.f32.mrf.mxu0
      %v1661 = vadd.f32 0.0, %v1660
      %v1662 = vpop.f32.mrf.mxu0
      %v1663 = vadd.f32 0.0, %v1662
      %1664 = vdwg.mxu0
      %v1665 = vadd.f32 %v1527, %v1641
      %v1666 = vadd.f32 %v1528, %v1643
      %v1667 = vadd.f32 %v1529, %v1646
      %v1668 = vadd.f32 %v1530, %v1648
      %v1669 = vadd.f32 %v1531, %v1651
      %v1670 = vadd.f32 %v1532, %v1653
      %v1671 = vadd.f32 %v1533, %v1656
      %v1672 = vadd.f32 %v1534, %v1658
      %v1673 = vadd.f32 %v1535, %v1661
      %v1674 = vadd.f32 %v1536, %v1663
      %vm1675 = vcmask 64512
      %1676 = vst.msk [vmem:[%s224] sm:$0xff] %vm1675, %v1665
      %1677 = vst.msk [vmem:[%s224 + $0x8] sm:$0xff] %vm1675, %v1666
      %1678 = vst.msk [vmem:[%s224 + $0x10] sm:$0xff] %vm1675, %v1667
      %1679 = vst.msk [vmem:[%s224 + $0x18] sm:$0xff] %vm1675, %v1668
      %1680 = vst.msk [vmem:[%s224 + $0x20] sm:$0xff] %vm1675, %v1669
      %1681 = vst.msk [vmem:[%s224 + $0x28] sm:$0xff] %vm1675, %v1670
      %1682 = vst.msk [vmem:[%s224 + $0x30] sm:$0xff] %vm1675, %v1671
      %1683 = vst.msk [vmem:[%s224 + $0x38] sm:$0xff] %vm1675, %v1672
      %1684 = vst.msk [vmem:[%s224 + $0x40] sm:$0xff] %vm1675, %v1673
      %1685 = vst.msk [vmem:[%s224 + $0x48] sm:$0xff] %vm1675, %v1674
      %p1686 = scmp.lt.s32.totalorder %s16, 1
      %s1687 = scalar_select %p1686, %s16, 1
      %s1688 = smul.addr %s1687, 10
      %s1689 = smul.addr %s1688, 8
      %s1690 = scalar_lea.vmem %s5, %s1689
      // Predicated region
      $region41: #{densenet_forward.30} parent=39 // pred_check
        %p1691 = pneg %p144
      $region42: #{densenet_forward.30} parent=39 // pred_check_branch
        %1693 = sbr.rel (%p1691) target = $region44
      $region43: #{densenet_forward.30} parent=39 // pred_region
        _
      $region44: #{densenet_forward.30} parent=39 // pred_fallthru
        _
    $region40: #{densenet_forward.30} parent=5 // pred_fallthru
      _
    %p1694 = scmp.le.s32.totalorder 2, %s11
    // Predicated region
    $region45: #{densenet_forward.30} parent=5 // pred_check
      %p1695 = pneg %p1694
    $region46: #{densenet_forward.30} parent=5 // pred_check_branch
      %1697 = sbr.rel (%p1695) target = $region48
    $region47: #{densenet_forward.30} parent=5 // pred_region
      %s1698 = ssub.s32 %s11, 2
      // Predicated region
      $region49: #{densenet_forward.30} parent=47 // pred_check
        %p1699 = pneg %p150
      $region50: #{densenet_forward.30} parent=47 // pred_check_branch
        %1701 = sbr.rel (%p1699) target = $region52
      $region51: #{densenet_forward.30} parent=47 // pred_region
        %p1702 = scmp.lt.s32.totalorder %s17, 1
        %s1703 = scalar_select %p1702, %s17, 1
        %s1704 = smul.addr %s1703, 10
        %s1705 = smul.addr %s1704, 8
        %s1706 = scalar_lea.vmem %s5, %s1705
      $region52: #{densenet_forward.30} parent=47 // pred_fallthru
        _
    $region48: #{densenet_forward.30} parent=5 // pred_fallthru
      _
  $region6: #{densenet_forward.30} parent=0 // loop_footer
    %s15 = sadd.s32 1, %s11
  $region7: #{densenet_forward.30} parent=0 // loop_footer_branch
    %10 = sbr.rel target = $region3
  $region8: #{densenet_forward.30} parent=0 // loop_exit
    _

// kernel: densenet_forward.37
$region0: #{densenet_forward.37}
  #allocation0 [shape = 'u32[]', space=smem, size = 0x4, offset = 0x4, fixed_abs, tag = 'smem constant byte address 0x4 - core index']
  #allocation1 [shape = 'u32[72,128]{1,0:T(1,128)}', space=vmem, size = 0x9000, scoped, tag = 'internal scratch']
  %s0 = inlined_call_operand.vmem [shape: f32[2,8,8,128], index: 0, kind: input, shape index: {}, may-alias: {0,1}]
  %s1 = inlined_call_operand.vmem [shape: f32[2,8,8,128], index: 1, kind: input, shape index: {}, may-alias: {0,1}]
  %s2 = inlined_call_operand.vmem [shape: f32[2,4,4,128], index: 2, kind: output, shape index: {}]
  %s3 = sld [smem:[#allocation0]]
  $region41: #{densenet_forward.37} parent=0
    _
  %s5 = ssub.s32 1, %s3
  %s6 = scalar_select 0, %s5, %s3
  loop: start=0, step=1, limit=10
  $region2: #{densenet_forward.37} parent=0 // loop_pre_header
    _
  $region3: #{densenet_forward.37} parent=0 // loop_header
    %s8 = sphi 0, %s12
    %p9 = scmp.ge.s32.totalorder %s8, 10
    %s15 = sphi 0, %s27
    %s16 = sphi 0, %s23
    %s17 = sphi 0, %s15
    %s18 = sphi 0, %s16
    %s19 = sphi 0, %s17
    %s20 = sphi 0, %s18
    %s34 = sphi 0, %s36
    %s37 = sphi 0, %s34
    %s38 = sphi 0, %s37
    %s54 = sphi 0, %s38
    %s66 = sphi 0, %s68
    %s69 = sphi 0, %s66
    %s70 = sphi 0, %s69
    %s86 = sphi 0, %s70
    %s94 = sphi 0, %s96
    %s97 = sphi 0, %s94
    %s98 = sphi 0, %s97
    %s114 = sphi 0, %s98
  $region4: #{densenet_forward.37} parent=0 // loop_header_branch
    %11 = sbr.rel (%p9) target = $region8
  $region5: #{densenet_forward.37} parent=0 // loop_body
    %s13 = ssub.s32 %s8, 1
    %s14 = ssub.s32 %s8, 2
    %s21 = sadd.s32 1, %s16
    %p22 = scmp.ge.s32.totalorder %s21, 4
    %s23 = scalar_select %p22, 0, %s21
    %s24 = sadd.s32 1, %s15
    %s25 = scalar_select %p22, %s24, %s15
    %p26 = scmp.ge.s32.totalorder %s25, 2
    %s27 = scalar_select %p26, 0, %s25
    %s28 = smul.u32 %s16, 2
    %s29 = smul.u32 %s23, 2
    %s30 = ssub.s32 %s15, %s27
    %s31 = ssub.s32 %s28, %s29
    %s32 = sor.u32 %s30, %s31
    %p33 = scmp.eq.s32.totalorder %s32, 0
    %s35 = sadd.s32 %s34, 1
    %s36 = scalar_select %p33, %s34, %s35
    %p39 = pneg %p33
    %p40 = scmp.eq.s32.totalorder %s8, 7
    %p41 = por %p39, %p40
    %p42 = scmp.ne.s32.totalorder %s34, %s37
    %p43 = scmp.eq.s32.totalorder %s8, 0
    %p44 = por %p42, %p43
    %p45 = scmp.ne.s32.totalorder %s34, %s37
    %p46 = scmp.eq.s32.totalorder %s13, 7
    %p47 = por %p45, %p46
    %p48 = scmp.ne.s32.totalorder %s37, %s38
    %p49 = scmp.eq.s32.totalorder %s13, 0
    %p50 = por %p48, %p49
    %p51 = scmp.ne.s32.totalorder %s37, %s38
    %p52 = scmp.eq.s32.totalorder %s14, 7
    %p53 = por %p51, %p52
    %p55 = scmp.ne.s32.totalorder %s38, %s54
    %p56 = scmp.eq.s32.totalorder %s14, 0
    %p57 = por %p55, %p56
    %s58 = smul.u32 %s16, 2
    %s59 = sadd.s32 %s58, 1
    %s60 = smul.u32 %s23, 2
    %s61 = sadd.s32 %s60, 1
    %s62 = ssub.s32 %s15, %s27
    %s63 = ssub.s32 %s59, %s61
    %s64 = sor.u32 %s62, %s63
    %p65 = scmp.eq.s32.totalorder %s64, 0
    %s67 = sadd.s32 %s66, 1
    %s68 = scalar_select %p65, %s66, %s67
    %p71 = pneg %p65
    %p72 = scmp.eq.s32.totalorder %s8, 7
    %p73 = por %p71, %p72
    %p74 = scmp.ne.s32.totalorder %s66, %s69
    %p75 = scmp.eq.s32.totalorder %s8, 0
    %p76 = por %p74, %p75
    %p77 = scmp.ne.s32.totalorder %s66, %s69
    %p78 = scmp.eq.s32.totalorder %s13, 7
    %p79 = por %p77, %p78
    %p80 = scmp.ne.s32.totalorder %s69, %s70
    %p81 = scmp.eq.s32.totalorder %s13, 0
    %p82 = por %p80, %p81
    %p83 = scmp.ne.s32.totalorder %s69, %s70
    %p84 = scmp.eq.s32.totalorder %s14, 7
    %p85 = por %p83, %p84
    %p87 = scmp.ne.s32.totalorder %s70, %s86
    %p88 = scmp.eq.s32.totalorder %s14, 0
    %p89 = por %p87, %p88
    %s90 = ssub.s32 %s15, %s27
    %s91 = ssub.s32 %s16, %s23
    %s92 = sor.u32 %s90, %s91
    %p93 = scmp.eq.s32.totalorder %s92, 0
    %s95 = sadd.s32 %s94, 1
    %s96 = scalar_select %p93, %s94, %s95
    %p99 = pneg %p93
    %p100 = scmp.eq.s32.totalorder %s8, 7
    %p101 = por %p99, %p100
    %p102 = scmp.ne.s32.totalorder %s94, %s97
    %p103 = scmp.eq.s32.totalorder %s8, 0
    %p104 = por %p102, %p103
    %p105 = scmp.ne.s32.totalorder %s94, %s97
    %p106 = scmp.eq.s32.totalorder %s13, 7
    %p107 = por %p105, %p106
    %p108 = scmp.ne.s32.totalorder %s97, %s98
    %p109 = scmp.eq.s32.totalorder %s13, 0
    %p110 = por %p108, %p109
    %p111 = scmp.ne.s32.totalorder %s97, %s98
    %p112 = scmp.eq.s32.totalorder %s14, 7
    %p113 = por %p111, %p112
    %p115 = scmp.ne.s32.totalorder %s98, %s114
    %p116 = scmp.eq.s32.totalorder %s14, 0
    %p117 = por %p115, %p116
    %p118 = scmp.le.s32.totalorder 1, %s8
    %p119 = scmp.lt.s32.totalorder %s8, 9
    %p120 = pnand %p118, %p119
    %p121 = pneg %p120
    // Predicated region
    $region9: #{densenet_forward.37} parent=5 // pred_check
      _
    $region10: #{densenet_forward.37} parent=5 // pred_check_branch
      %123 = sbr.rel (%p120) target = $region12
    $region11: #{densenet_forward.37} parent=5 // pred_region
      %s124 = ssub.s32 %s8, 1
    $region12: #{densenet_forward.37} parent=5 // pred_fallthru
      _
    %p125 = scmp.lt.s32.totalorder %s8, 8
    // Predicated region
    $region13: #{densenet_forward.37} parent=5 // pred_check
      %p126 = pneg %p125
    $region14: #{densenet_forward.37} parent=5 // pred_check_branch
      %128 = sbr.rel (%p126) target = $region16
    $region15: #{densenet_forward.37} parent=5 // pred_region
      // Predicated region
      $region17: #{densenet_forward.37} parent=15 // pred_check
        %p129 = pneg %p44
      $region18: #{densenet_forward.37} parent=15 // pred_check_branch
        %131 = sbr.rel (%p129) target = $region20
      $region19: #{densenet_forward.37} parent=15 // pred_region
        %s132 = smul.u32 %s16, 2
        %p133 = scmp.lt.s32.totalorder %s15, 1
        %s134 = scalar_select %p133, %s15, 1
        %p135 = scmp.lt.s32.totalorder %s132, 7
        %s136 = scalar_select %p135, %s132, 7
        %s137 = smul.addr %s134, 8
        %s138 = sadd.s32 %s136, %s137
        %s139 = smul.addr %s138, 8
        %s140 = scalar_lea.vmem %s0, %s139
        %s141 = smul.u32 %s16, 2
      $region20: #{densenet_forward.37} parent=15 // pred_fallthru
        _
      // Predicated region
      $region21: #{densenet_forward.37} parent=15 // pred_check
        %p142 = pneg %p76
      $region22: #{densenet_forward.37} parent=15 // pred_check_branch
        %144 = sbr.rel (%p142) target = $region24
      $region23: #{densenet_forward.37} parent=15 // pred_region
        %s145 = smul.u32 %s16, 2
        %s146 = sadd.s32 %s145, 1
        %p147 = scmp.lt.s32.totalorder %s15, 1
        %s148 = scalar_select %p147, %s15, 1
        %p149 = scmp.lt.s32.totalorder %s146, 7
        %s150 = scalar_select %p149, %s146, 7
        %s151 = smul.addr %s148, 8
        %s152 = sadd.s32 %s150, %s151
        %s153 = smul.addr %s152, 8
        %s154 = scalar_lea.vmem %s1, %s153
        %s155 = smul.u32 %s16, 2
        %s156 = sadd.s32 %s155, 1
      $region24: #{densenet_forward.37} parent=15 // pred_fallthru
        _
    $region16: #{densenet_forward.37} parent=5 // pred_fallthru
      _
    %p157 = scmp.le.s32.totalorder 1, %s8
    %p158 = scmp.lt.s32.totalorder %s8, 9
    %p159 = pnand %p157, %p158
    %p160 = pneg %p159
    // Predicated region
    $region25: #{densenet_forward.37} parent=5 // pred_check
      _
    $region26: #{densenet_forward.37} parent=5 // pred_check_branch
      %162 = sbr.rel (%p159) target = $region28
    $region27: #{densenet_forward.37} parent=5 // pred_region
      %s163 = ssub.s32 %s8, 1
      %s164 = smul.u32 %s18, 2
      %p165 = scmp.lt.s32.totalorder %s17, 1
      %s166 = scalar_select %p165, %s17, 1
      %p167 = scmp.lt.s32.totalorder %s164, 7
      %s168 = scalar_select %p167, %s164, 7
      %s169 = smul.addr %s166, 8
      %s170 = sadd.s32 %s168, %s169
      %s171 = smul.addr %s170, 8
      %s172 = scalar_lea.vmem %s0, %s171
      %p173 = pneg %p50
      %p174 = pneg %p47
      %s175 = smul.u32 %s18, 2
      %s176 = sadd.s32 %s175, 1
      %p177 = scmp.lt.s32.totalorder %s17, 1
      %s178 = scalar_select %p177, %s17, 1
      %p179 = scmp.lt.s32.totalorder %s176, 7
      %s180 = scalar_select %p179, %s176, 7
      %s181 = smul.addr %s178, 8
      %s182 = sadd.s32 %s180, %s181
      %s183 = smul.addr %s182, 8
      %s184 = scalar_lea.vmem %s1, %s183
      %p185 = pneg %p82
      %p186 = pneg %p79
      %p187 = pneg %p110
      %p188 = pneg %p107
      %p189 = scmp.lt.s32.totalorder %s17, 1
      %s190 = scalar_select %p189, %s17, 1
      %p191 = scmp.lt.s32.totalorder %s18, 3
      %s192 = scalar_select %p191, %s18, 3
      %s193 = smul.addr %s190, 4
      %s194 = sadd.s32 %s192, %s193
      %s195 = smul.addr %s194, 4
      %s196 = scalar_lea.vmem %s2, %s195
      %s197 = smul.u32 %s18, 2
      %p198 = scmp.lt.s32.totalorder %s17, 1
      %s199 = scalar_select %p198, %s17, 1
      %p200 = scmp.lt.s32.totalorder %s197, 7
      %s201 = scalar_select %p200, %s197, 7
      %s202 = smul.addr %s199, 8
      %s203 = sadd.s32 %s201, %s202
      %s204 = smul.addr %s203, 8
      %s205 = scalar_lea.vmem %s0, %s204
      %s206 = smul.u32 %s18, 2
      %s207 = smul.u32 %s18, 2
      %s208 = sadd.s32 %s207, 1
      %p209 = scmp.lt.s32.totalorder %s17, 1
      %s210 = scalar_select %p209, %s17, 1
      %p211 = scmp.lt.s32.totalorder %s208, 7
      %s212 = scalar_select %p211, %s208, 7
      %s213 = smul.addr %s210, 8
      %s214 = sadd.s32 %s212, %s213
      %s215 = smul.addr %s214, 8
      %s216 = scalar_lea.vmem %s1, %s215
      %s217 = smul.u32 %s18, 2
      %s218 = sadd.s32 %s217, 1
      %p219 = scmp.lt.s32.totalorder %s17, 1
      %s220 = scalar_select %p219, %s17, 1
      %p221 = scmp.lt.s32.totalorder %s18, 3
      %s222 = scalar_select %p221, %s18, 3
      %s223 = smul.addr %s220, 4
      %s224 = sadd.s32 %s222, %s223
      %s225 = smul.addr %s224, 4
      %s226 = scalar_lea.vmem %s2, %s225
      %v227 = vld [vmem:[%s205] sm:$0xff]
      %v228 = vld [vmem:[%s216] sm:$0xff]
      %v229 = vadd.f32 %v227, %v228
      %v230 = vlaneseq
      %v231 = vshrl.u32 %v230, 7
      %v232 = vlaneseq
      %v233 = vand.u32 %v232, 127
      %v234 = vmul.u32 %v231, 2
      %vm235 = vcmp.eq.s32.totalorder %v233, %v234
      %v236 = vadd.s32 %v234, 1
      %vm237 = vcmp.eq.s32.totalorder %v233, %v236
      %vm238 = vmor %vm235, %vm237
      %v239 = vsel %vm238, 0.25, 0.0
      %vm240 = vcmask 64512
      %v242 = vsel %vm240, %v239, 0
      %244 = vmatpush.msra.mxu0 0.0
      %245 = vmatpush.msra.mxu0 0.0
      %246 = vmatpush.msra.mxu0 0.0
      %247 = vmatpush.msra.mxu0 0.0
      %248 = vmatpush.msra.mxu0 0.0
      %249 = vmatpush.msra.mxu0 0.0
      %250 = vmatpush.msra.mxu0 0.0
      %251 = vmatpush.msra.mxu0 0.0
      %252 = vmatpush.msra.mxu0 0.0
      %253 = vmatpush.msra.mxu0 0.0
      %254 = vmatpush.msra.mxu0 0.0
      %255 = vmatpush.msra.mxu0 0.0
      %256 = vmatpush.msra.mxu0 0.0
      %257 = vmatpush.msra.mxu0 0.0
      %258 = vmatpush.msra.mxu0 0.0
      %259 = vmatpush.msra.mxu0 %v229
      %260 = vmatmul.f32.gmra.mxu0 %v242
      %v261 = vpop.f32.mrf.mxu0
      %v262 = vadd.f32 0.0, %v261
      %263 = vdwg.mxu0
      %264 = vst [vmem:[%s226] sm:$0xf] %v262
      %p265 = scmp.lt.s32.totalorder %s17, 1
      %s266 = scalar_select %p265, %s17, 1
      %p267 = scmp.lt.s32.totalorder %s18, 3
      %s268 = scalar_select %p267, %s18, 3
      %s269 = smul.addr %s266, 4
      %s270 = sadd.s32 %s268, %s269
      %s271 = smul.addr %s270, 4
      %s272 = scalar_lea.vmem %s2, %s271
      // Predicated region
      $region29: #{densenet_forward.37} parent=27 // pred_check
        %p273 = pneg %p107
      $region30: #{densenet_forward.37} parent=27 // pred_check_branch
        %275 = sbr.rel (%p273) target = $region32
      $region31: #{densenet_forward.37} parent=27 // pred_region
        _
      $region32: #{densenet_forward.37} parent=27 // pred_fallthru
        _
    $region28: #{densenet_forward.37} parent=5 // pred_fallthru
      _
    %p276 = scmp.le.s32.totalorder 2, %s8
    // Predicated region
    $region33: #{densenet_forward.37} parent=5 // pred_check
      %p277 = pneg %p276
    $region34: #{densenet_forward.37} parent=5 // pred_check_branch
      %279 = sbr.rel (%p277) target = $region36
    $region35: #{densenet_forward.37} parent=5 // pred_region
      %s280 = ssub.s32 %s8, 2
      // Predicated region
      $region37: #{densenet_forward.37} parent=35 // pred_check
        %p281 = pneg %p113
      $region38: #{densenet_forward.37} parent=35 // pred_check_branch
        %283 = sbr.rel (%p281) target = $region40
      $region39: #{densenet_forward.37} parent=35 // pred_region
        %p284 = scmp.lt.s32.totalorder %s19, 1
        %s285 = scalar_select %p284, %s19, 1
        %p286 = scmp.lt.s32.totalorder %s20, 3
        %s287 = scalar_select %p286, %s20, 3
        %s288 = smul.addr %s285, 4
        %s289 = sadd.s32 %s287, %s288
        %s290 = smul.addr %s289, 4
        %s291 = scalar_lea.vmem %s2, %s290
      $region40: #{densenet_forward.37} parent=35 // pred_fallthru
        _
    $region36: #{densenet_forward.37} parent=5 // pred_fallthru
      _
  $region6: #{densenet_forward.37} parent=0 // loop_footer
    %s12 = sadd.s32 1, %s8
  $region7: #{densenet_forward.37} parent=0 // loop_footer_branch
    %7 = sbr.rel target = $region3
  $region8: #{densenet_forward.37} parent=0 // loop_exit
    _

// kernel: densenet_forward.38
$region0: #{densenet_forward.38}
  #allocation0 [shape = 'u32[]', space=smem, size = 0x4, offset = 0x4, fixed_abs, tag = 'smem constant byte address 0x4 - core index']
  #allocation1 [shape = 'u32[72,128]{1,0:T(1,128)}', space=vmem, size = 0x9000, scoped, tag = 'internal scratch']
  %s0 = inlined_call_operand.vmem [shape: f32[32,128], index: 0, kind: input, shape index: {}]
  %s1 = inlined_call_operand.vmem [shape: f32[1,128], index: 1, kind: output, shape index: {0}]
  %s2 = inlined_call_operand.vmem [shape: f32[1,128], index: 2, kind: output, shape index: {1}]
  %3 = xla_tuple %s1, %s2
  %s4 = sld [smem:[#allocation0]]
  $region49: #{densenet_forward.38} parent=0
    _
  %s6 = ssub.s32 1, %s4
  %s7 = scalar_select 0, %s6, %s4
  loop: start=0, step=1, limit=4
  $region2: #{densenet_forward.38} parent=0 // loop_pre_header
    _
  $region3: #{densenet_forward.38} parent=0 // loop_header
    %s9 = sphi 0, %s13
    %p10 = scmp.ge.s32.totalorder %s9, 4
    %s19 = sphi 0, %s21
    %s22 = sphi 0, %s19
    %s23 = sphi 0, %s22
    %s39 = sphi 0, %s23
    %s43 = sphi 0, %s43
    %s45 = sphi 0, %s43
    %s46 = sphi 0, %s45
    %s60 = sphi 0, %s46
    %s64 = sphi 0, %s64
    %s66 = sphi 0, %s64
    %s67 = sphi 0, %s66
    %s81 = sphi 0, %s67
  $region4: #{densenet_forward.38} parent=0 // loop_header_branch
    %12 = sbr.rel (%p10) target = $region8
  $region5: #{densenet_forward.38} parent=0 // loop_body
    %s14 = ssub.s32 %s9, 1
    %s15 = ssub.s32 %s9, 2
    %s16 = sadd.s32 %s9, 1
    %s17 = ssub.s32 %s9, %s16
    %p18 = scmp.eq.s32.totalorder %s17, 0
    %s20 = sadd.s32 %s19, 1
    %s21 = scalar_select %p18, %s19, %s20
    %p24 = pneg %p18
    %p25 = scmp.eq.s32.totalorder %s9, 1
    %p26 = por %p24, %p25
    %p27 = scmp.ne.s32.totalorder %s19, %s22
    %p28 = scmp.eq.s32.totalorder %s9, 0
    %p29 = por %p27, %p28
    %p30 = scmp.ne.s32.totalorder %s19, %s22
    %p31 = scmp.eq.s32.totalorder %s14, 1
    %p32 = por %p30, %p31
    %p33 = scmp.ne.s32.totalorder %s22, %s23
    %p34 = scmp.eq.s32.totalorder %s14, 0
    %p35 = por %p33, %p34
    %p36 = scmp.ne.s32.totalorder %s22, %s23
    %p37 = scmp.eq.s32.totalorder %s15, 1
    %p38 = por %p36, %p37
    %p40 = scmp.ne.s32.totalorder %s23, %s39
    %p41 = scmp.eq.s32.totalorder %s15, 0
    %p42 = por %p40, %p41
    %s44 = sadd.s32 %s43, 1
    %p47 = scmp.eq.s32.totalorder %s9, 1
    %p48 = scmp.ne.s32.totalorder %s43, %s45
    %p49 = scmp.eq.s32.totalorder %s9, 0
    %p50 = por %p48, %p49
    %p51 = scmp.ne.s32.totalorder %s43, %s45
    %p52 = scmp.eq.s32.totalorder %s14, 1
    %p53 = por %p51, %p52
    %p54 = scmp.ne.s32.totalorder %s45, %s46
    %p55 = scmp.eq.s32.totalorder %s14, 0
    %p56 = por %p54, %p55
    %p57 = scmp.ne.s32.totalorder %s45, %s46
    %p58 = scmp.eq.s32.totalorder %s15, 1
    %p59 = por %p57, %p58
    %p61 = scmp.ne.s32.totalorder %s46, %s60
    %p62 = scmp.eq.s32.totalorder %s15, 0
    %p63 = por %p61, %p62
    %s65 = sadd.s32 %s64, 1
    %p68 = scmp.eq.s32.totalorder %s9, 1
    %p69 = scmp.ne.s32.totalorder %s64, %s66
    %p70 = scmp.eq.s32.totalorder %s9, 0
    %p71 = por %p69, %p70
    %p72 = scmp.ne.s32.totalorder %s64, %s66
    %p73 = scmp.eq.s32.totalorder %s14, 1
    %p74 = por %p72, %p73
    %p75 = scmp.ne.s32.totalorder %s66, %s67
    %p76 = scmp.eq.s32.totalorder %s14, 0
    %p77 = por %p75, %p76
    %p78 = scmp.ne.s32.totalorder %s66, %s67
    %p79 = scmp.eq.s32.totalorder %s15, 1
    %p80 = por %p78, %p79
    %p82 = scmp.ne.s32.totalorder %s67, %s81
    %p83 = scmp.eq.s32.totalorder %s15, 0
    %p84 = por %p82, %p83
    %p85 = scmp.le.s32.totalorder 1, %s9
    %p86 = scmp.lt.s32.totalorder %s9, 3
    %p87 = pnand %p85, %p86
    %p88 = pneg %p87
    // Predicated region
    $region9: #{densenet_forward.38} parent=5 // pred_check
      _
    $region10: #{densenet_forward.38} parent=5 // pred_check_branch
      %90 = sbr.rel (%p87) target = $region12
    $region11: #{densenet_forward.38} parent=5 // pred_region
      %s91 = ssub.s32 %s9, 1
    $region12: #{densenet_forward.38} parent=5 // pred_fallthru
      _
    %p92 = scmp.lt.s32.totalorder %s9, 2
    // Predicated region
    $region13: #{densenet_forward.38} parent=5 // pred_check
      %p93 = pneg %p92
    $region14: #{densenet_forward.38} parent=5 // pred_check_branch
      %95 = sbr.rel (%p93) target = $region16
    $region15: #{densenet_forward.38} parent=5 // pred_region
      // Predicated region
      $region17: #{densenet_forward.38} parent=15 // pred_check
        %p96 = pneg %p29
      $region18: #{densenet_forward.38} parent=15 // pred_check_branch
        %98 = sbr.rel (%p96) target = $region20
      $region19: #{densenet_forward.38} parent=15 // pred_region
        %s99 = smul.u32 2, %s9
        %p100 = scmp.lt.s32.totalorder %s99, 3
        %s101 = scalar_select %p100, %s99, 3
        %s102 = smul.addr %s101, 8
        %s103 = scalar_lea.vmem %s0, %s102
        %s104 = smul.u32 2, %s9
      $region20: #{densenet_forward.38} parent=15 // pred_fallthru
        _
    $region16: #{densenet_forward.38} parent=5 // pred_fallthru
      _
    %p105 = scmp.le.s32.totalorder 1, %s9
    %p106 = scmp.lt.s32.totalorder %s9, 3
    %p107 = pnand %p105, %p106
    %p108 = pneg %p107
    // Predicated region
    $region21: #{densenet_forward.38} parent=5 // pred_check
      _
    $region22: #{densenet_forward.38} parent=5 // pred_check_branch
      %110 = sbr.rel (%p107) target = $region24
    $region23: #{densenet_forward.38} parent=5 // pred_region
      %s111 = ssub.s32 %s9, 1
      %s112 = smul.u32 2, %s14
      %p113 = scmp.lt.s32.totalorder %s112, 3
      %s114 = scalar_select %p113, %s112, 3
      %s115 = smul.addr %s114, 8
      %s116 = scalar_lea.vmem %s0, %s115
      %p117 = pneg %p35
      %p118 = pneg %p32
      %p119 = pneg %p56
      %p120 = pneg %p53
      %p121 = pneg %p77
      %p122 = pneg %p74
      %s123 = smul.u32 2, %s14
      %p124 = scmp.lt.s32.totalorder %s123, 3
      %s125 = scalar_select %p124, %s123, 3
      %s126 = smul.addr %s125, 8
      %s127 = scalar_lea.vmem %s0, %s126
      %s128 = smul.u32 2, %s14
      %p129 = scmp.eq.s32.totalorder %s14, 0
      // Predicated region
      $region25: #{densenet_forward.38} parent=23 // pred_check
        %p130 = pneg %p129
      $region26: #{densenet_forward.38} parent=23 // pred_check_branch
        %132 = sbr.rel (%p130) target = $region28
      $region27: #{densenet_forward.38} parent=23 // pred_region
        %133 = vst [vmem:[%s1] sm:$0x1] 0.0
        %134 = vst [vmem:[%s2] sm:$0x1] 0.0
      $region28: #{densenet_forward.38} parent=23 // pred_fallthru
        _
      %v135 = vld [vmem:[%s127] sm:$0xff]
      %v136 = vld [vmem:[%s127 + $0x8] sm:$0xff]
      %v137 = vlaneseq
      %v138 = vshrl.u32 %v137, 7
      %v139 = vadd.s32 %v138, 8
      %s140 = smul.u32 %s14, 16
      %v141 = vstv %s140
      %v142 = vadd.s32 %v138, %v141
      %v143 = vadd.s32 %v139, %v141
      %vm144 = vcmp.lt.s32.totalorder %v142, 32
      %vm145 = vcmp.lt.s32.totalorder %v143, 32
      %v146 = vsel %vm144, %v135, 0.0
      %v147 = vsel %vm145, %v136, 0.0
      %v148 = vld [vmem:[%s1] sm:$0x1]
      %v149 = vadd.f32 %v146, %v147
      %v150 = vrot.slane %v149, 4
      %v151 = vadd.f32 %v149, %v150
      %v152 = vrot.slane %v151, 2
      %v153 = vadd.f32 %v151, %v152
      %v154 = vrot.slane %v153, 1
      %v155 = vadd.f32 %v153, %v154
      %v156 = vadd.f32 %v148, %v155
      %157 = vst [vmem:[%s1] sm:$0x1] %v156
      %v158 = vld [vmem:[%s2] sm:$0x1]
      %v159 = vmul.f32 %v146, %v146
      %v160 = vmul.f32 %v147, %v147
      %v161 = vadd.f32 %v159, %v160
      %v162 = vrot.slane %v161, 4
      %v163 = vadd.f32 %v161, %v162
      %v164 = vrot.slane %v163, 2
      %v165 = vadd.f32 %v163, %v164
      %v166 = vrot.slane %v165, 1
      %v167 = vadd.f32 %v165, %v166
      %v168 = vadd.f32 %v158, %v167
      %169 = vst [vmem:[%s2] sm:$0x1] %v168
      // Predicated region
      $region29: #{densenet_forward.38} parent=23 // pred_check
        %p170 = pneg %p53
      $region30: #{densenet_forward.38} parent=23 // pred_check_branch
        %172 = sbr.rel (%p170) target = $region32
      $region31: #{densenet_forward.38} parent=23 // pred_region
        _
      $region32: #{densenet_forward.38} parent=23 // pred_fallthru
        _
      // Predicated region
      $region33: #{densenet_forward.38} parent=23 // pred_check
        %p173 = pneg %p74
      $region34: #{densenet_forward.38} parent=23 // pred_check_branch
        %175 = sbr.rel (%p173) target = $region36
      $region35: #{densenet_forward.38} parent=23 // pred_region
        _
      $region36: #{densenet_forward.38} parent=23 // pred_fallthru
        _
      // Predicated region
      $region37: #{densenet_forward.38} parent=23 // pred_check
        %p176 = pneg %p53
      $region38: #{densenet_forward.38} parent=23 // pred_check_branch
        %178 = sbr.rel (%p176) target = $region40
      $region39: #{densenet_forward.38} parent=23 // pred_region
        _
      $region40: #{densenet_forward.38} parent=23 // pred_fallthru
        _
      // Predicated region
      $region41: #{densenet_forward.38} parent=23 // pred_check
        %p179 = pneg %p74
      $region42: #{densenet_forward.38} parent=23 // pred_check_branch
        %181 = sbr.rel (%p179) target = $region44
      $region43: #{densenet_forward.38} parent=23 // pred_region
        _
      $region44: #{densenet_forward.38} parent=23 // pred_fallthru
        _
    $region24: #{densenet_forward.38} parent=5 // pred_fallthru
      _
    %p182 = scmp.le.s32.totalorder 2, %s9
    // Predicated region
    $region45: #{densenet_forward.38} parent=5 // pred_check
      %p183 = pneg %p182
    $region46: #{densenet_forward.38} parent=5 // pred_check_branch
      %185 = sbr.rel (%p183) target = $region48
    $region47: #{densenet_forward.38} parent=5 // pred_region
      %s186 = ssub.s32 %s9, 2
    $region48: #{densenet_forward.38} parent=5 // pred_fallthru
      _
  $region6: #{densenet_forward.38} parent=0 // loop_footer
    %s13 = sadd.s32 1, %s9
  $region7: #{densenet_forward.38} parent=0 // loop_footer_branch
    %8 = sbr.rel target = $region3
  $region8: #{densenet_forward.38} parent=0 // loop_exit
    _

// kernel: densenet_forward.39
$region0: #{densenet_forward.39}
  #allocation0 [shape = 'u32[]', space=smem, size = 0x4, offset = 0x4, fixed_abs, tag = 'smem constant byte address 0x4 - core index']
  #allocation1 [shape = 'u32[72,128]{1,0:T(1,128)}', space=vmem, size = 0x9000, scoped, tag = 'internal scratch']
  %s0 = inlined_call_operand.vmem [shape: f32[32,128], index: 0, kind: input, shape index: {}]
  %s1 = inlined_call_operand.vmem [shape: f32[1,128], index: 1, kind: input, shape index: {}]
  %s2 = inlined_call_operand.vmem [shape: f32[1,128], index: 2, kind: input, shape index: {}]
  %s3 = inlined_call_operand.vmem [shape: bf16[128,128], index: 3, kind: input, shape index: {}]
  %s4 = inlined_call_operand.vmem [shape: f32[32,128], index: 4, kind: output, shape index: {}]
  %s5 = sld [smem:[#allocation0]]
  $region49: #{densenet_forward.39} parent=0
    _
  %s7 = ssub.s32 1, %s5
  %s8 = scalar_select 0, %s7, %s5
  loop: start=0, step=1, limit=4
  $region2: #{densenet_forward.39} parent=0 // loop_pre_header
    _
  $region3: #{densenet_forward.39} parent=0 // loop_header
    %s10 = sphi 0, %s14
    %p11 = scmp.ge.s32.totalorder %s10, 4
    %s20 = sphi 0, %s22
    %s23 = sphi 0, %s20
    %s24 = sphi 0, %s23
    %s40 = sphi 0, %s24
    %s44 = sphi 0, %s44
    %s46 = sphi 0, %s44
    %s47 = sphi 0, %s46
    %s61 = sphi 0, %s47
    %s65 = sphi 0, %s65
    %s67 = sphi 0, %s65
    %s68 = sphi 0, %s67
    %s82 = sphi 0, %s68
    %s86 = sphi 0, %s86
    %s88 = sphi 0, %s86
    %s89 = sphi 0, %s88
    %s103 = sphi 0, %s89
    %s109 = sphi 0, %s111
    %s112 = sphi 0, %s109
    %s113 = sphi 0, %s112
    %s129 = sphi 0, %s113
  $region4: #{densenet_forward.39} parent=0 // loop_header_branch
    %13 = sbr.rel (%p11) target = $region8
  $region5: #{densenet_forward.39} parent=0 // loop_body
    %s15 = ssub.s32 %s10, 1
    %s16 = ssub.s32 %s10, 2
    %s17 = sadd.s32 %s10, 1
    %s18 = ssub.s32 %s10, %s17
    %p19 = scmp.eq.s32.totalorder %s18, 0
    %s21 = sadd.s32 %s20, 1
    %s22 = scalar_select %p19, %s20, %s21
    %p25 = pneg %p19
    %p26 = scmp.eq.s32.totalorder %s10, 1
    %p27 = por %p25, %p26
    %p28 = scmp.ne.s32.totalorder %s20, %s23
    %p29 = scmp.eq.s32.totalorder %s10, 0
    %p30 = por %p28, %p29
    %p31 = scmp.ne.s32.totalorder %s20, %s23
    %p32 = scmp.eq.s32.totalorder %s15, 1
    %p33 = por %p31, %p32
    %p34 = scmp.ne.s32.totalorder %s23, %s24
    %p35 = scmp.eq.s32.totalorder %s15, 0
    %p36 = por %p34, %p35
    %p37 = scmp.ne.s32.totalorder %s23, %s24
    %p38 = scmp.eq.s32.totalorder %s16, 1
    %p39 = por %p37, %p38
    %p41 = scmp.ne.s32.totalorder %s24, %s40
    %p42 = scmp.eq.s32.totalorder %s16, 0
    %p43 = por %p41, %p42
    %s45 = sadd.s32 %s44, 1
    %p48 = scmp.eq.s32.totalorder %s10, 1
    %p49 = scmp.ne.s32.totalorder %s44, %s46
    %p50 = scmp.eq.s32.totalorder %s10, 0
    %p51 = por %p49, %p50
    %p52 = scmp.ne.s32.totalorder %s44, %s46
    %p53 = scmp.eq.s32.totalorder %s15, 1
    %p54 = por %p52, %p53
    %p55 = scmp.ne.s32.totalorder %s46, %s47
    %p56 = scmp.eq.s32.totalorder %s15, 0
    %p57 = por %p55, %p56
    %p58 = scmp.ne.s32.totalorder %s46, %s47
    %p59 = scmp.eq.s32.totalorder %s16, 1
    %p60 = por %p58, %p59
    %p62 = scmp.ne.s32.totalorder %s47, %s61
    %p63 = scmp.eq.s32.totalorder %s16, 0
    %p64 = por %p62, %p63
    %s66 = sadd.s32 %s65, 1
    %p69 = scmp.eq.s32.totalorder %s10, 1
    %p70 = scmp.ne.s32.totalorder %s65, %s67
    %p71 = scmp.eq.s32.totalorder %s10, 0
    %p72 = por %p70, %p71
    %p73 = scmp.ne.s32.totalorder %s65, %s67
    %p74 = scmp.eq.s32.totalorder %s15, 1
    %p75 = por %p73, %p74
    %p76 = scmp.ne.s32.totalorder %s67, %s68
    %p77 = scmp.eq.s32.totalorder %s15, 0
    %p78 = por %p76, %p77
    %p79 = scmp.ne.s32.totalorder %s67, %s68
    %p80 = scmp.eq.s32.totalorder %s16, 1
    %p81 = por %p79, %p80
    %p83 = scmp.ne.s32.totalorder %s68, %s82
    %p84 = scmp.eq.s32.totalorder %s16, 0
    %p85 = por %p83, %p84
    %s87 = sadd.s32 %s86, 1
    %p90 = scmp.eq.s32.totalorder %s10, 1
    %p91 = scmp.ne.s32.totalorder %s86, %s88
    %p92 = scmp.eq.s32.totalorder %s10, 0
    %p93 = por %p91, %p92
    %p94 = scmp.ne.s32.totalorder %s86, %s88
    %p95 = scmp.eq.s32.totalorder %s15, 1
    %p96 = por %p94, %p95
    %p97 = scmp.ne.s32.totalorder %s88, %s89
    %p98 = scmp.eq.s32.totalorder %s15, 0
    %p99 = por %p97, %p98
    %p100 = scmp.ne.s32.totalorder %s88, %s89
    %p101 = scmp.eq.s32.totalorder %s16, 1
    %p102 = por %p100, %p101
    %p104 = scmp.ne.s32.totalorder %s89, %s103
    %p105 = scmp.eq.s32.totalorder %s16, 0
    %p106 = por %p104, %p105
    %s107 = ssub.s32 %s10, %s17
    %p108 = scmp.eq.s32.totalorder %s107, 0
    %s110 = sadd.s32 %s109, 1
    %s111 = scalar_select %p108, %s109, %s110
    %p114 = pneg %p108
    %p115 = scmp.eq.s32.totalorder %s10, 1
    %p116 = por %p114, %p115
    %p117 = scmp.ne.s32.totalorder %s109, %s112
    %p118 = scmp.eq.s32.totalorder %s10, 0
    %p119 = por %p117, %p118
    %p120 = scmp.ne.s32.totalorder %s109, %s112
    %p121 = scmp.eq.s32.totalorder %s15, 1
    %p122 = por %p120, %p121
    %p123 = scmp.ne.s32.totalorder %s112, %s113
    %p124 = scmp.eq.s32.totalorder %s15, 0
    %p125 = por %p123, %p124
    %p126 = scmp.ne.s32.totalorder %s112, %s113
    %p127 = scmp.eq.s32.totalorder %s16, 1
    %p128 = por %p126, %p127
    %p130 = scmp.ne.s32.totalorder %s113, %s129
    %p131 = scmp.eq.s32.totalorder %s16, 0
    %p132 = por %p130, %p131
    %p133 = scmp.le.s32.totalorder 1, %s10
    %p134 = scmp.lt.s32.totalorder %s10, 3
    %p135 = pnand %p133, %p134
    %p136 = pneg %p135
    // Predicated region
    $region9: #{densenet_forward.39} parent=5 // pred_check
      _
    $region10: #{densenet_forward.39} parent=5 // pred_check_branch
      %138 = sbr.rel (%p135) target = $region12
    $region11: #{densenet_forward.39} parent=5 // pred_region
      %s139 = ssub.s32 %s10, 1
      // Predicated region
      $region13: #{densenet_forward.39} parent=11 // pred_check
        %p140 = pneg %p57
      $region14: #{densenet_forward.39} parent=11 // pred_check_branch
        %142 = sbr.rel (%p140) target = $region16
      $region15: #{densenet_forward.39} parent=11 // pred_region
        _
      $region16: #{densenet_forward.39} parent=11 // pred_fallthru
        _
      // Predicated region
      $region17: #{densenet_forward.39} parent=11 // pred_check
        %p143 = pneg %p78
      $region18: #{densenet_forward.39} parent=11 // pred_check_branch
        %145 = sbr.rel (%p143) target = $region20
      $region19: #{densenet_forward.39} parent=11 // pred_region
        _
      $region20: #{densenet_forward.39} parent=11 // pred_fallthru
        _
      // Predicated region
      $region21: #{densenet_forward.39} parent=11 // pred_check
        %p146 = pneg %p99
      $region22: #{densenet_forward.39} parent=11 // pred_check_branch
        %148 = sbr.rel (%p146) target = $region24
      $region23: #{densenet_forward.39} parent=11 // pred_region
        _
      $region24: #{densenet_forward.39} parent=11 // pred_fallthru
        _
    $region12: #{densenet_forward.39} parent=5 // pred_fallthru
      _
    %p149 = scmp.lt.s32.totalorder %s10, 2
    // Predicated region
    $region25: #{densenet_forward.39} parent=5 // pred_check
      %p150 = pneg %p149
    $region26: #{densenet_forward.39} parent=5 // pred_check_branch
      %152 = sbr.rel (%p150) target = $region28
    $region27: #{densenet_forward.39} parent=5 // pred_region
      // Predicated region
      $region29: #{densenet_forward.39} parent=27 // pred_check
        %p153 = pneg %p30
      $region30: #{densenet_forward.39} parent=27 // pred_check_branch
        %155 = sbr.rel (%p153) target = $region32
      $region31: #{densenet_forward.39} parent=27 // pred_region
        %s156 = smul.u32 2, %s10
        %p157 = scmp.lt.s32.totalorder %s156, 3
        %s158 = scalar_select %p157, %s156, 3
        %s159 = smul.addr %s158, 8
        %s160 = scalar_lea.vmem %s0, %s159
        %s161 = smul.u32 2, %s10
      $region32: #{densenet_forward.39} parent=27 // pred_fallthru
        _
    $region28: #{densenet_forward.39} parent=5 // pred_fallthru
      _
    %p162 = scmp.le.s32.totalorder 1, %s10
    %p163 = scmp.lt.s32.totalorder %s10, 3
    %p164 = pnand %p162, %p163
    %p165 = pneg %p164
    // Predicated region
    $region33: #{densenet_forward.39} parent=5 // pred_check
      _
    $region34: #{densenet_forward.39} parent=5 // pred_check_branch
      %167 = sbr.rel (%p164) target = $region36
    $region35: #{densenet_forward.39} parent=5 // pred_region
      %s168 = ssub.s32 %s10, 1
      %s169 = smul.u32 2, %s15
      %p170 = scmp.lt.s32.totalorder %s169, 3
      %s171 = scalar_select %p170, %s169, 3
      %s172 = smul.addr %s171, 8
      %s173 = scalar_lea.vmem %s0, %s172
      %p174 = pneg %p36
      %p175 = pneg %p33
      %p176 = pneg %p57
      %p177 = pneg %p54
      %p178 = pneg %p78
      %p179 = pneg %p75
      %p180 = pneg %p99
      %p181 = pneg %p96
      %p182 = pneg %p125
      %p183 = pneg %p122
      %s184 = smul.u32 2, %s15
      %p185 = scmp.lt.s32.totalorder %s184, 3
      %s186 = scalar_select %p185, %s184, 3
      %s187 = smul.addr %s186, 8
      %s188 = scalar_lea.vmem %s4, %s187
      %s189 = smul.u32 2, %s15
      %p190 = scmp.lt.s32.totalorder %s189, 3
      %s191 = scalar_select %p190, %s189, 3
      %s192 = smul.addr %s191, 8
      %s193 = scalar_lea.vmem %s0, %s192
      %s194 = smul.u32 2, %s15
      %s195 = smul.u32 2, %s15
      %p196 = scmp.lt.s32.totalorder %s195, 3
      %s197 = scalar_select %p196, %s195, 3
      %s198 = smul.addr %s197, 8
      %s199 = scalar_lea.vmem %s4, %s198
      %s200 = smul.u32 2, %s15
      %v201 = vld [vmem:[%s193] sm:$0xff]
      %v202 = vld [vmem:[%s193 + $0x8] sm:$0xff]
      %v203 = vld [vmem:[%s1] sm:$0x1]
      %v205 = vperm.slane %v203, 0
      %v207 = vmul.f32 %v201, %v205
      %v208 = vmul.f32 %v202, %v205
      %v209 = vld [vmem:[%s2] sm:$0x1]
      %v211 = vperm.slane %v209, 0
      %v213 = vadd.f32 %v207, %v211
      %v214 = vadd.f32 %v208, %v211
      %v215 = vmax.f32 %v213, 0.0
      %v216 = vmax.f32 %v214, 0.0
      %v217 = vpack.c.bf16 %v216, %v215
      %v218 = vld [vmem:[%s3] sm:$0xf]
      %v219 = vld [vmem:[%s3 + $0x4] sm:$0xf]
      %v220 = vld [vmem:[%s3 + $0x8] sm:$0xf]
      %v221 = vld [vmem:[%s3 + $0xc] sm:$0xf]
      %v222 = vld [vmem:[%s3 + $0x10] sm:$0xf]
      %v223 = vld [vmem:[%s3 + $0x14] sm:$0xf]
      %v224 = vld [vmem:[%s3 + $0x18] sm:$0xf]
      %v225 = vld [vmem:[%s3 + $0x1c] sm:$0xf]
      %v226 = vld [vmem:[%s3 + $0x20] sm:$0xf]
      %v227 = vld [vmem:[%s3 + $0x24] sm:$0xf]
      %v228 = vld [vmem:[%s3 + $0x28] sm:$0xf]
      %v229 = vld [vmem:[%s3 + $0x2c] sm:$0xf]
      %v230 = vld [vmem:[%s3 + $0x30] sm:$0xf]
      %v231 = vld [vmem:[%s3 + $0x34] sm:$0xf]
      %v232 = vld [vmem:[%s3 + $0x38] sm:$0xf]
      %v233 = vld [vmem:[%s3 + $0x3c] sm:$0xf]
      %v250 = vunpack.c.l.b16 %v218
      %v251 = vunpack.c.l.b16 %v219
      %v252 = vunpack.c.l.b16 %v220
      %v253 = vunpack.c.l.b16 %v221
      %v254 = vunpack.c.l.b16 %v222
      %v255 = vunpack.c.l.b16 %v223
      %v256 = vunpack.c.l.b16 %v224
      %v257 = vunpack.c.l.b16 %v225
      %v258 = vunpack.c.l.b16 %v226
      %v259 = vunpack.c.l.b16 %v227
      %v260 = vunpack.c.l.b16 %v228
      %v261 = vunpack.c.l.b16 %v229
      %v262 = vunpack.c.l.b16 %v230
      %v263 = vunpack.c.l.b16 %v231
      %v264 = vunpack.c.l.b16 %v232
      %v265 = vunpack.c.l.b16 %v233
      %v266 = vpack.c.b16 %v251, %v250
      %v267 = vpack.c.b16 %v253, %v252
      %v268 = vpack.c.b16 %v255, %v254
      %v269 = vpack.c.b16 %v257, %v256
      %v270 = vpack.c.b16 %v259, %v258
      %v271 = vpack.c.b16 %v261, %v260
      %v272 = vpack.c.b16 %v263, %v262
      %v273 = vpack.c.b16 %v265, %v264
      %282 = vmatpush.bf16.msra.mxu0 %v273
      %283 = vmatpush.bf16.msra.mxu0 %v272
      %284 = vmatpush.bf16.msra.mxu0 %v271
      %285 = vmatpush.bf16.msra.mxu0 %v270
      %286 = vmatpush.bf16.msra.mxu0 %v269
      %287 = vmatpush.bf16.msra.mxu0 %v268
      %288 = vmatpush.bf16.msra.mxu0 %v267
      %289 = vmatpush.bf16.msra.mxu0 %v266
      %290 = vmatmul.bf16.gmra.mxu0 %v217
      %v291 = vpop.f32.mrf.mxu0
      %v292 = vadd.f32 0.0, %v291
      %v293 = vpop.f32.mrf.mxu0
      %v294 = vadd.f32 0.0, %v293
      %295 = vdwg.mxu0
      %296 = vst [vmem:[%s199] sm:$0xff] %v292
      %297 = vst [vmem:[%s199 + $0x8] sm:$0xff] %v294
      %s298 = smul.u32 2, %s15
      %p299 = scmp.lt.s32.totalorder %s298, 3
      %s300 = scalar_select %p299, %s298, 3
      %s301 = smul.addr %s300, 8
      %s302 = scalar_lea.vmem %s4, %s301
      // Predicated region
      $region37: #{densenet_forward.39} parent=35 // pred_check
        %p303 = pneg %p122
      $region38: #{densenet_forward.39} parent=35 // pred_check_branch
        %305 = sbr.rel (%p303) target = $region40
      $region39: #{densenet_forward.39} parent=35 // pred_region
        %s306 = smul.u32 2, %s15
      $region40: #{densenet_forward.39} parent=35 // pred_fallthru
        _
    $region36: #{densenet_forward.39} parent=5 // pred_fallthru
      _
    %p307 = scmp.le.s32.totalorder 2, %s10
    // Predicated region
    $region41: #{densenet_forward.39} parent=5 // pred_check
      %p308 = pneg %p307
    $region42: #{densenet_forward.39} parent=5 // pred_check_branch
      %310 = sbr.rel (%p308) target = $region44
    $region43: #{densenet_forward.39} parent=5 // pred_region
      %s311 = ssub.s32 %s10, 2
      // Predicated region
      $region45: #{densenet_forward.39} parent=43 // pred_check
        %p312 = pneg %p128
      $region46: #{densenet_forward.39} parent=43 // pred_check_branch
        %314 = sbr.rel (%p312) target = $region48
      $region47: #{densenet_forward.39} parent=43 // pred_region
        %s315 = smul.u32 2, %s16
        %p316 = scmp.lt.s32.totalorder %s315, 3
        %s317 = scalar_select %p316, %s315, 3
        %s318 = smul.addr %s317, 8
        %s319 = scalar_lea.vmem %s4, %s318
      $region48: #{densenet_forward.39} parent=43 // pred_fallthru
        _
    $region44: #{densenet_forward.39} parent=5 // pred_fallthru
      _
  $region6: #{densenet_forward.39} parent=0 // loop_footer
    %s14 = sadd.s32 1, %s10
  $region7: #{densenet_forward.39} parent=0 // loop_footer_branch
    %9 = sbr.rel target = $region3
  $region8: #{densenet_forward.39} parent=0 // loop_exit
    _

// kernel: densenet_forward.41
$region0: #{densenet_forward.41}
  #allocation0 [shape = 'u32[]', space=smem, size = 0x4, offset = 0x4, fixed_abs, tag = 'smem constant byte address 0x4 - core index']
  #allocation1 [shape = 'u32[72,128]{1,0:T(1,128)}', space=vmem, size = 0x9000, scoped, tag = 'internal scratch']
  %s0 = inlined_call_operand.vmem [shape: f32[2,48,128], index: 0, kind: input, shape index: {}]
  %s1 = inlined_call_operand.vmem [shape: f32[48,1], index: 1, kind: input, shape index: {}]
  %s2 = inlined_call_operand.vmem [shape: f32[1,128], index: 2, kind: input, shape index: {}]
  %s3 = inlined_call_operand.vmem [shape: f32[1,128], index: 3, kind: input, shape index: {}]
  %s4 = inlined_call_operand.vmem [shape: bf16[9,128,8], index: 4, kind: input, shape index: {}]
  %s5 = inlined_call_operand.vmem [shape: f32[2,24,8], index: 5, kind: output, shape index: {}]
  %s6 = sld [smem:[#allocation0]]
  $region53: #{densenet_forward.41} parent=0
    _
  %s8 = ssub.s32 1, %s6
  %s9 = scalar_select 0, %s8, %s6
  loop: start=0, step=1, limit=4
  $region2: #{densenet_forward.41} parent=0 // loop_pre_header
    _
  $region3: #{densenet_forward.41} parent=0 // loop_header
    %s11 = sphi 0, %s15
    %p12 = scmp.ge.s32.totalorder %s11, 4
    %s21 = sphi 0, %s23
    %s24 = sphi 0, %s21
    %s25 = sphi 0, %s24
    %s41 = sphi 0, %s25
    %s45 = sphi 0, %s45
    %s47 = sphi 0, %s45
    %s48 = sphi 0, %s47
    %s62 = sphi 0, %s48
    %s66 = sphi 0, %s66
    %s68 = sphi 0, %s66
    %s69 = sphi 0, %s68
    %s83 = sphi 0, %s69
    %s87 = sphi 0, %s87
    %s89 = sphi 0, %s87
    %s90 = sphi 0, %s89
    %s104 = sphi 0, %s90
    %s108 = sphi 0, %s108
    %s110 = sphi 0, %s108
    %s111 = sphi 0, %s110
    %s125 = sphi 0, %s111
    %s131 = sphi 0, %s133
    %s134 = sphi 0, %s131
    %s135 = sphi 0, %s134
    %s151 = sphi 0, %s135
  $region4: #{densenet_forward.41} parent=0 // loop_header_branch
    %14 = sbr.rel (%p12) target = $region8
  $region5: #{densenet_forward.41} parent=0 // loop_body
    %s16 = ssub.s32 %s11, 1
    %s17 = ssub.s32 %s11, 2
    %s18 = sadd.s32 %s11, 1
    %s19 = ssub.s32 %s11, %s18
    %p20 = scmp.eq.s32.totalorder %s19, 0
    %s22 = sadd.s32 %s21, 1
    %s23 = scalar_select %p20, %s21, %s22
    %p26 = pneg %p20
    %p27 = scmp.eq.s32.totalorder %s11, 1
    %p28 = por %p26, %p27
    %p29 = scmp.ne.s32.totalorder %s21, %s24
    %p30 = scmp.eq.s32.totalorder %s11, 0
    %p31 = por %p29, %p30
    %p32 = scmp.ne.s32.totalorder %s21, %s24
    %p33 = scmp.eq.s32.totalorder %s16, 1
    %p34 = por %p32, %p33
    %p35 = scmp.ne.s32.totalorder %s24, %s25
    %p36 = scmp.eq.s32.totalorder %s16, 0
    %p37 = por %p35, %p36
    %p38 = scmp.ne.s32.totalorder %s24, %s25
    %p39 = scmp.eq.s32.totalorder %s17, 1
    %p40 = por %p38, %p39
    %p42 = scmp.ne.s32.totalorder %s25, %s41
    %p43 = scmp.eq.s32.totalorder %s17, 0
    %p44 = por %p42, %p43
    %s46 = sadd.s32 %s45, 1
    %p49 = scmp.eq.s32.totalorder %s11, 1
    %p50 = scmp.ne.s32.totalorder %s45, %s47
    %p51 = scmp.eq.s32.totalorder %s11, 0
    %p52 = por %p50, %p51
    %p53 = scmp.ne.s32.totalorder %s45, %s47
    %p54 = scmp.eq.s32.totalorder %s16, 1
    %p55 = por %p53, %p54
    %p56 = scmp.ne.s32.totalorder %s47, %s48
    %p57 = scmp.eq.s32.totalorder %s16, 0
    %p58 = por %p56, %p57
    %p59 = scmp.ne.s32.totalorder %s47, %s48
    %p60 = scmp.eq.s32.totalorder %s17, 1
    %p61 = por %p59, %p60
    %p63 = scmp.ne.s32.totalorder %s48, %s62
    %p64 = scmp.eq.s32.totalorder %s17, 0
    %p65 = por %p63, %p64
    %s67 = sadd.s32 %s66, 1
    %p70 = scmp.eq.s32.totalorder %s11, 1
    %p71 = scmp.ne.s32.totalorder %s66, %s68
    %p72 = scmp.eq.s32.totalorder %s11, 0
    %p73 = por %p71, %p72
    %p74 = scmp.ne.s32.totalorder %s66, %s68
    %p75 = scmp.eq.s32.totalorder %s16, 1
    %p76 = por %p74, %p75
    %p77 = scmp.ne.s32.totalorder %s68, %s69
    %p78 = scmp.eq.s32.totalorder %s16, 0
    %p79 = por %p77, %p78
    %p80 = scmp.ne.s32.totalorder %s68, %s69
    %p81 = scmp.eq.s32.totalorder %s17, 1
    %p82 = por %p80, %p81
    %p84 = scmp.ne.s32.totalorder %s69, %s83
    %p85 = scmp.eq.s32.totalorder %s17, 0
    %p86 = por %p84, %p85
    %s88 = sadd.s32 %s87, 1
    %p91 = scmp.eq.s32.totalorder %s11, 1
    %p92 = scmp.ne.s32.totalorder %s87, %s89
    %p93 = scmp.eq.s32.totalorder %s11, 0
    %p94 = por %p92, %p93
    %p95 = scmp.ne.s32.totalorder %s87, %s89
    %p96 = scmp.eq.s32.totalorder %s16, 1
    %p97 = por %p95, %p96
    %p98 = scmp.ne.s32.totalorder %s89, %s90
    %p99 = scmp.eq.s32.totalorder %s16, 0
    %p100 = por %p98, %p99
    %p101 = scmp.ne.s32.totalorder %s89, %s90
    %p102 = scmp.eq.s32.totalorder %s17, 1
    %p103 = por %p101, %p102
    %p105 = scmp.ne.s32.totalorder %s90, %s104
    %p106 = scmp.eq.s32.totalorder %s17, 0
    %p107 = por %p105, %p106
    %s109 = sadd.s32 %s108, 1
    %p112 = scmp.eq.s32.totalorder %s11, 1
    %p113 = scmp.ne.s32.totalorder %s108, %s110
    %p114 = scmp.eq.s32.totalorder %s11, 0
    %p115 = por %p113, %p114
    %p116 = scmp.ne.s32.totalorder %s108, %s110
    %p117 = scmp.eq.s32.totalorder %s16, 1
    %p118 = por %p116, %p117
    %p119 = scmp.ne.s32.totalorder %s110, %s111
    %p120 = scmp.eq.s32.totalorder %s16, 0
    %p121 = por %p119, %p120
    %p122 = scmp.ne.s32.totalorder %s110, %s111
    %p123 = scmp.eq.s32.totalorder %s17, 1
    %p124 = por %p122, %p123
    %p126 = scmp.ne.s32.totalorder %s111, %s125
    %p127 = scmp.eq.s32.totalorder %s17, 0
    %p128 = por %p126, %p127
    %s129 = ssub.s32 %s11, %s18
    %p130 = scmp.eq.s32.totalorder %s129, 0
    %s132 = sadd.s32 %s131, 1
    %s133 = scalar_select %p130, %s131, %s132
    %p136 = pneg %p130
    %p137 = scmp.eq.s32.totalorder %s11, 1
    %p138 = por %p136, %p137
    %p139 = scmp.ne.s32.totalorder %s131, %s134
    %p140 = scmp.eq.s32.totalorder %s11, 0
    %p141 = por %p139, %p140
    %p142 = scmp.ne.s32.totalorder %s131, %s134
    %p143 = scmp.eq.s32.totalorder %s16, 1
    %p144 = por %p142, %p143
    %p145 = scmp.ne.s32.totalorder %s134, %s135
    %p146 = scmp.eq.s32.totalorder %s16, 0
    %p147 = por %p145, %p146
    %p148 = scmp.ne.s32.totalorder %s134, %s135
    %p149 = scmp.eq.s32.totalorder %s17, 1
    %p150 = por %p148, %p149
    %p152 = scmp.ne.s32.totalorder %s135, %s151
    %p153 = scmp.eq.s32.totalorder %s17, 0
    %p154 = por %p152, %p153
    %p155 = scmp.le.s32.totalorder 1, %s11
    %p156 = scmp.lt.s32.totalorder %s11, 3
    %p157 = pnand %p155, %p156
    %p158 = pneg %p157
    // Predicated region
    $region9: #{densenet_forward.41} parent=5 // pred_check
      _
    $region10: #{densenet_forward.41} parent=5 // pred_check_branch
      %160 = sbr.rel (%p157) target = $region12
    $region11: #{densenet_forward.41} parent=5 // pred_region
      %s161 = ssub.s32 %s11, 1
      // Predicated region
      $region13: #{densenet_forward.41} parent=11 // pred_check
        %p162 = pneg %p58
      $region14: #{densenet_forward.41} parent=11 // pred_check_branch
        %164 = sbr.rel (%p162) target = $region16
      $region15: #{densenet_forward.41} parent=11 // pred_region
        _
      $region16: #{densenet_forward.41} parent=11 // pred_fallthru
        _
      // Predicated region
      $region17: #{densenet_forward.41} parent=11 // pred_check
        %p165 = pneg %p79
      $region18: #{densenet_forward.41} parent=11 // pred_check_branch
        %167 = sbr.rel (%p165) target = $region20
      $region19: #{densenet_forward.41} parent=11 // pred_region
        _
      $region20: #{densenet_forward.41} parent=11 // pred_fallthru
        _
      // Predicated region
      $region21: #{densenet_forward.41} parent=11 // pred_check
        %p168 = pneg %p100
      $region22: #{densenet_forward.41} parent=11 // pred_check_branch
        %170 = sbr.rel (%p168) target = $region24
      $region23: #{densenet_forward.41} parent=11 // pred_region
        _
      $region24: #{densenet_forward.41} parent=11 // pred_fallthru
        _
      // Predicated region
      $region25: #{densenet_forward.41} parent=11 // pred_check
        %p171 = pneg %p121
      $region26: #{densenet_forward.41} parent=11 // pred_check_branch
        %173 = sbr.rel (%p171) target = $region28
      $region27: #{densenet_forward.41} parent=11 // pred_region
        _
      $region28: #{densenet_forward.41} parent=11 // pred_fallthru
        _
    $region12: #{densenet_forward.41} parent=5 // pred_fallthru
      _
    %p174 = scmp.lt.s32.totalorder %s11, 2
    // Predicated region
    $region29: #{densenet_forward.41} parent=5 // pred_check
      %p175 = pneg %p174
    $region30: #{densenet_forward.41} parent=5 // pred_check_branch
      %177 = sbr.rel (%p175) target = $region32
    $region31: #{densenet_forward.41} parent=5 // pred_region
      // Predicated region
      $region33: #{densenet_forward.41} parent=31 // pred_check
        %p178 = pneg %p31
      $region34: #{densenet_forward.41} parent=31 // pred_check_branch
        %180 = sbr.rel (%p178) target = $region36
      $region35: #{densenet_forward.41} parent=31 // pred_region
        %p181 = scmp.lt.s32.totalorder %s11, 1
        %s182 = scalar_select %p181, %s11, 1
        %s183 = smul.addr %s182, 6
        %s184 = smul.addr %s183, 8
        %s185 = scalar_lea.vmem %s0, %s184
      $region36: #{densenet_forward.41} parent=31 // pred_fallthru
        _
    $region32: #{densenet_forward.41} parent=5 // pred_fallthru
      _
    %p186 = scmp.le.s32.totalorder 1, %s11
    %p187 = scmp.lt.s32.totalorder %s11, 3
    %p188 = pnand %p186, %p187
    %p189 = pneg %p188
    // Predicated region
    $region37: #{densenet_forward.41} parent=5 // pred_check
      _
    $region38: #{densenet_forward.41} parent=5 // pred_check_branch
      %191 = sbr.rel (%p188) target = $region40
    $region39: #{densenet_forward.41} parent=5 // pred_region
      %s192 = ssub.s32 %s11, 1
      %p193 = scmp.lt.s32.totalorder %s16, 1
      %s194 = scalar_select %p193, %s16, 1
      %s195 = smul.addr %s194, 6
      %s196 = smul.addr %s195, 8
      %s197 = scalar_lea.vmem %s0, %s196
      %p198 = pneg %p37
      %p199 = pneg %p34
      %p200 = pneg %p58
      %p201 = pneg %p55
      %p202 = pneg %p79
      %p203 = pneg %p76
      %p204 = pneg %p100
      %p205 = pneg %p97
      %p206 = pneg %p121
      %p207 = pneg %p118
      %p208 = pneg %p147
      %p209 = pneg %p144
      %p210 = scmp.lt.s32.totalorder %s16, 1
      %s211 = scalar_select %p210, %s16, 1
      %s212 = smul.addr %s211, 3
      %s213 = smul.addr %s212, 8
      %s214 = scalar_lea.vmem %s5, %s213
      %p215 = scmp.lt.s32.totalorder %s16, 1
      %s216 = scalar_select %p215, %s16, 1
      %s217 = smul.addr %s216, 6
      %s218 = smul.addr %s217, 8
      %s219 = scalar_lea.vmem %s0, %s218
      %p220 = scmp.lt.s32.totalorder %s16, 1
      %s221 = scalar_select %p220, %s16, 1
      %s222 = smul.addr %s221, 3
      %s223 = smul.addr %s222, 8
      %s224 = scalar_lea.vmem %s5, %s223
      %v225 = vld [vmem:[%s219] sm:$0xff]
      %v226 = vld [vmem:[%s219 + $0x8] sm:$0xff]
      %v227 = vld [vmem:[%s219 + $0x10] sm:$0xff]
      %v228 = vld [vmem:[%s219 + $0x18] sm:$0xff]
      %v229 = vld [vmem:[%s219 + $0x20] sm:$0xff]
      %v230 = vld [vmem:[%s219 + $0x28] sm:$0xff]
      %v231 = vld [vmem:[%s2] sm:$0x1]
      %v233 = vperm.slane %v231, 0
      %v235 = vmul.f32 %v225, %v233
      %v236 = vmul.f32 %v226, %v233
      %v237 = vmul.f32 %v227, %v233
      %v238 = vmul.f32 %v228, %v233
      %v239 = vmul.f32 %v229, %v233
      %v240 = vmul.f32 %v230, %v233
      %v241 = vld [vmem:[%s3] sm:$0x1]
      %v243 = vperm.slane %v241, 0
      %v245 = vadd.f32 %v235, %v243
      %v246 = vadd.f32 %v236, %v243
      %v247 = vadd.f32 %v237, %v243
      %v248 = vadd.f32 %v238, %v243
      %v249 = vadd.f32 %v239, %v243
      %v250 = vadd.f32 %v240, %v243
      %v251 = vmax.f32 %v245, 0.0
      %v252 = vmax.f32 %v246, 0.0
      %v253 = vmax.f32 %v247, 0.0
      %v254 = vmax.f32 %v248, 0.0
      %v255 = vmax.f32 %v249, 0.0
      %v256 = vmax.f32 %v250, 0.0
      %v257 = vld [vmem:[%s1] sm:$0xff]
      %v258 = vld [vmem:[%s1 + $0x8] sm:$0xff]
      %v259 = vld [vmem:[%s1 + $0x10] sm:$0xff]
      %v260 = vld [vmem:[%s1 + $0x18] sm:$0xff]
      %v261 = vld [vmem:[%s1 + $0x20] sm:$0xff]
      %v262 = vld [vmem:[%s1 + $0x28] sm:$0xff]
      %264 = vset.pattern.permute.xlu0 0
      %265 = vperm.xlu0 %264, %v257
      %v266 = vpop.permute.xlu0 %265
      %269 = vset.pattern.permute.xlu0 0
      %270 = vperm.xlu0 %269, %v258
      %v271 = vpop.permute.xlu0 %270
      %274 = vset.pattern.permute.xlu0 0
      %275 = vperm.xlu0 %274, %v259
      %v276 = vpop.permute.xlu0 %275
      %279 = vset.pattern.permute.xlu0 0
      %280 = vperm.xlu0 %279, %v260
      %v281 = vpop.permute.xlu0 %280
      %284 = vset.pattern.permute.xlu0 0
      %285 = vperm.xlu0 %284, %v261
      %v286 = vpop.permute.xlu0 %285
      %289 = vset.pattern.permute.xlu0 0
      %290 = vperm.xlu0 %289, %v262
      %v291 = vpop.permute.xlu0 %290
      %v293 = vmul.f32 %v251, %v266
      %v294 = vmul.f32 %v252, %v271
      %v295 = vmul.f32 %v253, %v276
      %v296 = vmul.f32 %v254, %v281
      %v297 = vmul.f32 %v255, %v286
      %v298 = vmul.f32 %v256, %v291
      %v299 = vpack.c.bf16 %v293, %v293
      %v300 = vpack.c.bf16 %v294, %v294
      %v301 = vpack.c.bf16 %v295, %v295
      %v302 = vpack.c.bf16 %v296, %v296
      %v303 = vpack.c.bf16 %v297, %v297
      %v304 = vpack.c.bf16 %v298, %v298
      %v305 = vld [vmem:[%s4] sm:$0xf]
      %v306 = vld [vmem:[%s4 + $0x4] sm:$0xf]
      %v307 = vld [vmem:[%s4 + $0x8] sm:$0xf]
      %v308 = vld [vmem:[%s4 + $0xc] sm:$0xf]
      %v309 = vld [vmem:[%s4 + $0x10] sm:$0xf]
      %v310 = vld [vmem:[%s4 + $0x14] sm:$0xf]
      %v311 = vld [vmem:[%s4 + $0x18] sm:$0xf]
      %v312 = vld [vmem:[%s4 + $0x1c] sm:$0xf]
      %v313 = vld [vmem:[%s4 + $0x20] sm:$0xf]
      %v314 = vld [vmem:[%s4 + $0x24] sm:$0xf]
      %v315 = vld [vmem:[%s4 + $0x28] sm:$0xf]
      %v316 = vld [vmem:[%s4 + $0x2c] sm:$0xf]
      %v317 = vld [vmem:[%s4 + $0x30] sm:$0xf]
      %v318 = vld [vmem:[%s4 + $0x34] sm:$0xf]
      %v319 = vld [vmem:[%s4 + $0x38] sm:$0xf]
      %v320 = vld [vmem:[%s4 + $0x3c] sm:$0xf]
      %s321 = scalar_lea.vmem %s4, 64
      %v322 = vld [vmem:[%s321] sm:$0xf]
      %v323 = vld [vmem:[%s321 + $0x4] sm:$0xf]
      %v324 = vld [vmem:[%s321 + $0x8] sm:$0xf]
      %v325 = vld [vmem:[%s321 + $0xc] sm:$0xf]
      %v326 = vld [vmem:[%s321 + $0x10] sm:$0xf]
      %v327 = vld [vmem:[%s321 + $0x14] sm:$0xf]
      %v328 = vld [vmem:[%s321 + $0x18] sm:$0xf]
      %v329 = vld [vmem:[%s321 + $0x1c] sm:$0xf]
      %v330 = vld [vmem:[%s321 + $0x20] sm:$0xf]
      %v331 = vld [vmem:[%s321 + $0x24] sm:$0xf]
      %v332 = vld [vmem:[%s321 + $0x28] sm:$0xf]
      %v333 = vld [vmem:[%s321 + $0x2c] sm:$0xf]
      %v334 = vld [vmem:[%s321 + $0x30] sm:$0xf]
      %v335 = vld [vmem:[%s321 + $0x34] sm:$0xf]
      %v336 = vld [vmem:[%s321 + $0x38] sm:$0xf]
      %v337 = vld [vmem:[%s321 + $0x3c] sm:$0xf]
      %v342 = vunpack.c.l.b16 %v299
      %v343 = vunpack.c.l.b16 %v300
      %v344 = vunpack.c.l.b16 %v301
      %v345 = vunpack.c.l.b16 %v302
      %v346 = vpack.c.b16 %v343, %v342
      %v347 = vpack.c.b16 %v345, %v344
      %vm348 = vcmask 1044480
      %v349 = vrot.slane %v346, 3
      %v350 = vrot.slane %v347, 3
      %v351 = vsel %vm348, %v349, %v350
      %v370 = vunpack.c.l.b16 %v322
      %v371 = vunpack.c.l.b16 %v323
      %v372 = vunpack.c.l.b16 %v324
      %v373 = vunpack.c.l.b16 %v325
      %v374 = vunpack.c.l.b16 %v326
      %v375 = vunpack.c.l.b16 %v327
      %v376 = vunpack.c.l.b16 %v328
      %v377 = vunpack.c.l.b16 %v329
      %v378 = vunpack.c.l.b16 %v330
      %v379 = vunpack.c.l.b16 %v331
      %v380 = vunpack.c.l.b16 %v332
      %v381 = vunpack.c.l.b16 %v333
      %v382 = vunpack.c.l.b16 %v334
      %v383 = vunpack.c.l.b16 %v335
      %v384 = vunpack.c.l.b16 %v336
      %v385 = vunpack.c.l.b16 %v337
      %v386 = vpack.c.b16 %v371, %v370
      %v387 = vpack.c.b16 %v373, %v372
      %v388 = vpack.c.b16 %v375, %v374
      %v389 = vpack.c.b16 %v377, %v376
      %v390 = vpack.c.b16 %v379, %v378
      %v391 = vpack.c.b16 %v381, %v380
      %v392 = vpack.c.b16 %v383, %v382
      %v393 = vpack.c.b16 %v385, %v384
      %402 = vmatpush.bf16.msra.mxu0 %v393
      %403 = vmatpush.bf16.msra.mxu0 %v392
      %404 = vmatpush.bf16.msra.mxu0 %v391
      %405 = vmatpush.bf16.msra.mxu0 %v390
      %406 = vmatpush.bf16.msra.mxu0 %v389
      %407 = vmatpush.bf16.msra.mxu0 %v388
      %408 = vmatpush.bf16.msra.mxu0 %v387
      %409 = vmatpush.bf16.msra.mxu0 %v386
      %410 = vmatmul.bf16.gmra.mxu0 %v351
      %v411 = vpop.f32.mrf.mxu0
      %v412 = vadd.f32 0.0, %v411
      %v413 = vpop.f32.mrf.mxu0
      %v414 = vadd.f32 0.0, %v413
      %415 = vmatmul.bf16.gmra.mxu0 %v350
      %v416 = vpop.f32.mrf.mxu0
      %v417 = vadd.f32 0.0, %v416
      %v418 = vpop.f32.mrf.mxu0
      %419 = vdwg.mxu0
      %vm420 = vsmask.f32 5376
      %v422 = vshrl.u32 %v346, 16
      %v424 = vrot.slane %v422, 2
      %v425 = vshll.u32 %v346, 16
      %v427 = vrot.slane %v425, 3
      %v428 = vor.u32 %v424, %v427
      %v430 = vshrl.u32 %v347, 16
      %v432 = vrot.slane %v430, 2
      %v433 = vshll.u32 %v347, 16
      %v435 = vrot.slane %v433, 3
      %v436 = vor.u32 %v432, %v435
      %v437 = vsel %vm420, %v428, %v436
      %v456 = vunpack.c.l.b16 %v305
      %v457 = vunpack.c.l.b16 %v306
      %v458 = vunpack.c.l.b16 %v307
      %v459 = vunpack.c.l.b16 %v308
      %v460 = vunpack.c.l.b16 %v309
      %v461 = vunpack.c.l.b16 %v310
      %v462 = vunpack.c.l.b16 %v311
      %v463 = vunpack.c.l.b16 %v312
      %v464 = vunpack.c.l.b16 %v313
      %v465 = vunpack.c.l.b16 %v314
      %v466 = vunpack.c.l.b16 %v315
      %v467 = vunpack.c.l.b16 %v316
      %v468 = vunpack.c.l.b16 %v317
      %v469 = vunpack.c.l.b16 %v318
      %v470 = vunpack.c.l.b16 %v319
      %v471 = vunpack.c.l.b16 %v320
      %v472 = vpack.c.b16 %v457, %v456
      %v473 = vpack.c.b16 %v459, %v458
      %v474 = vpack.c.b16 %v461, %v460
      %v475 = vpack.c.b16 %v463, %v462
      %v476 = vpack.c.b16 %v465, %v464
      %v477 = vpack.c.b16 %v467, %v466
      %v478 = vpack.c.b16 %v469, %v468
      %v479 = vpack.c.b16 %v471, %v470
      %488 = vmatpush.bf16.msra.mxu0 %v479
      %489 = vmatpush.bf16.msra.mxu0 %v478
      %490 = vmatpush.bf16.msra.mxu0 %v477
      %491 = vmatpush.bf16.msra.mxu0 %v476
      %492 = vmatpush.bf16.msra.mxu0 %v475
      %493 = vmatpush.bf16.msra.mxu0 %v474
      %494 = vmatpush.bf16.msra.mxu0 %v473
      %495 = vmatpush.bf16.msra.mxu0 %v472
      %496 = vmatmul.bf16.gmra.mxu0 %v437
      %v497 = vpop.f32.mrf.mxu0
      %v498 = vadd.f32 %v412, %v497
      %v499 = vpop.f32.mrf.mxu0
      %v500 = vadd.f32 %v414, %v499
      %501 = vmatmul.bf16.gmra.mxu0 %v436
      %v502 = vpop.f32.mrf.mxu0
      %v503 = vadd.f32 %v417, %v502
      %v504 = vpop.f32.mrf.mxu0
      %505 = vdwg.mxu0
      %s506 = scalar_lea.vmem %s4, 128
      %v507 = vld [vmem:[%s506] sm:$0xf]
      %v508 = vld [vmem:[%s506 + $0x4] sm:$0xf]
      %v509 = vld [vmem:[%s506 + $0x8] sm:$0xf]
      %v510 = vld [vmem:[%s506 + $0xc] sm:$0xf]
      %v511 = vld [vmem:[%s506 + $0x10] sm:$0xf]
      %v512 = vld [vmem:[%s506 + $0x14] sm:$0xf]
      %v513 = vld [vmem:[%s506 + $0x18] sm:$0xf]
      %v514 = vld [vmem:[%s506 + $0x1c] sm:$0xf]
      %v515 = vld [vmem:[%s506 + $0x20] sm:$0xf]
      %v516 = vld [vmem:[%s506 + $0x24] sm:$0xf]
      %v517 = vld [vmem:[%s506 + $0x28] sm:$0xf]
      %v518 = vld [vmem:[%s506 + $0x2c] sm:$0xf]
      %v519 = vld [vmem:[%s506 + $0x30] sm:$0xf]
      %v520 = vld [vmem:[%s506 + $0x34] sm:$0xf]
      %v521 = vld [vmem:[%s506 + $0x38] sm:$0xf]
      %v522 = vld [vmem:[%s506 + $0x3c] sm:$0xf]
      %vm523 = vsmask.f32 4352
      %v524 = vrot.slane %v422, 3
      %v525 = vrot.slane %v425, 4
      %v526 = vor.u32 %v524, %v525
      %v527 = vrot.slane %v430, 3
      %v528 = vrot.slane %v433, 4
      %v529 = vor.u32 %v527, %v528
      %v530 = vsel %vm523, %v526, %v529
      %v549 = vunpack.c.l.b16 %v507
      %v550 = vunpack.c.l.b16 %v508
      %v551 = vunpack.c.l.b16 %v509
      %v552 = vunpack.c.l.b16 %v510
      %v553 = vunpack.c.l.b16 %v511
      %v554 = vunpack.c.l.b16 %v512
      %v555 = vunpack.c.l.b16 %v513
      %v556 = vunpack.c.l.b16 %v514
      %v557 = vunpack.c.l.b16 %v515
      %v558 = vunpack.c.l.b16 %v516
      %v559 = vunpack.c.l.b16 %v517
      %v560 = vunpack.c.l.b16 %v518
      %v561 = vunpack.c.l.b16 %v519
      %v562 = vunpack.c.l.b16 %v520
      %v563 = vunpack.c.l.b16 %v521
      %v564 = vunpack.c.l.b16 %v522
      %v565 = vpack.c.b16 %v550, %v549
      %v566 = vpack.c.b16 %v552, %v551
      %v567 = vpack.c.b16 %v554, %v553
      %v568 = vpack.c.b16 %v556, %v555
      %v569 = vpack.c.b16 %v558, %v557
      %v570 = vpack.c.b16 %v560, %v559
      %v571 = vpack.c.b16 %v562, %v561
      %v572 = vpack.c.b16 %v564, %v563
      %581 = vmatpush.bf16.msra.mxu0 %v572
      %582 = vmatpush.bf16.msra.mxu0 %v571
      %583 = vmatpush.bf16.msra.mxu0 %v570
      %584 = vmatpush.bf16.msra.mxu0 %v569
      %585 = vmatpush.bf16.msra.mxu0 %v568
      %586 = vmatpush.bf16.msra.mxu0 %v567
      %587 = vmatpush.bf16.msra.mxu0 %v566
      %588 = vmatpush.bf16.msra.mxu0 %v565
      %589 = vmatmul.bf16.gmra.mxu0 %v530
      %v590 = vpop.f32.mrf.mxu0
      %v591 = vadd.f32 0.0, %v590
      %v592 = vpop.f32.mrf.mxu0
      %v593 = vadd.f32 0.0, %v592
      %594 = vmatmul.bf16.gmra.mxu0 %v529
      %v595 = vpop.f32.mrf.mxu0
      %v596 = vadd.f32 0.0, %v595
      %v597 = vpop.f32.mrf.mxu0
      %598 = vdwg.mxu0
      %v599 = vadd.f32 %v498, %v591
      %v600 = vadd.f32 %v500, %v593
      %v601 = vadd.f32 %v503, %v596
      %s602 = scalar_lea.vmem %s4, 192
      %v603 = vld [vmem:[%s602] sm:$0xf]
      %v604 = vld [vmem:[%s602 + $0x4] sm:$0xf]
      %v605 = vld [vmem:[%s602 + $0x8] sm:$0xf]
      %v606 = vld [vmem:[%s602 + $0xc] sm:$0xf]
      %v607 = vld [vmem:[%s602 + $0x10] sm:$0xf]
      %v608 = vld [vmem:[%s602 + $0x14] sm:$0xf]
      %v609 = vld [vmem:[%s602 + $0x18] sm:$0xf]
      %v610 = vld [vmem:[%s602 + $0x1c] sm:$0xf]
      %v611 = vld [vmem:[%s602 + $0x20] sm:$0xf]
      %v612 = vld [vmem:[%s602 + $0x24] sm:$0xf]
      %v613 = vld [vmem:[%s602 + $0x28] sm:$0xf]
      %v614 = vld [vmem:[%s602 + $0x2c] sm:$0xf]
      %v615 = vld [vmem:[%s602 + $0x30] sm:$0xf]
      %v616 = vld [vmem:[%s602 + $0x34] sm:$0xf]
      %v617 = vld [vmem:[%s602 + $0x38] sm:$0xf]
      %v618 = vld [vmem:[%s602 + $0x3c] sm:$0xf]
      %v620 = vunpack.c.l.b16 %v303
      %v621 = vpack.c.b16 %v344, %v343
      %v622 = vpack.c.b16 %v620, %v345
      %vm623 = vsmask.f32 6400
      %v625 = vshrl.u32 %v621, 16
      %v627 = vrot.slane %v625, 1
      %v628 = vshll.u32 %v621, 16
      %v630 = vrot.slane %v628, 2
      %v631 = vor.u32 %v627, %v630
      %v633 = vshrl.u32 %v622, 16
      %v635 = vrot.slane %v633, 1
      %v636 = vshll.u32 %v622, 16
      %v638 = vrot.slane %v636, 2
      %v639 = vor.u32 %v635, %v638
      %v640 = vsel %vm623, %v631, %v639
      %v659 = vunpack.c.l.b16 %v603
      %v660 = vunpack.c.l.b16 %v604
      %v661 = vunpack.c.l.b16 %v605
      %v662 = vunpack.c.l.b16 %v606
      %v663 = vunpack.c.l.b16 %v607
      %v664 = vunpack.c.l.b16 %v608
      %v665 = vunpack.c.l.b16 %v609
      %v666 = vunpack.c.l.b16 %v610
      %v667 = vunpack.c.l.b16 %v611
      %v668 = vunpack.c.l.b16 %v612
      %v669 = vunpack.c.l.b16 %v613
      %v670 = vunpack.c.l.b16 %v614
      %v671 = vunpack.c.l.b16 %v615
      %v672 = vunpack.c.l.b16 %v616
      %v673 = vunpack.c.l.b16 %v617
      %v674 = vunpack.c.l.b16 %v618
      %v675 = vpack.c.b16 %v660, %v659
      %v676 = vpack.c.b16 %v662, %v661
      %v677 = vpack.c.b16 %v664, %v663
      %v678 = vpack.c.b16 %v666, %v665
      %v679 = vpack.c.b16 %v668, %v667
      %v680 = vpack.c.b16 %v670, %v669
      %v681 = vpack.c.b16 %v672, %v671
      %v682 = vpack.c.b16 %v674, %v673
      %691 = vmatpush.bf16.msra.mxu0 %v682
      %692 = vmatpush.bf16.msra.mxu0 %v681
      %693 = vmatpush.bf16.msra.mxu0 %v680
      %694 = vmatpush.bf16.msra.mxu0 %v679
      %695 = vmatpush.bf16.msra.mxu0 %v678
      %696 = vmatpush.bf16.msra.mxu0 %v677
      %697 = vmatpush.bf16.msra.mxu0 %v676
      %698 = vmatpush.bf16.msra.mxu0 %v675
      %699 = vmatmul.bf16.gmra.mxu0 %v640
      %v700 = vpop.f32.mrf.mxu0
      %v701 = vadd.f32 0.0, %v700
      %v702 = vpop.f32.mrf.mxu0
      %v703 = vadd.f32 0.0, %v702
      %704 = vmatmul.bf16.gmra.mxu0 %v639
      %v705 = vpop.f32.mrf.mxu0
      %v706 = vadd.f32 0.0, %v705
      %v707 = vpop.f32.mrf.mxu0
      %708 = vdwg.mxu0
      %v709 = vadd.f32 %v599, %v701
      %v710 = vadd.f32 %v600, %v703
      %v711 = vadd.f32 %v601, %v706
      %s712 = scalar_lea.vmem %s4, 256
      %v713 = vld [vmem:[%s712] sm:$0xf]
      %v714 = vld [vmem:[%s712 + $0x4] sm:$0xf]
      %v715 = vld [vmem:[%s712 + $0x8] sm:$0xf]
      %v716 = vld [vmem:[%s712 + $0xc] sm:$0xf]
      %v717 = vld [vmem:[%s712 + $0x10] sm:$0xf]
      %v718 = vld [vmem:[%s712 + $0x14] sm:$0xf]
      %v719 = vld [vmem:[%s712 + $0x18] sm:$0xf]
      %v720 = vld [vmem:[%s712 + $0x1c] sm:$0xf]
      %v721 = vld [vmem:[%s712 + $0x20] sm:$0xf]
      %v722 = vld [vmem:[%s712 + $0x24] sm:$0xf]
      %v723 = vld [vmem:[%s712 + $0x28] sm:$0xf]
      %v724 = vld [vmem:[%s712 + $0x2c] sm:$0xf]
      %v725 = vld [vmem:[%s712 + $0x30] sm:$0xf]
      %v726 = vld [vmem:[%s712 + $0x34] sm:$0xf]
      %v727 = vld [vmem:[%s712 + $0x38] sm:$0xf]
      %v728 = vld [vmem:[%s712 + $0x3c] sm:$0xf]
      %vm729 = vcmask 1045504
      %v730 = vrot.slane %v621, 2
      %v731 = vrot.slane %v622, 2
      %v732 = vsel %vm729, %v730, %v731
      %v751 = vunpack.c.l.b16 %v713
      %v752 = vunpack.c.l.b16 %v714
      %v753 = vunpack.c.l.b16 %v715
      %v754 = vunpack.c.l.b16 %v716
      %v755 = vunpack.c.l.b16 %v717
      %v756 = vunpack.c.l.b16 %v718
      %v757 = vunpack.c.l.b16 %v719
      %v758 = vunpack.c.l.b16 %v720
      %v759 = vunpack.c.l.b16 %v721
      %v760 = vunpack.c.l.b16 %v722
      %v761 = vunpack.c.l.b16 %v723
      %v762 = vunpack.c.l.b16 %v724
      %v763 = vunpack.c.l.b16 %v725
      %v764 = vunpack.c.l.b16 %v726
      %v765 = vunpack.c.l.b16 %v727
      %v766 = vunpack.c.l.b16 %v728
      %v767 = vpack.c.b16 %v752, %v751
      %v768 = vpack.c.b16 %v754, %v753
      %v769 = vpack.c.b16 %v756, %v755
      %v770 = vpack.c.b16 %v758, %v757
      %v771 = vpack.c.b16 %v760, %v759
      %v772 = vpack.c.b16 %v762, %v761
      %v773 = vpack.c.b16 %v764, %v763
      %v774 = vpack.c.b16 %v766, %v765
      %783 = vmatpush.bf16.msra.mxu0 %v774
      %784 = vmatpush.bf16.msra.mxu0 %v773
      %785 = vmatpush.bf16.msra.mxu0 %v772
      %786 = vmatpush.bf16.msra.mxu0 %v771
      %787 = vmatpush.bf16.msra.mxu0 %v770
      %788 = vmatpush.bf16.msra.mxu0 %v769
      %789 = vmatpush.bf16.msra.mxu0 %v768
      %790 = vmatpush.bf16.msra.mxu0 %v767
      %791 = vmatmul.bf16.gmra.mxu0 %v732
      %v792 = vpop.f32.mrf.mxu0
      %v793 = vadd.f32 0.0, %v792
      %v794 = vpop.f32.mrf.mxu0
      %v795 = vadd.f32 0.0, %v794
      %796 = vmatmul.bf16.gmra.mxu0 %v731
      %v797 = vpop.f32.mrf.mxu0
      %v798 = vadd.f32 0.0, %v797
      %v799 = vpop.f32.mrf.mxu0
      %800 = vdwg.mxu0
      %v801 = vadd.f32 %v709, %v793
      %v802 = vadd.f32 %v710, %v795
      %v803 = vadd.f32 %v711, %v798
      %s804 = scalar_lea.vmem %s4, 320
      %v805 = vld [vmem:[%s804] sm:$0xf]
      %v806 = vld [vmem:[%s804 + $0x4] sm:$0xf]
      %v807 = vld [vmem:[%s804 + $0x8] sm:$0xf]
      %v808 = vld [vmem:[%s804 + $0xc] sm:$0xf]
      %v809 = vld [vmem:[%s804 + $0x10] sm:$0xf]
      %v810 = vld [vmem:[%s804 + $0x14] sm:$0xf]
      %v811 = vld [vmem:[%s804 + $0x18] sm:$0xf]
      %v812 = vld [vmem:[%s804 + $0x1c] sm:$0xf]
      %v813 = vld [vmem:[%s804 + $0x20] sm:$0xf]
      %v814 = vld [vmem:[%s804 + $0x24] sm:$0xf]
      %v815 = vld [vmem:[%s804 + $0x28] sm:$0xf]
      %v816 = vld [vmem:[%s804 + $0x2c] sm:$0xf]
      %v817 = vld [vmem:[%s804 + $0x30] sm:$0xf]
      %v818 = vld [vmem:[%s804 + $0x34] sm:$0xf]
      %v819 = vld [vmem:[%s804 + $0x38] sm:$0xf]
      %v820 = vld [vmem:[%s804 + $0x3c] sm:$0xf]
      %v821 = vrot.slane %v625, 2
      %v822 = vrot.slane %v628, 3
      %v823 = vor.u32 %v821, %v822
      %v824 = vrot.slane %v633, 2
      %v825 = vrot.slane %v636, 3
      %v826 = vor.u32 %v824, %v825
      %v827 = vsel %vm420, %v823, %v826
      %v846 = vunpack.c.l.b16 %v805
      %v847 = vunpack.c.l.b16 %v806
      %v848 = vunpack.c.l.b16 %v807
      %v849 = vunpack.c.l.b16 %v808
      %v850 = vunpack.c.l.b16 %v809
      %v851 = vunpack.c.l.b16 %v810
      %v852 = vunpack.c.l.b16 %v811
      %v853 = vunpack.c.l.b16 %v812
      %v854 = vunpack.c.l.b16 %v813
      %v855 = vunpack.c.l.b16 %v814
      %v856 = vunpack.c.l.b16 %v815
      %v857 = vunpack.c.l.b16 %v816
      %v858 = vunpack.c.l.b16 %v817
      %v859 = vunpack.c.l.b16 %v818
      %v860 = vunpack.c.l.b16 %v819
      %v861 = vunpack.c.l.b16 %v820
      %v862 = vpack.c.b16 %v847, %v846
      %v863 = vpack.c.b16 %v849, %v848
      %v864 = vpack.c.b16 %v851, %v850
      %v865 = vpack.c.b16 %v853, %v852
      %v866 = vpack.c.b16 %v855, %v854
      %v867 = vpack.c.b16 %v857, %v856
      %v868 = vpack.c.b16 %v859, %v858
      %v869 = vpack.c.b16 %v861, %v860
      %878 = vmatpush.bf16.msra.mxu0 %v869
      %879 = vmatpush.bf16.msra.mxu0 %v868
      %880 = vmatpush.bf16.msra.mxu0 %v867
      %881 = vmatpush.bf16.msra.mxu0 %v866
      %882 = vmatpush.bf16.msra.mxu0 %v865
      %883 = vmatpush.bf16.msra.mxu0 %v864
      %884 = vmatpush.bf16.msra.mxu0 %v863
      %885 = vmatpush.bf16.msra.mxu0 %v862
      %886 = vmatmul.bf16.gmra.mxu0 %v827
      %v887 = vpop.f32.mrf.mxu0
      %v888 = vadd.f32 0.0, %v887
      %v889 = vpop.f32.mrf.mxu0
      %v890 = vadd.f32 0.0, %v889
      %891 = vmatmul.bf16.gmra.mxu0 %v826
      %v892 = vpop.f32.mrf.mxu0
      %v893 = vadd.f32 0.0, %v892
      %v894 = vpop.f32.mrf.mxu0
      %895 = vdwg.mxu0
      %v896 = vadd.f32 %v801, %v888
      %v897 = vadd.f32 %v802, %v890
      %v898 = vadd.f32 %v803, %v893
      %s899 = scalar_lea.vmem %s4, 384
      %v900 = vld [vmem:[%s899] sm:$0xf]
      %v901 = vld [vmem:[%s899 + $0x4] sm:$0xf]
      %v902 = vld [vmem:[%s899 + $0x8] sm:$0xf]
      %v903 = vld [vmem:[%s899 + $0xc] sm:$0xf]
      %v904 = vld [vmem:[%s899 + $0x10] sm:$0xf]
      %v905 = vld [vmem:[%s899 + $0x14] sm:$0xf]
      %v906 = vld [vmem:[%s899 + $0x18] sm:$0xf]
      %v907 = vld [vmem:[%s899 + $0x1c] sm:$0xf]
      %v908 = vld [vmem:[%s899 + $0x20] sm:$0xf]
      %v909 = vld [vmem:[%s899 + $0x24] sm:$0xf]
      %v910 = vld [vmem:[%s899 + $0x28] sm:$0xf]
      %v911 = vld [vmem:[%s899 + $0x2c] sm:$0xf]
      %v912 = vld [vmem:[%s899 + $0x30] sm:$0xf]
      %v913 = vld [vmem:[%s899 + $0x34] sm:$0xf]
      %v914 = vld [vmem:[%s899 + $0x38] sm:$0xf]
      %v915 = vld [vmem:[%s899 + $0x3c] sm:$0xf]
      %v917 = vunpack.c.l.b16 %v304
      %v918 = vpack.c.b16 %v917, %v620
      %vm919 = vsmask.f32 7424
      %v920 = vrot.slane %v433, 1
      %v921 = vor.u32 %v430, %v920
      %v923 = vshll.u32 %v918, 16
      %v925 = vrot.slane %v923, 1
      %v926 = vsel %vm919, %v921, %v925
      %v927 = vshrl.u32 %v918, 16
      %v929 = vor.u32 %v927, %v925
      %v948 = vunpack.c.l.b16 %v900
      %v949 = vunpack.c.l.b16 %v901
      %v950 = vunpack.c.l.b16 %v902
      %v951 = vunpack.c.l.b16 %v903
      %v952 = vunpack.c.l.b16 %v904
      %v953 = vunpack.c.l.b16 %v905
      %v954 = vunpack.c.l.b16 %v906
      %v955 = vunpack.c.l.b16 %v907
      %v956 = vunpack.c.l.b16 %v908
      %v957 = vunpack.c.l.b16 %v909
      %v958 = vunpack.c.l.b16 %v910
      %v959 = vunpack.c.l.b16 %v911
      %v960 = vunpack.c.l.b16 %v912
      %v961 = vunpack.c.l.b16 %v913
      %v962 = vunpack.c.l.b16 %v914
      %v963 = vunpack.c.l.b16 %v915
      %v964 = vpack.c.b16 %v949, %v948
      %v965 = vpack.c.b16 %v951, %v950
      %v966 = vpack.c.b16 %v953, %v952
      %v967 = vpack.c.b16 %v955, %v954
      %v968 = vpack.c.b16 %v957, %v956
      %v969 = vpack.c.b16 %v959, %v958
      %v970 = vpack.c.b16 %v961, %v960
      %v971 = vpack.c.b16 %v963, %v962
      %980 = vmatpush.bf16.msra.mxu0 %v971
      %981 = vmatpush.bf16.msra.mxu0 %v970
      %982 = vmatpush.bf16.msra.mxu0 %v969
      %983 = vmatpush.bf16.msra.mxu0 %v968
      %984 = vmatpush.bf16.msra.mxu0 %v967
      %985 = vmatpush.bf16.msra.mxu0 %v966
      %986 = vmatpush.bf16.msra.mxu0 %v965
      %987 = vmatpush.bf16.msra.mxu0 %v964
      %988 = vmatmul.bf16.gmra.mxu0 %v926
      %v989 = vpop.f32.mrf.mxu0
      %v990 = vadd.f32 0.0, %v989
      %v991 = vpop.f32.mrf.mxu0
      %v992 = vadd.f32 0.0, %v991
      %993 = vmatmul.bf16.gmra.mxu0 %v929
      %v994 = vpop.f32.mrf.mxu0
      %v995 = vadd.f32 0.0, %v994
      %v996 = vpop.f32.mrf.mxu0
      %997 = vdwg.mxu0
      %v998 = vadd.f32 %v896, %v990
      %v999 = vadd.f32 %v897, %v992
      %v1000 = vadd.f32 %v898, %v995
      %s1001 = scalar_lea.vmem %s4, 448
      %v1002 = vld [vmem:[%s1001] sm:$0xf]
      %v1003 = vld [vmem:[%s1001 + $0x4] sm:$0xf]
      %v1004 = vld [vmem:[%s1001 + $0x8] sm:$0xf]
      %v1005 = vld [vmem:[%s1001 + $0xc] sm:$0xf]
      %v1006 = vld [vmem:[%s1001 + $0x10] sm:$0xf]
      %v1007 = vld [vmem:[%s1001 + $0x14] sm:$0xf]
      %v1008 = vld [vmem:[%s1001 + $0x18] sm:$0xf]
      %v1009 = vld [vmem:[%s1001 + $0x1c] sm:$0xf]
      %v1010 = vld [vmem:[%s1001 + $0x20] sm:$0xf]
      %v1011 = vld [vmem:[%s1001 + $0x24] sm:$0xf]
      %v1012 = vld [vmem:[%s1001 + $0x28] sm:$0xf]
      %v1013 = vld [vmem:[%s1001 + $0x2c] sm:$0xf]
      %v1014 = vld [vmem:[%s1001 + $0x30] sm:$0xf]
      %v1015 = vld [vmem:[%s1001 + $0x34] sm:$0xf]
      %v1016 = vld [vmem:[%s1001 + $0x38] sm:$0xf]
      %v1017 = vld [vmem:[%s1001 + $0x3c] sm:$0xf]
      %vm1018 = vcmask 1046528
      %v1019 = vrot.slane %v347, 1
      %v1020 = vrot.slane %v918, 1
      %v1021 = vsel %vm1018, %v1019, %v1020
      %v1040 = vunpack.c.l.b16 %v1002
      %v1041 = vunpack.c.l.b16 %v1003
      %v1042 = vunpack.c.l.b16 %v1004
      %v1043 = vunpack.c.l.b16 %v1005
      %v1044 = vunpack.c.l.b16 %v1006
      %v1045 = vunpack.c.l.b16 %v1007
      %v1046 = vunpack.c.l.b16 %v1008
      %v1047 = vunpack.c.l.b16 %v1009
      %v1048 = vunpack.c.l.b16 %v1010
      %v1049 = vunpack.c.l.b16 %v1011
      %v1050 = vunpack.c.l.b16 %v1012
      %v1051 = vunpack.c.l.b16 %v1013
      %v1052 = vunpack.c.l.b16 %v1014
      %v1053 = vunpack.c.l.b16 %v1015
      %v1054 = vunpack.c.l.b16 %v1016
      %v1055 = vunpack.c.l.b16 %v1017
      %v1056 = vpack.c.b16 %v1041, %v1040
      %v1057 = vpack.c.b16 %v1043, %v1042
      %v1058 = vpack.c.b16 %v1045, %v1044
      %v1059 = vpack.c.b16 %v1047, %v1046
      %v1060 = vpack.c.b16 %v1049, %v1048
      %v1061 = vpack.c.b16 %v1051, %v1050
      %v1062 = vpack.c.b16 %v1053, %v1052
      %v1063 = vpack.c.b16 %v1055, %v1054
      %1072 = vmatpush.bf16.msra.mxu0 %v1063
      %1073 = vmatpush.bf16.msra.mxu0 %v1062
      %1074 = vmatpush.bf16.msra.mxu0 %v1061
      %1075 = vmatpush.bf16.msra.mxu0 %v1060
      %1076 = vmatpush.bf16.msra.mxu0 %v1059
      %1077 = vmatpush.bf16.msra.mxu0 %v1058
      %1078 = vmatpush.bf16.msra.mxu0 %v1057
      %1079 = vmatpush.bf16.msra.mxu0 %v1056
      %1080 = vmatmul.bf16.gmra.mxu0 %v1021
      %v1081 = vpop.f32.mrf.mxu0
      %v1082 = vadd.f32 0.0, %v1081
      %v1083 = vpop.f32.mrf.mxu0
      %v1084 = vadd.f32 0.0, %v1083
      %1085 = vmatmul.bf16.gmra.mxu0 %v1020
      %v1086 = vpop.f32.mrf.mxu0
      %v1087 = vadd.f32 0.0, %v1086
      %v1088 = vpop.f32.mrf.mxu0
      %1089 = vdwg.mxu0
      %v1090 = vadd.f32 %v998, %v1082
      %v1091 = vadd.f32 %v999, %v1084
      %v1092 = vadd.f32 %v1000, %v1087
      %s1093 = scalar_lea.vmem %s4, 512
      %v1094 = vld [vmem:[%s1093] sm:$0xf]
      %v1095 = vld [vmem:[%s1093 + $0x4] sm:$0xf]
      %v1096 = vld [vmem:[%s1093 + $0x8] sm:$0xf]
      %v1097 = vld [vmem:[%s1093 + $0xc] sm:$0xf]
      %v1098 = vld [vmem:[%s1093 + $0x10] sm:$0xf]
      %v1099 = vld [vmem:[%s1093 + $0x14] sm:$0xf]
      %v1100 = vld [vmem:[%s1093 + $0x18] sm:$0xf]
      %v1101 = vld [vmem:[%s1093 + $0x1c] sm:$0xf]
      %v1102 = vld [vmem:[%s1093 + $0x20] sm:$0xf]
      %v1103 = vld [vmem:[%s1093 + $0x24] sm:$0xf]
      %v1104 = vld [vmem:[%s1093 + $0x28] sm:$0xf]
      %v1105 = vld [vmem:[%s1093 + $0x2c] sm:$0xf]
      %v1106 = vld [vmem:[%s1093 + $0x30] sm:$0xf]
      %v1107 = vld [vmem:[%s1093 + $0x34] sm:$0xf]
      %v1108 = vld [vmem:[%s1093 + $0x38] sm:$0xf]
      %v1109 = vld [vmem:[%s1093 + $0x3c] sm:$0xf]
      %v1110 = vrot.slane %v430, 1
      %v1111 = vrot.slane %v433, 2
      %v1112 = vor.u32 %v1110, %v1111
      %v1113 = vrot.slane %v927, 1
      %v1114 = vrot.slane %v923, 2
      %v1115 = vor.u32 %v1113, %v1114
      %v1116 = vsel %vm623, %v1112, %v1115
      %v1135 = vunpack.c.l.b16 %v1094
      %v1136 = vunpack.c.l.b16 %v1095
      %v1137 = vunpack.c.l.b16 %v1096
      %v1138 = vunpack.c.l.b16 %v1097
      %v1139 = vunpack.c.l.b16 %v1098
      %v1140 = vunpack.c.l.b16 %v1099
      %v1141 = vunpack.c.l.b16 %v1100
      %v1142 = vunpack.c.l.b16 %v1101
      %v1143 = vunpack.c.l.b16 %v1102
      %v1144 = vunpack.c.l.b16 %v1103
      %v1145 = vunpack.c.l.b16 %v1104
      %v1146 = vunpack.c.l.b16 %v1105
      %v1147 = vunpack.c.l.b16 %v1106
      %v1148 = vunpack.c.l.b16 %v1107
      %v1149 = vunpack.c.l.b16 %v1108
      %v1150 = vunpack.c.l.b16 %v1109
      %v1151 = vpack.c.b16 %v1136, %v1135
      %v1152 = vpack.c.b16 %v1138, %v1137
      %v1153 = vpack.c.b16 %v1140, %v1139
      %v1154 = vpack.c.b16 %v1142, %v1141
      %v1155 = vpack.c.b16 %v1144, %v1143
      %v1156 = vpack.c.b16 %v1146, %v1145
      %v1157 = vpack.c.b16 %v1148, %v1147
      %v1158 = vpack.c.b16 %v1150, %v1149
      %1167 = vmatpush.bf16.msra.mxu0 %v1158
      %1168 = vmatpush.bf16.msra.mxu0 %v1157
      %1169 = vmatpush.bf16.msra.mxu0 %v1156
      %1170 = vmatpush.bf16.msra.mxu0 %v1155
      %1171 = vmatpush.bf16.msra.mxu0 %v1154
      %1172 = vmatpush.bf16.msra.mxu0 %v1153
      %1173 = vmatpush.bf16.msra.mxu0 %v1152
      %1174 = vmatpush.bf16.msra.mxu0 %v1151
      %1175 = vmatmul.bf16.gmra.mxu0 %v1116
      %v1176 = vpop.f32.mrf.mxu0
      %v1177 = vadd.f32 0.0, %v1176
      %v1178 = vpop.f32.mrf.mxu0
      %v1179 = vadd.f32 0.0, %v1178
      %1180 = vmatmul.bf16.gmra.mxu0 %v1115
      %v1181 = vpop.f32.mrf.mxu0
      %v1182 = vadd.f32 0.0, %v1181
      %v1183 = vpop.f32.mrf.mxu0
      %1184 = vdwg.mxu0
      %v1185 = vadd.f32 %v1090, %v1177
      %v1186 = vadd.f32 %v1091, %v1179
      %v1187 = vadd.f32 %v1092, %v1182
      %vm1188 = vcmask 64512
      %1189 = vst.msk [vmem:[%s224] sm:$0xff] %vm1188, %v1185
      %1190 = vst.msk [vmem:[%s224 + $0x8] sm:$0xff] %vm1188, %v1186
      %1191 = vst.msk [vmem:[%s224 + $0x10] sm:$0xff] %vm1188, %v1187
      %p1192 = scmp.lt.s32.totalorder %s16, 1
      %s1193 = scalar_select %p1192, %s16, 1
      %s1194 = smul.addr %s1193, 3
      %s1195 = smul.addr %s1194, 8
      %s1196 = scalar_lea.vmem %s5, %s1195
      // Predicated region
      $region41: #{densenet_forward.41} parent=39 // pred_check
        %p1197 = pneg %p144
      $region42: #{densenet_forward.41} parent=39 // pred_check_branch
        %1199 = sbr.rel (%p1197) target = $region44
      $region43: #{densenet_forward.41} parent=39 // pred_region
        _
      $region44: #{densenet_forward.41} parent=39 // pred_fallthru
        _
    $region40: #{densenet_forward.41} parent=5 // pred_fallthru
      _
    %p1200 = scmp.le.s32.totalorder 2, %s11
    // Predicated region
    $region45: #{densenet_forward.41} parent=5 // pred_check
      %p1201 = pneg %p1200
    $region46: #{densenet_forward.41} parent=5 // pred_check_branch
      %1203 = sbr.rel (%p1201) target = $region48
    $region47: #{densenet_forward.41} parent=5 // pred_region
      %s1204 = ssub.s32 %s11, 2
      // Predicated region
      $region49: #{densenet_forward.41} parent=47 // pred_check
        %p1205 = pneg %p150
      $region50: #{densenet_forward.41} parent=47 // pred_check_branch
        %1207 = sbr.rel (%p1205) target = $region52
      $region51: #{densenet_forward.41} parent=47 // pred_region
        %p1208 = scmp.lt.s32.totalorder %s17, 1
        %s1209 = scalar_select %p1208, %s17, 1
        %s1210 = smul.addr %s1209, 3
        %s1211 = smul.addr %s1210, 8
        %s1212 = scalar_lea.vmem %s5, %s1211
      $region52: #{densenet_forward.41} parent=47 // pred_fallthru
        _
    $region48: #{densenet_forward.41} parent=5 // pred_fallthru
      _
  $region6: #{densenet_forward.41} parent=0 // loop_footer
    %s15 = sadd.s32 1, %s11
  $region7: #{densenet_forward.41} parent=0 // loop_footer_branch
    %10 = sbr.rel target = $region3
  $region8: #{densenet_forward.41} parent=0 // loop_exit
    _

// kernel: densenet_forward.47
$region0: #{densenet_forward.47}
  #allocation0 [shape = 'u32[]', space=smem, size = 0x4, offset = 0x4, fixed_abs, tag = 'smem constant byte address 0x4 - core index']
  #allocation1 [shape = 'u32[72,128]{1,0:T(1,128)}', space=vmem, size = 0x9000, scoped, tag = 'internal scratch']
  %s0 = inlined_call_operand.vmem [shape: f32[2,16,128], index: 0, kind: input, shape index: {}]
  %s1 = inlined_call_operand.vmem [shape: f32[1,128], index: 1, kind: input, shape index: {}]
  %s2 = inlined_call_operand.vmem [shape: f32[1,128], index: 2, kind: input, shape index: {}]
  %s3 = inlined_call_operand.vmem [shape: bf16[128,10], index: 3, kind: input, shape index: {}]
  %s4 = inlined_call_operand.vmem [shape: f32[1,10], index: 4, kind: input, shape index: {}]
  %s5 = inlined_call_operand.hbm [shape: f32[2,10], index: 5, kind: output, shape index: {}]
  %s6 = sld [smem:[#allocation0]]
  $region30: #{densenet_forward.47} parent=0
    _
  %s8 = ssub.s32 1, %s6
  %s9 = scalar_select 0, %s8, %s6
  $region1: #{densenet_forward.47} parent=0
    #allocation2 [shape = 'u8[1024]{0}', space=vmem, size = 0x400, scoped, tag = 'output window, operand 0, single buffered']
    #allocation3 [shape = 's32[1]{0}', space=sflag, size = 0x4, scoped, tag = 'scoped memory for densenet_forward.47']
    %10 = vsyncpa [#allocation3], 0
    // Predicated region
    $region2: #{densenet_forward.47} parent=1 // pred_check
      _
    $region3: #{densenet_forward.47} parent=1 // pred_check_branch
      %12 = sbr.rel (0) target = $region5
    $region4: #{densenet_forward.47} parent=1 // pred_region
      _
    $region5: #{densenet_forward.47} parent=1 // pred_fallthru
      _
    // Predicated region
    $region6: #{densenet_forward.47} parent=1 // pred_check
      _
    $region7: #{densenet_forward.47} parent=1 // pred_check_branch
      %14 = sbr.rel (0) target = $region9
    $region8: #{densenet_forward.47} parent=1 // pred_region
      _
    $region9: #{densenet_forward.47} parent=1 // pred_fallthru
      _
    // Predicated region
    $region10: #{densenet_forward.47} parent=1 // pred_check
      _
    $region11: #{densenet_forward.47} parent=1 // pred_check_branch
      %16 = sbr.rel (0) target = $region13
    $region12: #{densenet_forward.47} parent=1 // pred_region
      _
    $region13: #{densenet_forward.47} parent=1 // pred_fallthru
      _
    // Predicated region
    $region14: #{densenet_forward.47} parent=1 // pred_check
      _
    $region15: #{densenet_forward.47} parent=1 // pred_check_branch
      %18 = sbr.rel (0) target = $region17
    $region16: #{densenet_forward.47} parent=1 // pred_region
      _
    $region17: #{densenet_forward.47} parent=1 // pred_fallthru
      _
    // Predicated region
    $region18: #{densenet_forward.47} parent=1 // pred_check
      _
    $region19: #{densenet_forward.47} parent=1 // pred_check_branch
      %20 = sbr.rel (0) target = $region21
    $region20: #{densenet_forward.47} parent=1 // pred_region
      _
    $region21: #{densenet_forward.47} parent=1 // pred_fallthru
      _
    %v21 = vld [vmem:[%s1] sm:$0x1]
    %v22 = vld [vmem:[%s2] sm:$0x1]
    %v23 = vld [vmem:[%s0] sm:$0xff]
    %v24 = vld [vmem:[%s0 + $0x8] sm:$0xff]
    %v25 = vld [vmem:[%s0 + $0x10] sm:$0xff]
    %v26 = vld [vmem:[%s0 + $0x18] sm:$0xff]
    %v28 = vperm.slane %v21, 0
    %v30 = vmul.f32 %v23, %v28
    %v31 = vmul.f32 %v24, %v28
    %v32 = vmul.f32 %v25, %v28
    %v33 = vmul.f32 %v26, %v28
    %v35 = vperm.slane %v22, 0
    %v37 = vadd.f32 %v30, %v35
    %v38 = vadd.f32 %v31, %v35
    %v39 = vadd.f32 %v32, %v35
    %v40 = vadd.f32 %v33, %v35
    %v41 = vmax.f32 %v37, 0.0
    %v42 = vmax.f32 %v38, 0.0
    %v43 = vmax.f32 %v39, 0.0
    %v44 = vmax.f32 %v40, 0.0
    %v45 = vadd.f32 %v41, %v42
    %v46 = vrot.slane %v45, 4
    %v47 = vadd.f32 %v45, %v46
    %v48 = vrot.slane %v47, 2
    %v49 = vadd.f32 %v47, %v48
    %v50 = vrot.slane %v49, 1
    %v51 = vadd.f32 %v49, %v50
    %v52 = vadd.f32 %v43, %v44
    %v53 = vrot.slane %v52, 4
    %v54 = vadd.f32 %v52, %v53
    %v55 = vrot.slane %v54, 2
    %v56 = vadd.f32 %v54, %v55
    %v57 = vrot.slane %v56, 1
    %v58 = vadd.f32 %v56, %v57
    %v59 = vrcp.pop 16.0
    %v60 = vmul.f32 16.0, %v59
    %v61 = vsub.f32 1.0, %v60
    %v62 = vmul.f32 %v59, %v61
    %v63 = vadd.f32 %v59, %v62
    %vm64 = vweird.f32 %v59
    %v65 = vsel %vm64, %v59, %v63
    %v66 = vmul.f32 %v51, %v65
    %v67 = vmul.f32 %v58, %v65
    %v68 = vpack.c.bf16 %v66, %v66
    %v69 = vpack.c.bf16 %v67, %v67
    %v70 = vld [vmem:[%s3] sm:$0xf]
    %v71 = vld [vmem:[%s3 + $0x4] sm:$0xf]
    %v72 = vld [vmem:[%s3 + $0x8] sm:$0xf]
    %v73 = vld [vmem:[%s3 + $0xc] sm:$0xf]
    %v74 = vld [vmem:[%s3 + $0x10] sm:$0xf]
    %v75 = vld [vmem:[%s3 + $0x14] sm:$0xf]
    %v76 = vld [vmem:[%s3 + $0x18] sm:$0xf]
    %v77 = vld [vmem:[%s3 + $0x1c] sm:$0xf]
    %v78 = vld [vmem:[%s3 + $0x20] sm:$0xf]
    %v79 = vld [vmem:[%s3 + $0x24] sm:$0xf]
    %v80 = vld [vmem:[%s3 + $0x28] sm:$0xf]
    %v81 = vld [vmem:[%s3 + $0x2c] sm:$0xf]
    %v82 = vld [vmem:[%s3 + $0x30] sm:$0xf]
    %v83 = vld [vmem:[%s3 + $0x34] sm:$0xf]
    %v84 = vld [vmem:[%s3 + $0x38] sm:$0xf]
    %v85 = vld [vmem:[%s3 + $0x3c] sm:$0xf]
    %v86 = vld [vmem:[%s4] sm:$0x1]
    %v88 = vperm.slane %v86, 0
    %v92 = vunpack.c.l.b16 %v68
    %v93 = vunpack.c.l.b16 %v69
    %vm94 = vcmask 1041409
    %v95 = vsel %vm94, %v93, %v92
    %v96 = vpack.c.b16 %v95, %v95
    %v114 = vunpack.c.l.b16 %v70
    %v115 = vunpack.c.l.b16 %v71
    %v116 = vunpack.c.l.b16 %v72
    %v117 = vunpack.c.l.b16 %v73
    %v118 = vunpack.c.l.b16 %v74
    %v119 = vunpack.c.l.b16 %v75
    %v120 = vunpack.c.l.b16 %v76
    %v121 = vunpack.c.l.b16 %v77
    %v122 = vunpack.c.l.b16 %v78
    %v123 = vunpack.c.l.b16 %v79
    %v124 = vunpack.c.l.b16 %v80
    %v125 = vunpack.c.l.b16 %v81
    %v126 = vunpack.c.l.b16 %v82
    %v127 = vunpack.c.l.b16 %v83
    %v128 = vunpack.c.l.b16 %v84
    %v129 = vunpack.c.l.b16 %v85
    %v130 = vpack.c.b16 %v115, %v114
    %v131 = vpack.c.b16 %v117, %v116
    %v132 = vpack.c.b16 %v119, %v118
    %v133 = vpack.c.b16 %v121, %v120
    %v134 = vpack.c.b16 %v123, %v122
    %v135 = vpack.c.b16 %v125, %v124
    %v136 = vpack.c.b16 %v127, %v126
    %v137 = vpack.c.b16 %v129, %v128
    %146 = vmatpush.bf16.msra.mxu0 %v137
    %147 = vmatpush.bf16.msra.mxu0 %v136
    %148 = vmatpush.bf16.msra.mxu0 %v135
    %149 = vmatpush.bf16.msra.mxu0 %v134
    %150 = vmatpush.bf16.msra.mxu0 %v133
    %151 = vmatpush.bf16.msra.mxu0 %v132
    %152 = vmatpush.bf16.msra.mxu0 %v131
    %153 = vmatpush.bf16.msra.mxu0 %v130
    %154 = vmatmul.bf16.gmra.mxu0 %v96
    %v155 = vpop.f32.mrf.mxu0
    %v156 = vadd.f32 %v88, %v155
    %v157 = vpop.f32.mrf.mxu0
    %158 = vdwg.mxu0
    %vm159 = vcmask 74752
    %160 = vst.msk [vmem:[#allocation2] sm:$0x3] %vm159, %v156
    // Predicated region
    $region22: #{densenet_forward.47} parent=1 // pred_check
      _
    $region23: #{densenet_forward.47} parent=1 // pred_check_branch
      %162 = sbr.rel (0) target = $region25
    $region24: #{densenet_forward.47} parent=1 // pred_region
      %164 = vsyncadd [#allocation3], 0
      %s166 = sshll.u32 [#allocation2], 4
      %s167 = int_to_ptr.vmem [resolvable:$true] %s166
      %s168 = sshll.u32 %s5, 4
      %s169 = int_to_ptr.hbm [resolvable:$true] %s168
      %171 = dma.vmem_to_hbm [thread:$0]  %s167, 32, %s169, [#allocation3]
    $region25: #{densenet_forward.47} parent=1 // pred_fallthru
      _
    // Predicated region
    $region26: #{densenet_forward.47} parent=1 // pred_check
      _
    $region27: #{densenet_forward.47} parent=1 // pred_check_branch
      %173 = sbr.rel (0) target = $region29
    $region28: #{densenet_forward.47} parent=1 // pred_region
      %175 = dma.done [#allocation3], 32
    $region29: #{densenet_forward.47} parent=1 // pred_fallthru
      _
    %176 = vsyncpa [#allocation3], 1

</llo_original>
